<compile_context>
chip_gen: v7x
topology: tpu7x:2x2x1
jax: 0.10.0
libtpu: 0.0.40
codegen_flags: <defaults>
</compile_context>

<pallas_src>
from functools import partial

import jax
import jax.numpy as jnp
from jax.experimental import pallas as pl
from jax.experimental.pallas import tpu as pltpu


_N_LAYERS = 10  # 4 enc + bin + dec_in + 4 dec


def _calc_bnd(p_h, p_w, b_n):
    s = (p_w // 16) * (p_h // 16)
    return b_n // s


# ---------------------------------------------------------------------------
# Fused kernel.  grid = (batch_tiles, itrs)
#   positional refs: r_ref, W0,b0, ..., W9,b9, loss_ref, r_scratch
# ---------------------------------------------------------------------------
def _conv_ar_kernel(r_ref, *refs):
    params = refs[: 2 * _N_LAYERS]
    loss_ref = refs[2 * _N_LAYERS]
    rcur_ref = refs[2 * _N_LAYERS + 1]

    t = pl.program_id(1)

    @pl.when(t == 0)
    def _():  # new batch tile: load its residual into the VMEM carry; zero the loss acc
        rcur_ref[...] = r_ref[...]
        loss_ref[...] = jnp.zeros_like(loss_ref)

    def dense(x, idx, relu):
        w = params[2 * idx][0]        # (K, N) bf16 -> MXU operand
        b = params[2 * idx + 1][0]    # (1, N) f32
        y = jnp.dot(x.astype(jnp.bfloat16), w,
                    preferred_element_type=jnp.float32) + b
        return jnp.maximum(y, 0.0) if relu else y

    def s2d(x):   # (M, C) -> (M//4, 4C): k2/s2 conv gather in child-major row order
        m4 = x.shape[0] // 4
        return jnp.concatenate(
            [x[j * m4:(j + 1) * m4, :] for j in range(4)], axis=1)

    def d2s(x):   # (M, 4C) -> (4M, C): inverse of s2d
        c = x.shape[1] // 4
        return jnp.concatenate(
            [x[:, j * c:(j + 1) * c] for j in range(4)], axis=0)

    cur = rcur_ref[...]                       # (bt*64, 4*c_in) f32 residual, level-1 layout

    # --- ConvEncoder: 4 x (k=2, s=2 conv + ReLU); first s2d folded into the layout.
    h = dense(cur, 0, True)                   # (bt*64, 64)
    h = dense(s2d(h), 1, True)                # (bt*16, 128)
    h = dense(s2d(h), 2, True)                # (bt*4, 256)
    h = dense(s2d(h), 3, True)                # (bt, 512)

    # --- ConvBinarizer: 1x1 conv, sign(tanh(y)) == sign(y) (tanh monotone, no EUP pass).
    # NOTE: exact zero maps to +1 (torch.sign(0) == 0) - measure-zero edge case.
    z = dense(h, 4, False)                    # (bt, bnd)
    code = jnp.where(z >= 0.0, 1.0, -1.0).astype(jnp.float32)

    # --- ConvDecoder: 1x1 conv, then 4 x (1x1 conv + depth_to_space), final tanh.
    d = dense(code, 5, True)                  # (bt, 512)
    d = d2s(dense(d, 6, True))                # (bt*4, 256)
    d = d2s(dense(d, 7, True))                # (bt*16, 128)
    d = d2s(dense(d, 8, True))                # (bt*64, 64)
    dec = jnp.tanh(dense(d, 9, False))        # (bt*64, 4*c_in); final d2s skipped (perm-inv)

    # --- fused residual update + loss contribution (f32), accumulated across iterations
    #     in the resident lane-dense output block (single HBM write per batch tile).
    new_r = cur - dec
    rcur_ref[...] = new_r
    s = jnp.sum(jnp.abs(new_r), keepdims=True)                # (1, 1)
    loss_ref[...] += jnp.broadcast_to(s, loss_ref.shape)      # (1, 1, 128) slab


# ---------------------------------------------------------------------------
# Layout: one-time permutation (plain JAX, done once per forward on a few KB).
# ---------------------------------------------------------------------------
def _to_child_major_level1(r_nchw, bt):
    """(N, C, 16, 16) NCHW -> (N//bt, bt*64, 4C) flattened to ((N//bt)*bt*64, 4C) f32.

    Rows are ordered per batch tile in a recursive 'child-major' order with the
    sample index as the FASTEST row bit, so every in-kernel space_to_depth is a
    contiguous 4-way row split + channel concat (depth_to_space its inverse) and the
    whole tile is processed with batched (tall-M) matmuls.  The channel axis already
    holds the first space_to_depth (2x2 pixel block, (h0, w0, c) ordering).
    """
    n, c, H, W = r_nchw.shape
    assert H == 16 and W == 16, "canonical ConvAR encoder expects 16x16 patches"
    assert n % bt == 0, "batch must be divisible by batch tile"
    nt = n // bt
    x = jnp.transpose(r_nchw, (0, 2, 3, 1))                    # (n, 16, 16, c)
    # split h, w into bits (MSB first): (nt, s, h3,h2,h1,h0, w3,w2,w1,w0, c)
    x = x.reshape(nt, bt, 2, 2, 2, 2, 2, 2, 2, 2, c)
    # rows <- (tile; h1,w1, h2,w2, h3,w3, sample) ; channels <- (h0, w0, c)
    x = jnp.transpose(x, (0, 4, 8, 3, 7, 2, 6, 1, 5, 9, 10))
    return x.reshape(nt * bt * 64, 4 * c).astype(jnp.float32)


# ---------------------------------------------------------------------------
# Parameters: each layer stacked over `itrs`; weights stored in bf16 for the MXU.
# ---------------------------------------------------------------------------
def init_params(key, itrs, c_in, bnd):
    enc_ch = [c_in, 64, 128, 256, 512]
    dec_ch = [512, 256, 128, 64, c_in]
    dims = []
    for li in range(4):
        dims.append((enc_ch[li] * 4, enc_ch[li + 1]))   # encoder k2/s2 (s2d-folded)
    dims.append((512, bnd))                              # binarizer 1x1
    dims.append((bnd, 512))                              # decoder input 1x1
    for li in range(4):
        dims.append((dec_ch[li], dec_ch[li + 1] * 4))    # decoder 1x1 (pre-d2s)
    Ws, Bs = [], []
    for (K, N) in dims:
        key, kw, kb = jax.random.split(key, 3)
        w = jax.random.normal(kw, (itrs, K, N), jnp.float32) * (1.0 / jnp.sqrt(K))
        b = 0.01 * jax.random.normal(kb, (itrs, 1, N), jnp.float32)
        Ws.append(w.astype(jnp.bfloat16))   # bf16 weights (MXU), f32 accumulation
        Bs.append(b)                         # biases stay f32
    return Ws, Bs


# ---------------------------------------------------------------------------
# ConvAR.forward
# ---------------------------------------------------------------------------
@partial(jax.jit, static_argnames=("batch_tile",))
def conv_ar_forward(params, r_nchw, batch_tile=None):
    Ws, Bs = params
    itrs = Ws[0].shape[0]
    n, c, H, W = r_nchw.shape
    bt = n if batch_tile is None else batch_tile   # default: whole batch per grid step
    nt = n // bt
    rows = bt * (H // 2) * (W // 2)                 # rows per batch tile at level-1
    k0 = 4 * c

    r0 = _to_child_major_level1(r_nchw, bt)         # ((nt*rows), k0)

    in_specs = [pl.BlockSpec((rows, k0), lambda b, t: (b, 0))]
    args = [r0]
    for wl, bl in zip(Ws, Bs):
        _, K, N = wl.shape
        in_specs.append(pl.BlockSpec((1, K, N), lambda b, t: (t, 0, 0)))
        in_specs.append(pl.BlockSpec((1, 1, N), lambda b, t: (t, 0, 0)))
        args += [wl, bl]

    partials = pl.pallas_call(
        _conv_ar_kernel,
        grid=(nt, itrs),
        in_specs=in_specs,
        out_specs=pl.BlockSpec((1, 1, 128), lambda b, t: (b, 0, 0)),
        out_shape=jax.ShapeDtypeStruct((nt, 1, 128), jnp.float32),
        scratch_shapes=[pltpu.VMEM((rows, k0), jnp.float32)],
        compiler_params=pltpu.CompilerParams(
            dimension_semantics=("parallel", "arbitrary"),
            vmem_limit_bytes=32 * 1024 * 1024,
        ),
    )(*args)

    # per-iteration mean = (sum over batch of |r|) / total_elems; loss = mean over itrs.
    total_elems = float(n * c * H * W)
    return jnp.sum(partials[:, 0, 0]) / (total_elems * itrs)


# ---------------------------------------------------------------------------
if __name__ == "__main__":
    # ConvAR(itrs=2, p_s=16, b_n=32) -> bnd = 32
    itrs = 2
    p_h = p_w = 16
    b_n = 32
    c_in = 3
    bnd = _calc_bnd(p_h, p_w, b_n)
    assert bnd > 0, "Too Few Bits"

    key = jax.random.PRNGKey(0)
    key_params, key_input = jax.random.split(key)
    params = init_params(key_params, itrs, c_in, bnd)

    # Input residual patches r: (N, C, p_h, p_w) NCHW, values in [-1, 1].
    r = jax.random.uniform(
        key_input, (2, c_in, p_h, p_w), jnp.float32, minval=-1.0, maxval=1.0
    )

    loss = conv_ar_forward(params, r)
    loss = jax.block_until_ready(loss)
    assert loss.shape == () and bool(jnp.isfinite(loss))
    print("KERNEL_OK")
</pallas_src>

<mosaic_0001>
module attributes {stable_mosaic.version = 11 : i64} {
  func.func @_conv_ar_kernel(%arg0: i32, %arg1: i32, %arg2: memref<128x12xf32, #tpu.memory_space<vmem>>, %arg3: memref<1x12x64xbf16, #tpu.memory_space<vmem>>, %arg4: memref<1x1x64xf32, #tpu.memory_space<vmem>>, %arg5: memref<1x256x128xbf16, #tpu.memory_space<vmem>>, %arg6: memref<1x1x128xf32, #tpu.memory_space<vmem>>, %arg7: memref<1x512x256xbf16, #tpu.memory_space<vmem>>, %arg8: memref<1x1x256xf32, #tpu.memory_space<vmem>>, %arg9: memref<1x1024x512xbf16, #tpu.memory_space<vmem>>, %arg10: memref<1x1x512xf32, #tpu.memory_space<vmem>>, %arg11: memref<1x512x32xbf16, #tpu.memory_space<vmem>>, %arg12: memref<1x1x32xf32, #tpu.memory_space<vmem>>, %arg13: memref<1x32x512xbf16, #tpu.memory_space<vmem>>, %arg14: memref<1x1x512xf32, #tpu.memory_space<vmem>>, %arg15: memref<1x512x1024xbf16, #tpu.memory_space<vmem>>, %arg16: memref<1x1x1024xf32, #tpu.memory_space<vmem>>, %arg17: memref<1x256x512xbf16, #tpu.memory_space<vmem>>, %arg18: memref<1x1x512xf32, #tpu.memory_space<vmem>>, %arg19: memref<1x128x256xbf16, #tpu.memory_space<vmem>>, %arg20: memref<1x1x256xf32, #tpu.memory_space<vmem>>, %arg21: memref<1x64x12xbf16, #tpu.memory_space<vmem>>, %arg22: memref<1x1x12xf32, #tpu.memory_space<vmem>>, %arg23: memref<1x1x128xf32, #tpu.memory_space<vmem>>, %arg24: memref<128x12xf32, #tpu.memory_space<vmem>>) attributes {dimension_semantics = [#tpu.dimension_semantics<parallel>, #tpu.dimension_semantics<arbitrary>], iteration_bounds = array<i64: 1, 2>, scalar_prefetch = 0 : i64, scratch_operands = 1 : i64, tpu.core_type = #tpu.core_type<tc>, window_params = [{transform_indices = @transform_0, window_bounds = array<i64: 128, 12>}, {transform_indices = @transform_1, window_bounds = array<i64: 1, 12, 64>}, {transform_indices = @transform_2, window_bounds = array<i64: 1, 1, 64>}, {transform_indices = @transform_3, window_bounds = array<i64: 1, 256, 128>}, {transform_indices = @transform_4, window_bounds = array<i64: 1, 1, 128>}, {transform_indices = @transform_5, window_bounds = array<i64: 1, 512, 256>}, {transform_indices = @transform_6, window_bounds = array<i64: 1, 1, 256>}, {transform_indices = @transform_7, window_bounds = array<i64: 1, 1024, 512>}, {transform_indices = @transform_8, window_bounds = array<i64: 1, 1, 512>}, {transform_indices = @transform_9, window_bounds = array<i64: 1, 512, 32>}, {transform_indices = @transform_10, window_bounds = array<i64: 1, 1, 32>}, {transform_indices = @transform_11, window_bounds = array<i64: 1, 32, 512>}, {transform_indices = @transform_12, window_bounds = array<i64: 1, 1, 512>}, {transform_indices = @transform_13, window_bounds = array<i64: 1, 512, 1024>}, {transform_indices = @transform_14, window_bounds = array<i64: 1, 1, 1024>}, {transform_indices = @transform_15, window_bounds = array<i64: 1, 256, 512>}, {transform_indices = @transform_16, window_bounds = array<i64: 1, 1, 512>}, {transform_indices = @transform_17, window_bounds = array<i64: 1, 128, 256>}, {transform_indices = @transform_18, window_bounds = array<i64: 1, 1, 256>}, {transform_indices = @transform_19, window_bounds = array<i64: 1, 64, 12>}, {transform_indices = @transform_20, window_bounds = array<i64: 1, 1, 12>}, {transform_indices = @transform_21, window_bounds = array<i64: 1, 1, 128>}]} {
    %c0_i32 = arith.constant 0 : i32
    %0 = arith.cmpi eq, %arg1, %c0_i32 : i32
    %1 = arith.extui %0 : i1 to i32
    %c0_i32_0 = arith.constant 0 : i32
    %2 = arith.cmpi ne, %1, %c0_i32_0 : i32
    scf.if %2 {
      %c0_91 = arith.constant 0 : index
      %c0_92 = arith.constant 0 : index
      %149 = vector.load %arg2[%c0_91, %c0_92] : memref<128x12xf32, #tpu.memory_space<vmem>>, vector<128x12xf32>
      %c0_93 = arith.constant 0 : index
      %c0_94 = arith.constant 0 : index
      %150 = vector.load %arg24[%c0_93, %c0_94] : memref<128x12xf32, #tpu.memory_space<vmem>>, vector<128x12xf32>
      tpu.vector_store %arg24[%c0_93, %c0_94], %149 {strides = array<i32>} : memref<128x12xf32, #tpu.memory_space<vmem>>, vector<128x12xf32>,
      %cst_95 = arith.constant 0.000000e+00 : f32
      %151 = vector.broadcast %cst_95 : f32 to vector<1x1x128xf32>
      %c0_96 = arith.constant 0 : index
      %c0_97 = arith.constant 0 : index
      %c0_98 = arith.constant 0 : index
      %152 = vector.load %arg23[%c0_96, %c0_97, %c0_98] : memref<1x1x128xf32, #tpu.memory_space<vmem>>, vector<1x1x128xf32>
      tpu.vector_store %arg23[%c0_96, %c0_97, %c0_98], %151 {strides = array<i32>} : memref<1x1x128xf32, #tpu.memory_space<vmem>>, vector<1x1x128xf32>,
    } else {
    }
    %c0 = arith.constant 0 : index
    %c0_1 = arith.constant 0 : index
    %3 = vector.load %arg24[%c0, %c0_1] : memref<128x12xf32, #tpu.memory_space<vmem>>, vector<128x12xf32>
    %c0_2 = arith.constant 0 : index
    %c0_3 = arith.constant 0 : index
    %c0_4 = arith.constant 0 : index
    %4 = vector.load %arg3[%c0_2, %c0_3, %c0_4] : memref<1x12x64xbf16, #tpu.memory_space<vmem>>, vector<1x12x64xbf16>
    %5 = vector.shape_cast %4 : vector<1x12x64xbf16> to vector<12x64xbf16>
    %c0_5 = arith.constant 0 : index
    %c0_6 = arith.constant 0 : index
    %c0_7 = arith.constant 0 : index
    %6 = vector.load %arg4[%c0_5, %c0_6, %c0_7] : memref<1x1x64xf32, #tpu.memory_space<vmem>>, vector<1x1x64xf32>
    %7 = vector.shape_cast %6 : vector<1x1x64xf32> to vector<1x64xf32>
    %8 = arith.truncf %3 : vector<128x12xf32> to vector<128x12xbf16>
    %cst = arith.constant dense<0.000000e+00> : vector<128x64xf32>
    %9 = tpu.matmul %8, %5, %cst {dimension_numbers = #tpu.dot_dimension_numbers<[1], [0], [0], [1], [0, 0, 1, 1], [], []>} : vector<128x12xbf16>, vector<12x64xbf16>, vector<128x64xf32> -> vector<128x64xf32>
    %10 = vector.broadcast %7 : vector<1x64xf32> to vector<128x64xf32>
    %11 = arith.addf %9, %10 : vector<128x64xf32>
    %cst_8 = arith.constant 0.000000e+00 : f32
    %12 = vector.broadcast %cst_8 : f32 to vector<128x64xf32>
    %13 = arith.maximumf %11, %12 : vector<128x64xf32>
    %14 = vector.extract_strided_slice %13 {offsets = [0, 0], sizes = [32, 64], strides = [1, 1]} : vector<128x64xf32> to vector<32x64xf32>
    %15 = vector.extract_strided_slice %13 {offsets = [32, 0], sizes = [32, 64], strides = [1, 1]} : vector<128x64xf32> to vector<32x64xf32>
    %16 = vector.extract_strided_slice %13 {offsets = [64, 0], sizes = [32, 64], strides = [1, 1]} : vector<128x64xf32> to vector<32x64xf32>
    %17 = vector.extract_strided_slice %13 {offsets = [96, 0], sizes = [32, 64], strides = [1, 1]} : vector<128x64xf32> to vector<32x64xf32>
    %18 = tpu.concatenate %14, %15, %16, %17 in 1 : vector<32x64xf32>, vector<32x64xf32>, vector<32x64xf32>, vector<32x64xf32> -> vector<32x256xf32>
    %c0_9 = arith.constant 0 : index
    %c0_10 = arith.constant 0 : index
    %c0_11 = arith.constant 0 : index
    %19 = vector.load %arg5[%c0_9, %c0_10, %c0_11] : memref<1x256x128xbf16, #tpu.memory_space<vmem>>, vector<1x256x128xbf16>
    %20 = vector.shape_cast %19 : vector<1x256x128xbf16> to vector<256x128xbf16>
    %c0_12 = arith.constant 0 : index
    %c0_13 = arith.constant 0 : index
    %c0_14 = arith.constant 0 : index
    %21 = vector.load %arg6[%c0_12, %c0_13, %c0_14] : memref<1x1x128xf32, #tpu.memory_space<vmem>>, vector<1x1x128xf32>
    %22 = vector.shape_cast %21 : vector<1x1x128xf32> to vector<1x128xf32>
    %23 = arith.truncf %18 : vector<32x256xf32> to vector<32x256xbf16>
    %cst_15 = arith.constant dense<0.000000e+00> : vector<32x128xf32>
    %24 = tpu.matmul %23, %20, %cst_15 {dimension_numbers = #tpu.dot_dimension_numbers<[1], [0], [0], [1], [0, 0, 1, 1], [], []>} : vector<32x256xbf16>, vector<256x128xbf16>, vector<32x128xf32> -> vector<32x128xf32>
    %25 = vector.broadcast %22 : vector<1x128xf32> to vector<32x128xf32>
    %26 = arith.addf %24, %25 : vector<32x128xf32>
    %cst_16 = arith.constant 0.000000e+00 : f32
    %27 = vector.broadcast %cst_16 : f32 to vector<32x128xf32>
    %28 = arith.maximumf %26, %27 : vector<32x128xf32>
    %29 = vector.extract_strided_slice %28 {offsets = [0, 0], sizes = [8, 128], strides = [1, 1]} : vector<32x128xf32> to vector<8x128xf32>
    %30 = vector.extract_strided_slice %28 {offsets = [8, 0], sizes = [8, 128], strides = [1, 1]} : vector<32x128xf32> to vector<8x128xf32>
    %31 = vector.extract_strided_slice %28 {offsets = [16, 0], sizes = [8, 128], strides = [1, 1]} : vector<32x128xf32> to vector<8x128xf32>
    %32 = vector.extract_strided_slice %28 {offsets = [24, 0], sizes = [8, 128], strides = [1, 1]} : vector<32x128xf32> to vector<8x128xf32>
    %33 = tpu.concatenate %29, %30, %31, %32 in 1 : vector<8x128xf32>, vector<8x128xf32>, vector<8x128xf32>, vector<8x128xf32> -> vector<8x512xf32>
    %c0_17 = arith.constant 0 : index
    %c0_18 = arith.constant 0 : index
    %c0_19 = arith.constant 0 : index
    %34 = vector.load %arg7[%c0_17, %c0_18, %c0_19] : memref<1x512x256xbf16, #tpu.memory_space<vmem>>, vector<1x512x256xbf16>
    %35 = vector.shape_cast %34 : vector<1x512x256xbf16> to vector<512x256xbf16>
    %c0_20 = arith.constant 0 : index
    %c0_21 = arith.constant 0 : index
    %c0_22 = arith.constant 0 : index
    %36 = vector.load %arg8[%c0_20, %c0_21, %c0_22] : memref<1x1x256xf32, #tpu.memory_space<vmem>>, vector<1x1x256xf32>
    %37 = vector.shape_cast %36 : vector<1x1x256xf32> to vector<1x256xf32>
    %38 = arith.truncf %33 : vector<8x512xf32> to vector<8x512xbf16>
    %cst_23 = arith.constant dense<0.000000e+00> : vector<8x256xf32>
    %39 = tpu.matmul %38, %35, %cst_23 {dimension_numbers = #tpu.dot_dimension_numbers<[1], [0], [0], [1], [0, 0, 1, 1], [], []>} : vector<8x512xbf16>, vector<512x256xbf16>, vector<8x256xf32> -> vector<8x256xf32>
    %40 = vector.broadcast %37 : vector<1x256xf32> to vector<8x256xf32>
    %41 = arith.addf %39, %40 : vector<8x256xf32>
    %cst_24 = arith.constant 0.000000e+00 : f32
    %42 = vector.broadcast %cst_24 : f32 to vector<8x256xf32>
    %43 = arith.maximumf %41, %42 : vector<8x256xf32>
    %44 = vector.extract_strided_slice %43 {offsets = [0, 0], sizes = [2, 256], strides = [1, 1]} : vector<8x256xf32> to vector<2x256xf32>
    %45 = vector.extract_strided_slice %43 {offsets = [2, 0], sizes = [2, 256], strides = [1, 1]} : vector<8x256xf32> to vector<2x256xf32>
    %46 = vector.extract_strided_slice %43 {offsets = [4, 0], sizes = [2, 256], strides = [1, 1]} : vector<8x256xf32> to vector<2x256xf32>
    %47 = vector.extract_strided_slice %43 {offsets = [6, 0], sizes = [2, 256], strides = [1, 1]} : vector<8x256xf32> to vector<2x256xf32>
    %48 = tpu.concatenate %44, %45, %46, %47 in 1 : vector<2x256xf32>, vector<2x256xf32>, vector<2x256xf32>, vector<2x256xf32> -> vector<2x1024xf32>
    %c0_25 = arith.constant 0 : index
    %c0_26 = arith.constant 0 : index
    %c0_27 = arith.constant 0 : index
    %49 = vector.load %arg9[%c0_25, %c0_26, %c0_27] : memref<1x1024x512xbf16, #tpu.memory_space<vmem>>, vector<1x1024x512xbf16>
    %50 = vector.shape_cast %49 : vector<1x1024x512xbf16> to vector<1024x512xbf16>
    %c0_28 = arith.constant 0 : index
    %c0_29 = arith.constant 0 : index
    %c0_30 = arith.constant 0 : index
    %51 = vector.load %arg10[%c0_28, %c0_29, %c0_30] : memref<1x1x512xf32, #tpu.memory_space<vmem>>, vector<1x1x512xf32>
    %52 = vector.shape_cast %51 : vector<1x1x512xf32> to vector<1x512xf32>
    %53 = arith.truncf %48 : vector<2x1024xf32> to vector<2x1024xbf16>
    %cst_31 = arith.constant dense<0.000000e+00> : vector<2x512xf32>
    %54 = tpu.matmul %53, %50, %cst_31 {dimension_numbers = #tpu.dot_dimension_numbers<[1], [0], [0], [1], [0, 0, 1, 1], [], []>} : vector<2x1024xbf16>, vector<1024x512xbf16>, vector<2x512xf32> -> vector<2x512xf32>
    %55 = vector.broadcast %52 : vector<1x512xf32> to vector<2x512xf32>
    %56 = arith.addf %54, %55 : vector<2x512xf32>
    %cst_32 = arith.constant 0.000000e+00 : f32
    %57 = vector.broadcast %cst_32 : f32 to vector<2x512xf32>
    %58 = arith.maximumf %56, %57 : vector<2x512xf32>
    %c0_33 = arith.constant 0 : index
    %c0_34 = arith.constant 0 : index
    %c0_35 = arith.constant 0 : index
    %59 = vector.load %arg11[%c0_33, %c0_34, %c0_35] : memref<1x512x32xbf16, #tpu.memory_space<vmem>>, vector<1x512x32xbf16>
    %60 = vector.shape_cast %59 : vector<1x512x32xbf16> to vector<512x32xbf16>
    %c0_36 = arith.constant 0 : index
    %c0_37 = arith.constant 0 : index
    %c0_38 = arith.constant 0 : index
    %61 = vector.load %arg12[%c0_36, %c0_37, %c0_38] : memref<1x1x32xf32, #tpu.memory_space<vmem>>, vector<1x1x32xf32>
    %62 = vector.shape_cast %61 : vector<1x1x32xf32> to vector<1x32xf32>
    %63 = arith.truncf %58 : vector<2x512xf32> to vector<2x512xbf16>
    %cst_39 = arith.constant dense<0.000000e+00> : vector<2x32xf32>
    %64 = tpu.matmul %63, %60, %cst_39 {dimension_numbers = #tpu.dot_dimension_numbers<[1], [0], [0], [1], [0, 0, 1, 1], [], []>} : vector<2x512xbf16>, vector<512x32xbf16>, vector<2x32xf32> -> vector<2x32xf32>
    %65 = vector.broadcast %62 : vector<1x32xf32> to vector<2x32xf32>
    %66 = arith.addf %64, %65 : vector<2x32xf32>
    %cst_40 = arith.constant 0.000000e+00 : f32
    %67 = vector.broadcast %cst_40 : f32 to vector<2x32xf32>
    %68 = arith.cmpf oge, %66, %67 : vector<2x32xf32>
    %cst_41 = arith.constant 1.000000e+00 : f32
    %cst_42 = arith.constant -1.000000e+00 : f32
    %69 = vector.broadcast %cst_41 : f32 to vector<2x32xf32>
    %70 = vector.broadcast %cst_42 : f32 to vector<2x32xf32>
    %71 = arith.select %68, %69, %70 : vector<2x32xi1>, vector<2x32xf32>
    %c0_43 = arith.constant 0 : index
    %c0_44 = arith.constant 0 : index
    %c0_45 = arith.constant 0 : index
    %72 = vector.load %arg13[%c0_43, %c0_44, %c0_45] : memref<1x32x512xbf16, #tpu.memory_space<vmem>>, vector<1x32x512xbf16>
    %73 = vector.shape_cast %72 : vector<1x32x512xbf16> to vector<32x512xbf16>
    %c0_46 = arith.constant 0 : index
    %c0_47 = arith.constant 0 : index
    %c0_48 = arith.constant 0 : index
    %74 = vector.load %arg14[%c0_46, %c0_47, %c0_48] : memref<1x1x512xf32, #tpu.memory_space<vmem>>, vector<1x1x512xf32>
    %75 = vector.shape_cast %74 : vector<1x1x512xf32> to vector<1x512xf32>
    %76 = arith.truncf %71 : vector<2x32xf32> to vector<2x32xbf16>
    %cst_49 = arith.constant dense<0.000000e+00> : vector<2x512xf32>
    %77 = tpu.matmul %76, %73, %cst_49 {dimension_numbers = #tpu.dot_dimension_numbers<[1], [0], [0], [1], [0, 0, 1, 1], [], []>} : vector<2x32xbf16>, vector<32x512xbf16>, vector<2x512xf32> -> vector<2x512xf32>
    %78 = vector.broadcast %75 : vector<1x512xf32> to vector<2x512xf32>
    %79 = arith.addf %77, %78 : vector<2x512xf32>
    %cst_50 = arith.constant 0.000000e+00 : f32
    %80 = vector.broadcast %cst_50 : f32 to vector<2x512xf32>
    %81 = arith.maximumf %79, %80 : vector<2x512xf32>
    %c0_51 = arith.constant 0 : index
    %c0_52 = arith.constant 0 : index
    %c0_53 = arith.constant 0 : index
    %82 = vector.load %arg15[%c0_51, %c0_52, %c0_53] : memref<1x512x1024xbf16, #tpu.memory_space<vmem>>, vector<1x512x1024xbf16>
    %83 = vector.shape_cast %82 : vector<1x512x1024xbf16> to vector<512x1024xbf16>
    %c0_54 = arith.constant 0 : index
    %c0_55 = arith.constant 0 : index
    %c0_56 = arith.constant 0 : index
    %84 = vector.load %arg16[%c0_54, %c0_55, %c0_56] : memref<1x1x1024xf32, #tpu.memory_space<vmem>>, vector<1x1x1024xf32>
    %85 = vector.shape_cast %84 : vector<1x1x1024xf32> to vector<1x1024xf32>
    %86 = arith.truncf %81 : vector<2x512xf32> to vector<2x512xbf16>
    %cst_57 = arith.constant dense<0.000000e+00> : vector<2x1024xf32>
    %87 = tpu.matmul %86, %83, %cst_57 {dimension_numbers = #tpu.dot_dimension_numbers<[1], [0], [0], [1], [0, 0, 1, 1], [], []>} : vector<2x512xbf16>, vector<512x1024xbf16>, vector<2x1024xf32> -> vector<2x1024xf32>
    %88 = vector.broadcast %85 : vector<1x1024xf32> to vector<2x1024xf32>
    %89 = arith.addf %87, %88 : vector<2x1024xf32>
    %cst_58 = arith.constant 0.000000e+00 : f32
    %90 = vector.broadcast %cst_58 : f32 to vector<2x1024xf32>
    %91 = arith.maximumf %89, %90 : vector<2x1024xf32>
    %92 = vector.extract_strided_slice %91 {offsets = [0, 0], sizes = [2, 256], strides = [1, 1]} : vector<2x1024xf32> to vector<2x256xf32>
    %93 = vector.extract_strided_slice %91 {offsets = [0, 256], sizes = [2, 256], strides = [1, 1]} : vector<2x1024xf32> to vector<2x256xf32>
    %94 = vector.extract_strided_slice %91 {offsets = [0, 512], sizes = [2, 256], strides = [1, 1]} : vector<2x1024xf32> to vector<2x256xf32>
    %95 = vector.extract_strided_slice %91 {offsets = [0, 768], sizes = [2, 256], strides = [1, 1]} : vector<2x1024xf32> to vector<2x256xf32>
    %96 = tpu.concatenate %92, %93, %94, %95 in 0 : vector<2x256xf32>, vector<2x256xf32>, vector<2x256xf32>, vector<2x256xf32> -> vector<8x256xf32>
    %c0_59 = arith.constant 0 : index
    %c0_60 = arith.constant 0 : index
    %c0_61 = arith.constant 0 : index
    %97 = vector.load %arg17[%c0_59, %c0_60, %c0_61] : memref<1x256x512xbf16, #tpu.memory_space<vmem>>, vector<1x256x512xbf16>
    %98 = vector.shape_cast %97 : vector<1x256x512xbf16> to vector<256x512xbf16>
    %c0_62 = arith.constant 0 : index
    %c0_63 = arith.constant 0 : index
    %c0_64 = arith.constant 0 : index
    %99 = vector.load %arg18[%c0_62, %c0_63, %c0_64] : memref<1x1x512xf32, #tpu.memory_space<vmem>>, vector<1x1x512xf32>
    %100 = vector.shape_cast %99 : vector<1x1x512xf32> to vector<1x512xf32>
    %101 = arith.truncf %96 : vector<8x256xf32> to vector<8x256xbf16>
    %cst_65 = arith.constant dense<0.000000e+00> : vector<8x512xf32>
    %102 = tpu.matmul %101, %98, %cst_65 {dimension_numbers = #tpu.dot_dimension_numbers<[1], [0], [0], [1], [0, 0, 1, 1], [], []>} : vector<8x256xbf16>, vector<256x512xbf16>, vector<8x512xf32> -> vector<8x512xf32>
    %103 = vector.broadcast %100 : vector<1x512xf32> to vector<8x512xf32>
    %104 = arith.addf %102, %103 : vector<8x512xf32>
    %cst_66 = arith.constant 0.000000e+00 : f32
    %105 = vector.broadcast %cst_66 : f32 to vector<8x512xf32>
    %106 = arith.maximumf %104, %105 : vector<8x512xf32>
    %107 = vector.extract_strided_slice %106 {offsets = [0, 0], sizes = [8, 128], strides = [1, 1]} : vector<8x512xf32> to vector<8x128xf32>
    %108 = vector.extract_strided_slice %106 {offsets = [0, 128], sizes = [8, 128], strides = [1, 1]} : vector<8x512xf32> to vector<8x128xf32>
    %109 = vector.extract_strided_slice %106 {offsets = [0, 256], sizes = [8, 128], strides = [1, 1]} : vector<8x512xf32> to vector<8x128xf32>
    %110 = vector.extract_strided_slice %106 {offsets = [0, 384], sizes = [8, 128], strides = [1, 1]} : vector<8x512xf32> to vector<8x128xf32>
    %111 = tpu.concatenate %107, %108, %109, %110 in 0 : vector<8x128xf32>, vector<8x128xf32>, vector<8x128xf32>, vector<8x128xf32> -> vector<32x128xf32>
    %c0_67 = arith.constant 0 : index
    %c0_68 = arith.constant 0 : index
    %c0_69 = arith.constant 0 : index
    %112 = vector.load %arg19[%c0_67, %c0_68, %c0_69] : memref<1x128x256xbf16, #tpu.memory_space<vmem>>, vector<1x128x256xbf16>
    %113 = vector.shape_cast %112 : vector<1x128x256xbf16> to vector<128x256xbf16>
    %c0_70 = arith.constant 0 : index
    %c0_71 = arith.constant 0 : index
    %c0_72 = arith.constant 0 : index
    %114 = vector.load %arg20[%c0_70, %c0_71, %c0_72] : memref<1x1x256xf32, #tpu.memory_space<vmem>>, vector<1x1x256xf32>
    %115 = vector.shape_cast %114 : vector<1x1x256xf32> to vector<1x256xf32>
    %116 = arith.truncf %111 : vector<32x128xf32> to vector<32x128xbf16>
    %cst_73 = arith.constant dense<0.000000e+00> : vector<32x256xf32>
    %117 = tpu.matmul %116, %113, %cst_73 {dimension_numbers = #tpu.dot_dimension_numbers<[1], [0], [0], [1], [0, 0, 1, 1], [], []>} : vector<32x128xbf16>, vector<128x256xbf16>, vector<32x256xf32> -> vector<32x256xf32>
    %118 = vector.broadcast %115 : vector<1x256xf32> to vector<32x256xf32>
    %119 = arith.addf %117, %118 : vector<32x256xf32>
    %cst_74 = arith.constant 0.000000e+00 : f32
    %120 = vector.broadcast %cst_74 : f32 to vector<32x256xf32>
    %121 = arith.maximumf %119, %120 : vector<32x256xf32>
    %122 = vector.extract_strided_slice %121 {offsets = [0, 0], sizes = [32, 64], strides = [1, 1]} : vector<32x256xf32> to vector<32x64xf32>
    %123 = vector.extract_strided_slice %121 {offsets = [0, 64], sizes = [32, 64], strides = [1, 1]} : vector<32x256xf32> to vector<32x64xf32>
    %124 = vector.extract_strided_slice %121 {offsets = [0, 128], sizes = [32, 64], strides = [1, 1]} : vector<32x256xf32> to vector<32x64xf32>
    %125 = vector.extract_strided_slice %121 {offsets = [0, 192], sizes = [32, 64], strides = [1, 1]} : vector<32x256xf32> to vector<32x64xf32>
    %126 = tpu.concatenate %122, %123, %124, %125 in 0 : vector<32x64xf32>, vector<32x64xf32>, vector<32x64xf32>, vector<32x64xf32> -> vector<128x64xf32>
    %c0_75 = arith.constant 0 : index
    %c0_76 = arith.constant 0 : index
    %c0_77 = arith.constant 0 : index
    %127 = vector.load %arg21[%c0_75, %c0_76, %c0_77] : memref<1x64x12xbf16, #tpu.memory_space<vmem>>, vector<1x64x12xbf16>
    %128 = vector.shape_cast %127 : vector<1x64x12xbf16> to vector<64x12xbf16>
    %c0_78 = arith.constant 0 : index
    %c0_79 = arith.constant 0 : index
    %c0_80 = arith.constant 0 : index
    %129 = vector.load %arg22[%c0_78, %c0_79, %c0_80] : memref<1x1x12xf32, #tpu.memory_space<vmem>>, vector<1x1x12xf32>
    %130 = vector.shape_cast %129 : vector<1x1x12xf32> to vector<1x12xf32>
    %131 = arith.truncf %126 : vector<128x64xf32> to vector<128x64xbf16>
    %cst_81 = arith.constant dense<0.000000e+00> : vector<128x12xf32>
    %132 = tpu.matmul %131, %128, %cst_81 {dimension_numbers = #tpu.dot_dimension_numbers<[1], [0], [0], [1], [0, 0, 1, 1], [], []>} : vector<128x64xbf16>, vector<64x12xbf16>, vector<128x12xf32> -> vector<128x12xf32>
    %133 = vector.broadcast %130 : vector<1x12xf32> to vector<128x12xf32>
    %134 = arith.addf %132, %133 : vector<128x12xf32>
    %135 = math.tanh %134 : vector<128x12xf32>
    %136 = arith.subf %3, %135 : vector<128x12xf32>
    %c0_82 = arith.constant 0 : index
    %c0_83 = arith.constant 0 : index
    %137 = vector.load %arg24[%c0_82, %c0_83] : memref<128x12xf32, #tpu.memory_space<vmem>>, vector<128x12xf32>
    tpu.vector_store %arg24[%c0_82, %c0_83], %136 {strides = array<i32>} : memref<128x12xf32, #tpu.memory_space<vmem>>, vector<128x12xf32>,
    %138 = math.absf %136 : vector<128x12xf32>
    %139 = vector.shape_cast %138 : vector<128x12xf32> to vector<1x128x12xf32>
    %cst_84 = arith.constant dense<0.000000e+00> : vector<1xf32>
    %140 = vector.multi_reduction <add>, %139, %cst_84 [1, 2] : vector<1x128x12xf32> to vector<1xf32>
    %141 = vector.shape_cast %140 : vector<1xf32> to vector<1x1x1xf32>
    %142 = vector.extract %141[0, 0, 0] : f32 from vector<1x1x1xf32>
    %143 = vector.broadcast %142 : f32 to vector<1x1xf32>
    %c0_85 = arith.constant 0 : index
    %c0_86 = arith.constant 0 : index
    %c0_87 = arith.constant 0 : index
    %144 = vector.load %arg23[%c0_85, %c0_86, %c0_87] : memref<1x1x128xf32, #tpu.memory_space<vmem>>, vector<1x1x128xf32>
    %145 = vector.shape_cast %143 : vector<1x1xf32> to vector<1x1x1xf32>
    %146 = vector.broadcast %145 : vector<1x1x1xf32> to vector<1x1x128xf32>
    %147 = arith.addf %144, %146 : vector<1x1x128xf32>
    %c0_88 = arith.constant 0 : index
    %c0_89 = arith.constant 0 : index
    %c0_90 = arith.constant 0 : index
    %148 = vector.load %arg23[%c0_88, %c0_89, %c0_90] : memref<1x1x128xf32, #tpu.memory_space<vmem>>, vector<1x1x128xf32>
    tpu.vector_store %arg23[%c0_88, %c0_89, %c0_90], %147 {strides = array<i32>} : memref<1x1x128xf32, #tpu.memory_space<vmem>>, vector<1x1x128xf32>,
    return
  }
  func.func @transform_0(%arg0: i32, %arg1: i32) -> (i32, i32) {
    %c0_i32 = arith.constant 0 : i32
    %c0_i32_0 = arith.constant 0 : i32
    return %arg0, %c0_i32 : i32, i32
  }
  func.func @transform_1(%arg0: i32, %arg1: i32) -> (i32, i32, i32) {
    %c0_i32 = arith.constant 0 : i32
    %c0_i32_0 = arith.constant 0 : i32
    %c0_i32_1 = arith.constant 0 : i32
    return %arg1, %c0_i32, %c0_i32_0 : i32, i32, i32
  }
  func.func @transform_2(%arg0: i32, %arg1: i32) -> (i32, i32, i32) {
    %c0_i32 = arith.constant 0 : i32
    %c0_i32_0 = arith.constant 0 : i32
    %c0_i32_1 = arith.constant 0 : i32
    return %arg1, %c0_i32, %c0_i32_0 : i32, i32, i32
  }
  func.func @transform_3(%arg0: i32, %arg1: i32) -> (i32, i32, i32) {
    %c0_i32 = arith.constant 0 : i32
    %c0_i32_0 = arith.constant 0 : i32
    %c0_i32_1 = arith.constant 0 : i32
    return %arg1, %c0_i32, %c0_i32_0 : i32, i32, i32
  }
  func.func @transform_4(%arg0: i32, %arg1: i32) -> (i32, i32, i32) {
    %c0_i32 = arith.constant 0 : i32
    %c0_i32_0 = arith.constant 0 : i32
    %c0_i32_1 = arith.constant 0 : i32
    return %arg1, %c0_i32, %c0_i32_0 : i32, i32, i32
  }
  func.func @transform_5(%arg0: i32, %arg1: i32) -> (i32, i32, i32) {
    %c0_i32 = arith.constant 0 : i32
    %c0_i32_0 = arith.constant 0 : i32
    %c0_i32_1 = arith.constant 0 : i32
    return %arg1, %c0_i32, %c0_i32_0 : i32, i32, i32
  }
  func.func @transform_6(%arg0: i32, %arg1: i32) -> (i32, i32, i32) {
    %c0_i32 = arith.constant 0 : i32
    %c0_i32_0 = arith.constant 0 : i32
    %c0_i32_1 = arith.constant 0 : i32
    return %arg1, %c0_i32, %c0_i32_0 : i32, i32, i32
  }
  func.func @transform_7(%arg0: i32, %arg1: i32) -> (i32, i32, i32) {
    %c0_i32 = arith.constant 0 : i32
    %c0_i32_0 = arith.constant 0 : i32
    %c0_i32_1 = arith.constant 0 : i32
    return %arg1, %c0_i32, %c0_i32_0 : i32, i32, i32
  }
  func.func @transform_8(%arg0: i32, %arg1: i32) -> (i32, i32, i32) {
    %c0_i32 = arith.constant 0 : i32
    %c0_i32_0 = arith.constant 0 : i32
    %c0_i32_1 = arith.constant 0 : i32
    return %arg1, %c0_i32, %c0_i32_0 : i32, i32, i32
  }
  func.func @transform_9(%arg0: i32, %arg1: i32) -> (i32, i32, i32) {
    %c0_i32 = arith.constant 0 : i32
    %c0_i32_0 = arith.constant 0 : i32
    %c0_i32_1 = arith.constant 0 : i32
    return %arg1, %c0_i32, %c0_i32_0 : i32, i32, i32
  }
  func.func @transform_10(%arg0: i32, %arg1: i32) -> (i32, i32, i32) {
    %c0_i32 = arith.constant 0 : i32
    %c0_i32_0 = arith.constant 0 : i32
    %c0_i32_1 = arith.constant 0 : i32
    return %arg1, %c0_i32, %c0_i32_0 : i32, i32, i32
  }
  func.func @transform_11(%arg0: i32, %arg1: i32) -> (i32, i32, i32) {
    %c0_i32 = arith.constant 0 : i32
    %c0_i32_0 = arith.constant 0 : i32
    %c0_i32_1 = arith.constant 0 : i32
    return %arg1, %c0_i32, %c0_i32_0 : i32, i32, i32
  }
  func.func @transform_12(%arg0: i32, %arg1: i32) -> (i32, i32, i32) {
    %c0_i32 = arith.constant 0 : i32
    %c0_i32_0 = arith.constant 0 : i32
    %c0_i32_1 = arith.constant 0 : i32
    return %arg1, %c0_i32, %c0_i32_0 : i32, i32, i32
  }
  func.func @transform_13(%arg0: i32, %arg1: i32) -> (i32, i32, i32) {
    %c0_i32 = arith.constant 0 : i32
    %c0_i32_0 = arith.constant 0 : i32
    %c0_i32_1 = arith.constant 0 : i32
    return %arg1, %c0_i32, %c0_i32_0 : i32, i32, i32
  }
  func.func @transform_14(%arg0: i32, %arg1: i32) -> (i32, i32, i32) {
    %c0_i32 = arith.constant 0 : i32
    %c0_i32_0 = arith.constant 0 : i32
    %c0_i32_1 = arith.constant 0 : i32
    return %arg1, %c0_i32, %c0_i32_0 : i32, i32, i32
  }
  func.func @transform_15(%arg0: i32, %arg1: i32) -> (i32, i32, i32) {
    %c0_i32 = arith.constant 0 : i32
    %c0_i32_0 = arith.constant 0 : i32
    %c0_i32_1 = arith.constant 0 : i32
    return %arg1, %c0_i32, %c0_i32_0 : i32, i32, i32
  }
  func.func @transform_16(%arg0: i32, %arg1: i32) -> (i32, i32, i32) {
    %c0_i32 = arith.constant 0 : i32
    %c0_i32_0 = arith.constant 0 : i32
    %c0_i32_1 = arith.constant 0 : i32
    return %arg1, %c0_i32, %c0_i32_0 : i32, i32, i32
  }
  func.func @transform_17(%arg0: i32, %arg1: i32) -> (i32, i32, i32) {
    %c0_i32 = arith.constant 0 : i32
    %c0_i32_0 = arith.constant 0 : i32
    %c0_i32_1 = arith.constant 0 : i32
    return %arg1, %c0_i32, %c0_i32_0 : i32, i32, i32
  }
  func.func @transform_18(%arg0: i32, %arg1: i32) -> (i32, i32, i32) {
    %c0_i32 = arith.constant 0 : i32
    %c0_i32_0 = arith.constant 0 : i32
    %c0_i32_1 = arith.constant 0 : i32
    return %arg1, %c0_i32, %c0_i32_0 : i32, i32, i32
  }
  func.func @transform_19(%arg0: i32, %arg1: i32) -> (i32, i32, i32) {
    %c0_i32 = arith.constant 0 : i32
    %c0_i32_0 = arith.constant 0 : i32
    %c0_i32_1 = arith.constant 0 : i32
    return %arg1, %c0_i32, %c0_i32_0 : i32, i32, i32
  }
  func.func @transform_20(%arg0: i32, %arg1: i32) -> (i32, i32, i32) {
    %c0_i32 = arith.constant 0 : i32
    %c0_i32_0 = arith.constant 0 : i32
    %c0_i32_1 = arith.constant 0 : i32
    return %arg1, %c0_i32, %c0_i32_0 : i32, i32, i32
  }
  func.func @transform_21(%arg0: i32, %arg1: i32) -> (i32, i32, i32) {
    %c0_i32 = arith.constant 0 : i32
    %c0_i32_0 = arith.constant 0 : i32
    %c0_i32_1 = arith.constant 0 : i32
    return %arg0, %c0_i32, %c0_i32_0 : i32, i32, i32
  }
}

</mosaic_0001>

<llo_original>
// kernel: conv_ar_forward.1
$region0: #{conv_ar_forward.1}
  #allocation0 [shape = 'u32[]', space=smem, size = 0x4, offset = 0x4, fixed_abs, tag = 'smem constant byte address 0x4 - core index']
  #allocation1 [shape = 'u32[144,128]{1,0:T(1,128)}', space=vmem, size = 0x12000, scoped, tag = 'internal scratch']
  #allocation2 [shape = 'f32[128,12]{1,0:T(8,128)}', space=vmem, size = 0x10000, scoped, tag = 'scratch operand']
  %s0 = inlined_call_operand.vmem [shape: f32[128,12], index: 0, kind: input, shape index: {}]
  %s1 = inlined_call_operand.vmem [shape: bf16[2,12,64], index: 1, kind: input, shape index: {}]
  %s2 = inlined_call_operand.hbm [shape: f32[2,1,64], index: 2, kind: input, shape index: {}]
  %s3 = inlined_call_operand.hbm [shape: bf16[2,256,128], index: 3, kind: input, shape index: {}]
  %s4 = inlined_call_operand.hbm [shape: f32[2,1,128], index: 4, kind: input, shape index: {}]
  %s5 = inlined_call_operand.vmem [shape: bf16[2,512,256], index: 5, kind: input, shape index: {}]
  %s6 = inlined_call_operand.hbm [shape: f32[2,1,256], index: 6, kind: input, shape index: {}]
  %s7 = inlined_call_operand.hbm [shape: bf16[2,1024,512], index: 7, kind: input, shape index: {}]
  %s8 = inlined_call_operand.hbm [shape: f32[2,1,512], index: 8, kind: input, shape index: {}]
  %s9 = inlined_call_operand.vmem [shape: bf16[2,512,32], index: 9, kind: input, shape index: {}]
  %s10 = inlined_call_operand.hbm [shape: f32[2,1,32], index: 10, kind: input, shape index: {}]
  %s11 = inlined_call_operand.hbm [shape: bf16[2,32,512], index: 11, kind: input, shape index: {}]
  %s12 = inlined_call_operand.hbm [shape: f32[2,1,512], index: 12, kind: input, shape index: {}]
  %s13 = inlined_call_operand.hbm [shape: bf16[2,512,1024], index: 13, kind: input, shape index: {}]
  %s14 = inlined_call_operand.hbm [shape: f32[2,1,1024], index: 14, kind: input, shape index: {}]
  %s15 = inlined_call_operand.vmem [shape: bf16[2,256,512], index: 15, kind: input, shape index: {}]
  %s16 = inlined_call_operand.hbm [shape: f32[2,1,512], index: 16, kind: input, shape index: {}]
  %s17 = inlined_call_operand.hbm [shape: bf16[2,128,256], index: 17, kind: input, shape index: {}]
  %s18 = inlined_call_operand.hbm [shape: f32[2,1,256], index: 18, kind: input, shape index: {}]
  %s19 = inlined_call_operand.vmem [shape: bf16[2,64,12], index: 19, kind: input, shape index: {}]
  %s20 = inlined_call_operand.hbm [shape: f32[2,1,12], index: 20, kind: input, shape index: {}]
  %s21 = inlined_call_operand.vmem [shape: f32[1,1,128], index: 21, kind: output, shape index: {}]
  %s22 = sld [smem:[#allocation0]]
  $region181: #{conv_ar_forward.1} parent=0
    _
  %s24 = ssub.s32 1, %s22
  %s25 = scalar_select 0, %s24, %s22
  $region1: #{conv_ar_forward.1} parent=0
    #allocation3 [shape = 'u8[1024]{0}', space=vmem, size = 0x400, scoped, tag = 'input window, operand 2']
    #allocation4 [shape = 's32[2]{0}', space=sflag, size = 0x8, scoped, tag = 'scoped memory for conv_ar_forward.1']
    #allocation5 [shape = 'u8[131072]{0}', space=vmem, size = 0x20000, scoped, tag = 'input window, operand 3']
    #allocation6 [shape = 's32[2]{0}', space=sflag, size = 0x8, scoped, tag = 'scoped memory for conv_ar_forward.1']
    #allocation7 [shape = 'u8[1024]{0}', space=vmem, size = 0x400, scoped, tag = 'input window, operand 4']
    #allocation8 [shape = 'u8[2048]{0}', space=vmem, size = 0x800, scoped, tag = 'input window, operand 6']
    #allocation9 [shape = 's32[2]{0}', space=sflag, size = 0x8, scoped, tag = 'scoped memory for conv_ar_forward.1']
    #allocation10 [shape = 'u8[2097152]{0}', space=vmem, size = 0x200000, scoped, tag = 'input window, operand 7']
    #allocation11 [shape = 'u8[4096]{0}', space=vmem, size = 0x1000, scoped, tag = 'input window, operand 8']
    #allocation12 [shape = 's32[2]{0}', space=sflag, size = 0x8, scoped, tag = 'scoped memory for conv_ar_forward.1']
    #allocation13 [shape = 'u8[1024]{0}', space=vmem, size = 0x400, scoped, tag = 'input window, operand 10']
    #allocation14 [shape = 'u8[65536]{0}', space=vmem, size = 0x10000, scoped, tag = 'input window, operand 11']
    #allocation15 [shape = 's32[2]{0}', space=sflag, size = 0x8, scoped, tag = 'scoped memory for conv_ar_forward.1']
    #allocation16 [shape = 'u8[4096]{0}', space=vmem, size = 0x1000, scoped, tag = 'input window, operand 12']
    #allocation17 [shape = 'u8[2097152]{0}', space=vmem, size = 0x200000, scoped, tag = 'input window, operand 13']
    #allocation18 [shape = 's32[2]{0}', space=sflag, size = 0x8, scoped, tag = 'scoped memory for conv_ar_forward.1']
    #allocation19 [shape = 'u8[8192]{0}', space=vmem, size = 0x2000, scoped, tag = 'input window, operand 14']
    #allocation20 [shape = 'u8[4096]{0}', space=vmem, size = 0x1000, scoped, tag = 'input window, operand 16']
    #allocation21 [shape = 's32[2]{0}', space=sflag, size = 0x8, scoped, tag = 'scoped memory for conv_ar_forward.1']
    #allocation22 [shape = 'u8[131072]{0}', space=vmem, size = 0x20000, scoped, tag = 'input window, operand 17']
    #allocation23 [shape = 'u8[2048]{0}', space=vmem, size = 0x800, scoped, tag = 'input window, operand 18']
    #allocation24 [shape = 's32[2]{0}', space=sflag, size = 0x8, scoped, tag = 'scoped memory for conv_ar_forward.1']
    #allocation25 [shape = 'u8[1024]{0}', space=vmem, size = 0x400, scoped, tag = 'input window, operand 20']
    %26 = vsyncpa [#allocation4], 0
    %s27 = scalar_lea.sflag [#allocation4], 1
    %28 = vsyncpa %s27, 0
    %29 = vsyncpa [#allocation6], 0
    %s30 = scalar_lea.sflag [#allocation6], 1
    %31 = vsyncpa %s30, 0
    %32 = vsyncpa [#allocation9], 0
    %s33 = scalar_lea.sflag [#allocation9], 1
    %34 = vsyncpa %s33, 0
    %35 = vsyncpa [#allocation12], 0
    %s36 = scalar_lea.sflag [#allocation12], 1
    %37 = vsyncpa %s36, 0
    %38 = vsyncpa [#allocation15], 0
    %s39 = scalar_lea.sflag [#allocation15], 1
    %40 = vsyncpa %s39, 0
    %41 = vsyncpa [#allocation18], 0
    %s42 = scalar_lea.sflag [#allocation18], 1
    %43 = vsyncpa %s42, 0
    %44 = vsyncpa [#allocation21], 0
    %s45 = scalar_lea.sflag [#allocation21], 1
    %46 = vsyncpa %s45, 0
    %47 = vsyncpa [#allocation24], 0
    %s48 = scalar_lea.sflag [#allocation24], 1
    %49 = vsyncpa %s48, 0
    loop: start=0, step=1, limit=4
    $region2: #{conv_ar_forward.1} parent=1 // loop_pre_header
      _
    $region3: #{conv_ar_forward.1} parent=1 // loop_header
      %s51 = sphi 0, %s55
      %p52 = scmp.ge.s32.totalorder %s51, 4
      %s58 = sphi 0, %s70
      %s59 = sphi 0, %s66
      %s60 = sphi 0, %s58
      %s61 = sphi 0, %s59
      %s62 = sphi 0, %s60
      %s63 = sphi 0, %s61
      %s73 = sphi 0, %s75
      %s76 = sphi 0, %s73
      %s77 = sphi 0, %s76
      %s93 = sphi 0, %s77
      %s99 = sphi 0, %s101
      %s102 = sphi 0, %s99
      %s103 = sphi 0, %s102
      %s119 = sphi 0, %s103
      %s125 = sphi 0, %s127
      %s128 = sphi 0, %s125
      %s129 = sphi 0, %s128
      %s145 = sphi 0, %s129
      %s151 = sphi 0, %s153
      %s154 = sphi 0, %s151
      %s155 = sphi 0, %s154
      %s171 = sphi 0, %s155
      %s177 = sphi 0, %s179
      %s180 = sphi 0, %s177
      %s181 = sphi 0, %s180
      %s197 = sphi 0, %s181
      %s203 = sphi 0, %s205
      %s206 = sphi 0, %s203
      %s207 = sphi 0, %s206
      %s223 = sphi 0, %s207
      %s229 = sphi 0, %s231
      %s232 = sphi 0, %s229
      %s233 = sphi 0, %s232
      %s249 = sphi 0, %s233
      %s255 = sphi 0, %s257
      %s258 = sphi 0, %s255
      %s259 = sphi 0, %s258
      %s275 = sphi 0, %s259
      %s281 = sphi 0, %s283
      %s284 = sphi 0, %s281
      %s285 = sphi 0, %s284
      %s301 = sphi 0, %s285
      %s307 = sphi 0, %s309
      %s310 = sphi 0, %s307
      %s311 = sphi 0, %s310
      %s327 = sphi 0, %s311
      %s333 = sphi 0, %s335
      %s336 = sphi 0, %s333
      %s337 = sphi 0, %s336
      %s353 = sphi 0, %s337
      %s359 = sphi 0, %s361
      %s362 = sphi 0, %s359
      %s363 = sphi 0, %s362
      %s379 = sphi 0, %s363
      %s385 = sphi 0, %s387
      %s388 = sphi 0, %s385
      %s389 = sphi 0, %s388
      %s405 = sphi 0, %s389
      %s411 = sphi 0, %s413
      %s414 = sphi 0, %s411
      %s415 = sphi 0, %s414
      %s431 = sphi 0, %s415
      %s437 = sphi 0, %s439
      %s440 = sphi 0, %s437
      %s441 = sphi 0, %s440
      %s457 = sphi 0, %s441
      %s463 = sphi 0, %s465
      %s466 = sphi 0, %s463
      %s467 = sphi 0, %s466
      %s483 = sphi 0, %s467
      %s489 = sphi 0, %s491
      %s492 = sphi 0, %s489
      %s493 = sphi 0, %s492
      %s509 = sphi 0, %s493
      %s515 = sphi 0, %s517
      %s518 = sphi 0, %s515
      %s519 = sphi 0, %s518
      %s535 = sphi 0, %s519
      %s541 = sphi 0, %s543
      %s544 = sphi 0, %s541
      %s545 = sphi 0, %s544
      %s561 = sphi 0, %s545
      %s567 = sphi 0, %s569
      %s570 = sphi 0, %s567
      %s571 = sphi 0, %s570
      %s587 = sphi 0, %s571
      %s593 = sphi 0, %s595
      %s596 = sphi 0, %s593
      %s597 = sphi 0, %s596
      %s613 = sphi 0, %s597
      %s619 = sphi 0, %s621
      %s622 = sphi 0, %s619
      %s623 = sphi 0, %s622
      %s639 = sphi 0, %s623
    $region4: #{conv_ar_forward.1} parent=1 // loop_header_branch
      %54 = sbr.rel (%p52) target = $region8
    $region5: #{conv_ar_forward.1} parent=1 // loop_body
      %s56 = ssub.s32 %s51, 1
      %s57 = ssub.s32 %s51, 2
      %s64 = sadd.s32 1, %s59
      %p65 = scmp.ge.s32.totalorder %s64, 2
      %s66 = scalar_select %p65, 0, %s64
      %s67 = sadd.s32 1, %s58
      %s68 = scalar_select %p65, %s67, %s58
      %p69 = scmp.ge.s32.totalorder %s68, 1
      %s70 = scalar_select %p69, 0, %s68
      %s71 = ssub.s32 %s58, %s70
      %p72 = scmp.eq.s32.totalorder %s71, 0
      %s74 = sadd.s32 %s73, 1
      %s75 = scalar_select %p72, %s73, %s74
      %p78 = pneg %p72
      %p79 = scmp.eq.s32.totalorder %s51, 1
      %p80 = por %p78, %p79
      %p81 = scmp.ne.s32.totalorder %s73, %s76
      %p82 = scmp.eq.s32.totalorder %s51, 0
      %p83 = por %p81, %p82
      %p84 = scmp.ne.s32.totalorder %s73, %s76
      %p85 = scmp.eq.s32.totalorder %s56, 1
      %p86 = por %p84, %p85
      %p87 = scmp.ne.s32.totalorder %s76, %s77
      %p88 = scmp.eq.s32.totalorder %s56, 0
      %p89 = por %p87, %p88
      %p90 = scmp.ne.s32.totalorder %s76, %s77
      %p91 = scmp.eq.s32.totalorder %s57, 1
      %p92 = por %p90, %p91
      %p94 = scmp.ne.s32.totalorder %s77, %s93
      %p95 = scmp.eq.s32.totalorder %s57, 0
      %p96 = por %p94, %p95
      %s97 = ssub.s32 %s59, %s66
      %p98 = scmp.eq.s32.totalorder %s97, 0
      %s100 = sadd.s32 %s99, 1
      %s101 = scalar_select %p98, %s99, %s100
      %p104 = pneg %p98
      %p105 = scmp.eq.s32.totalorder %s51, 1
      %p106 = por %p104, %p105
      %p107 = scmp.ne.s32.totalorder %s99, %s102
      %p108 = scmp.eq.s32.totalorder %s51, 0
      %p109 = por %p107, %p108
      %p110 = scmp.ne.s32.totalorder %s99, %s102
      %p111 = scmp.eq.s32.totalorder %s56, 1
      %p112 = por %p110, %p111
      %p113 = scmp.ne.s32.totalorder %s102, %s103
      %p114 = scmp.eq.s32.totalorder %s56, 0
      %p115 = por %p113, %p114
      %p116 = scmp.ne.s32.totalorder %s102, %s103
      %p117 = scmp.eq.s32.totalorder %s57, 1
      %p118 = por %p116, %p117
      %p120 = scmp.ne.s32.totalorder %s103, %s119
      %p121 = scmp.eq.s32.totalorder %s57, 0
      %p122 = por %p120, %p121
      %s123 = ssub.s32 %s59, %s66
      %p124 = scmp.eq.s32.totalorder %s123, 0
      %s126 = sadd.s32 %s125, 1
      %s127 = scalar_select %p124, %s125, %s126
      %p130 = pneg %p124
      %p131 = scmp.eq.s32.totalorder %s51, 1
      %p132 = por %p130, %p131
      %p133 = scmp.ne.s32.totalorder %s125, %s128
      %p134 = scmp.eq.s32.totalorder %s51, 0
      %p135 = por %p133, %p134
      %p136 = scmp.ne.s32.totalorder %s125, %s128
      %p137 = scmp.eq.s32.totalorder %s56, 1
      %p138 = por %p136, %p137
      %p139 = scmp.ne.s32.totalorder %s128, %s129
      %p140 = scmp.eq.s32.totalorder %s56, 0
      %p141 = por %p139, %p140
      %p142 = scmp.ne.s32.totalorder %s128, %s129
      %p143 = scmp.eq.s32.totalorder %s57, 1
      %p144 = por %p142, %p143
      %p146 = scmp.ne.s32.totalorder %s129, %s145
      %p147 = scmp.eq.s32.totalorder %s57, 0
      %p148 = por %p146, %p147
      %s149 = ssub.s32 %s59, %s66
      %p150 = scmp.eq.s32.totalorder %s149, 0
      %s152 = sadd.s32 %s151, 1
      %s153 = scalar_select %p150, %s151, %s152
      %p156 = pneg %p150
      %p157 = scmp.eq.s32.totalorder %s51, 1
      %p158 = por %p156, %p157
      %p159 = scmp.ne.s32.totalorder %s151, %s154
      %p160 = scmp.eq.s32.totalorder %s51, 0
      %p161 = por %p159, %p160
      %p162 = scmp.ne.s32.totalorder %s151, %s154
      %p163 = scmp.eq.s32.totalorder %s56, 1
      %p164 = por %p162, %p163
      %p165 = scmp.ne.s32.totalorder %s154, %s155
      %p166 = scmp.eq.s32.totalorder %s56, 0
      %p167 = por %p165, %p166
      %p168 = scmp.ne.s32.totalorder %s154, %s155
      %p169 = scmp.eq.s32.totalorder %s57, 1
      %p170 = por %p168, %p169
      %p172 = scmp.ne.s32.totalorder %s155, %s171
      %p173 = scmp.eq.s32.totalorder %s57, 0
      %p174 = por %p172, %p173
      %s175 = ssub.s32 %s59, %s66
      %p176 = scmp.eq.s32.totalorder %s175, 0
      %s178 = sadd.s32 %s177, 1
      %s179 = scalar_select %p176, %s177, %s178
      %p182 = pneg %p176
      %p183 = scmp.eq.s32.totalorder %s51, 1
      %p184 = por %p182, %p183
      %p185 = scmp.ne.s32.totalorder %s177, %s180
      %p186 = scmp.eq.s32.totalorder %s51, 0
      %p187 = por %p185, %p186
      %p188 = scmp.ne.s32.totalorder %s177, %s180
      %p189 = scmp.eq.s32.totalorder %s56, 1
      %p190 = por %p188, %p189
      %p191 = scmp.ne.s32.totalorder %s180, %s181
      %p192 = scmp.eq.s32.totalorder %s56, 0
      %p193 = por %p191, %p192
      %p194 = scmp.ne.s32.totalorder %s180, %s181
      %p195 = scmp.eq.s32.totalorder %s57, 1
      %p196 = por %p194, %p195
      %p198 = scmp.ne.s32.totalorder %s181, %s197
      %p199 = scmp.eq.s32.totalorder %s57, 0
      %p200 = por %p198, %p199
      %s201 = ssub.s32 %s59, %s66
      %p202 = scmp.eq.s32.totalorder %s201, 0
      %s204 = sadd.s32 %s203, 1
      %s205 = scalar_select %p202, %s203, %s204
      %p208 = pneg %p202
      %p209 = scmp.eq.s32.totalorder %s51, 1
      %p210 = por %p208, %p209
      %p211 = scmp.ne.s32.totalorder %s203, %s206
      %p212 = scmp.eq.s32.totalorder %s51, 0
      %p213 = por %p211, %p212
      %p214 = scmp.ne.s32.totalorder %s203, %s206
      %p215 = scmp.eq.s32.totalorder %s56, 1
      %p216 = por %p214, %p215
      %p217 = scmp.ne.s32.totalorder %s206, %s207
      %p218 = scmp.eq.s32.totalorder %s56, 0
      %p219 = por %p217, %p218
      %p220 = scmp.ne.s32.totalorder %s206, %s207
      %p221 = scmp.eq.s32.totalorder %s57, 1
      %p222 = por %p220, %p221
      %p224 = scmp.ne.s32.totalorder %s207, %s223
      %p225 = scmp.eq.s32.totalorder %s57, 0
      %p226 = por %p224, %p225
      %s227 = ssub.s32 %s59, %s66
      %p228 = scmp.eq.s32.totalorder %s227, 0
      %s230 = sadd.s32 %s229, 1
      %s231 = scalar_select %p228, %s229, %s230
      %p234 = pneg %p228
      %p235 = scmp.eq.s32.totalorder %s51, 1
      %p236 = por %p234, %p235
      %p237 = scmp.ne.s32.totalorder %s229, %s232
      %p238 = scmp.eq.s32.totalorder %s51, 0
      %p239 = por %p237, %p238
      %p240 = scmp.ne.s32.totalorder %s229, %s232
      %p241 = scmp.eq.s32.totalorder %s56, 1
      %p242 = por %p240, %p241
      %p243 = scmp.ne.s32.totalorder %s232, %s233
      %p244 = scmp.eq.s32.totalorder %s56, 0
      %p245 = por %p243, %p244
      %p246 = scmp.ne.s32.totalorder %s232, %s233
      %p247 = scmp.eq.s32.totalorder %s57, 1
      %p248 = por %p246, %p247
      %p250 = scmp.ne.s32.totalorder %s233, %s249
      %p251 = scmp.eq.s32.totalorder %s57, 0
      %p252 = por %p250, %p251
      %s253 = ssub.s32 %s59, %s66
      %p254 = scmp.eq.s32.totalorder %s253, 0
      %s256 = sadd.s32 %s255, 1
      %s257 = scalar_select %p254, %s255, %s256
      %p260 = pneg %p254
      %p261 = scmp.eq.s32.totalorder %s51, 1
      %p262 = por %p260, %p261
      %p263 = scmp.ne.s32.totalorder %s255, %s258
      %p264 = scmp.eq.s32.totalorder %s51, 0
      %p265 = por %p263, %p264
      %p266 = scmp.ne.s32.totalorder %s255, %s258
      %p267 = scmp.eq.s32.totalorder %s56, 1
      %p268 = por %p266, %p267
      %p269 = scmp.ne.s32.totalorder %s258, %s259
      %p270 = scmp.eq.s32.totalorder %s56, 0
      %p271 = por %p269, %p270
      %p272 = scmp.ne.s32.totalorder %s258, %s259
      %p273 = scmp.eq.s32.totalorder %s57, 1
      %p274 = por %p272, %p273
      %p276 = scmp.ne.s32.totalorder %s259, %s275
      %p277 = scmp.eq.s32.totalorder %s57, 0
      %p278 = por %p276, %p277
      %s279 = ssub.s32 %s59, %s66
      %p280 = scmp.eq.s32.totalorder %s279, 0
      %s282 = sadd.s32 %s281, 1
      %s283 = scalar_select %p280, %s281, %s282
      %p286 = pneg %p280
      %p287 = scmp.eq.s32.totalorder %s51, 1
      %p288 = por %p286, %p287
      %p289 = scmp.ne.s32.totalorder %s281, %s284
      %p290 = scmp.eq.s32.totalorder %s51, 0
      %p291 = por %p289, %p290
      %p292 = scmp.ne.s32.totalorder %s281, %s284
      %p293 = scmp.eq.s32.totalorder %s56, 1
      %p294 = por %p292, %p293
      %p295 = scmp.ne.s32.totalorder %s284, %s285
      %p296 = scmp.eq.s32.totalorder %s56, 0
      %p297 = por %p295, %p296
      %p298 = scmp.ne.s32.totalorder %s284, %s285
      %p299 = scmp.eq.s32.totalorder %s57, 1
      %p300 = por %p298, %p299
      %p302 = scmp.ne.s32.totalorder %s285, %s301
      %p303 = scmp.eq.s32.totalorder %s57, 0
      %p304 = por %p302, %p303
      %s305 = ssub.s32 %s59, %s66
      %p306 = scmp.eq.s32.totalorder %s305, 0
      %s308 = sadd.s32 %s307, 1
      %s309 = scalar_select %p306, %s307, %s308
      %p312 = pneg %p306
      %p313 = scmp.eq.s32.totalorder %s51, 1
      %p314 = por %p312, %p313
      %p315 = scmp.ne.s32.totalorder %s307, %s310
      %p316 = scmp.eq.s32.totalorder %s51, 0
      %p317 = por %p315, %p316
      %p318 = scmp.ne.s32.totalorder %s307, %s310
      %p319 = scmp.eq.s32.totalorder %s56, 1
      %p320 = por %p318, %p319
      %p321 = scmp.ne.s32.totalorder %s310, %s311
      %p322 = scmp.eq.s32.totalorder %s56, 0
      %p323 = por %p321, %p322
      %p324 = scmp.ne.s32.totalorder %s310, %s311
      %p325 = scmp.eq.s32.totalorder %s57, 1
      %p326 = por %p324, %p325
      %p328 = scmp.ne.s32.totalorder %s311, %s327
      %p329 = scmp.eq.s32.totalorder %s57, 0
      %p330 = por %p328, %p329
      %s331 = ssub.s32 %s59, %s66
      %p332 = scmp.eq.s32.totalorder %s331, 0
      %s334 = sadd.s32 %s333, 1
      %s335 = scalar_select %p332, %s333, %s334
      %p338 = pneg %p332
      %p339 = scmp.eq.s32.totalorder %s51, 1
      %p340 = por %p338, %p339
      %p341 = scmp.ne.s32.totalorder %s333, %s336
      %p342 = scmp.eq.s32.totalorder %s51, 0
      %p343 = por %p341, %p342
      %p344 = scmp.ne.s32.totalorder %s333, %s336
      %p345 = scmp.eq.s32.totalorder %s56, 1
      %p346 = por %p344, %p345
      %p347 = scmp.ne.s32.totalorder %s336, %s337
      %p348 = scmp.eq.s32.totalorder %s56, 0
      %p349 = por %p347, %p348
      %p350 = scmp.ne.s32.totalorder %s336, %s337
      %p351 = scmp.eq.s32.totalorder %s57, 1
      %p352 = por %p350, %p351
      %p354 = scmp.ne.s32.totalorder %s337, %s353
      %p355 = scmp.eq.s32.totalorder %s57, 0
      %p356 = por %p354, %p355
      %s357 = ssub.s32 %s59, %s66
      %p358 = scmp.eq.s32.totalorder %s357, 0
      %s360 = sadd.s32 %s359, 1
      %s361 = scalar_select %p358, %s359, %s360
      %p364 = pneg %p358
      %p365 = scmp.eq.s32.totalorder %s51, 1
      %p366 = por %p364, %p365
      %p367 = scmp.ne.s32.totalorder %s359, %s362
      %p368 = scmp.eq.s32.totalorder %s51, 0
      %p369 = por %p367, %p368
      %p370 = scmp.ne.s32.totalorder %s359, %s362
      %p371 = scmp.eq.s32.totalorder %s56, 1
      %p372 = por %p370, %p371
      %p373 = scmp.ne.s32.totalorder %s362, %s363
      %p374 = scmp.eq.s32.totalorder %s56, 0
      %p375 = por %p373, %p374
      %p376 = scmp.ne.s32.totalorder %s362, %s363
      %p377 = scmp.eq.s32.totalorder %s57, 1
      %p378 = por %p376, %p377
      %p380 = scmp.ne.s32.totalorder %s363, %s379
      %p381 = scmp.eq.s32.totalorder %s57, 0
      %p382 = por %p380, %p381
      %s383 = ssub.s32 %s59, %s66
      %p384 = scmp.eq.s32.totalorder %s383, 0
      %s386 = sadd.s32 %s385, 1
      %s387 = scalar_select %p384, %s385, %s386
      %p390 = pneg %p384
      %p391 = scmp.eq.s32.totalorder %s51, 1
      %p392 = por %p390, %p391
      %p393 = scmp.ne.s32.totalorder %s385, %s388
      %p394 = scmp.eq.s32.totalorder %s51, 0
      %p395 = por %p393, %p394
      %p396 = scmp.ne.s32.totalorder %s385, %s388
      %p397 = scmp.eq.s32.totalorder %s56, 1
      %p398 = por %p396, %p397
      %p399 = scmp.ne.s32.totalorder %s388, %s389
      %p400 = scmp.eq.s32.totalorder %s56, 0
      %p401 = por %p399, %p400
      %p402 = scmp.ne.s32.totalorder %s388, %s389
      %p403 = scmp.eq.s32.totalorder %s57, 1
      %p404 = por %p402, %p403
      %p406 = scmp.ne.s32.totalorder %s389, %s405
      %p407 = scmp.eq.s32.totalorder %s57, 0
      %p408 = por %p406, %p407
      %s409 = ssub.s32 %s59, %s66
      %p410 = scmp.eq.s32.totalorder %s409, 0
      %s412 = sadd.s32 %s411, 1
      %s413 = scalar_select %p410, %s411, %s412
      %p416 = pneg %p410
      %p417 = scmp.eq.s32.totalorder %s51, 1
      %p418 = por %p416, %p417
      %p419 = scmp.ne.s32.totalorder %s411, %s414
      %p420 = scmp.eq.s32.totalorder %s51, 0
      %p421 = por %p419, %p420
      %p422 = scmp.ne.s32.totalorder %s411, %s414
      %p423 = scmp.eq.s32.totalorder %s56, 1
      %p424 = por %p422, %p423
      %p425 = scmp.ne.s32.totalorder %s414, %s415
      %p426 = scmp.eq.s32.totalorder %s56, 0
      %p427 = por %p425, %p426
      %p428 = scmp.ne.s32.totalorder %s414, %s415
      %p429 = scmp.eq.s32.totalorder %s57, 1
      %p430 = por %p428, %p429
      %p432 = scmp.ne.s32.totalorder %s415, %s431
      %p433 = scmp.eq.s32.totalorder %s57, 0
      %p434 = por %p432, %p433
      %s435 = ssub.s32 %s59, %s66
      %p436 = scmp.eq.s32.totalorder %s435, 0
      %s438 = sadd.s32 %s437, 1
      %s439 = scalar_select %p436, %s437, %s438
      %p442 = pneg %p436
      %p443 = scmp.eq.s32.totalorder %s51, 1
      %p444 = por %p442, %p443
      %p445 = scmp.ne.s32.totalorder %s437, %s440
      %p446 = scmp.eq.s32.totalorder %s51, 0
      %p447 = por %p445, %p446
      %p448 = scmp.ne.s32.totalorder %s437, %s440
      %p449 = scmp.eq.s32.totalorder %s56, 1
      %p450 = por %p448, %p449
      %p451 = scmp.ne.s32.totalorder %s440, %s441
      %p452 = scmp.eq.s32.totalorder %s56, 0
      %p453 = por %p451, %p452
      %p454 = scmp.ne.s32.totalorder %s440, %s441
      %p455 = scmp.eq.s32.totalorder %s57, 1
      %p456 = por %p454, %p455
      %p458 = scmp.ne.s32.totalorder %s441, %s457
      %p459 = scmp.eq.s32.totalorder %s57, 0
      %p460 = por %p458, %p459
      %s461 = ssub.s32 %s59, %s66
      %p462 = scmp.eq.s32.totalorder %s461, 0
      %s464 = sadd.s32 %s463, 1
      %s465 = scalar_select %p462, %s463, %s464
      %p468 = pneg %p462
      %p469 = scmp.eq.s32.totalorder %s51, 1
      %p470 = por %p468, %p469
      %p471 = scmp.ne.s32.totalorder %s463, %s466
      %p472 = scmp.eq.s32.totalorder %s51, 0
      %p473 = por %p471, %p472
      %p474 = scmp.ne.s32.totalorder %s463, %s466
      %p475 = scmp.eq.s32.totalorder %s56, 1
      %p476 = por %p474, %p475
      %p477 = scmp.ne.s32.totalorder %s466, %s467
      %p478 = scmp.eq.s32.totalorder %s56, 0
      %p479 = por %p477, %p478
      %p480 = scmp.ne.s32.totalorder %s466, %s467
      %p481 = scmp.eq.s32.totalorder %s57, 1
      %p482 = por %p480, %p481
      %p484 = scmp.ne.s32.totalorder %s467, %s483
      %p485 = scmp.eq.s32.totalorder %s57, 0
      %p486 = por %p484, %p485
      %s487 = ssub.s32 %s59, %s66
      %p488 = scmp.eq.s32.totalorder %s487, 0
      %s490 = sadd.s32 %s489, 1
      %s491 = scalar_select %p488, %s489, %s490
      %p494 = pneg %p488
      %p495 = scmp.eq.s32.totalorder %s51, 1
      %p496 = por %p494, %p495
      %p497 = scmp.ne.s32.totalorder %s489, %s492
      %p498 = scmp.eq.s32.totalorder %s51, 0
      %p499 = por %p497, %p498
      %p500 = scmp.ne.s32.totalorder %s489, %s492
      %p501 = scmp.eq.s32.totalorder %s56, 1
      %p502 = por %p500, %p501
      %p503 = scmp.ne.s32.totalorder %s492, %s493
      %p504 = scmp.eq.s32.totalorder %s56, 0
      %p505 = por %p503, %p504
      %p506 = scmp.ne.s32.totalorder %s492, %s493
      %p507 = scmp.eq.s32.totalorder %s57, 1
      %p508 = por %p506, %p507
      %p510 = scmp.ne.s32.totalorder %s493, %s509
      %p511 = scmp.eq.s32.totalorder %s57, 0
      %p512 = por %p510, %p511
      %s513 = ssub.s32 %s59, %s66
      %p514 = scmp.eq.s32.totalorder %s513, 0
      %s516 = sadd.s32 %s515, 1
      %s517 = scalar_select %p514, %s515, %s516
      %p520 = pneg %p514
      %p521 = scmp.eq.s32.totalorder %s51, 1
      %p522 = por %p520, %p521
      %p523 = scmp.ne.s32.totalorder %s515, %s518
      %p524 = scmp.eq.s32.totalorder %s51, 0
      %p525 = por %p523, %p524
      %p526 = scmp.ne.s32.totalorder %s515, %s518
      %p527 = scmp.eq.s32.totalorder %s56, 1
      %p528 = por %p526, %p527
      %p529 = scmp.ne.s32.totalorder %s518, %s519
      %p530 = scmp.eq.s32.totalorder %s56, 0
      %p531 = por %p529, %p530
      %p532 = scmp.ne.s32.totalorder %s518, %s519
      %p533 = scmp.eq.s32.totalorder %s57, 1
      %p534 = por %p532, %p533
      %p536 = scmp.ne.s32.totalorder %s519, %s535
      %p537 = scmp.eq.s32.totalorder %s57, 0
      %p538 = por %p536, %p537
      %s539 = ssub.s32 %s59, %s66
      %p540 = scmp.eq.s32.totalorder %s539, 0
      %s542 = sadd.s32 %s541, 1
      %s543 = scalar_select %p540, %s541, %s542
      %p546 = pneg %p540
      %p547 = scmp.eq.s32.totalorder %s51, 1
      %p548 = por %p546, %p547
      %p549 = scmp.ne.s32.totalorder %s541, %s544
      %p550 = scmp.eq.s32.totalorder %s51, 0
      %p551 = por %p549, %p550
      %p552 = scmp.ne.s32.totalorder %s541, %s544
      %p553 = scmp.eq.s32.totalorder %s56, 1
      %p554 = por %p552, %p553
      %p555 = scmp.ne.s32.totalorder %s544, %s545
      %p556 = scmp.eq.s32.totalorder %s56, 0
      %p557 = por %p555, %p556
      %p558 = scmp.ne.s32.totalorder %s544, %s545
      %p559 = scmp.eq.s32.totalorder %s57, 1
      %p560 = por %p558, %p559
      %p562 = scmp.ne.s32.totalorder %s545, %s561
      %p563 = scmp.eq.s32.totalorder %s57, 0
      %p564 = por %p562, %p563
      %s565 = ssub.s32 %s59, %s66
      %p566 = scmp.eq.s32.totalorder %s565, 0
      %s568 = sadd.s32 %s567, 1
      %s569 = scalar_select %p566, %s567, %s568
      %p572 = pneg %p566
      %p573 = scmp.eq.s32.totalorder %s51, 1
      %p574 = por %p572, %p573
      %p575 = scmp.ne.s32.totalorder %s567, %s570
      %p576 = scmp.eq.s32.totalorder %s51, 0
      %p577 = por %p575, %p576
      %p578 = scmp.ne.s32.totalorder %s567, %s570
      %p579 = scmp.eq.s32.totalorder %s56, 1
      %p580 = por %p578, %p579
      %p581 = scmp.ne.s32.totalorder %s570, %s571
      %p582 = scmp.eq.s32.totalorder %s56, 0
      %p583 = por %p581, %p582
      %p584 = scmp.ne.s32.totalorder %s570, %s571
      %p585 = scmp.eq.s32.totalorder %s57, 1
      %p586 = por %p584, %p585
      %p588 = scmp.ne.s32.totalorder %s571, %s587
      %p589 = scmp.eq.s32.totalorder %s57, 0
      %p590 = por %p588, %p589
      %s591 = ssub.s32 %s59, %s66
      %p592 = scmp.eq.s32.totalorder %s591, 0
      %s594 = sadd.s32 %s593, 1
      %s595 = scalar_select %p592, %s593, %s594
      %p598 = pneg %p592
      %p599 = scmp.eq.s32.totalorder %s51, 1
      %p600 = por %p598, %p599
      %p601 = scmp.ne.s32.totalorder %s593, %s596
      %p602 = scmp.eq.s32.totalorder %s51, 0
      %p603 = por %p601, %p602
      %p604 = scmp.ne.s32.totalorder %s593, %s596
      %p605 = scmp.eq.s32.totalorder %s56, 1
      %p606 = por %p604, %p605
      %p607 = scmp.ne.s32.totalorder %s596, %s597
      %p608 = scmp.eq.s32.totalorder %s56, 0
      %p609 = por %p607, %p608
      %p610 = scmp.ne.s32.totalorder %s596, %s597
      %p611 = scmp.eq.s32.totalorder %s57, 1
      %p612 = por %p610, %p611
      %p614 = scmp.ne.s32.totalorder %s597, %s613
      %p615 = scmp.eq.s32.totalorder %s57, 0
      %p616 = por %p614, %p615
      %s617 = ssub.s32 %s58, %s70
      %p618 = scmp.eq.s32.totalorder %s617, 0
      %s620 = sadd.s32 %s619, 1
      %s621 = scalar_select %p618, %s619, %s620
      %p624 = pneg %p618
      %p625 = scmp.eq.s32.totalorder %s51, 1
      %p626 = por %p624, %p625
      %p627 = scmp.ne.s32.totalorder %s619, %s622
      %p628 = scmp.eq.s32.totalorder %s51, 0
      %p629 = por %p627, %p628
      %p630 = scmp.ne.s32.totalorder %s619, %s622
      %p631 = scmp.eq.s32.totalorder %s56, 1
      %p632 = por %p630, %p631
      %p633 = scmp.ne.s32.totalorder %s622, %s623
      %p634 = scmp.eq.s32.totalorder %s56, 0
      %p635 = por %p633, %p634
      %p636 = scmp.ne.s32.totalorder %s622, %s623
      %p637 = scmp.eq.s32.totalorder %s57, 1
      %p638 = por %p636, %p637
      %p640 = scmp.ne.s32.totalorder %s623, %s639
      %p641 = scmp.eq.s32.totalorder %s57, 0
      %p642 = por %p640, %p641
      %p643 = scmp.le.s32.totalorder 1, %s51
      %p644 = scmp.lt.s32.totalorder %s51, 3
      %p645 = pnand %p643, %p644
      %p646 = pneg %p645
      // Predicated region
      $region9: #{conv_ar_forward.1} parent=5 // pred_check
        _
      $region10: #{conv_ar_forward.1} parent=5 // pred_check_branch
        %648 = sbr.rel (%p645) target = $region12
      $region11: #{conv_ar_forward.1} parent=5 // pred_region
        %s649 = ssub.s32 %s51, 1
        // Predicated region
        $region13: #{conv_ar_forward.1} parent=11 // pred_check
          %p650 = pneg %p89
        $region14: #{conv_ar_forward.1} parent=11 // pred_check_branch
          %652 = sbr.rel (%p650) target = $region16
        $region15: #{conv_ar_forward.1} parent=11 // pred_region
          %s653 = smul.u32 16, %s60
          %p654 = scmp.lt.s32.totalorder %s653, 15
          %s655 = scalar_select %p654, %s653, 15
          %s656 = smul.addr %s655, 8
          %s657 = scalar_lea.vmem %s0, %s656
          %s658 = smul.u32 16, %s60
        $region16: #{conv_ar_forward.1} parent=11 // pred_fallthru
          _
      $region12: #{conv_ar_forward.1} parent=5 // pred_fallthru
        _
      %p659 = scmp.lt.s32.totalorder %s51, 2
      // Predicated region
      $region17: #{conv_ar_forward.1} parent=5 // pred_check
        %p660 = pneg %p659
      $region18: #{conv_ar_forward.1} parent=5 // pred_check_branch
        %662 = sbr.rel (%p660) target = $region20
      $region19: #{conv_ar_forward.1} parent=5 // pred_region
        // Predicated region
        $region21: #{conv_ar_forward.1} parent=19 // pred_check
          %p663 = pneg %p109
        $region22: #{conv_ar_forward.1} parent=19 // pred_check_branch
          %665 = sbr.rel (%p663) target = $region24
        $region23: #{conv_ar_forward.1} parent=19 // pred_region
          %p666 = scmp.lt.s32.totalorder %s59, 1
          %s667 = scalar_select %p666, %s59, 1
          %s668 = smul.addr %s667, 2
          %s669 = smul.addr %s668, 4
          %s670 = scalar_lea.vmem %s1, %s669
        $region24: #{conv_ar_forward.1} parent=19 // pred_fallthru
          _
        // Predicated region
        $region25: #{conv_ar_forward.1} parent=19 // pred_check
          %p671 = pneg %p135
        $region26: #{conv_ar_forward.1} parent=19 // pred_check_branch
          %673 = sbr.rel (%p671) target = $region28
        $region27: #{conv_ar_forward.1} parent=19 // pred_region
          %s674 = sand.u32 %s125, 1
          %s675 = scalar_lea.sflag [#allocation4], %s674
          %s676 = sand.u32 %s125, 1
          %s677 = scalar_lea.vmem [#allocation3], %s676
          %s679 = ssub.s32 16, 16
          %680 = vsyncadd %s675, %s679
          %s681 = smul.addr %s59, 16
          %s682 = scalar_lea.hbm %s2, %s681
          %s684 = sshll.u32 %s677, 4
          %s685 = int_to_ptr.vmem [resolvable:$true] %s684
          %687 = dma.hbm_to_vmem [thread:$0]  %s682, 16, %s685, %s675
        $region28: #{conv_ar_forward.1} parent=19 // pred_fallthru
          _
        // Predicated region
        $region29: #{conv_ar_forward.1} parent=19 // pred_check
          %p688 = pneg %p161
        $region30: #{conv_ar_forward.1} parent=19 // pred_check_branch
          %690 = sbr.rel (%p688) target = $region32
        $region31: #{conv_ar_forward.1} parent=19 // pred_region
          %s691 = sand.u32 %s51, 1
          %s692 = scalar_lea.sflag [#allocation6], %s691
          %s693 = sand.u32 %s151, 1
          %s694 = smul.addr %s693, 128
          %s695 = scalar_lea.vmem [#allocation5], %s694
          %s697 = ssub.s32 2048, 2048
          %698 = vsyncadd %s692, %s697
          %s699 = smul.addr %s59, 32
          %s700 = smul.addr %s699, 64
          %s701 = scalar_lea.hbm %s3, %s700
          %s702 = sshll.u32 %s695, 4
          %s703 = int_to_ptr.vmem [resolvable:$true] %s702
          %708 = dma.hbm_to_vmem [thread:$0]  %s701, 2048, %s703, %s692, 64, 64, 4
        $region32: #{conv_ar_forward.1} parent=19 // pred_fallthru
          _
        // Predicated region
        $region33: #{conv_ar_forward.1} parent=19 // pred_check
          %p709 = pneg %p187
        $region34: #{conv_ar_forward.1} parent=19 // pred_check_branch
          %711 = sbr.rel (%p709) target = $region36
        $region35: #{conv_ar_forward.1} parent=19 // pred_region
          %s712 = sand.u32 %s51, 1
          %s713 = scalar_lea.sflag [#allocation6], %s712
          %s714 = sand.u32 %s177, 1
          %s715 = scalar_lea.vmem [#allocation7], %s714
          %s717 = ssub.s32 16, 16
          %718 = vsyncadd %s713, %s717
          %s719 = smul.addr %s59, 16
          %s720 = scalar_lea.hbm %s4, %s719
          %s722 = sshll.u32 %s715, 4
          %s723 = int_to_ptr.vmem [resolvable:$true] %s722
          %725 = dma.hbm_to_vmem [thread:$0]  %s720, 16, %s723, %s713
        $region36: #{conv_ar_forward.1} parent=19 // pred_fallthru
          _
        // Predicated region
        $region37: #{conv_ar_forward.1} parent=19 // pred_check
          %p726 = pneg %p213
        $region38: #{conv_ar_forward.1} parent=19 // pred_check_branch
          %728 = sbr.rel (%p726) target = $region40
        $region39: #{conv_ar_forward.1} parent=19 // pred_region
          %p729 = scmp.lt.s32.totalorder %s59, 1
          %s730 = scalar_select %p729, %s59, 1
          %s731 = smul.addr %s730, 128
          %s732 = smul.addr %s731, 4
          %s733 = scalar_lea.vmem %s5, %s732
        $region40: #{conv_ar_forward.1} parent=19 // pred_fallthru
          _
        // Predicated region
        $region41: #{conv_ar_forward.1} parent=19 // pred_check
          %p734 = pneg %p239
        $region42: #{conv_ar_forward.1} parent=19 // pred_check_branch
          %736 = sbr.rel (%p734) target = $region44
        $region43: #{conv_ar_forward.1} parent=19 // pred_region
          %s737 = sand.u32 %s51, 1
          %s738 = scalar_lea.sflag [#allocation9], %s737
          %s739 = sand.u32 %s229, 1
          %s740 = smul.addr %s739, 2
          %s741 = scalar_lea.vmem [#allocation8], %s740
          %s743 = ssub.s32 32, 32
          %744 = vsyncadd %s738, %s743
          %s745 = smul.addr %s59, 2
          %s746 = smul.addr %s745, 16
          %s747 = scalar_lea.hbm %s6, %s746
          %s749 = sshll.u32 %s741, 4
          %s750 = int_to_ptr.vmem [resolvable:$true] %s749
          %752 = dma.hbm_to_vmem [thread:$0]  %s747, 32, %s750, %s738
        $region44: #{conv_ar_forward.1} parent=19 // pred_fallthru
          _
        // Predicated region
        $region45: #{conv_ar_forward.1} parent=19 // pred_check
          %p753 = pneg %p265
        $region46: #{conv_ar_forward.1} parent=19 // pred_check_branch
          %755 = sbr.rel (%p753) target = $region48
        $region47: #{conv_ar_forward.1} parent=19 // pred_region
          %s756 = sand.u32 %s51, 1
          %s757 = scalar_lea.sflag [#allocation9], %s756
          %s758 = sand.u32 %s255, 1
          %s759 = smul.addr %s758, 2048
          %s760 = scalar_lea.vmem [#allocation10], %s759
          %s762 = ssub.s32 32768, 32768
          %763 = vsyncadd %s757, %s762
          %s764 = smul.addr %s59, 512
          %s765 = smul.addr %s764, 64
          %s766 = scalar_lea.hbm %s7, %s765
          %s767 = sshll.u32 %s760, 4
          %s768 = int_to_ptr.vmem [resolvable:$true] %s767
          %773 = dma.hbm_to_vmem [thread:$0]  %s766, 32768, %s768, %s757, 256, 256, 16
        $region48: #{conv_ar_forward.1} parent=19 // pred_fallthru
          _
        // Predicated region
        $region49: #{conv_ar_forward.1} parent=19 // pred_check
          %p774 = pneg %p291
        $region50: #{conv_ar_forward.1} parent=19 // pred_check_branch
          %776 = sbr.rel (%p774) target = $region52
        $region51: #{conv_ar_forward.1} parent=19 // pred_region
          %s777 = sand.u32 %s51, 1
          %s778 = scalar_lea.sflag [#allocation12], %s777
          %s779 = sand.u32 %s281, 1
          %s780 = smul.addr %s779, 4
          %s781 = scalar_lea.vmem [#allocation11], %s780
          %s783 = ssub.s32 64, 64
          %784 = vsyncadd %s778, %s783
          %s785 = smul.addr %s59, 4
          %s786 = smul.addr %s785, 16
          %s787 = scalar_lea.hbm %s8, %s786
          %s789 = sshll.u32 %s781, 4
          %s790 = int_to_ptr.vmem [resolvable:$true] %s789
          %792 = dma.hbm_to_vmem [thread:$0]  %s787, 64, %s790, %s778
        $region52: #{conv_ar_forward.1} parent=19 // pred_fallthru
          _
        // Predicated region
        $region53: #{conv_ar_forward.1} parent=19 // pred_check
          %p793 = pneg %p317
        $region54: #{conv_ar_forward.1} parent=19 // pred_check_branch
          %795 = sbr.rel (%p793) target = $region56
        $region55: #{conv_ar_forward.1} parent=19 // pred_region
          %p796 = scmp.lt.s32.totalorder %s59, 1
          %s797 = scalar_select %p796, %s59, 1
          %s798 = smul.addr %s797, 64
          %s799 = smul.addr %s798, 4
          %s800 = scalar_lea.vmem %s9, %s799
        $region56: #{conv_ar_forward.1} parent=19 // pred_fallthru
          _
        // Predicated region
        $region57: #{conv_ar_forward.1} parent=19 // pred_check
          %p801 = pneg %p343
        $region58: #{conv_ar_forward.1} parent=19 // pred_check_branch
          %803 = sbr.rel (%p801) target = $region60
        $region59: #{conv_ar_forward.1} parent=19 // pred_region
          %s804 = sand.u32 %s51, 1
          %s805 = scalar_lea.sflag [#allocation12], %s804
          %s806 = sand.u32 %s333, 1
          %s807 = scalar_lea.vmem [#allocation13], %s806
          %s809 = ssub.s32 16, 16
          %810 = vsyncadd %s805, %s809
          %s811 = smul.addr %s59, 16
          %s812 = scalar_lea.hbm %s10, %s811
          %s814 = sshll.u32 %s807, 4
          %s815 = int_to_ptr.vmem [resolvable:$true] %s814
          %817 = dma.hbm_to_vmem [thread:$0]  %s812, 16, %s815, %s805
        $region60: #{conv_ar_forward.1} parent=19 // pred_fallthru
          _
        // Predicated region
        $region61: #{conv_ar_forward.1} parent=19 // pred_check
          %p818 = pneg %p369
        $region62: #{conv_ar_forward.1} parent=19 // pred_check_branch
          %820 = sbr.rel (%p818) target = $region64
        $region63: #{conv_ar_forward.1} parent=19 // pred_region
          %s821 = sand.u32 %s51, 1
          %s822 = scalar_lea.sflag [#allocation15], %s821
          %s823 = sand.u32 %s359, 1
          %s824 = smul.addr %s823, 64
          %s825 = scalar_lea.vmem [#allocation14], %s824
          %s827 = ssub.s32 1024, 1024
          %828 = vsyncadd %s822, %s827
          %s829 = smul.addr %s59, 16
          %s830 = smul.addr %s829, 64
          %s831 = scalar_lea.hbm %s11, %s830
          %s832 = sshll.u32 %s825, 4
          %s833 = int_to_ptr.vmem [resolvable:$true] %s832
          %838 = dma.hbm_to_vmem [thread:$0]  %s831, 1024, %s833, %s822, 256, 256, 16
        $region64: #{conv_ar_forward.1} parent=19 // pred_fallthru
          _
        // Predicated region
        $region65: #{conv_ar_forward.1} parent=19 // pred_check
          %p839 = pneg %p395
        $region66: #{conv_ar_forward.1} parent=19 // pred_check_branch
          %841 = sbr.rel (%p839) target = $region68
        $region67: #{conv_ar_forward.1} parent=19 // pred_region
          %s842 = sand.u32 %s51, 1
          %s843 = scalar_lea.sflag [#allocation15], %s842
          %s844 = sand.u32 %s385, 1
          %s845 = smul.addr %s844, 4
          %s846 = scalar_lea.vmem [#allocation16], %s845
          %s848 = ssub.s32 64, 64
          %849 = vsyncadd %s843, %s848
          %s850 = smul.addr %s59, 4
          %s851 = smul.addr %s850, 16
          %s852 = scalar_lea.hbm %s12, %s851
          %s854 = sshll.u32 %s846, 4
          %s855 = int_to_ptr.vmem [resolvable:$true] %s854
          %857 = dma.hbm_to_vmem [thread:$0]  %s852, 64, %s855, %s843
        $region68: #{conv_ar_forward.1} parent=19 // pred_fallthru
          _
        // Predicated region
        $region69: #{conv_ar_forward.1} parent=19 // pred_check
          %p858 = pneg %p421
        $region70: #{conv_ar_forward.1} parent=19 // pred_check_branch
          %860 = sbr.rel (%p858) target = $region72
        $region71: #{conv_ar_forward.1} parent=19 // pred_region
          %s861 = sand.u32 %s51, 1
          %s862 = scalar_lea.sflag [#allocation18], %s861
          %s863 = sand.u32 %s411, 1
          %s864 = smul.addr %s863, 2048
          %s865 = scalar_lea.vmem [#allocation17], %s864
          %s867 = ssub.s32 32768, 32768
          %868 = vsyncadd %s862, %s867
          %s869 = smul.addr %s59, 512
          %s870 = smul.addr %s869, 64
          %s871 = scalar_lea.hbm %s13, %s870
          %s872 = sshll.u32 %s865, 4
          %s873 = int_to_ptr.vmem [resolvable:$true] %s872
          %878 = dma.hbm_to_vmem [thread:$0]  %s871, 32768, %s873, %s862, 512, 512, 32
        $region72: #{conv_ar_forward.1} parent=19 // pred_fallthru
          _
        // Predicated region
        $region73: #{conv_ar_forward.1} parent=19 // pred_check
          %p879 = pneg %p447
        $region74: #{conv_ar_forward.1} parent=19 // pred_check_branch
          %881 = sbr.rel (%p879) target = $region76
        $region75: #{conv_ar_forward.1} parent=19 // pred_region
          %s882 = sand.u32 %s51, 1
          %s883 = scalar_lea.sflag [#allocation18], %s882
          %s884 = sand.u32 %s437, 1
          %s885 = smul.addr %s884, 8
          %s886 = scalar_lea.vmem [#allocation19], %s885
          %s888 = ssub.s32 128, 128
          %889 = vsyncadd %s883, %s888
          %s890 = smul.addr %s59, 8
          %s891 = smul.addr %s890, 16
          %s892 = scalar_lea.hbm %s14, %s891
          %s894 = sshll.u32 %s886, 4
          %s895 = int_to_ptr.vmem [resolvable:$true] %s894
          %897 = dma.hbm_to_vmem [thread:$0]  %s892, 128, %s895, %s883
        $region76: #{conv_ar_forward.1} parent=19 // pred_fallthru
          _
        // Predicated region
        $region77: #{conv_ar_forward.1} parent=19 // pred_check
          %p898 = pneg %p473
        $region78: #{conv_ar_forward.1} parent=19 // pred_check_branch
          %900 = sbr.rel (%p898) target = $region80
        $region79: #{conv_ar_forward.1} parent=19 // pred_region
          %p901 = scmp.lt.s32.totalorder %s59, 1
          %s902 = scalar_select %p901, %s59, 1
          %s903 = smul.addr %s902, 128
          %s904 = smul.addr %s903, 4
          %s905 = scalar_lea.vmem %s15, %s904
        $region80: #{conv_ar_forward.1} parent=19 // pred_fallthru
          _
        // Predicated region
        $region81: #{conv_ar_forward.1} parent=19 // pred_check
          %p906 = pneg %p499
        $region82: #{conv_ar_forward.1} parent=19 // pred_check_branch
          %908 = sbr.rel (%p906) target = $region84
        $region83: #{conv_ar_forward.1} parent=19 // pred_region
          %s909 = sand.u32 %s51, 1
          %s910 = scalar_lea.sflag [#allocation21], %s909
          %s911 = sand.u32 %s489, 1
          %s912 = smul.addr %s911, 4
          %s913 = scalar_lea.vmem [#allocation20], %s912
          %s915 = ssub.s32 64, 64
          %916 = vsyncadd %s910, %s915
          %s917 = smul.addr %s59, 4
          %s918 = smul.addr %s917, 16
          %s919 = scalar_lea.hbm %s16, %s918
          %s921 = sshll.u32 %s913, 4
          %s922 = int_to_ptr.vmem [resolvable:$true] %s921
          %924 = dma.hbm_to_vmem [thread:$0]  %s919, 64, %s922, %s910
        $region84: #{conv_ar_forward.1} parent=19 // pred_fallthru
          _
        // Predicated region
        $region85: #{conv_ar_forward.1} parent=19 // pred_check
          %p925 = pneg %p525
        $region86: #{conv_ar_forward.1} parent=19 // pred_check_branch
          %927 = sbr.rel (%p925) target = $region88
        $region87: #{conv_ar_forward.1} parent=19 // pred_region
          %s928 = sand.u32 %s51, 1
          %s929 = scalar_lea.sflag [#allocation21], %s928
          %s930 = sand.u32 %s515, 1
          %s931 = smul.addr %s930, 128
          %s932 = scalar_lea.vmem [#allocation22], %s931
          %s934 = ssub.s32 2048, 2048
          %935 = vsyncadd %s929, %s934
          %s936 = smul.addr %s59, 32
          %s937 = smul.addr %s936, 64
          %s938 = scalar_lea.hbm %s17, %s937
          %s939 = sshll.u32 %s932, 4
          %s940 = int_to_ptr.vmem [resolvable:$true] %s939
          %945 = dma.hbm_to_vmem [thread:$0]  %s938, 2048, %s940, %s929, 128, 128, 8
        $region88: #{conv_ar_forward.1} parent=19 // pred_fallthru
          _
        // Predicated region
        $region89: #{conv_ar_forward.1} parent=19 // pred_check
          %p946 = pneg %p551
        $region90: #{conv_ar_forward.1} parent=19 // pred_check_branch
          %948 = sbr.rel (%p946) target = $region92
        $region91: #{conv_ar_forward.1} parent=19 // pred_region
          %s949 = sand.u32 %s51, 1
          %s950 = scalar_lea.sflag [#allocation24], %s949
          %s951 = sand.u32 %s541, 1
          %s952 = smul.addr %s951, 2
          %s953 = scalar_lea.vmem [#allocation23], %s952
          %s955 = ssub.s32 32, 32
          %956 = vsyncadd %s950, %s955
          %s957 = smul.addr %s59, 2
          %s958 = smul.addr %s957, 16
          %s959 = scalar_lea.hbm %s18, %s958
          %s961 = sshll.u32 %s953, 4
          %s962 = int_to_ptr.vmem [resolvable:$true] %s961
          %964 = dma.hbm_to_vmem [thread:$0]  %s959, 32, %s962, %s950
        $region92: #{conv_ar_forward.1} parent=19 // pred_fallthru
          _
        // Predicated region
        $region93: #{conv_ar_forward.1} parent=19 // pred_check
          %p965 = pneg %p577
        $region94: #{conv_ar_forward.1} parent=19 // pred_check_branch
          %967 = sbr.rel (%p965) target = $region96
        $region95: #{conv_ar_forward.1} parent=19 // pred_region
          %p968 = scmp.lt.s32.totalorder %s59, 1
          %s969 = scalar_select %p968, %s59, 1
          %s970 = smul.addr %s969, 8
          %s971 = smul.addr %s970, 4
          %s972 = scalar_lea.vmem %s19, %s971
        $region96: #{conv_ar_forward.1} parent=19 // pred_fallthru
          _
        // Predicated region
        $region97: #{conv_ar_forward.1} parent=19 // pred_check
          %p973 = pneg %p603
        $region98: #{conv_ar_forward.1} parent=19 // pred_check_branch
          %975 = sbr.rel (%p973) target = $region100
        $region99: #{conv_ar_forward.1} parent=19 // pred_region
          %s976 = sand.u32 %s51, 1
          %s977 = scalar_lea.sflag [#allocation24], %s976
          %s978 = sand.u32 %s593, 1
          %s979 = scalar_lea.vmem [#allocation25], %s978
          %s981 = ssub.s32 16, 16
          %982 = vsyncadd %s977, %s981
          %s983 = smul.addr %s59, 16
          %s984 = scalar_lea.hbm %s20, %s983
          %s986 = sshll.u32 %s979, 4
          %s987 = int_to_ptr.vmem [resolvable:$true] %s986
          %989 = dma.hbm_to_vmem [thread:$0]  %s984, 16, %s987, %s977
        $region100: #{conv_ar_forward.1} parent=19 // pred_fallthru
          _
      $region20: #{conv_ar_forward.1} parent=5 // pred_fallthru
        _
      %p990 = scmp.le.s32.totalorder 1, %s51
      %p991 = scmp.lt.s32.totalorder %s51, 3
      %p992 = pnand %p990, %p991
      %p993 = pneg %p992
      // Predicated region
      $region101: #{conv_ar_forward.1} parent=5 // pred_check
        _
      $region102: #{conv_ar_forward.1} parent=5 // pred_check_branch
        %995 = sbr.rel (%p992) target = $region104
      $region103: #{conv_ar_forward.1} parent=5 // pred_region
        %s996 = ssub.s32 %s51, 1
        %s997 = sand.u32 %s128, 1
        %s998 = scalar_lea.sflag [#allocation4], %s997
        %s999 = sand.u32 %s128, 1
        %s1000 = scalar_lea.vmem [#allocation3], %s999
        // Predicated region
        $region105: #{conv_ar_forward.1} parent=103 // pred_check
          %p1001 = pneg %p141
        $region106: #{conv_ar_forward.1} parent=103 // pred_check_branch
          %1003 = sbr.rel (%p1001) target = $region108
        $region107: #{conv_ar_forward.1} parent=103 // pred_region
          %1004 = dma.done %s998, 16
        $region108: #{conv_ar_forward.1} parent=103 // pred_fallthru
          _
        %s1005 = sand.u32 %s56, 1
        %s1006 = scalar_lea.sflag [#allocation6], %s1005
        %s1007 = sand.u32 %s154, 1
        %s1008 = smul.addr %s1007, 128
        %s1009 = scalar_lea.vmem [#allocation5], %s1008
        // Predicated region
        $region109: #{conv_ar_forward.1} parent=103 // pred_check
          %p1010 = pneg %p167
        $region110: #{conv_ar_forward.1} parent=103 // pred_check_branch
          %1012 = sbr.rel (%p1010) target = $region112
        $region111: #{conv_ar_forward.1} parent=103 // pred_region
          %1013 = dma.done %s1006, 2048
        $region112: #{conv_ar_forward.1} parent=103 // pred_fallthru
          _
        %s1014 = sand.u32 %s56, 1
        %s1015 = scalar_lea.sflag [#allocation6], %s1014
        %s1016 = sand.u32 %s180, 1
        %s1017 = scalar_lea.vmem [#allocation7], %s1016
        // Predicated region
        $region113: #{conv_ar_forward.1} parent=103 // pred_check
          %p1018 = pneg %p193
        $region114: #{conv_ar_forward.1} parent=103 // pred_check_branch
          %1020 = sbr.rel (%p1018) target = $region116
        $region115: #{conv_ar_forward.1} parent=103 // pred_region
          %1021 = dma.done %s1015, 16
        $region116: #{conv_ar_forward.1} parent=103 // pred_fallthru
          _
        %s1022 = sand.u32 %s56, 1
        %s1023 = scalar_lea.sflag [#allocation9], %s1022
        %s1024 = sand.u32 %s232, 1
        %s1025 = smul.addr %s1024, 2
        %s1026 = scalar_lea.vmem [#allocation8], %s1025
        // Predicated region
        $region117: #{conv_ar_forward.1} parent=103 // pred_check
          %p1027 = pneg %p245
        $region118: #{conv_ar_forward.1} parent=103 // pred_check_branch
          %1029 = sbr.rel (%p1027) target = $region120
        $region119: #{conv_ar_forward.1} parent=103 // pred_region
          %1030 = dma.done %s1023, 32
        $region120: #{conv_ar_forward.1} parent=103 // pred_fallthru
          _
        %s1031 = sand.u32 %s56, 1
        %s1032 = scalar_lea.sflag [#allocation9], %s1031
        %s1033 = sand.u32 %s258, 1
        %s1034 = smul.addr %s1033, 2048
        %s1035 = scalar_lea.vmem [#allocation10], %s1034
        // Predicated region
        $region121: #{conv_ar_forward.1} parent=103 // pred_check
          %p1036 = pneg %p271
        $region122: #{conv_ar_forward.1} parent=103 // pred_check_branch
          %1038 = sbr.rel (%p1036) target = $region124
        $region123: #{conv_ar_forward.1} parent=103 // pred_region
          %1039 = dma.done %s1032, 32768
        $region124: #{conv_ar_forward.1} parent=103 // pred_fallthru
          _
        %s1040 = sand.u32 %s56, 1
        %s1041 = scalar_lea.sflag [#allocation12], %s1040
        %s1042 = sand.u32 %s284, 1
        %s1043 = smul.addr %s1042, 4
        %s1044 = scalar_lea.vmem [#allocation11], %s1043
        // Predicated region
        $region125: #{conv_ar_forward.1} parent=103 // pred_check
          %p1045 = pneg %p297
        $region126: #{conv_ar_forward.1} parent=103 // pred_check_branch
          %1047 = sbr.rel (%p1045) target = $region128
        $region127: #{conv_ar_forward.1} parent=103 // pred_region
          %1048 = dma.done %s1041, 64
        $region128: #{conv_ar_forward.1} parent=103 // pred_fallthru
          _
        %s1049 = sand.u32 %s56, 1
        %s1050 = scalar_lea.sflag [#allocation12], %s1049
        %s1051 = sand.u32 %s336, 1
        %s1052 = scalar_lea.vmem [#allocation13], %s1051
        // Predicated region
        $region129: #{conv_ar_forward.1} parent=103 // pred_check
          %p1053 = pneg %p349
        $region130: #{conv_ar_forward.1} parent=103 // pred_check_branch
          %1055 = sbr.rel (%p1053) target = $region132
        $region131: #{conv_ar_forward.1} parent=103 // pred_region
          %1056 = dma.done %s1050, 16
        $region132: #{conv_ar_forward.1} parent=103 // pred_fallthru
          _
        %s1057 = sand.u32 %s56, 1
        %s1058 = scalar_lea.sflag [#allocation15], %s1057
        %s1059 = sand.u32 %s362, 1
        %s1060 = smul.addr %s1059, 64
        %s1061 = scalar_lea.vmem [#allocation14], %s1060
        // Predicated region
        $region133: #{conv_ar_forward.1} parent=103 // pred_check
          %p1062 = pneg %p375
        $region134: #{conv_ar_forward.1} parent=103 // pred_check_branch
          %1064 = sbr.rel (%p1062) target = $region136
        $region135: #{conv_ar_forward.1} parent=103 // pred_region
          %1065 = dma.done %s1058, 1024
        $region136: #{conv_ar_forward.1} parent=103 // pred_fallthru
          _
        %s1066 = sand.u32 %s56, 1
        %s1067 = scalar_lea.sflag [#allocation15], %s1066
        %s1068 = sand.u32 %s388, 1
        %s1069 = smul.addr %s1068, 4
        %s1070 = scalar_lea.vmem [#allocation16], %s1069
        // Predicated region
        $region137: #{conv_ar_forward.1} parent=103 // pred_check
          %p1071 = pneg %p401
        $region138: #{conv_ar_forward.1} parent=103 // pred_check_branch
          %1073 = sbr.rel (%p1071) target = $region140
        $region139: #{conv_ar_forward.1} parent=103 // pred_region
          %1074 = dma.done %s1067, 64
        $region140: #{conv_ar_forward.1} parent=103 // pred_fallthru
          _
        %s1075 = sand.u32 %s56, 1
        %s1076 = scalar_lea.sflag [#allocation18], %s1075
        %s1077 = sand.u32 %s414, 1
        %s1078 = smul.addr %s1077, 2048
        %s1079 = scalar_lea.vmem [#allocation17], %s1078
        // Predicated region
        $region141: #{conv_ar_forward.1} parent=103 // pred_check
          %p1080 = pneg %p427
        $region142: #{conv_ar_forward.1} parent=103 // pred_check_branch
          %1082 = sbr.rel (%p1080) target = $region144
        $region143: #{conv_ar_forward.1} parent=103 // pred_region
          %1083 = dma.done %s1076, 32768
        $region144: #{conv_ar_forward.1} parent=103 // pred_fallthru
          _
        %s1084 = sand.u32 %s56, 1
        %s1085 = scalar_lea.sflag [#allocation18], %s1084
        %s1086 = sand.u32 %s440, 1
        %s1087 = smul.addr %s1086, 8
        %s1088 = scalar_lea.vmem [#allocation19], %s1087
        // Predicated region
        $region145: #{conv_ar_forward.1} parent=103 // pred_check
          %p1089 = pneg %p453
        $region146: #{conv_ar_forward.1} parent=103 // pred_check_branch
          %1091 = sbr.rel (%p1089) target = $region148
        $region147: #{conv_ar_forward.1} parent=103 // pred_region
          %1092 = dma.done %s1085, 128
        $region148: #{conv_ar_forward.1} parent=103 // pred_fallthru
          _
        %s1093 = sand.u32 %s56, 1
        %s1094 = scalar_lea.sflag [#allocation21], %s1093
        %s1095 = sand.u32 %s492, 1
        %s1096 = smul.addr %s1095, 4
        %s1097 = scalar_lea.vmem [#allocation20], %s1096
        // Predicated region
        $region149: #{conv_ar_forward.1} parent=103 // pred_check
          %p1098 = pneg %p505
        $region150: #{conv_ar_forward.1} parent=103 // pred_check_branch
          %1100 = sbr.rel (%p1098) target = $region152
        $region151: #{conv_ar_forward.1} parent=103 // pred_region
          %1101 = dma.done %s1094, 64
        $region152: #{conv_ar_forward.1} parent=103 // pred_fallthru
          _
        %s1102 = sand.u32 %s56, 1
        %s1103 = scalar_lea.sflag [#allocation21], %s1102
        %s1104 = sand.u32 %s518, 1
        %s1105 = smul.addr %s1104, 128
        %s1106 = scalar_lea.vmem [#allocation22], %s1105
        // Predicated region
        $region153: #{conv_ar_forward.1} parent=103 // pred_check
          %p1107 = pneg %p531
        $region154: #{conv_ar_forward.1} parent=103 // pred_check_branch
          %1109 = sbr.rel (%p1107) target = $region156
        $region155: #{conv_ar_forward.1} parent=103 // pred_region
          %1110 = dma.done %s1103, 2048
        $region156: #{conv_ar_forward.1} parent=103 // pred_fallthru
          _
        %s1111 = sand.u32 %s56, 1
        %s1112 = scalar_lea.sflag [#allocation24], %s1111
        %s1113 = sand.u32 %s544, 1
        %s1114 = smul.addr %s1113, 2
        %s1115 = scalar_lea.vmem [#allocation23], %s1114
        // Predicated region
        $region157: #{conv_ar_forward.1} parent=103 // pred_check
          %p1116 = pneg %p557
        $region158: #{conv_ar_forward.1} parent=103 // pred_check_branch
          %1118 = sbr.rel (%p1116) target = $region160
        $region159: #{conv_ar_forward.1} parent=103 // pred_region
          %1119 = dma.done %s1112, 32
        $region160: #{conv_ar_forward.1} parent=103 // pred_fallthru
          _
        %s1120 = sand.u32 %s56, 1
        %s1121 = scalar_lea.sflag [#allocation24], %s1120
        %s1122 = sand.u32 %s596, 1
        %s1123 = scalar_lea.vmem [#allocation25], %s1122
        // Predicated region
        $region161: #{conv_ar_forward.1} parent=103 // pred_check
          %p1124 = pneg %p609
        $region162: #{conv_ar_forward.1} parent=103 // pred_check_branch
          %1126 = sbr.rel (%p1124) target = $region164
        $region163: #{conv_ar_forward.1} parent=103 // pred_region
          %1127 = dma.done %s1121, 16
        $region164: #{conv_ar_forward.1} parent=103 // pred_fallthru
          _
        %s1128 = smul.u32 16, %s60
        %p1129 = scmp.lt.s32.totalorder %s1128, 15
        %s1130 = scalar_select %p1129, %s1128, 15
        %s1131 = smul.addr %s1130, 8
        %s1132 = scalar_lea.vmem %s0, %s1131
        %p1133 = pneg %p89
        %p1134 = pneg %p86
        %p1135 = scmp.lt.s32.totalorder %s61, 1
        %s1136 = scalar_select %p1135, %s61, 1
        %s1137 = smul.addr %s1136, 2
        %s1138 = smul.addr %s1137, 4
        %s1139 = scalar_lea.vmem %s1, %s1138
        %p1140 = pneg %p115
        %p1141 = pneg %p112
        %s1142 = sand.u32 %s128, 1
        %s1143 = scalar_lea.sflag [#allocation4], %s1142
        %s1144 = sand.u32 %s128, 1
        %s1145 = scalar_lea.vmem [#allocation3], %s1144
        %p1146 = pneg %p141
        %p1147 = pneg %p138
        %s1148 = sand.u32 %s56, 1
        %s1149 = scalar_lea.sflag [#allocation6], %s1148
        %s1150 = sand.u32 %s154, 1
        %s1151 = smul.addr %s1150, 128
        %s1152 = scalar_lea.vmem [#allocation5], %s1151
        %p1153 = pneg %p167
        %p1154 = pneg %p164
        %s1155 = sand.u32 %s56, 1
        %s1156 = scalar_lea.sflag [#allocation6], %s1155
        %s1157 = sand.u32 %s180, 1
        %s1158 = scalar_lea.vmem [#allocation7], %s1157
        %p1159 = pneg %p193
        %p1160 = pneg %p190
        %p1161 = scmp.lt.s32.totalorder %s61, 1
        %s1162 = scalar_select %p1161, %s61, 1
        %s1163 = smul.addr %s1162, 128
        %s1164 = smul.addr %s1163, 4
        %s1165 = scalar_lea.vmem %s5, %s1164
        %p1166 = pneg %p219
        %p1167 = pneg %p216
        %s1168 = sand.u32 %s56, 1
        %s1169 = scalar_lea.sflag [#allocation9], %s1168
        %s1170 = sand.u32 %s232, 1
        %s1171 = smul.addr %s1170, 2
        %s1172 = scalar_lea.vmem [#allocation8], %s1171
        %p1173 = pneg %p245
        %p1174 = pneg %p242
        %s1175 = sand.u32 %s56, 1
        %s1176 = scalar_lea.sflag [#allocation9], %s1175
        %s1177 = sand.u32 %s258, 1
        %s1178 = smul.addr %s1177, 2048
        %s1179 = scalar_lea.vmem [#allocation10], %s1178
        %p1180 = pneg %p271
        %p1181 = pneg %p268
        %s1182 = sand.u32 %s56, 1
        %s1183 = scalar_lea.sflag [#allocation12], %s1182
        %s1184 = sand.u32 %s284, 1
        %s1185 = smul.addr %s1184, 4
        %s1186 = scalar_lea.vmem [#allocation11], %s1185
        %p1187 = pneg %p297
        %p1188 = pneg %p294
        %p1189 = scmp.lt.s32.totalorder %s61, 1
        %s1190 = scalar_select %p1189, %s61, 1
        %s1191 = smul.addr %s1190, 64
        %s1192 = smul.addr %s1191, 4
        %s1193 = scalar_lea.vmem %s9, %s1192
        %p1194 = pneg %p323
        %p1195 = pneg %p320
        %s1196 = sand.u32 %s56, 1
        %s1197 = scalar_lea.sflag [#allocation12], %s1196
        %s1198 = sand.u32 %s336, 1
        %s1199 = scalar_lea.vmem [#allocation13], %s1198
        %p1200 = pneg %p349
        %p1201 = pneg %p346
        %s1202 = sand.u32 %s56, 1
        %s1203 = scalar_lea.sflag [#allocation15], %s1202
        %s1204 = sand.u32 %s362, 1
        %s1205 = smul.addr %s1204, 64
        %s1206 = scalar_lea.vmem [#allocation14], %s1205
        %p1207 = pneg %p375
        %p1208 = pneg %p372
        %s1209 = sand.u32 %s56, 1
        %s1210 = scalar_lea.sflag [#allocation15], %s1209
        %s1211 = sand.u32 %s388, 1
        %s1212 = smul.addr %s1211, 4
        %s1213 = scalar_lea.vmem [#allocation16], %s1212
        %p1214 = pneg %p401
        %p1215 = pneg %p398
        %s1216 = sand.u32 %s56, 1
        %s1217 = scalar_lea.sflag [#allocation18], %s1216
        %s1218 = sand.u32 %s414, 1
        %s1219 = smul.addr %s1218, 2048
        %s1220 = scalar_lea.vmem [#allocation17], %s1219
        %p1221 = pneg %p427
        %p1222 = pneg %p424
        %s1223 = sand.u32 %s56, 1
        %s1224 = scalar_lea.sflag [#allocation18], %s1223
        %s1225 = sand.u32 %s440, 1
        %s1226 = smul.addr %s1225, 8
        %s1227 = scalar_lea.vmem [#allocation19], %s1226
        %p1228 = pneg %p453
        %p1229 = pneg %p450
        %p1230 = scmp.lt.s32.totalorder %s61, 1
        %s1231 = scalar_select %p1230, %s61, 1
        %s1232 = smul.addr %s1231, 128
        %s1233 = smul.addr %s1232, 4
        %s1234 = scalar_lea.vmem %s15, %s1233
        %p1235 = pneg %p479
        %p1236 = pneg %p476
        %s1237 = sand.u32 %s56, 1
        %s1238 = scalar_lea.sflag [#allocation21], %s1237
        %s1239 = sand.u32 %s492, 1
        %s1240 = smul.addr %s1239, 4
        %s1241 = scalar_lea.vmem [#allocation20], %s1240
        %p1242 = pneg %p505
        %p1243 = pneg %p502
        %s1244 = sand.u32 %s56, 1
        %s1245 = scalar_lea.sflag [#allocation21], %s1244
        %s1246 = sand.u32 %s518, 1
        %s1247 = smul.addr %s1246, 128
        %s1248 = scalar_lea.vmem [#allocation22], %s1247
        %p1249 = pneg %p531
        %p1250 = pneg %p528
        %s1251 = sand.u32 %s56, 1
        %s1252 = scalar_lea.sflag [#allocation24], %s1251
        %s1253 = sand.u32 %s544, 1
        %s1254 = smul.addr %s1253, 2
        %s1255 = scalar_lea.vmem [#allocation23], %s1254
        %p1256 = pneg %p557
        %p1257 = pneg %p554
        %p1258 = scmp.lt.s32.totalorder %s61, 1
        %s1259 = scalar_select %p1258, %s61, 1
        %s1260 = smul.addr %s1259, 8
        %s1261 = smul.addr %s1260, 4
        %s1262 = scalar_lea.vmem %s19, %s1261
        %p1263 = pneg %p583
        %p1264 = pneg %p580
        %s1265 = sand.u32 %s56, 1
        %s1266 = scalar_lea.sflag [#allocation24], %s1265
        %s1267 = sand.u32 %s596, 1
        %s1268 = scalar_lea.vmem [#allocation25], %s1267
        %p1269 = pneg %p609
        %p1270 = pneg %p606
        %p1271 = pneg %p635
        %p1272 = pneg %p632
        %p1273 = scmp.lt.s32.totalorder %s60, 0
        %s1274 = scalar_select %p1273, %s60, 0
        %s1275 = scalar_lea.vmem %s21, %s1274
        %s1276 = smul.u32 16, %s60
        %p1277 = scmp.lt.s32.totalorder %s1276, 15
        %s1278 = scalar_select %p1277, %s1276, 15
        %s1279 = smul.addr %s1278, 8
        %s1280 = scalar_lea.vmem %s0, %s1279
        %s1281 = smul.u32 16, %s60
        %p1282 = scmp.lt.s32.totalorder %s61, 1
        %s1283 = scalar_select %p1282, %s61, 1
        %s1284 = smul.addr %s1283, 2
        %s1285 = smul.addr %s1284, 4
        %s1286 = scalar_lea.vmem %s1, %s1285
        %p1287 = scmp.lt.s32.totalorder %s61, 1
        %s1288 = scalar_select %p1287, %s61, 1
        %s1289 = smul.addr %s1288, 128
        %s1290 = smul.addr %s1289, 4
        %s1291 = scalar_lea.vmem %s5, %s1290
        %p1292 = scmp.lt.s32.totalorder %s61, 1
        %s1293 = scalar_select %p1292, %s61, 1
        %s1294 = smul.addr %s1293, 64
        %s1295 = smul.addr %s1294, 4
        %s1296 = scalar_lea.vmem %s9, %s1295
        %p1297 = scmp.lt.s32.totalorder %s61, 1
        %s1298 = scalar_select %p1297, %s61, 1
        %s1299 = smul.addr %s1298, 128
        %s1300 = smul.addr %s1299, 4
        %s1301 = scalar_lea.vmem %s15, %s1300
        %p1302 = scmp.lt.s32.totalorder %s61, 1
        %s1303 = scalar_select %p1302, %s61, 1
        %s1304 = smul.addr %s1303, 8
        %s1305 = smul.addr %s1304, 4
        %s1306 = scalar_lea.vmem %s19, %s1305
        %p1307 = scmp.lt.s32.totalorder %s60, 0
        %s1308 = scalar_select %p1307, %s60, 0
        %s1309 = scalar_lea.vmem %s21, %s1308
        %p1311 = scmp.eq.s32.totalorder %s61, 0
        // Predicated region
        $region165: #{conv_ar_forward.1} parent=103 // pred_check
          %p1312 = pneg %p1311
        $region166: #{conv_ar_forward.1} parent=103 // pred_check_branch
          %1314 = sbr.rel (%p1312) target = $region168
        $region167: #{conv_ar_forward.1} parent=103 // pred_region
          %v1315 = vld [vmem:[%s1280] sm:$0xff]
          %v1316 = vld [vmem:[%s1280 + $0x8] sm:$0xff]
          %v1317 = vld [vmem:[%s1280 + $0x10] sm:$0xff]
          %v1318 = vld [vmem:[%s1280 + $0x18] sm:$0xff]
          %v1319 = vld [vmem:[%s1280 + $0x20] sm:$0xff]
          %v1320 = vld [vmem:[%s1280 + $0x28] sm:$0xff]
          %v1321 = vld [vmem:[%s1280 + $0x30] sm:$0xff]
          %v1322 = vld [vmem:[%s1280 + $0x38] sm:$0xff]
          %v1323 = vld [vmem:[%s1280 + $0x40] sm:$0xff]
          %v1324 = vld [vmem:[%s1280 + $0x48] sm:$0xff]
          %v1325 = vld [vmem:[%s1280 + $0x50] sm:$0xff]
          %v1326 = vld [vmem:[%s1280 + $0x58] sm:$0xff]
          %v1327 = vld [vmem:[%s1280 + $0x60] sm:$0xff]
          %v1328 = vld [vmem:[%s1280 + $0x68] sm:$0xff]
          %v1329 = vld [vmem:[%s1280 + $0x70] sm:$0xff]
          %v1330 = vld [vmem:[%s1280 + $0x78] sm:$0xff]
          %vm1331 = vcmask 97280
          %1332 = vst.msk [vmem:[#allocation2] sm:$0xff] %vm1331, %v1315
          %1333 = vst.msk [vmem:[#allocation2 + $0x8] sm:$0xff] %vm1331, %v1316
          %1334 = vst.msk [vmem:[#allocation2 + $0x10] sm:$0xff] %vm1331, %v1317
          %1335 = vst.msk [vmem:[#allocation2 + $0x18] sm:$0xff] %vm1331, %v1318
          %1336 = vst.msk [vmem:[#allocation2 + $0x20] sm:$0xff] %vm1331, %v1319
          %1337 = vst.msk [vmem:[#allocation2 + $0x28] sm:$0xff] %vm1331, %v1320
          %1338 = vst.msk [vmem:[#allocation2 + $0x30] sm:$0xff] %vm1331, %v1321
          %1339 = vst.msk [vmem:[#allocation2 + $0x38] sm:$0xff] %vm1331, %v1322
          %1340 = vst.msk [vmem:[#allocation2 + $0x40] sm:$0xff] %vm1331, %v1323
          %1341 = vst.msk [vmem:[#allocation2 + $0x48] sm:$0xff] %vm1331, %v1324
          %1342 = vst.msk [vmem:[#allocation2 + $0x50] sm:$0xff] %vm1331, %v1325
          %1343 = vst.msk [vmem:[#allocation2 + $0x58] sm:$0xff] %vm1331, %v1326
          %1344 = vst.msk [vmem:[#allocation2 + $0x60] sm:$0xff] %vm1331, %v1327
          %1345 = vst.msk [vmem:[#allocation2 + $0x68] sm:$0xff] %vm1331, %v1328
          %1346 = vst.msk [vmem:[#allocation2 + $0x70] sm:$0xff] %vm1331, %v1329
          %1347 = vst.msk [vmem:[#allocation2 + $0x78] sm:$0xff] %vm1331, %v1330
          %1348 = vst [vmem:[%s1309] sm:$0x1] 0.0
        $region168: #{conv_ar_forward.1} parent=103 // pred_fallthru
          _
        %v1349 = vld [vmem:[#allocation2] sm:$0xff]
        %v1350 = vld [vmem:[#allocation2 + $0x8] sm:$0xff]
        %v1351 = vld [vmem:[#allocation2 + $0x10] sm:$0xff]
        %v1352 = vld [vmem:[#allocation2 + $0x18] sm:$0xff]
        %v1353 = vld [vmem:[#allocation2 + $0x20] sm:$0xff]
        %v1354 = vld [vmem:[#allocation2 + $0x28] sm:$0xff]
        %v1355 = vld [vmem:[#allocation2 + $0x30] sm:$0xff]
        %v1356 = vld [vmem:[#allocation2 + $0x38] sm:$0xff]
        %v1357 = vld [vmem:[#allocation2 + $0x40] sm:$0xff]
        %v1358 = vld [vmem:[#allocation2 + $0x48] sm:$0xff]
        %v1359 = vld [vmem:[#allocation2 + $0x50] sm:$0xff]
        %v1360 = vld [vmem:[#allocation2 + $0x58] sm:$0xff]
        %v1361 = vld [vmem:[#allocation2 + $0x60] sm:$0xff]
        %v1362 = vld [vmem:[#allocation2 + $0x68] sm:$0xff]
        %v1363 = vld [vmem:[#allocation2 + $0x70] sm:$0xff]
        %v1364 = vld [vmem:[#allocation2 + $0x78] sm:$0xff]
        %v1365 = vld [vmem:[%s1286] sm:$0xf]
        %v1366 = vld [vmem:[%s1286 + $0x4] sm:$0x3]
        %v1367 = vld [vmem:[%s1000] sm:$0x1]
        %v1368 = vpack.c.bf16 %v1350, %v1349
        %v1369 = vpack.c.bf16 %v1352, %v1351
        %v1370 = vpack.c.bf16 %v1354, %v1353
        %v1371 = vpack.c.bf16 %v1356, %v1355
        %v1372 = vpack.c.bf16 %v1358, %v1357
        %v1373 = vpack.c.bf16 %v1360, %v1359
        %v1374 = vpack.c.bf16 %v1362, %v1361
        %v1375 = vpack.c.bf16 %v1364, %v1363
        %v1377 = vlaneseq
        %v1378 = vshrl.u32 %v1377, 7
        %v1379 = vsub.s32 0, %v1378
        %v1380 = vrot.slane %v1367, %v1379
        %v1384 = vunpack.c.l.b16 %v1365
        %v1385 = vunpack.c.l.b16 %v1366
        %v1386 = vpack.c.b16 %v1385, %v1384
        %vm1387 = vcmask 97280
        %v1389 = vsel %vm1387, %v1368, 0
        %v1392 = vsel %vm1387, %v1369, 0
        %v1395 = vsel %vm1387, %v1370, 0
        %v1398 = vsel %vm1387, %v1371, 0
        %v1401 = vsel %vm1387, %v1372, 0
        %v1404 = vsel %vm1387, %v1373, 0
        %v1407 = vsel %vm1387, %v1374, 0
        %v1410 = vsel %vm1387, %v1375, 0
        %vm1412 = vcmask 1045504
        %v1414 = vsel %vm1412, %v1386, 0
        %1416 = vmatprep.subr.bf16.mxu0 0
        %1417 = vmatpush1.bf16.msra.mxu0 %v1414
        %1418 = vmatprep.subr.bf16.mxu0 0
        %1419 = vmatpush1.bf16.msra.mxu0 0
        %1420 = vmatprep.subr.bf16.mxu0 0
        %1421 = vmatpush1.bf16.msra.mxu0 0
        %1422 = vmatprep.subr.bf16.mxu0 0
        %1423 = vmatpush1.bf16.msra.mxu0 0
        %1424 = vmatprep.subr.bf16.mxu0 0
        %1425 = vmatpush1.bf16.msra.mxu0 0
        %1426 = vmatprep.subr.bf16.mxu0 0
        %1427 = vmatpush1.bf16.msra.mxu0 0
        %1428 = vmatprep.subr.bf16.mxu0 0
        %1429 = vmatpush1.bf16.msra.mxu0 0
        %1430 = vmatprep.subr.bf16.mxu0 0
        %1431 = vmatpush1.bf16.msra.mxu0 0
        %1432 = vmatprep.subr.bf16.mxu0 0
        %1433 = vmatpush1.bf16.msra.mxu0 0
        %1434 = vmatprep.subr.bf16.mxu0 0
        %1435 = vmatpush1.bf16.msra.mxu0 0
        %1436 = vmatprep.subr.bf16.mxu0 0
        %1437 = vmatpush1.bf16.msra.mxu0 0
        %1438 = vmatprep.subr.bf16.mxu0 0
        %1439 = vmatpush1.bf16.msra.mxu0 0
        %1440 = vmatprep.subr.bf16.mxu0 0
        %1441 = vmatpush1.bf16.msra.mxu0 0
        %1442 = vmatprep.subr.bf16.mxu0 0
        %1443 = vmatpush1.bf16.msra.mxu0 0
        %1444 = vmatprep.subr.bf16.mxu0 0
        %1445 = vmatpush1.bf16.msra.mxu0 0
        %1446 = vmatprep.subr.bf16.mxu0 0
        %1447 = vmatpush1.bf16.msra.mxu0 0
        %1448 = vmatprep.mubr.bf16.mxu0 0
        %1449 = vmatmul.mubr.bf16.gmra.mrb[0].mxu0 %v1389
        %v1450 = vpop.f32.mrb[0].mxu0
        %v1451 = vadd.f32 %v1380, %v1450
        %v1452 = vpop.f32.mrb[0].mxu0
        %v1453 = vpop.f32.mrb[0].mxu0
        %v1454 = vadd.f32 %v1380, %v1453
        %v1455 = vpop.f32.mrb[0].mxu0
        %1456 = vmatprep.mubr.bf16.mxu0 0
        %1457 = vmatmul.mubr.bf16.gmra.mrb[0].mxu0 %v1392
        %v1458 = vpop.f32.mrb[0].mxu0
        %v1459 = vadd.f32 %v1380, %v1458
        %v1460 = vpop.f32.mrb[0].mxu0
        %v1461 = vpop.f32.mrb[0].mxu0
        %v1462 = vadd.f32 %v1380, %v1461
        %v1463 = vpop.f32.mrb[0].mxu0
        %1464 = vmatprep.mubr.bf16.mxu0 0
        %1465 = vmatmul.mubr.bf16.gmra.mrb[0].mxu0 %v1395
        %v1466 = vpop.f32.mrb[0].mxu0
        %v1467 = vadd.f32 %v1380, %v1466
        %v1468 = vpop.f32.mrb[0].mxu0
        %v1469 = vpop.f32.mrb[0].mxu0
        %v1470 = vadd.f32 %v1380, %v1469
        %v1471 = vpop.f32.mrb[0].mxu0
        %1472 = vmatprep.mubr.bf16.mxu0 0
        %1473 = vmatmul.mubr.bf16.gmra.mrb[0].mxu0 %v1398
        %v1474 = vpop.f32.mrb[0].mxu0
        %v1475 = vadd.f32 %v1380, %v1474
        %v1476 = vpop.f32.mrb[0].mxu0
        %v1477 = vpop.f32.mrb[0].mxu0
        %v1478 = vadd.f32 %v1380, %v1477
        %v1479 = vpop.f32.mrb[0].mxu0
        %1480 = vmatprep.mubr.bf16.mxu0 0
        %1481 = vmatmul.mubr.bf16.gmra.mrb[0].mxu0 %v1401
        %v1482 = vpop.f32.mrb[0].mxu0
        %v1483 = vadd.f32 %v1380, %v1482
        %v1484 = vpop.f32.mrb[0].mxu0
        %v1485 = vpop.f32.mrb[0].mxu0
        %v1486 = vadd.f32 %v1380, %v1485
        %v1487 = vpop.f32.mrb[0].mxu0
        %1488 = vmatprep.mubr.bf16.mxu0 0
        %1489 = vmatmul.mubr.bf16.gmra.mrb[0].mxu0 %v1404
        %v1490 = vpop.f32.mrb[0].mxu0
        %v1491 = vadd.f32 %v1380, %v1490
        %v1492 = vpop.f32.mrb[0].mxu0
        %v1493 = vpop.f32.mrb[0].mxu0
        %v1494 = vadd.f32 %v1380, %v1493
        %v1495 = vpop.f32.mrb[0].mxu0
        %1496 = vmatprep.mubr.bf16.mxu0 0
        %1497 = vmatmul.mubr.bf16.gmra.mrb[0].mxu0 %v1407
        %v1498 = vpop.f32.mrb[0].mxu0
        %v1499 = vadd.f32 %v1380, %v1498
        %v1500 = vpop.f32.mrb[0].mxu0
        %v1501 = vpop.f32.mrb[0].mxu0
        %v1502 = vadd.f32 %v1380, %v1501
        %v1503 = vpop.f32.mrb[0].mxu0
        %1504 = vmatprep.mubr.bf16.mxu0 0
        %1505 = vmatmul.mubr.bf16.gmra.mrb[0].mxu0 %v1410
        %v1506 = vpop.f32.mrb[0].mxu0
        %v1507 = vadd.f32 %v1380, %v1506
        %v1508 = vpop.f32.mrb[0].mxu0
        %v1509 = vpop.f32.mrb[0].mxu0
        %v1510 = vadd.f32 %v1380, %v1509
        %v1511 = vpop.f32.mrb[0].mxu0
        %1512 = vdwg.mxu0
        %v1513 = vmax.f32 %v1451, 0.0
        %v1514 = vmax.f32 %v1454, 0.0
        %v1515 = vmax.f32 %v1459, 0.0
        %v1516 = vmax.f32 %v1462, 0.0
        %v1517 = vmax.f32 %v1467, 0.0
        %v1518 = vmax.f32 %v1470, 0.0
        %v1519 = vmax.f32 %v1475, 0.0
        %v1520 = vmax.f32 %v1478, 0.0
        %v1521 = vmax.f32 %v1483, 0.0
        %v1522 = vmax.f32 %v1486, 0.0
        %v1523 = vmax.f32 %v1491, 0.0
        %v1524 = vmax.f32 %v1494, 0.0
        %v1525 = vmax.f32 %v1499, 0.0
        %v1526 = vmax.f32 %v1502, 0.0
        %v1527 = vmax.f32 %v1507, 0.0
        %v1528 = vmax.f32 %v1510, 0.0
        %1533 = vrot.lane.b32.xlu0 %v1517, 64
        %v1534 = vpop.permute.xlu0 %1533
        %1535 = vrot.lane.b32.xlu0 %v1518, 64
        %v1536 = vpop.permute.xlu0 %1535
        %1537 = vrot.lane.b32.xlu0 %v1519, 64
        %v1538 = vpop.permute.xlu0 %1537
        %1539 = vrot.lane.b32.xlu0 %v1520, 64
        %v1540 = vpop.permute.xlu0 %1539
        %1549 = vrot.lane.b32.xlu0 %v1525, 64
        %v1550 = vpop.permute.xlu0 %1549
        %1551 = vrot.lane.b32.xlu0 %v1526, 64
        %v1552 = vpop.permute.xlu0 %1551
        %1553 = vrot.lane.b32.xlu0 %v1527, 64
        %v1554 = vpop.permute.xlu0 %1553
        %1555 = vrot.lane.b32.xlu0 %v1528, 64
        %v1556 = vpop.permute.xlu0 %1555
        %vm1561 = vcmask 523264
        %v1562 = vsel %vm1561, %v1513, %v1534
        %v1563 = vsel %vm1561, %v1514, %v1536
        %v1564 = vsel %vm1561, %v1515, %v1538
        %v1565 = vsel %vm1561, %v1516, %v1540
        %v1566 = vsel %vm1561, %v1521, %v1550
        %v1567 = vsel %vm1561, %v1522, %v1552
        %v1568 = vsel %vm1561, %v1523, %v1554
        %v1569 = vsel %vm1561, %v1524, %v1556
        %v1570 = vld [vmem:[%s1009] sm:$0xf]
        %v1571 = vld [vmem:[%s1009 + $0x4] sm:$0xf]
        %v1572 = vld [vmem:[%s1009 + $0x8] sm:$0xf]
        %v1573 = vld [vmem:[%s1009 + $0xc] sm:$0xf]
        %v1574 = vld [vmem:[%s1009 + $0x10] sm:$0xf]
        %v1575 = vld [vmem:[%s1009 + $0x14] sm:$0xf]
        %v1576 = vld [vmem:[%s1009 + $0x18] sm:$0xf]
        %v1577 = vld [vmem:[%s1009 + $0x1c] sm:$0xf]
        %v1578 = vld [vmem:[%s1009 + $0x20] sm:$0xf]
        %v1579 = vld [vmem:[%s1009 + $0x24] sm:$0xf]
        %v1580 = vld [vmem:[%s1009 + $0x28] sm:$0xf]
        %v1581 = vld [vmem:[%s1009 + $0x2c] sm:$0xf]
        %v1582 = vld [vmem:[%s1009 + $0x30] sm:$0xf]
        %v1583 = vld [vmem:[%s1009 + $0x34] sm:$0xf]
        %v1584 = vld [vmem:[%s1009 + $0x38] sm:$0xf]
        %v1585 = vld [vmem:[%s1009 + $0x3c] sm:$0xf]
        %v1586 = vld [vmem:[%s1009 + $0x40] sm:$0xf]
        %v1587 = vld [vmem:[%s1009 + $0x44] sm:$0xf]
        %v1588 = vld [vmem:[%s1009 + $0x48] sm:$0xf]
        %v1589 = vld [vmem:[%s1009 + $0x4c] sm:$0xf]
        %v1590 = vld [vmem:[%s1009 + $0x50] sm:$0xf]
        %v1591 = vld [vmem:[%s1009 + $0x54] sm:$0xf]
        %v1592 = vld [vmem:[%s1009 + $0x58] sm:$0xf]
        %v1593 = vld [vmem:[%s1009 + $0x5c] sm:$0xf]
        %v1594 = vld [vmem:[%s1009 + $0x60] sm:$0xf]
        %v1595 = vld [vmem:[%s1009 + $0x64] sm:$0xf]
        %v1596 = vld [vmem:[%s1009 + $0x68] sm:$0xf]
        %v1597 = vld [vmem:[%s1009 + $0x6c] sm:$0xf]
        %v1598 = vld [vmem:[%s1009 + $0x70] sm:$0xf]
        %v1599 = vld [vmem:[%s1009 + $0x74] sm:$0xf]
        %v1600 = vld [vmem:[%s1009 + $0x78] sm:$0xf]
        %v1601 = vld [vmem:[%s1009 + $0x7c] sm:$0xf]
        %v1602 = vld [vmem:[%s1017] sm:$0x1]
        %v1603 = vpack.c.bf16 %v1563, %v1562
        %v1604 = vpack.c.bf16 %v1567, %v1566
        %v1605 = vpack.c.bf16 %v1565, %v1564
        %v1606 = vpack.c.bf16 %v1569, %v1568
        %v1608 = vlaneseq
        %v1609 = vshrl.u32 %v1608, 7
        %v1610 = vsub.s32 0, %v1609
        %v1611 = vrot.slane %v1602, %v1610
        %v1645 = vunpack.c.l.b16 %v1570
        %v1646 = vunpack.c.l.b16 %v1571
        %v1647 = vunpack.c.l.b16 %v1572
        %v1648 = vunpack.c.l.b16 %v1573
        %v1649 = vunpack.c.l.b16 %v1574
        %v1650 = vunpack.c.l.b16 %v1575
        %v1651 = vunpack.c.l.b16 %v1576
        %v1652 = vunpack.c.l.b16 %v1577
        %v1653 = vunpack.c.l.b16 %v1578
        %v1654 = vunpack.c.l.b16 %v1579
        %v1655 = vunpack.c.l.b16 %v1580
        %v1656 = vunpack.c.l.b16 %v1581
        %v1657 = vunpack.c.l.b16 %v1582
        %v1658 = vunpack.c.l.b16 %v1583
        %v1659 = vunpack.c.l.b16 %v1584
        %v1660 = vunpack.c.l.b16 %v1585
        %v1661 = vunpack.c.l.b16 %v1586
        %v1662 = vunpack.c.l.b16 %v1587
        %v1663 = vunpack.c.l.b16 %v1588
        %v1664 = vunpack.c.l.b16 %v1589
        %v1665 = vunpack.c.l.b16 %v1590
        %v1666 = vunpack.c.l.b16 %v1591
        %v1667 = vunpack.c.l.b16 %v1592
        %v1668 = vunpack.c.l.b16 %v1593
        %v1669 = vunpack.c.l.b16 %v1594
        %v1670 = vunpack.c.l.b16 %v1595
        %v1671 = vunpack.c.l.b16 %v1596
        %v1672 = vunpack.c.l.b16 %v1597
        %v1673 = vunpack.c.l.b16 %v1598
        %v1674 = vunpack.c.l.b16 %v1599
        %v1675 = vunpack.c.l.b16 %v1600
        %v1676 = vunpack.c.l.b16 %v1601
        %v1677 = vpack.c.b16 %v1646, %v1645
        %v1678 = vpack.c.b16 %v1648, %v1647
        %v1679 = vpack.c.b16 %v1650, %v1649
        %v1680 = vpack.c.b16 %v1652, %v1651
        %v1681 = vpack.c.b16 %v1654, %v1653
        %v1682 = vpack.c.b16 %v1656, %v1655
        %v1683 = vpack.c.b16 %v1658, %v1657
        %v1684 = vpack.c.b16 %v1660, %v1659
        %v1685 = vpack.c.b16 %v1662, %v1661
        %v1686 = vpack.c.b16 %v1664, %v1663
        %v1687 = vpack.c.b16 %v1666, %v1665
        %v1688 = vpack.c.b16 %v1668, %v1667
        %v1689 = vpack.c.b16 %v1670, %v1669
        %v1690 = vpack.c.b16 %v1672, %v1671
        %v1691 = vpack.c.b16 %v1674, %v1673
        %v1692 = vpack.c.b16 %v1676, %v1675
        %1709 = vmatprep.subr.bf16.mxu0 0
        %1710 = vmatpush1.bf16.msra.mxu0 %v1677
        %1711 = vmatprep.subr.bf16.mxu0 0
        %1712 = vmatpush1.bf16.msra.mxu0 %v1678
        %1713 = vmatprep.subr.bf16.mxu0 0
        %1714 = vmatpush1.bf16.msra.mxu0 %v1679
        %1715 = vmatprep.subr.bf16.mxu0 0
        %1716 = vmatpush1.bf16.msra.mxu0 %v1680
        %1717 = vmatprep.subr.bf16.mxu0 0
        %1718 = vmatpush1.bf16.msra.mxu0 %v1681
        %1719 = vmatprep.subr.bf16.mxu0 0
        %1720 = vmatpush1.bf16.msra.mxu0 %v1682
        %1721 = vmatprep.subr.bf16.mxu0 0
        %1722 = vmatpush1.bf16.msra.mxu0 %v1683
        %1723 = vmatprep.subr.bf16.mxu0 0
        %1724 = vmatpush1.bf16.msra.mxu0 %v1684
        %1725 = vmatprep.subr.bf16.mxu0 0
        %1726 = vmatpush1.bf16.msra.mxu0 %v1685
        %1727 = vmatprep.subr.bf16.mxu0 0
        %1728 = vmatpush1.bf16.msra.mxu0 %v1686
        %1729 = vmatprep.subr.bf16.mxu0 0
        %1730 = vmatpush1.bf16.msra.mxu0 %v1687
        %1731 = vmatprep.subr.bf16.mxu0 0
        %1732 = vmatpush1.bf16.msra.mxu0 %v1688
        %1733 = vmatprep.subr.bf16.mxu0 0
        %1734 = vmatpush1.bf16.msra.mxu0 %v1689
        %1735 = vmatprep.subr.bf16.mxu0 0
        %1736 = vmatpush1.bf16.msra.mxu0 %v1690
        %1737 = vmatprep.subr.bf16.mxu0 0
        %1738 = vmatpush1.bf16.msra.mxu0 %v1691
        %1739 = vmatprep.subr.bf16.mxu0 0
        %1740 = vmatpush1.bf16.msra.mxu0 %v1692
        %1741 = vmatprep.mubr.bf16.mxu0 %v1604
        %1742 = vmatmul.mubr.bf16.gmra.mrb[0].mxu0 %v1603
        %v1743 = vpop.f32.mrb[0].mxu0
        %v1744 = vadd.f32 %v1611, %v1743
        %v1745 = vpop.f32.mrb[0].mxu0
        %v1746 = vpop.f32.mrb[0].mxu0
        %v1747 = vadd.f32 %v1611, %v1746
        %v1748 = vpop.f32.mrb[0].mxu0
        %1749 = vmatprep.mubr.bf16.mxu0 %v1606
        %1750 = vmatmul.mubr.bf16.gmra.mrb[0].mxu0 %v1605
        %v1751 = vpop.f32.mrb[0].mxu0
        %v1752 = vadd.f32 %v1611, %v1751
        %v1753 = vpop.f32.mrb[0].mxu0
        %v1754 = vpop.f32.mrb[0].mxu0
        %v1755 = vadd.f32 %v1611, %v1754
        %v1756 = vpop.f32.mrb[0].mxu0
        %1757 = vdwg.mxu0
        %v1758 = vmax.f32 %v1744, 0.0
        %v1759 = vmax.f32 %v1747, 0.0
        %v1760 = vmax.f32 %v1752, 0.0
        %v1761 = vmax.f32 %v1755, 0.0
        %v1762 = vld [vmem:[%s1291] sm:$0xff]
        %v1763 = vld [vmem:[%s1291 + $0x8] sm:$0xff]
        %v1764 = vld [vmem:[%s1291 + $0x10] sm:$0xff]
        %v1765 = vld [vmem:[%s1291 + $0x18] sm:$0xff]
        %v1766 = vld [vmem:[%s1291 + $0x20] sm:$0xff]
        %v1767 = vld [vmem:[%s1291 + $0x28] sm:$0xff]
        %v1768 = vld [vmem:[%s1291 + $0x30] sm:$0xff]
        %v1769 = vld [vmem:[%s1291 + $0x38] sm:$0xff]
        %v1770 = vld [vmem:[%s1291 + $0x40] sm:$0xff]
        %v1771 = vld [vmem:[%s1291 + $0x48] sm:$0xff]
        %v1772 = vld [vmem:[%s1291 + $0x50] sm:$0xff]
        %v1773 = vld [vmem:[%s1291 + $0x58] sm:$0xff]
        %v1774 = vld [vmem:[%s1291 + $0x60] sm:$0xff]
        %v1775 = vld [vmem:[%s1291 + $0x68] sm:$0xff]
        %v1776 = vld [vmem:[%s1291 + $0x70] sm:$0xff]
        %v1777 = vld [vmem:[%s1291 + $0x78] sm:$0xff]
        %v1778 = vld [vmem:[%s1291 + $0x80] sm:$0xff]
        %v1779 = vld [vmem:[%s1291 + $0x88] sm:$0xff]
        %v1780 = vld [vmem:[%s1291 + $0x90] sm:$0xff]
        %v1781 = vld [vmem:[%s1291 + $0x98] sm:$0xff]
        %v1782 = vld [vmem:[%s1291 + $0xa0] sm:$0xff]
        %v1783 = vld [vmem:[%s1291 + $0xa8] sm:$0xff]
        %v1784 = vld [vmem:[%s1291 + $0xb0] sm:$0xff]
        %v1785 = vld [vmem:[%s1291 + $0xb8] sm:$0xff]
        %v1786 = vld [vmem:[%s1291 + $0xc0] sm:$0xff]
        %v1787 = vld [vmem:[%s1291 + $0xc8] sm:$0xff]
        %v1788 = vld [vmem:[%s1291 + $0xd0] sm:$0xff]
        %v1789 = vld [vmem:[%s1291 + $0xd8] sm:$0xff]
        %v1790 = vld [vmem:[%s1291 + $0xe0] sm:$0xff]
        %v1791 = vld [vmem:[%s1291 + $0xe8] sm:$0xff]
        %v1792 = vld [vmem:[%s1291 + $0xf0] sm:$0xff]
        %v1793 = vld [vmem:[%s1291 + $0xf8] sm:$0xff]
        %v1794 = vld [vmem:[%s1291 + $0x100] sm:$0xff]
        %v1795 = vld [vmem:[%s1291 + $0x108] sm:$0xff]
        %v1796 = vld [vmem:[%s1291 + $0x110] sm:$0xff]
        %v1797 = vld [vmem:[%s1291 + $0x118] sm:$0xff]
        %v1798 = vld [vmem:[%s1291 + $0x120] sm:$0xff]
        %v1799 = vld [vmem:[%s1291 + $0x128] sm:$0xff]
        %v1800 = vld [vmem:[%s1291 + $0x130] sm:$0xff]
        %v1801 = vld [vmem:[%s1291 + $0x138] sm:$0xff]
        %v1802 = vld [vmem:[%s1291 + $0x140] sm:$0xff]
        %v1803 = vld [vmem:[%s1291 + $0x148] sm:$0xff]
        %v1804 = vld [vmem:[%s1291 + $0x150] sm:$0xff]
        %v1805 = vld [vmem:[%s1291 + $0x158] sm:$0xff]
        %v1806 = vld [vmem:[%s1291 + $0x160] sm:$0xff]
        %v1807 = vld [vmem:[%s1291 + $0x168] sm:$0xff]
        %v1808 = vld [vmem:[%s1291 + $0x170] sm:$0xff]
        %v1809 = vld [vmem:[%s1291 + $0x178] sm:$0xff]
        %v1810 = vld [vmem:[%s1291 + $0x180] sm:$0xff]
        %v1811 = vld [vmem:[%s1291 + $0x188] sm:$0xff]
        %v1812 = vld [vmem:[%s1291 + $0x190] sm:$0xff]
        %v1813 = vld [vmem:[%s1291 + $0x198] sm:$0xff]
        %v1814 = vld [vmem:[%s1291 + $0x1a0] sm:$0xff]
        %v1815 = vld [vmem:[%s1291 + $0x1a8] sm:$0xff]
        %v1816 = vld [vmem:[%s1291 + $0x1b0] sm:$0xff]
        %v1817 = vld [vmem:[%s1291 + $0x1b8] sm:$0xff]
        %v1818 = vld [vmem:[%s1291 + $0x1c0] sm:$0xff]
        %v1819 = vld [vmem:[%s1291 + $0x1c8] sm:$0xff]
        %v1820 = vld [vmem:[%s1291 + $0x1d0] sm:$0xff]
        %v1821 = vld [vmem:[%s1291 + $0x1d8] sm:$0xff]
        %v1822 = vld [vmem:[%s1291 + $0x1e0] sm:$0xff]
        %v1823 = vld [vmem:[%s1291 + $0x1e8] sm:$0xff]
        %v1824 = vld [vmem:[%s1291 + $0x1f0] sm:$0xff]
        %v1825 = vld [vmem:[%s1291 + $0x1f8] sm:$0xff]
        %v1826 = vld [vmem:[%s1026] sm:$0x3]
        %v1827 = vpack.c.bf16 %v1758, %v1758
        %v1828 = vpack.c.bf16 %v1759, %v1759
        %v1829 = vpack.c.bf16 %v1760, %v1760
        %v1830 = vpack.c.bf16 %v1761, %v1761
        %v1832 = vlaneseq
        %v1833 = vshrl.u32 %v1832, 7
        %v1834 = vsub.s32 0, %v1833
        %v1835 = vrot.slane %v1826, %v1834
        %v1836 = vlaneseq
        %v1837 = vshrl.u32 %v1836, 7
        %v1838 = vsub.s32 1, %v1837
        %v1839 = vrot.slane %v1826, %v1838
        %v1906 = vunpack.c.l.b16 %v1762
        %v1907 = vunpack.c.h.b16 %v1762
        %v1908 = vunpack.c.l.b16 %v1763
        %v1909 = vunpack.c.h.b16 %v1763
        %v1910 = vunpack.c.l.b16 %v1764
        %v1911 = vunpack.c.h.b16 %v1764
        %v1912 = vunpack.c.l.b16 %v1765
        %v1913 = vunpack.c.h.b16 %v1765
        %v1914 = vunpack.c.l.b16 %v1766
        %v1915 = vunpack.c.h.b16 %v1766
        %v1916 = vunpack.c.l.b16 %v1767
        %v1917 = vunpack.c.h.b16 %v1767
        %v1918 = vunpack.c.l.b16 %v1768
        %v1919 = vunpack.c.h.b16 %v1768
        %v1920 = vunpack.c.l.b16 %v1769
        %v1921 = vunpack.c.h.b16 %v1769
        %v1922 = vunpack.c.l.b16 %v1770
        %v1923 = vunpack.c.h.b16 %v1770
        %v1924 = vunpack.c.l.b16 %v1771
        %v1925 = vunpack.c.h.b16 %v1771
        %v1926 = vunpack.c.l.b16 %v1772
        %v1927 = vunpack.c.h.b16 %v1772
        %v1928 = vunpack.c.l.b16 %v1773
        %v1929 = vunpack.c.h.b16 %v1773
        %v1930 = vunpack.c.l.b16 %v1774
        %v1931 = vunpack.c.h.b16 %v1774
        %v1932 = vunpack.c.l.b16 %v1775
        %v1933 = vunpack.c.h.b16 %v1775
        %v1934 = vunpack.c.l.b16 %v1776
        %v1935 = vunpack.c.h.b16 %v1776
        %v1936 = vunpack.c.l.b16 %v1777
        %v1937 = vunpack.c.h.b16 %v1777
        %v1938 = vunpack.c.l.b16 %v1778
        %v1939 = vunpack.c.h.b16 %v1778
        %v1940 = vunpack.c.l.b16 %v1779
        %v1941 = vunpack.c.h.b16 %v1779
        %v1942 = vunpack.c.l.b16 %v1780
        %v1943 = vunpack.c.h.b16 %v1780
        %v1944 = vunpack.c.l.b16 %v1781
        %v1945 = vunpack.c.h.b16 %v1781
        %v1946 = vunpack.c.l.b16 %v1782
        %v1947 = vunpack.c.h.b16 %v1782
        %v1948 = vunpack.c.l.b16 %v1783
        %v1949 = vunpack.c.h.b16 %v1783
        %v1950 = vunpack.c.l.b16 %v1784
        %v1951 = vunpack.c.h.b16 %v1784
        %v1952 = vunpack.c.l.b16 %v1785
        %v1953 = vunpack.c.h.b16 %v1785
        %v1954 = vunpack.c.l.b16 %v1786
        %v1955 = vunpack.c.h.b16 %v1786
        %v1956 = vunpack.c.l.b16 %v1787
        %v1957 = vunpack.c.h.b16 %v1787
        %v1958 = vunpack.c.l.b16 %v1788
        %v1959 = vunpack.c.h.b16 %v1788
        %v1960 = vunpack.c.l.b16 %v1789
        %v1961 = vunpack.c.h.b16 %v1789
        %v1962 = vunpack.c.l.b16 %v1790
        %v1963 = vunpack.c.h.b16 %v1790
        %v1964 = vunpack.c.l.b16 %v1791
        %v1965 = vunpack.c.h.b16 %v1791
        %v1966 = vunpack.c.l.b16 %v1792
        %v1967 = vunpack.c.h.b16 %v1792
        %v1968 = vunpack.c.l.b16 %v1793
        %v1969 = vunpack.c.h.b16 %v1793
        %v1970 = vunpack.c.l.b16 %v1794
        %v1971 = vunpack.c.h.b16 %v1794
        %v1972 = vunpack.c.l.b16 %v1795
        %v1973 = vunpack.c.h.b16 %v1795
        %v1974 = vunpack.c.l.b16 %v1796
        %v1975 = vunpack.c.h.b16 %v1796
        %v1976 = vunpack.c.l.b16 %v1797
        %v1977 = vunpack.c.h.b16 %v1797
        %v1978 = vunpack.c.l.b16 %v1798
        %v1979 = vunpack.c.h.b16 %v1798
        %v1980 = vunpack.c.l.b16 %v1799
        %v1981 = vunpack.c.h.b16 %v1799
        %v1982 = vunpack.c.l.b16 %v1800
        %v1983 = vunpack.c.h.b16 %v1800
        %v1984 = vunpack.c.l.b16 %v1801
        %v1985 = vunpack.c.h.b16 %v1801
        %v1986 = vunpack.c.l.b16 %v1802
        %v1987 = vunpack.c.h.b16 %v1802
        %v1988 = vunpack.c.l.b16 %v1803
        %v1989 = vunpack.c.h.b16 %v1803
        %v1990 = vunpack.c.l.b16 %v1804
        %v1991 = vunpack.c.h.b16 %v1804
        %v1992 = vunpack.c.l.b16 %v1805
        %v1993 = vunpack.c.h.b16 %v1805
        %v1994 = vunpack.c.l.b16 %v1806
        %v1995 = vunpack.c.h.b16 %v1806
        %v1996 = vunpack.c.l.b16 %v1807
        %v1997 = vunpack.c.h.b16 %v1807
        %v1998 = vunpack.c.l.b16 %v1808
        %v1999 = vunpack.c.h.b16 %v1808
        %v2000 = vunpack.c.l.b16 %v1809
        %v2001 = vunpack.c.h.b16 %v1809
        %v2002 = vunpack.c.l.b16 %v1810
        %v2003 = vunpack.c.h.b16 %v1810
        %v2004 = vunpack.c.l.b16 %v1811
        %v2005 = vunpack.c.h.b16 %v1811
        %v2006 = vunpack.c.l.b16 %v1812
        %v2007 = vunpack.c.h.b16 %v1812
        %v2008 = vunpack.c.l.b16 %v1813
        %v2009 = vunpack.c.h.b16 %v1813
        %v2010 = vunpack.c.l.b16 %v1814
        %v2011 = vunpack.c.h.b16 %v1814
        %v2012 = vunpack.c.l.b16 %v1815
        %v2013 = vunpack.c.h.b16 %v1815
        %v2014 = vunpack.c.l.b16 %v1816
        %v2015 = vunpack.c.h.b16 %v1816
        %v2016 = vunpack.c.l.b16 %v1817
        %v2017 = vunpack.c.h.b16 %v1817
        %v2018 = vunpack.c.l.b16 %v1818
        %v2019 = vunpack.c.h.b16 %v1818
        %v2020 = vunpack.c.l.b16 %v1819
        %v2021 = vunpack.c.h.b16 %v1819
        %v2022 = vunpack.c.l.b16 %v1820
        %v2023 = vunpack.c.h.b16 %v1820
        %v2024 = vunpack.c.l.b16 %v1821
        %v2025 = vunpack.c.h.b16 %v1821
        %v2026 = vunpack.c.l.b16 %v1822
        %v2027 = vunpack.c.h.b16 %v1822
        %v2028 = vunpack.c.l.b16 %v1823
        %v2029 = vunpack.c.h.b16 %v1823
        %v2030 = vunpack.c.l.b16 %v1824
        %v2031 = vunpack.c.h.b16 %v1824
        %v2032 = vunpack.c.l.b16 %v1825
        %v2033 = vunpack.c.h.b16 %v1825
        %v2034 = vpack.c.b16 %v1908, %v1906
        %v2035 = vpack.c.b16 %v1909, %v1907
        %v2036 = vpack.c.b16 %v1912, %v1910
        %v2037 = vpack.c.b16 %v1913, %v1911
        %v2038 = vpack.c.b16 %v1916, %v1914
        %v2039 = vpack.c.b16 %v1917, %v1915
        %v2040 = vpack.c.b16 %v1920, %v1918
        %v2041 = vpack.c.b16 %v1921, %v1919
        %v2042 = vpack.c.b16 %v1924, %v1922
        %v2043 = vpack.c.b16 %v1925, %v1923
        %v2044 = vpack.c.b16 %v1928, %v1926
        %v2045 = vpack.c.b16 %v1929, %v1927
        %v2046 = vpack.c.b16 %v1932, %v1930
        %v2047 = vpack.c.b16 %v1933, %v1931
        %v2048 = vpack.c.b16 %v1936, %v1934
        %v2049 = vpack.c.b16 %v1937, %v1935
        %v2050 = vpack.c.b16 %v1940, %v1938
        %v2051 = vpack.c.b16 %v1941, %v1939
        %v2052 = vpack.c.b16 %v1944, %v1942
        %v2053 = vpack.c.b16 %v1945, %v1943
        %v2054 = vpack.c.b16 %v1948, %v1946
        %v2055 = vpack.c.b16 %v1949, %v1947
        %v2056 = vpack.c.b16 %v1952, %v1950
        %v2057 = vpack.c.b16 %v1953, %v1951
        %v2058 = vpack.c.b16 %v1956, %v1954
        %v2059 = vpack.c.b16 %v1957, %v1955
        %v2060 = vpack.c.b16 %v1960, %v1958
        %v2061 = vpack.c.b16 %v1961, %v1959
        %v2062 = vpack.c.b16 %v1964, %v1962
        %v2063 = vpack.c.b16 %v1965, %v1963
        %v2064 = vpack.c.b16 %v1968, %v1966
        %v2065 = vpack.c.b16 %v1969, %v1967
        %v2066 = vpack.c.b16 %v1972, %v1970
        %v2067 = vpack.c.b16 %v1973, %v1971
        %v2068 = vpack.c.b16 %v1976, %v1974
        %v2069 = vpack.c.b16 %v1977, %v1975
        %v2070 = vpack.c.b16 %v1980, %v1978
        %v2071 = vpack.c.b16 %v1981, %v1979
        %v2072 = vpack.c.b16 %v1984, %v1982
        %v2073 = vpack.c.b16 %v1985, %v1983
        %v2074 = vpack.c.b16 %v1988, %v1986
        %v2075 = vpack.c.b16 %v1989, %v1987
        %v2076 = vpack.c.b16 %v1992, %v1990
        %v2077 = vpack.c.b16 %v1993, %v1991
        %v2078 = vpack.c.b16 %v1996, %v1994
        %v2079 = vpack.c.b16 %v1997, %v1995
        %v2080 = vpack.c.b16 %v2000, %v1998
        %v2081 = vpack.c.b16 %v2001, %v1999
        %v2082 = vpack.c.b16 %v2004, %v2002
        %v2083 = vpack.c.b16 %v2005, %v2003
        %v2084 = vpack.c.b16 %v2008, %v2006
        %v2085 = vpack.c.b16 %v2009, %v2007
        %v2086 = vpack.c.b16 %v2012, %v2010
        %v2087 = vpack.c.b16 %v2013, %v2011
        %v2088 = vpack.c.b16 %v2016, %v2014
        %v2089 = vpack.c.b16 %v2017, %v2015
        %v2090 = vpack.c.b16 %v2020, %v2018
        %v2091 = vpack.c.b16 %v2021, %v2019
        %v2092 = vpack.c.b16 %v2024, %v2022
        %v2093 = vpack.c.b16 %v2025, %v2023
        %v2094 = vpack.c.b16 %v2028, %v2026
        %v2095 = vpack.c.b16 %v2029, %v2027
        %v2096 = vpack.c.b16 %v2032, %v2030
        %v2097 = vpack.c.b16 %v2033, %v2031
        %2162 = vmatprep.subr.bf16.mxu0 %v2035
        %2163 = vmatpush1.bf16.msra.mxu0 %v2034
        %2164 = vmatprep.subr.bf16.mxu0 %v2037
        %2165 = vmatpush1.bf16.msra.mxu0 %v2036
        %2166 = vmatprep.subr.bf16.mxu0 %v2039
        %2167 = vmatpush1.bf16.msra.mxu0 %v2038
        %2168 = vmatprep.subr.bf16.mxu0 %v2041
        %2169 = vmatpush1.bf16.msra.mxu0 %v2040
        %2170 = vmatprep.subr.bf16.mxu0 %v2043
        %2171 = vmatpush1.bf16.msra.mxu0 %v2042
        %2172 = vmatprep.subr.bf16.mxu0 %v2045
        %2173 = vmatpush1.bf16.msra.mxu0 %v2044
        %2174 = vmatprep.subr.bf16.mxu0 %v2047
        %2175 = vmatpush1.bf16.msra.mxu0 %v2046
        %2176 = vmatprep.subr.bf16.mxu0 %v2049
        %2177 = vmatpush1.bf16.msra.mxu0 %v2048
        %2178 = vmatprep.subr.bf16.mxu0 %v2051
        %2179 = vmatpush1.bf16.msra.mxu0 %v2050
        %2180 = vmatprep.subr.bf16.mxu0 %v2053
        %2181 = vmatpush1.bf16.msra.mxu0 %v2052
        %2182 = vmatprep.subr.bf16.mxu0 %v2055
        %2183 = vmatpush1.bf16.msra.mxu0 %v2054
        %2184 = vmatprep.subr.bf16.mxu0 %v2057
        %2185 = vmatpush1.bf16.msra.mxu0 %v2056
        %2186 = vmatprep.subr.bf16.mxu0 %v2059
        %2187 = vmatpush1.bf16.msra.mxu0 %v2058
        %2188 = vmatprep.subr.bf16.mxu0 %v2061
        %2189 = vmatpush1.bf16.msra.mxu0 %v2060
        %2190 = vmatprep.subr.bf16.mxu0 %v2063
        %2191 = vmatpush1.bf16.msra.mxu0 %v2062
        %2192 = vmatprep.subr.bf16.mxu0 %v2065
        %2193 = vmatpush1.bf16.msra.mxu0 %v2064
        %2194 = vmatprep.mubr.bf16.mxu0 %v1828
        %2195 = vmatmul.mubr.bf16.gmra.mrb[0].mxu0 %v1827
        %v2196 = vpop.f32.mrb[0].mxu0
        %v2197 = vadd.f32 %v1835, %v2196
        %v2198 = vpop.f32.mrb[0].mxu0
        %v2199 = vadd.f32 %v1839, %v2198
        %v2200 = vpop.f32.mrb[0].mxu0
        %v2201 = vpop.f32.mrb[0].mxu0
        %2202 = vdwg.mxu0
        %2203 = vmatprep.subr.bf16.mxu0 %v2067
        %2204 = vmatpush1.bf16.msra.mxu0 %v2066
        %2205 = vmatprep.subr.bf16.mxu0 %v2069
        %2206 = vmatpush1.bf16.msra.mxu0 %v2068
        %2207 = vmatprep.subr.bf16.mxu0 %v2071
        %2208 = vmatpush1.bf16.msra.mxu0 %v2070
        %2209 = vmatprep.subr.bf16.mxu0 %v2073
        %2210 = vmatpush1.bf16.msra.mxu0 %v2072
        %2211 = vmatprep.subr.bf16.mxu0 %v2075
        %2212 = vmatpush1.bf16.msra.mxu0 %v2074
        %2213 = vmatprep.subr.bf16.mxu0 %v2077
        %2214 = vmatpush1.bf16.msra.mxu0 %v2076
        %2215 = vmatprep.subr.bf16.mxu0 %v2079
        %2216 = vmatpush1.bf16.msra.mxu0 %v2078
        %2217 = vmatprep.subr.bf16.mxu0 %v2081
        %2218 = vmatpush1.bf16.msra.mxu0 %v2080
        %2219 = vmatprep.subr.bf16.mxu0 %v2083
        %2220 = vmatpush1.bf16.msra.mxu0 %v2082
        %2221 = vmatprep.subr.bf16.mxu0 %v2085
        %2222 = vmatpush1.bf16.msra.mxu0 %v2084
        %2223 = vmatprep.subr.bf16.mxu0 %v2087
        %2224 = vmatpush1.bf16.msra.mxu0 %v2086
        %2225 = vmatprep.subr.bf16.mxu0 %v2089
        %2226 = vmatpush1.bf16.msra.mxu0 %v2088
        %2227 = vmatprep.subr.bf16.mxu0 %v2091
        %2228 = vmatpush1.bf16.msra.mxu0 %v2090
        %2229 = vmatprep.subr.bf16.mxu0 %v2093
        %2230 = vmatpush1.bf16.msra.mxu0 %v2092
        %2231 = vmatprep.subr.bf16.mxu0 %v2095
        %2232 = vmatpush1.bf16.msra.mxu0 %v2094
        %2233 = vmatprep.subr.bf16.mxu0 %v2097
        %2234 = vmatpush1.bf16.msra.mxu0 %v2096
        %2235 = vmatprep.mubr.bf16.mxu0 %v1830
        %2236 = vmatmul.mubr.bf16.gmra.mrb[0].mxu0 %v1829
        %v2237 = vpop.f32.mrb[0].mxu0
        %v2238 = vadd.f32 %v2197, %v2237
        %v2239 = vpop.f32.mrb[0].mxu0
        %v2240 = vadd.f32 %v2199, %v2239
        %v2241 = vpop.f32.mrb[0].mxu0
        %v2242 = vpop.f32.mrb[0].mxu0
        %2243 = vdwg.mxu0
        %v2244 = vmax.f32 %v2238, 0.0
        %v2245 = vmax.f32 %v2240, 0.0
        %v2248 = vrot.slane %v2244, 2
        %v2249 = vrot.slane %v2245, 2
        %v2252 = vrot.slane %v2244, 4
        %v2253 = vrot.slane %v2245, 4
        %v2256 = vrot.slane %v2244, 6
        %v2257 = vrot.slane %v2245, 6
        %v2260 = vld [vmem:[%s1035] sm:$0xff]
        %v2261 = vld [vmem:[%s1035 + $0x8] sm:$0xff]
        %v2262 = vld [vmem:[%s1035 + $0x10] sm:$0xff]
        %v2263 = vld [vmem:[%s1035 + $0x18] sm:$0xff]
        %v2264 = vld [vmem:[%s1035 + $0x20] sm:$0xff]
        %v2265 = vld [vmem:[%s1035 + $0x28] sm:$0xff]
        %v2266 = vld [vmem:[%s1035 + $0x30] sm:$0xff]
        %v2267 = vld [vmem:[%s1035 + $0x38] sm:$0xff]
        %v2268 = vld [vmem:[%s1035 + $0x40] sm:$0xff]
        %v2269 = vld [vmem:[%s1035 + $0x48] sm:$0xff]
        %v2270 = vld [vmem:[%s1035 + $0x50] sm:$0xff]
        %v2271 = vld [vmem:[%s1035 + $0x58] sm:$0xff]
        %v2272 = vld [vmem:[%s1035 + $0x60] sm:$0xff]
        %v2273 = vld [vmem:[%s1035 + $0x68] sm:$0xff]
        %v2274 = vld [vmem:[%s1035 + $0x70] sm:$0xff]
        %v2275 = vld [vmem:[%s1035 + $0x78] sm:$0xff]
        %v2276 = vld [vmem:[%s1035 + $0x80] sm:$0xff]
        %v2277 = vld [vmem:[%s1035 + $0x88] sm:$0xff]
        %v2278 = vld [vmem:[%s1035 + $0x90] sm:$0xff]
        %v2279 = vld [vmem:[%s1035 + $0x98] sm:$0xff]
        %v2280 = vld [vmem:[%s1035 + $0xa0] sm:$0xff]
        %v2281 = vld [vmem:[%s1035 + $0xa8] sm:$0xff]
        %v2282 = vld [vmem:[%s1035 + $0xb0] sm:$0xff]
        %v2283 = vld [vmem:[%s1035 + $0xb8] sm:$0xff]
        %v2284 = vld [vmem:[%s1035 + $0xc0] sm:$0xff]
        %v2285 = vld [vmem:[%s1035 + $0xc8] sm:$0xff]
        %v2286 = vld [vmem:[%s1035 + $0xd0] sm:$0xff]
        %v2287 = vld [vmem:[%s1035 + $0xd8] sm:$0xff]
        %v2288 = vld [vmem:[%s1035 + $0xe0] sm:$0xff]
        %v2289 = vld [vmem:[%s1035 + $0xe8] sm:$0xff]
        %v2290 = vld [vmem:[%s1035 + $0xf0] sm:$0xff]
        %v2291 = vld [vmem:[%s1035 + $0xf8] sm:$0xff]
        %v2292 = vld [vmem:[%s1035 + $0x100] sm:$0xff]
        %v2293 = vld [vmem:[%s1035 + $0x108] sm:$0xff]
        %v2294 = vld [vmem:[%s1035 + $0x110] sm:$0xff]
        %v2295 = vld [vmem:[%s1035 + $0x118] sm:$0xff]
        %v2296 = vld [vmem:[%s1035 + $0x120] sm:$0xff]
        %v2297 = vld [vmem:[%s1035 + $0x128] sm:$0xff]
        %v2298 = vld [vmem:[%s1035 + $0x130] sm:$0xff]
        %v2299 = vld [vmem:[%s1035 + $0x138] sm:$0xff]
        %v2300 = vld [vmem:[%s1035 + $0x140] sm:$0xff]
        %v2301 = vld [vmem:[%s1035 + $0x148] sm:$0xff]
        %v2302 = vld [vmem:[%s1035 + $0x150] sm:$0xff]
        %v2303 = vld [vmem:[%s1035 + $0x158] sm:$0xff]
        %v2304 = vld [vmem:[%s1035 + $0x160] sm:$0xff]
        %v2305 = vld [vmem:[%s1035 + $0x168] sm:$0xff]
        %v2306 = vld [vmem:[%s1035 + $0x170] sm:$0xff]
        %v2307 = vld [vmem:[%s1035 + $0x178] sm:$0xff]
        %v2308 = vld [vmem:[%s1035 + $0x180] sm:$0xff]
        %v2309 = vld [vmem:[%s1035 + $0x188] sm:$0xff]
        %v2310 = vld [vmem:[%s1035 + $0x190] sm:$0xff]
        %v2311 = vld [vmem:[%s1035 + $0x198] sm:$0xff]
        %v2312 = vld [vmem:[%s1035 + $0x1a0] sm:$0xff]
        %v2313 = vld [vmem:[%s1035 + $0x1a8] sm:$0xff]
        %v2314 = vld [vmem:[%s1035 + $0x1b0] sm:$0xff]
        %v2315 = vld [vmem:[%s1035 + $0x1b8] sm:$0xff]
        %v2316 = vld [vmem:[%s1035 + $0x1c0] sm:$0xff]
        %v2317 = vld [vmem:[%s1035 + $0x1c8] sm:$0xff]
        %v2318 = vld [vmem:[%s1035 + $0x1d0] sm:$0xff]
        %v2319 = vld [vmem:[%s1035 + $0x1d8] sm:$0xff]
        %v2320 = vld [vmem:[%s1035 + $0x1e0] sm:$0xff]
        %v2321 = vld [vmem:[%s1035 + $0x1e8] sm:$0xff]
        %v2322 = vld [vmem:[%s1035 + $0x1f0] sm:$0xff]
        %v2323 = vld [vmem:[%s1035 + $0x1f8] sm:$0xff]
        %v2324 = vld [vmem:[%s1035 + $0x200] sm:$0xff]
        %v2325 = vld [vmem:[%s1035 + $0x208] sm:$0xff]
        %v2326 = vld [vmem:[%s1035 + $0x210] sm:$0xff]
        %v2327 = vld [vmem:[%s1035 + $0x218] sm:$0xff]
        %v2328 = vld [vmem:[%s1035 + $0x220] sm:$0xff]
        %v2329 = vld [vmem:[%s1035 + $0x228] sm:$0xff]
        %v2330 = vld [vmem:[%s1035 + $0x230] sm:$0xff]
        %v2331 = vld [vmem:[%s1035 + $0x238] sm:$0xff]
        %v2332 = vld [vmem:[%s1035 + $0x240] sm:$0xff]
        %v2333 = vld [vmem:[%s1035 + $0x248] sm:$0xff]
        %v2334 = vld [vmem:[%s1035 + $0x250] sm:$0xff]
        %v2335 = vld [vmem:[%s1035 + $0x258] sm:$0xff]
        %v2336 = vld [vmem:[%s1035 + $0x260] sm:$0xff]
        %v2337 = vld [vmem:[%s1035 + $0x268] sm:$0xff]
        %v2338 = vld [vmem:[%s1035 + $0x270] sm:$0xff]
        %v2339 = vld [vmem:[%s1035 + $0x278] sm:$0xff]
        %v2340 = vld [vmem:[%s1035 + $0x280] sm:$0xff]
        %v2341 = vld [vmem:[%s1035 + $0x288] sm:$0xff]
        %v2342 = vld [vmem:[%s1035 + $0x290] sm:$0xff]
        %v2343 = vld [vmem:[%s1035 + $0x298] sm:$0xff]
        %v2344 = vld [vmem:[%s1035 + $0x2a0] sm:$0xff]
        %v2345 = vld [vmem:[%s1035 + $0x2a8] sm:$0xff]
        %v2346 = vld [vmem:[%s1035 + $0x2b0] sm:$0xff]
        %v2347 = vld [vmem:[%s1035 + $0x2b8] sm:$0xff]
        %v2348 = vld [vmem:[%s1035 + $0x2c0] sm:$0xff]
        %v2349 = vld [vmem:[%s1035 + $0x2c8] sm:$0xff]
        %v2350 = vld [vmem:[%s1035 + $0x2d0] sm:$0xff]
        %v2351 = vld [vmem:[%s1035 + $0x2d8] sm:$0xff]
        %v2352 = vld [vmem:[%s1035 + $0x2e0] sm:$0xff]
        %v2353 = vld [vmem:[%s1035 + $0x2e8] sm:$0xff]
        %v2354 = vld [vmem:[%s1035 + $0x2f0] sm:$0xff]
        %v2355 = vld [vmem:[%s1035 + $0x2f8] sm:$0xff]
        %v2356 = vld [vmem:[%s1035 + $0x300] sm:$0xff]
        %v2357 = vld [vmem:[%s1035 + $0x308] sm:$0xff]
        %v2358 = vld [vmem:[%s1035 + $0x310] sm:$0xff]
        %v2359 = vld [vmem:[%s1035 + $0x318] sm:$0xff]
        %v2360 = vld [vmem:[%s1035 + $0x320] sm:$0xff]
        %v2361 = vld [vmem:[%s1035 + $0x328] sm:$0xff]
        %v2362 = vld [vmem:[%s1035 + $0x330] sm:$0xff]
        %v2363 = vld [vmem:[%s1035 + $0x338] sm:$0xff]
        %v2364 = vld [vmem:[%s1035 + $0x340] sm:$0xff]
        %v2365 = vld [vmem:[%s1035 + $0x348] sm:$0xff]
        %v2366 = vld [vmem:[%s1035 + $0x350] sm:$0xff]
        %v2367 = vld [vmem:[%s1035 + $0x358] sm:$0xff]
        %v2368 = vld [vmem:[%s1035 + $0x360] sm:$0xff]
        %v2369 = vld [vmem:[%s1035 + $0x368] sm:$0xff]
        %v2370 = vld [vmem:[%s1035 + $0x370] sm:$0xff]
        %v2371 = vld [vmem:[%s1035 + $0x378] sm:$0xff]
        %v2372 = vld [vmem:[%s1035 + $0x380] sm:$0xff]
        %v2373 = vld [vmem:[%s1035 + $0x388] sm:$0xff]
        %v2374 = vld [vmem:[%s1035 + $0x390] sm:$0xff]
        %v2375 = vld [vmem:[%s1035 + $0x398] sm:$0xff]
        %v2376 = vld [vmem:[%s1035 + $0x3a0] sm:$0xff]
        %v2377 = vld [vmem:[%s1035 + $0x3a8] sm:$0xff]
        %v2378 = vld [vmem:[%s1035 + $0x3b0] sm:$0xff]
        %v2379 = vld [vmem:[%s1035 + $0x3b8] sm:$0xff]
        %v2380 = vld [vmem:[%s1035 + $0x3c0] sm:$0xff]
        %v2381 = vld [vmem:[%s1035 + $0x3c8] sm:$0xff]
        %v2382 = vld [vmem:[%s1035 + $0x3d0] sm:$0xff]
        %v2383 = vld [vmem:[%s1035 + $0x3d8] sm:$0xff]
        %v2384 = vld [vmem:[%s1035 + $0x3e0] sm:$0xff]
        %v2385 = vld [vmem:[%s1035 + $0x3e8] sm:$0xff]
        %v2386 = vld [vmem:[%s1035 + $0x3f0] sm:$0xff]
        %v2387 = vld [vmem:[%s1035 + $0x3f8] sm:$0xff]
        %v2388 = vld [vmem:[%s1035 + $0x400] sm:$0xff]
        %v2389 = vld [vmem:[%s1035 + $0x408] sm:$0xff]
        %v2390 = vld [vmem:[%s1035 + $0x410] sm:$0xff]
        %v2391 = vld [vmem:[%s1035 + $0x418] sm:$0xff]
        %v2392 = vld [vmem:[%s1035 + $0x420] sm:$0xff]
        %v2393 = vld [vmem:[%s1035 + $0x428] sm:$0xff]
        %v2394 = vld [vmem:[%s1035 + $0x430] sm:$0xff]
        %v2395 = vld [vmem:[%s1035 + $0x438] sm:$0xff]
        %v2396 = vld [vmem:[%s1035 + $0x440] sm:$0xff]
        %v2397 = vld [vmem:[%s1035 + $0x448] sm:$0xff]
        %v2398 = vld [vmem:[%s1035 + $0x450] sm:$0xff]
        %v2399 = vld [vmem:[%s1035 + $0x458] sm:$0xff]
        %v2400 = vld [vmem:[%s1035 + $0x460] sm:$0xff]
        %v2401 = vld [vmem:[%s1035 + $0x468] sm:$0xff]
        %v2402 = vld [vmem:[%s1035 + $0x470] sm:$0xff]
        %v2403 = vld [vmem:[%s1035 + $0x478] sm:$0xff]
        %v2404 = vld [vmem:[%s1035 + $0x480] sm:$0xff]
        %v2405 = vld [vmem:[%s1035 + $0x488] sm:$0xff]
        %v2406 = vld [vmem:[%s1035 + $0x490] sm:$0xff]
        %v2407 = vld [vmem:[%s1035 + $0x498] sm:$0xff]
        %v2408 = vld [vmem:[%s1035 + $0x4a0] sm:$0xff]
        %v2409 = vld [vmem:[%s1035 + $0x4a8] sm:$0xff]
        %v2410 = vld [vmem:[%s1035 + $0x4b0] sm:$0xff]
        %v2411 = vld [vmem:[%s1035 + $0x4b8] sm:$0xff]
        %v2412 = vld [vmem:[%s1035 + $0x4c0] sm:$0xff]
        %v2413 = vld [vmem:[%s1035 + $0x4c8] sm:$0xff]
        %v2414 = vld [vmem:[%s1035 + $0x4d0] sm:$0xff]
        %v2415 = vld [vmem:[%s1035 + $0x4d8] sm:$0xff]
        %v2416 = vld [vmem:[%s1035 + $0x4e0] sm:$0xff]
        %v2417 = vld [vmem:[%s1035 + $0x4e8] sm:$0xff]
        %v2418 = vld [vmem:[%s1035 + $0x4f0] sm:$0xff]
        %v2419 = vld [vmem:[%s1035 + $0x4f8] sm:$0xff]
        %v2420 = vld [vmem:[%s1035 + $0x500] sm:$0xff]
        %v2421 = vld [vmem:[%s1035 + $0x508] sm:$0xff]
        %v2422 = vld [vmem:[%s1035 + $0x510] sm:$0xff]
        %v2423 = vld [vmem:[%s1035 + $0x518] sm:$0xff]
        %v2424 = vld [vmem:[%s1035 + $0x520] sm:$0xff]
        %v2425 = vld [vmem:[%s1035 + $0x528] sm:$0xff]
        %v2426 = vld [vmem:[%s1035 + $0x530] sm:$0xff]
        %v2427 = vld [vmem:[%s1035 + $0x538] sm:$0xff]
        %v2428 = vld [vmem:[%s1035 + $0x540] sm:$0xff]
        %v2429 = vld [vmem:[%s1035 + $0x548] sm:$0xff]
        %v2430 = vld [vmem:[%s1035 + $0x550] sm:$0xff]
        %v2431 = vld [vmem:[%s1035 + $0x558] sm:$0xff]
        %v2432 = vld [vmem:[%s1035 + $0x560] sm:$0xff]
        %v2433 = vld [vmem:[%s1035 + $0x568] sm:$0xff]
        %v2434 = vld [vmem:[%s1035 + $0x570] sm:$0xff]
        %v2435 = vld [vmem:[%s1035 + $0x578] sm:$0xff]
        %v2436 = vld [vmem:[%s1035 + $0x580] sm:$0xff]
        %v2437 = vld [vmem:[%s1035 + $0x588] sm:$0xff]
        %v2438 = vld [vmem:[%s1035 + $0x590] sm:$0xff]
        %v2439 = vld [vmem:[%s1035 + $0x598] sm:$0xff]
        %v2440 = vld [vmem:[%s1035 + $0x5a0] sm:$0xff]
        %v2441 = vld [vmem:[%s1035 + $0x5a8] sm:$0xff]
        %v2442 = vld [vmem:[%s1035 + $0x5b0] sm:$0xff]
        %v2443 = vld [vmem:[%s1035 + $0x5b8] sm:$0xff]
        %v2444 = vld [vmem:[%s1035 + $0x5c0] sm:$0xff]
        %v2445 = vld [vmem:[%s1035 + $0x5c8] sm:$0xff]
        %v2446 = vld [vmem:[%s1035 + $0x5d0] sm:$0xff]
        %v2447 = vld [vmem:[%s1035 + $0x5d8] sm:$0xff]
        %v2448 = vld [vmem:[%s1035 + $0x5e0] sm:$0xff]
        %v2449 = vld [vmem:[%s1035 + $0x5e8] sm:$0xff]
        %v2450 = vld [vmem:[%s1035 + $0x5f0] sm:$0xff]
        %v2451 = vld [vmem:[%s1035 + $0x5f8] sm:$0xff]
        %v2452 = vld [vmem:[%s1035 + $0x600] sm:$0xff]
        %v2453 = vld [vmem:[%s1035 + $0x608] sm:$0xff]
        %v2454 = vld [vmem:[%s1035 + $0x610] sm:$0xff]
        %v2455 = vld [vmem:[%s1035 + $0x618] sm:$0xff]
        %v2456 = vld [vmem:[%s1035 + $0x620] sm:$0xff]
        %v2457 = vld [vmem:[%s1035 + $0x628] sm:$0xff]
        %v2458 = vld [vmem:[%s1035 + $0x630] sm:$0xff]
        %v2459 = vld [vmem:[%s1035 + $0x638] sm:$0xff]
        %v2460 = vld [vmem:[%s1035 + $0x640] sm:$0xff]
        %v2461 = vld [vmem:[%s1035 + $0x648] sm:$0xff]
        %v2462 = vld [vmem:[%s1035 + $0x650] sm:$0xff]
        %v2463 = vld [vmem:[%s1035 + $0x658] sm:$0xff]
        %v2464 = vld [vmem:[%s1035 + $0x660] sm:$0xff]
        %v2465 = vld [vmem:[%s1035 + $0x668] sm:$0xff]
        %v2466 = vld [vmem:[%s1035 + $0x670] sm:$0xff]
        %v2467 = vld [vmem:[%s1035 + $0x678] sm:$0xff]
        %v2468 = vld [vmem:[%s1035 + $0x680] sm:$0xff]
        %v2469 = vld [vmem:[%s1035 + $0x688] sm:$0xff]
        %v2470 = vld [vmem:[%s1035 + $0x690] sm:$0xff]
        %v2471 = vld [vmem:[%s1035 + $0x698] sm:$0xff]
        %v2472 = vld [vmem:[%s1035 + $0x6a0] sm:$0xff]
        %v2473 = vld [vmem:[%s1035 + $0x6a8] sm:$0xff]
        %v2474 = vld [vmem:[%s1035 + $0x6b0] sm:$0xff]
        %v2475 = vld [vmem:[%s1035 + $0x6b8] sm:$0xff]
        %v2476 = vld [vmem:[%s1035 + $0x6c0] sm:$0xff]
        %v2477 = vld [vmem:[%s1035 + $0x6c8] sm:$0xff]
        %v2478 = vld [vmem:[%s1035 + $0x6d0] sm:$0xff]
        %v2479 = vld [vmem:[%s1035 + $0x6d8] sm:$0xff]
        %v2480 = vld [vmem:[%s1035 + $0x6e0] sm:$0xff]
        %v2481 = vld [vmem:[%s1035 + $0x6e8] sm:$0xff]
        %v2482 = vld [vmem:[%s1035 + $0x6f0] sm:$0xff]
        %v2483 = vld [vmem:[%s1035 + $0x6f8] sm:$0xff]
        %v2484 = vld [vmem:[%s1035 + $0x700] sm:$0xff]
        %v2485 = vld [vmem:[%s1035 + $0x708] sm:$0xff]
        %v2486 = vld [vmem:[%s1035 + $0x710] sm:$0xff]
        %v2487 = vld [vmem:[%s1035 + $0x718] sm:$0xff]
        %v2488 = vld [vmem:[%s1035 + $0x720] sm:$0xff]
        %v2489 = vld [vmem:[%s1035 + $0x728] sm:$0xff]
        %v2490 = vld [vmem:[%s1035 + $0x730] sm:$0xff]
        %v2491 = vld [vmem:[%s1035 + $0x738] sm:$0xff]
        %v2492 = vld [vmem:[%s1035 + $0x740] sm:$0xff]
        %v2493 = vld [vmem:[%s1035 + $0x748] sm:$0xff]
        %v2494 = vld [vmem:[%s1035 + $0x750] sm:$0xff]
        %v2495 = vld [vmem:[%s1035 + $0x758] sm:$0xff]
        %v2496 = vld [vmem:[%s1035 + $0x760] sm:$0xff]
        %v2497 = vld [vmem:[%s1035 + $0x768] sm:$0xff]
        %v2498 = vld [vmem:[%s1035 + $0x770] sm:$0xff]
        %v2499 = vld [vmem:[%s1035 + $0x778] sm:$0xff]
        %v2500 = vld [vmem:[%s1035 + $0x780] sm:$0xff]
        %v2501 = vld [vmem:[%s1035 + $0x788] sm:$0xff]
        %v2502 = vld [vmem:[%s1035 + $0x790] sm:$0xff]
        %v2503 = vld [vmem:[%s1035 + $0x798] sm:$0xff]
        %v2504 = vld [vmem:[%s1035 + $0x7a0] sm:$0xff]
        %v2505 = vld [vmem:[%s1035 + $0x7a8] sm:$0xff]
        %v2506 = vld [vmem:[%s1035 + $0x7b0] sm:$0xff]
        %v2507 = vld [vmem:[%s1035 + $0x7b8] sm:$0xff]
        %v2508 = vld [vmem:[%s1035 + $0x7c0] sm:$0xff]
        %v2509 = vld [vmem:[%s1035 + $0x7c8] sm:$0xff]
        %v2510 = vld [vmem:[%s1035 + $0x7d0] sm:$0xff]
        %v2511 = vld [vmem:[%s1035 + $0x7d8] sm:$0xff]
        %v2512 = vld [vmem:[%s1035 + $0x7e0] sm:$0xff]
        %v2513 = vld [vmem:[%s1035 + $0x7e8] sm:$0xff]
        %v2514 = vld [vmem:[%s1035 + $0x7f0] sm:$0xff]
        %v2515 = vld [vmem:[%s1035 + $0x7f8] sm:$0xff]
        %v2516 = vld [vmem:[%s1044] sm:$0xf]
        %v2517 = vpack.c.bf16 %v2244, %v2244
        %v2518 = vpack.c.bf16 %v2245, %v2245
        %v2519 = vpack.c.bf16 %v2248, %v2248
        %v2520 = vpack.c.bf16 %v2249, %v2249
        %v2521 = vpack.c.bf16 %v2252, %v2252
        %v2522 = vpack.c.bf16 %v2253, %v2253
        %v2523 = vpack.c.bf16 %v2256, %v2256
        %v2524 = vpack.c.bf16 %v2257, %v2257
        %v2526 = vlaneseq
        %v2527 = vshrl.u32 %v2526, 7
        %v2528 = vsub.s32 0, %v2527
        %v2529 = vrot.slane %v2516, %v2528
        %v2530 = vlaneseq
        %v2531 = vshrl.u32 %v2530, 7
        %v2532 = vsub.s32 1, %v2531
        %v2533 = vrot.slane %v2516, %v2532
        %v2534 = vlaneseq
        %v2535 = vshrl.u32 %v2534, 7
        %v2536 = vsub.s32 2, %v2535
        %v2537 = vrot.slane %v2516, %v2536
        %v2538 = vlaneseq
        %v2539 = vshrl.u32 %v2538, 7
        %v2540 = vsub.s32 3, %v2539
        %v2541 = vrot.slane %v2516, %v2540
        %v2802 = vunpack.c.l.b16 %v2260
        %v2803 = vunpack.c.h.b16 %v2260
        %v2804 = vunpack.c.l.b16 %v2261
        %v2805 = vunpack.c.h.b16 %v2261
        %v2806 = vunpack.c.l.b16 %v2262
        %v2807 = vunpack.c.h.b16 %v2262
        %v2808 = vunpack.c.l.b16 %v2263
        %v2809 = vunpack.c.h.b16 %v2263
        %v2810 = vunpack.c.l.b16 %v2264
        %v2811 = vunpack.c.h.b16 %v2264
        %v2812 = vunpack.c.l.b16 %v2265
        %v2813 = vunpack.c.h.b16 %v2265
        %v2814 = vunpack.c.l.b16 %v2266
        %v2815 = vunpack.c.h.b16 %v2266
        %v2816 = vunpack.c.l.b16 %v2267
        %v2817 = vunpack.c.h.b16 %v2267
        %v2818 = vunpack.c.l.b16 %v2268
        %v2819 = vunpack.c.h.b16 %v2268
        %v2820 = vunpack.c.l.b16 %v2269
        %v2821 = vunpack.c.h.b16 %v2269
        %v2822 = vunpack.c.l.b16 %v2270
        %v2823 = vunpack.c.h.b16 %v2270
        %v2824 = vunpack.c.l.b16 %v2271
        %v2825 = vunpack.c.h.b16 %v2271
        %v2826 = vunpack.c.l.b16 %v2272
        %v2827 = vunpack.c.h.b16 %v2272
        %v2828 = vunpack.c.l.b16 %v2273
        %v2829 = vunpack.c.h.b16 %v2273
        %v2830 = vunpack.c.l.b16 %v2274
        %v2831 = vunpack.c.h.b16 %v2274
        %v2832 = vunpack.c.l.b16 %v2275
        %v2833 = vunpack.c.h.b16 %v2275
        %v2834 = vunpack.c.l.b16 %v2276
        %v2835 = vunpack.c.h.b16 %v2276
        %v2836 = vunpack.c.l.b16 %v2277
        %v2837 = vunpack.c.h.b16 %v2277
        %v2838 = vunpack.c.l.b16 %v2278
        %v2839 = vunpack.c.h.b16 %v2278
        %v2840 = vunpack.c.l.b16 %v2279
        %v2841 = vunpack.c.h.b16 %v2279
        %v2842 = vunpack.c.l.b16 %v2280
        %v2843 = vunpack.c.h.b16 %v2280
        %v2844 = vunpack.c.l.b16 %v2281
        %v2845 = vunpack.c.h.b16 %v2281
        %v2846 = vunpack.c.l.b16 %v2282
        %v2847 = vunpack.c.h.b16 %v2282
        %v2848 = vunpack.c.l.b16 %v2283
        %v2849 = vunpack.c.h.b16 %v2283
        %v2850 = vunpack.c.l.b16 %v2284
        %v2851 = vunpack.c.h.b16 %v2284
        %v2852 = vunpack.c.l.b16 %v2285
        %v2853 = vunpack.c.h.b16 %v2285
        %v2854 = vunpack.c.l.b16 %v2286
        %v2855 = vunpack.c.h.b16 %v2286
        %v2856 = vunpack.c.l.b16 %v2287
        %v2857 = vunpack.c.h.b16 %v2287
        %v2858 = vunpack.c.l.b16 %v2288
        %v2859 = vunpack.c.h.b16 %v2288
        %v2860 = vunpack.c.l.b16 %v2289
        %v2861 = vunpack.c.h.b16 %v2289
        %v2862 = vunpack.c.l.b16 %v2290
        %v2863 = vunpack.c.h.b16 %v2290
        %v2864 = vunpack.c.l.b16 %v2291
        %v2865 = vunpack.c.h.b16 %v2291
        %v2866 = vunpack.c.l.b16 %v2292
        %v2867 = vunpack.c.h.b16 %v2292
        %v2868 = vunpack.c.l.b16 %v2293
        %v2869 = vunpack.c.h.b16 %v2293
        %v2870 = vunpack.c.l.b16 %v2294
        %v2871 = vunpack.c.h.b16 %v2294
        %v2872 = vunpack.c.l.b16 %v2295
        %v2873 = vunpack.c.h.b16 %v2295
        %v2874 = vunpack.c.l.b16 %v2296
        %v2875 = vunpack.c.h.b16 %v2296
        %v2876 = vunpack.c.l.b16 %v2297
        %v2877 = vunpack.c.h.b16 %v2297
        %v2878 = vunpack.c.l.b16 %v2298
        %v2879 = vunpack.c.h.b16 %v2298
        %v2880 = vunpack.c.l.b16 %v2299
        %v2881 = vunpack.c.h.b16 %v2299
        %v2882 = vunpack.c.l.b16 %v2300
        %v2883 = vunpack.c.h.b16 %v2300
        %v2884 = vunpack.c.l.b16 %v2301
        %v2885 = vunpack.c.h.b16 %v2301
        %v2886 = vunpack.c.l.b16 %v2302
        %v2887 = vunpack.c.h.b16 %v2302
        %v2888 = vunpack.c.l.b16 %v2303
        %v2889 = vunpack.c.h.b16 %v2303
        %v2890 = vunpack.c.l.b16 %v2304
        %v2891 = vunpack.c.h.b16 %v2304
        %v2892 = vunpack.c.l.b16 %v2305
        %v2893 = vunpack.c.h.b16 %v2305
        %v2894 = vunpack.c.l.b16 %v2306
        %v2895 = vunpack.c.h.b16 %v2306
        %v2896 = vunpack.c.l.b16 %v2307
        %v2897 = vunpack.c.h.b16 %v2307
        %v2898 = vunpack.c.l.b16 %v2308
        %v2899 = vunpack.c.h.b16 %v2308
        %v2900 = vunpack.c.l.b16 %v2309
        %v2901 = vunpack.c.h.b16 %v2309
        %v2902 = vunpack.c.l.b16 %v2310
        %v2903 = vunpack.c.h.b16 %v2310
        %v2904 = vunpack.c.l.b16 %v2311
        %v2905 = vunpack.c.h.b16 %v2311
        %v2906 = vunpack.c.l.b16 %v2312
        %v2907 = vunpack.c.h.b16 %v2312
        %v2908 = vunpack.c.l.b16 %v2313
        %v2909 = vunpack.c.h.b16 %v2313
        %v2910 = vunpack.c.l.b16 %v2314
        %v2911 = vunpack.c.h.b16 %v2314
        %v2912 = vunpack.c.l.b16 %v2315
        %v2913 = vunpack.c.h.b16 %v2315
        %v2914 = vunpack.c.l.b16 %v2316
        %v2915 = vunpack.c.h.b16 %v2316
        %v2916 = vunpack.c.l.b16 %v2317
        %v2917 = vunpack.c.h.b16 %v2317
        %v2918 = vunpack.c.l.b16 %v2318
        %v2919 = vunpack.c.h.b16 %v2318
        %v2920 = vunpack.c.l.b16 %v2319
        %v2921 = vunpack.c.h.b16 %v2319
        %v2922 = vunpack.c.l.b16 %v2320
        %v2923 = vunpack.c.h.b16 %v2320
        %v2924 = vunpack.c.l.b16 %v2321
        %v2925 = vunpack.c.h.b16 %v2321
        %v2926 = vunpack.c.l.b16 %v2322
        %v2927 = vunpack.c.h.b16 %v2322
        %v2928 = vunpack.c.l.b16 %v2323
        %v2929 = vunpack.c.h.b16 %v2323
        %v2930 = vunpack.c.l.b16 %v2324
        %v2931 = vunpack.c.h.b16 %v2324
        %v2932 = vunpack.c.l.b16 %v2325
        %v2933 = vunpack.c.h.b16 %v2325
        %v2934 = vunpack.c.l.b16 %v2326
        %v2935 = vunpack.c.h.b16 %v2326
        %v2936 = vunpack.c.l.b16 %v2327
        %v2937 = vunpack.c.h.b16 %v2327
        %v2938 = vunpack.c.l.b16 %v2328
        %v2939 = vunpack.c.h.b16 %v2328
        %v2940 = vunpack.c.l.b16 %v2329
        %v2941 = vunpack.c.h.b16 %v2329
        %v2942 = vunpack.c.l.b16 %v2330
        %v2943 = vunpack.c.h.b16 %v2330
        %v2944 = vunpack.c.l.b16 %v2331
        %v2945 = vunpack.c.h.b16 %v2331
        %v2946 = vunpack.c.l.b16 %v2332
        %v2947 = vunpack.c.h.b16 %v2332
        %v2948 = vunpack.c.l.b16 %v2333
        %v2949 = vunpack.c.h.b16 %v2333
        %v2950 = vunpack.c.l.b16 %v2334
        %v2951 = vunpack.c.h.b16 %v2334
        %v2952 = vunpack.c.l.b16 %v2335
        %v2953 = vunpack.c.h.b16 %v2335
        %v2954 = vunpack.c.l.b16 %v2336
        %v2955 = vunpack.c.h.b16 %v2336
        %v2956 = vunpack.c.l.b16 %v2337
        %v2957 = vunpack.c.h.b16 %v2337
        %v2958 = vunpack.c.l.b16 %v2338
        %v2959 = vunpack.c.h.b16 %v2338
        %v2960 = vunpack.c.l.b16 %v2339
        %v2961 = vunpack.c.h.b16 %v2339
        %v2962 = vunpack.c.l.b16 %v2340
        %v2963 = vunpack.c.h.b16 %v2340
        %v2964 = vunpack.c.l.b16 %v2341
        %v2965 = vunpack.c.h.b16 %v2341
        %v2966 = vunpack.c.l.b16 %v2342
        %v2967 = vunpack.c.h.b16 %v2342
        %v2968 = vunpack.c.l.b16 %v2343
        %v2969 = vunpack.c.h.b16 %v2343
        %v2970 = vunpack.c.l.b16 %v2344
        %v2971 = vunpack.c.h.b16 %v2344
        %v2972 = vunpack.c.l.b16 %v2345
        %v2973 = vunpack.c.h.b16 %v2345
        %v2974 = vunpack.c.l.b16 %v2346
        %v2975 = vunpack.c.h.b16 %v2346
        %v2976 = vunpack.c.l.b16 %v2347
        %v2977 = vunpack.c.h.b16 %v2347
        %v2978 = vunpack.c.l.b16 %v2348
        %v2979 = vunpack.c.h.b16 %v2348
        %v2980 = vunpack.c.l.b16 %v2349
        %v2981 = vunpack.c.h.b16 %v2349
        %v2982 = vunpack.c.l.b16 %v2350
        %v2983 = vunpack.c.h.b16 %v2350
        %v2984 = vunpack.c.l.b16 %v2351
        %v2985 = vunpack.c.h.b16 %v2351
        %v2986 = vunpack.c.l.b16 %v2352
        %v2987 = vunpack.c.h.b16 %v2352
        %v2988 = vunpack.c.l.b16 %v2353
        %v2989 = vunpack.c.h.b16 %v2353
        %v2990 = vunpack.c.l.b16 %v2354
        %v2991 = vunpack.c.h.b16 %v2354
        %v2992 = vunpack.c.l.b16 %v2355
        %v2993 = vunpack.c.h.b16 %v2355
        %v2994 = vunpack.c.l.b16 %v2356
        %v2995 = vunpack.c.h.b16 %v2356
        %v2996 = vunpack.c.l.b16 %v2357
        %v2997 = vunpack.c.h.b16 %v2357
        %v2998 = vunpack.c.l.b16 %v2358
        %v2999 = vunpack.c.h.b16 %v2358
        %v3000 = vunpack.c.l.b16 %v2359
        %v3001 = vunpack.c.h.b16 %v2359
        %v3002 = vunpack.c.l.b16 %v2360
        %v3003 = vunpack.c.h.b16 %v2360
        %v3004 = vunpack.c.l.b16 %v2361
        %v3005 = vunpack.c.h.b16 %v2361
        %v3006 = vunpack.c.l.b16 %v2362
        %v3007 = vunpack.c.h.b16 %v2362
        %v3008 = vunpack.c.l.b16 %v2363
        %v3009 = vunpack.c.h.b16 %v2363
        %v3010 = vunpack.c.l.b16 %v2364
        %v3011 = vunpack.c.h.b16 %v2364
        %v3012 = vunpack.c.l.b16 %v2365
        %v3013 = vunpack.c.h.b16 %v2365
        %v3014 = vunpack.c.l.b16 %v2366
        %v3015 = vunpack.c.h.b16 %v2366
        %v3016 = vunpack.c.l.b16 %v2367
        %v3017 = vunpack.c.h.b16 %v2367
        %v3018 = vunpack.c.l.b16 %v2368
        %v3019 = vunpack.c.h.b16 %v2368
        %v3020 = vunpack.c.l.b16 %v2369
        %v3021 = vunpack.c.h.b16 %v2369
        %v3022 = vunpack.c.l.b16 %v2370
        %v3023 = vunpack.c.h.b16 %v2370
        %v3024 = vunpack.c.l.b16 %v2371
        %v3025 = vunpack.c.h.b16 %v2371
        %v3026 = vunpack.c.l.b16 %v2372
        %v3027 = vunpack.c.h.b16 %v2372
        %v3028 = vunpack.c.l.b16 %v2373
        %v3029 = vunpack.c.h.b16 %v2373
        %v3030 = vunpack.c.l.b16 %v2374
        %v3031 = vunpack.c.h.b16 %v2374
        %v3032 = vunpack.c.l.b16 %v2375
        %v3033 = vunpack.c.h.b16 %v2375
        %v3034 = vunpack.c.l.b16 %v2376
        %v3035 = vunpack.c.h.b16 %v2376
        %v3036 = vunpack.c.l.b16 %v2377
        %v3037 = vunpack.c.h.b16 %v2377
        %v3038 = vunpack.c.l.b16 %v2378
        %v3039 = vunpack.c.h.b16 %v2378
        %v3040 = vunpack.c.l.b16 %v2379
        %v3041 = vunpack.c.h.b16 %v2379
        %v3042 = vunpack.c.l.b16 %v2380
        %v3043 = vunpack.c.h.b16 %v2380
        %v3044 = vunpack.c.l.b16 %v2381
        %v3045 = vunpack.c.h.b16 %v2381
        %v3046 = vunpack.c.l.b16 %v2382
        %v3047 = vunpack.c.h.b16 %v2382
        %v3048 = vunpack.c.l.b16 %v2383
        %v3049 = vunpack.c.h.b16 %v2383
        %v3050 = vunpack.c.l.b16 %v2384
        %v3051 = vunpack.c.h.b16 %v2384
        %v3052 = vunpack.c.l.b16 %v2385
        %v3053 = vunpack.c.h.b16 %v2385
        %v3054 = vunpack.c.l.b16 %v2386
        %v3055 = vunpack.c.h.b16 %v2386
        %v3056 = vunpack.c.l.b16 %v2387
        %v3057 = vunpack.c.h.b16 %v2387
        %v3058 = vunpack.c.l.b16 %v2388
        %v3059 = vunpack.c.h.b16 %v2388
        %v3060 = vunpack.c.l.b16 %v2389
        %v3061 = vunpack.c.h.b16 %v2389
        %v3062 = vunpack.c.l.b16 %v2390
        %v3063 = vunpack.c.h.b16 %v2390
        %v3064 = vunpack.c.l.b16 %v2391
        %v3065 = vunpack.c.h.b16 %v2391
        %v3066 = vunpack.c.l.b16 %v2392
        %v3067 = vunpack.c.h.b16 %v2392
        %v3068 = vunpack.c.l.b16 %v2393
        %v3069 = vunpack.c.h.b16 %v2393
        %v3070 = vunpack.c.l.b16 %v2394
        %v3071 = vunpack.c.h.b16 %v2394
        %v3072 = vunpack.c.l.b16 %v2395
        %v3073 = vunpack.c.h.b16 %v2395
        %v3074 = vunpack.c.l.b16 %v2396
        %v3075 = vunpack.c.h.b16 %v2396
        %v3076 = vunpack.c.l.b16 %v2397
        %v3077 = vunpack.c.h.b16 %v2397
        %v3078 = vunpack.c.l.b16 %v2398
        %v3079 = vunpack.c.h.b16 %v2398
        %v3080 = vunpack.c.l.b16 %v2399
        %v3081 = vunpack.c.h.b16 %v2399
        %v3082 = vunpack.c.l.b16 %v2400
        %v3083 = vunpack.c.h.b16 %v2400
        %v3084 = vunpack.c.l.b16 %v2401
        %v3085 = vunpack.c.h.b16 %v2401
        %v3086 = vunpack.c.l.b16 %v2402
        %v3087 = vunpack.c.h.b16 %v2402
        %v3088 = vunpack.c.l.b16 %v2403
        %v3089 = vunpack.c.h.b16 %v2403
        %v3090 = vunpack.c.l.b16 %v2404
        %v3091 = vunpack.c.h.b16 %v2404
        %v3092 = vunpack.c.l.b16 %v2405
        %v3093 = vunpack.c.h.b16 %v2405
        %v3094 = vunpack.c.l.b16 %v2406
        %v3095 = vunpack.c.h.b16 %v2406
        %v3096 = vunpack.c.l.b16 %v2407
        %v3097 = vunpack.c.h.b16 %v2407
        %v3098 = vunpack.c.l.b16 %v2408
        %v3099 = vunpack.c.h.b16 %v2408
        %v3100 = vunpack.c.l.b16 %v2409
        %v3101 = vunpack.c.h.b16 %v2409
        %v3102 = vunpack.c.l.b16 %v2410
        %v3103 = vunpack.c.h.b16 %v2410
        %v3104 = vunpack.c.l.b16 %v2411
        %v3105 = vunpack.c.h.b16 %v2411
        %v3106 = vunpack.c.l.b16 %v2412
        %v3107 = vunpack.c.h.b16 %v2412
        %v3108 = vunpack.c.l.b16 %v2413
        %v3109 = vunpack.c.h.b16 %v2413
        %v3110 = vunpack.c.l.b16 %v2414
        %v3111 = vunpack.c.h.b16 %v2414
        %v3112 = vunpack.c.l.b16 %v2415
        %v3113 = vunpack.c.h.b16 %v2415
        %v3114 = vunpack.c.l.b16 %v2416
        %v3115 = vunpack.c.h.b16 %v2416
        %v3116 = vunpack.c.l.b16 %v2417
        %v3117 = vunpack.c.h.b16 %v2417
        %v3118 = vunpack.c.l.b16 %v2418
        %v3119 = vunpack.c.h.b16 %v2418
        %v3120 = vunpack.c.l.b16 %v2419
        %v3121 = vunpack.c.h.b16 %v2419
        %v3122 = vunpack.c.l.b16 %v2420
        %v3123 = vunpack.c.h.b16 %v2420
        %v3124 = vunpack.c.l.b16 %v2421
        %v3125 = vunpack.c.h.b16 %v2421
        %v3126 = vunpack.c.l.b16 %v2422
        %v3127 = vunpack.c.h.b16 %v2422
        %v3128 = vunpack.c.l.b16 %v2423
        %v3129 = vunpack.c.h.b16 %v2423
        %v3130 = vunpack.c.l.b16 %v2424
        %v3131 = vunpack.c.h.b16 %v2424
        %v3132 = vunpack.c.l.b16 %v2425
        %v3133 = vunpack.c.h.b16 %v2425
        %v3134 = vunpack.c.l.b16 %v2426
        %v3135 = vunpack.c.h.b16 %v2426
        %v3136 = vunpack.c.l.b16 %v2427
        %v3137 = vunpack.c.h.b16 %v2427
        %v3138 = vunpack.c.l.b16 %v2428
        %v3139 = vunpack.c.h.b16 %v2428
        %v3140 = vunpack.c.l.b16 %v2429
        %v3141 = vunpack.c.h.b16 %v2429
        %v3142 = vunpack.c.l.b16 %v2430
        %v3143 = vunpack.c.h.b16 %v2430
        %v3144 = vunpack.c.l.b16 %v2431
        %v3145 = vunpack.c.h.b16 %v2431
        %v3146 = vunpack.c.l.b16 %v2432
        %v3147 = vunpack.c.h.b16 %v2432
        %v3148 = vunpack.c.l.b16 %v2433
        %v3149 = vunpack.c.h.b16 %v2433
        %v3150 = vunpack.c.l.b16 %v2434
        %v3151 = vunpack.c.h.b16 %v2434
        %v3152 = vunpack.c.l.b16 %v2435
        %v3153 = vunpack.c.h.b16 %v2435
        %v3154 = vunpack.c.l.b16 %v2436
        %v3155 = vunpack.c.h.b16 %v2436
        %v3156 = vunpack.c.l.b16 %v2437
        %v3157 = vunpack.c.h.b16 %v2437
        %v3158 = vunpack.c.l.b16 %v2438
        %v3159 = vunpack.c.h.b16 %v2438
        %v3160 = vunpack.c.l.b16 %v2439
        %v3161 = vunpack.c.h.b16 %v2439
        %v3162 = vunpack.c.l.b16 %v2440
        %v3163 = vunpack.c.h.b16 %v2440
        %v3164 = vunpack.c.l.b16 %v2441
        %v3165 = vunpack.c.h.b16 %v2441
        %v3166 = vunpack.c.l.b16 %v2442
        %v3167 = vunpack.c.h.b16 %v2442
        %v3168 = vunpack.c.l.b16 %v2443
        %v3169 = vunpack.c.h.b16 %v2443
        %v3170 = vunpack.c.l.b16 %v2444
        %v3171 = vunpack.c.h.b16 %v2444
        %v3172 = vunpack.c.l.b16 %v2445
        %v3173 = vunpack.c.h.b16 %v2445
        %v3174 = vunpack.c.l.b16 %v2446
        %v3175 = vunpack.c.h.b16 %v2446
        %v3176 = vunpack.c.l.b16 %v2447
        %v3177 = vunpack.c.h.b16 %v2447
        %v3178 = vunpack.c.l.b16 %v2448
        %v3179 = vunpack.c.h.b16 %v2448
        %v3180 = vunpack.c.l.b16 %v2449
        %v3181 = vunpack.c.h.b16 %v2449
        %v3182 = vunpack.c.l.b16 %v2450
        %v3183 = vunpack.c.h.b16 %v2450
        %v3184 = vunpack.c.l.b16 %v2451
        %v3185 = vunpack.c.h.b16 %v2451
        %v3186 = vunpack.c.l.b16 %v2452
        %v3187 = vunpack.c.h.b16 %v2452
        %v3188 = vunpack.c.l.b16 %v2453
        %v3189 = vunpack.c.h.b16 %v2453
        %v3190 = vunpack.c.l.b16 %v2454
        %v3191 = vunpack.c.h.b16 %v2454
        %v3192 = vunpack.c.l.b16 %v2455
        %v3193 = vunpack.c.h.b16 %v2455
        %v3194 = vunpack.c.l.b16 %v2456
        %v3195 = vunpack.c.h.b16 %v2456
        %v3196 = vunpack.c.l.b16 %v2457
        %v3197 = vunpack.c.h.b16 %v2457
        %v3198 = vunpack.c.l.b16 %v2458
        %v3199 = vunpack.c.h.b16 %v2458
        %v3200 = vunpack.c.l.b16 %v2459
        %v3201 = vunpack.c.h.b16 %v2459
        %v3202 = vunpack.c.l.b16 %v2460
        %v3203 = vunpack.c.h.b16 %v2460
        %v3204 = vunpack.c.l.b16 %v2461
        %v3205 = vunpack.c.h.b16 %v2461
        %v3206 = vunpack.c.l.b16 %v2462
        %v3207 = vunpack.c.h.b16 %v2462
        %v3208 = vunpack.c.l.b16 %v2463
        %v3209 = vunpack.c.h.b16 %v2463
        %v3210 = vunpack.c.l.b16 %v2464
        %v3211 = vunpack.c.h.b16 %v2464
        %v3212 = vunpack.c.l.b16 %v2465
        %v3213 = vunpack.c.h.b16 %v2465
        %v3214 = vunpack.c.l.b16 %v2466
        %v3215 = vunpack.c.h.b16 %v2466
        %v3216 = vunpack.c.l.b16 %v2467
        %v3217 = vunpack.c.h.b16 %v2467
        %v3218 = vunpack.c.l.b16 %v2468
        %v3219 = vunpack.c.h.b16 %v2468
        %v3220 = vunpack.c.l.b16 %v2469
        %v3221 = vunpack.c.h.b16 %v2469
        %v3222 = vunpack.c.l.b16 %v2470
        %v3223 = vunpack.c.h.b16 %v2470
        %v3224 = vunpack.c.l.b16 %v2471
        %v3225 = vunpack.c.h.b16 %v2471
        %v3226 = vunpack.c.l.b16 %v2472
        %v3227 = vunpack.c.h.b16 %v2472
        %v3228 = vunpack.c.l.b16 %v2473
        %v3229 = vunpack.c.h.b16 %v2473
        %v3230 = vunpack.c.l.b16 %v2474
        %v3231 = vunpack.c.h.b16 %v2474
        %v3232 = vunpack.c.l.b16 %v2475
        %v3233 = vunpack.c.h.b16 %v2475
        %v3234 = vunpack.c.l.b16 %v2476
        %v3235 = vunpack.c.h.b16 %v2476
        %v3236 = vunpack.c.l.b16 %v2477
        %v3237 = vunpack.c.h.b16 %v2477
        %v3238 = vunpack.c.l.b16 %v2478
        %v3239 = vunpack.c.h.b16 %v2478
        %v3240 = vunpack.c.l.b16 %v2479
        %v3241 = vunpack.c.h.b16 %v2479
        %v3242 = vunpack.c.l.b16 %v2480
        %v3243 = vunpack.c.h.b16 %v2480
        %v3244 = vunpack.c.l.b16 %v2481
        %v3245 = vunpack.c.h.b16 %v2481
        %v3246 = vunpack.c.l.b16 %v2482
        %v3247 = vunpack.c.h.b16 %v2482
        %v3248 = vunpack.c.l.b16 %v2483
        %v3249 = vunpack.c.h.b16 %v2483
        %v3250 = vunpack.c.l.b16 %v2484
        %v3251 = vunpack.c.h.b16 %v2484
        %v3252 = vunpack.c.l.b16 %v2485
        %v3253 = vunpack.c.h.b16 %v2485
        %v3254 = vunpack.c.l.b16 %v2486
        %v3255 = vunpack.c.h.b16 %v2486
        %v3256 = vunpack.c.l.b16 %v2487
        %v3257 = vunpack.c.h.b16 %v2487
        %v3258 = vunpack.c.l.b16 %v2488
        %v3259 = vunpack.c.h.b16 %v2488
        %v3260 = vunpack.c.l.b16 %v2489
        %v3261 = vunpack.c.h.b16 %v2489
        %v3262 = vunpack.c.l.b16 %v2490
        %v3263 = vunpack.c.h.b16 %v2490
        %v3264 = vunpack.c.l.b16 %v2491
        %v3265 = vunpack.c.h.b16 %v2491
        %v3266 = vunpack.c.l.b16 %v2492
        %v3267 = vunpack.c.h.b16 %v2492
        %v3268 = vunpack.c.l.b16 %v2493
        %v3269 = vunpack.c.h.b16 %v2493
        %v3270 = vunpack.c.l.b16 %v2494
        %v3271 = vunpack.c.h.b16 %v2494
        %v3272 = vunpack.c.l.b16 %v2495
        %v3273 = vunpack.c.h.b16 %v2495
        %v3274 = vunpack.c.l.b16 %v2496
        %v3275 = vunpack.c.h.b16 %v2496
        %v3276 = vunpack.c.l.b16 %v2497
        %v3277 = vunpack.c.h.b16 %v2497
        %v3278 = vunpack.c.l.b16 %v2498
        %v3279 = vunpack.c.h.b16 %v2498
        %v3280 = vunpack.c.l.b16 %v2499
        %v3281 = vunpack.c.h.b16 %v2499
        %v3282 = vunpack.c.l.b16 %v2500
        %v3283 = vunpack.c.h.b16 %v2500
        %v3284 = vunpack.c.l.b16 %v2501
        %v3285 = vunpack.c.h.b16 %v2501
        %v3286 = vunpack.c.l.b16 %v2502
        %v3287 = vunpack.c.h.b16 %v2502
        %v3288 = vunpack.c.l.b16 %v2503
        %v3289 = vunpack.c.h.b16 %v2503
        %v3290 = vunpack.c.l.b16 %v2504
        %v3291 = vunpack.c.h.b16 %v2504
        %v3292 = vunpack.c.l.b16 %v2505
        %v3293 = vunpack.c.h.b16 %v2505
        %v3294 = vunpack.c.l.b16 %v2506
        %v3295 = vunpack.c.h.b16 %v2506
        %v3296 = vunpack.c.l.b16 %v2507
        %v3297 = vunpack.c.h.b16 %v2507
        %v3298 = vunpack.c.l.b16 %v2508
        %v3299 = vunpack.c.h.b16 %v2508
        %v3300 = vunpack.c.l.b16 %v2509
        %v3301 = vunpack.c.h.b16 %v2509
        %v3302 = vunpack.c.l.b16 %v2510
        %v3303 = vunpack.c.h.b16 %v2510
        %v3304 = vunpack.c.l.b16 %v2511
        %v3305 = vunpack.c.h.b16 %v2511
        %v3306 = vunpack.c.l.b16 %v2512
        %v3307 = vunpack.c.h.b16 %v2512
        %v3308 = vunpack.c.l.b16 %v2513
        %v3309 = vunpack.c.h.b16 %v2513
        %v3310 = vunpack.c.l.b16 %v2514
        %v3311 = vunpack.c.h.b16 %v2514
        %v3312 = vunpack.c.l.b16 %v2515
        %v3313 = vunpack.c.h.b16 %v2515
        %v3314 = vpack.c.b16 %v2806, %v2802
        %v3315 = vpack.c.b16 %v2807, %v2803
        %v3316 = vpack.c.b16 %v2808, %v2804
        %v3317 = vpack.c.b16 %v2809, %v2805
        %v3318 = vpack.c.b16 %v2814, %v2810
        %v3319 = vpack.c.b16 %v2815, %v2811
        %v3320 = vpack.c.b16 %v2816, %v2812
        %v3321 = vpack.c.b16 %v2817, %v2813
        %v3322 = vpack.c.b16 %v2822, %v2818
        %v3323 = vpack.c.b16 %v2823, %v2819
        %v3324 = vpack.c.b16 %v2824, %v2820
        %v3325 = vpack.c.b16 %v2825, %v2821
        %v3326 = vpack.c.b16 %v2830, %v2826
        %v3327 = vpack.c.b16 %v2831, %v2827
        %v3328 = vpack.c.b16 %v2832, %v2828
        %v3329 = vpack.c.b16 %v2833, %v2829
        %v3330 = vpack.c.b16 %v2838, %v2834
        %v3331 = vpack.c.b16 %v2839, %v2835
        %v3332 = vpack.c.b16 %v2840, %v2836
        %v3333 = vpack.c.b16 %v2841, %v2837
        %v3334 = vpack.c.b16 %v2846, %v2842
        %v3335 = vpack.c.b16 %v2847, %v2843
        %v3336 = vpack.c.b16 %v2848, %v2844
        %v3337 = vpack.c.b16 %v2849, %v2845
        %v3338 = vpack.c.b16 %v2854, %v2850
        %v3339 = vpack.c.b16 %v2855, %v2851
        %v3340 = vpack.c.b16 %v2856, %v2852
        %v3341 = vpack.c.b16 %v2857, %v2853
        %v3342 = vpack.c.b16 %v2862, %v2858
        %v3343 = vpack.c.b16 %v2863, %v2859
        %v3344 = vpack.c.b16 %v2864, %v2860
        %v3345 = vpack.c.b16 %v2865, %v2861
        %v3346 = vpack.c.b16 %v2870, %v2866
        %v3347 = vpack.c.b16 %v2871, %v2867
        %v3348 = vpack.c.b16 %v2872, %v2868
        %v3349 = vpack.c.b16 %v2873, %v2869
        %v3350 = vpack.c.b16 %v2878, %v2874
        %v3351 = vpack.c.b16 %v2879, %v2875
        %v3352 = vpack.c.b16 %v2880, %v2876
        %v3353 = vpack.c.b16 %v2881, %v2877
        %v3354 = vpack.c.b16 %v2886, %v2882
        %v3355 = vpack.c.b16 %v2887, %v2883
        %v3356 = vpack.c.b16 %v2888, %v2884
        %v3357 = vpack.c.b16 %v2889, %v2885
        %v3358 = vpack.c.b16 %v2894, %v2890
        %v3359 = vpack.c.b16 %v2895, %v2891
        %v3360 = vpack.c.b16 %v2896, %v2892
        %v3361 = vpack.c.b16 %v2897, %v2893
        %v3362 = vpack.c.b16 %v2902, %v2898
        %v3363 = vpack.c.b16 %v2903, %v2899
        %v3364 = vpack.c.b16 %v2904, %v2900
        %v3365 = vpack.c.b16 %v2905, %v2901
        %v3366 = vpack.c.b16 %v2910, %v2906
        %v3367 = vpack.c.b16 %v2911, %v2907
        %v3368 = vpack.c.b16 %v2912, %v2908
        %v3369 = vpack.c.b16 %v2913, %v2909
        %v3370 = vpack.c.b16 %v2918, %v2914
        %v3371 = vpack.c.b16 %v2919, %v2915
        %v3372 = vpack.c.b16 %v2920, %v2916
        %v3373 = vpack.c.b16 %v2921, %v2917
        %v3374 = vpack.c.b16 %v2926, %v2922
        %v3375 = vpack.c.b16 %v2927, %v2923
        %v3376 = vpack.c.b16 %v2928, %v2924
        %v3377 = vpack.c.b16 %v2929, %v2925
        %v3378 = vpack.c.b16 %v2934, %v2930
        %v3379 = vpack.c.b16 %v2935, %v2931
        %v3380 = vpack.c.b16 %v2936, %v2932
        %v3381 = vpack.c.b16 %v2937, %v2933
        %v3382 = vpack.c.b16 %v2942, %v2938
        %v3383 = vpack.c.b16 %v2943, %v2939
        %v3384 = vpack.c.b16 %v2944, %v2940
        %v3385 = vpack.c.b16 %v2945, %v2941
        %v3386 = vpack.c.b16 %v2950, %v2946
        %v3387 = vpack.c.b16 %v2951, %v2947
        %v3388 = vpack.c.b16 %v2952, %v2948
        %v3389 = vpack.c.b16 %v2953, %v2949
        %v3390 = vpack.c.b16 %v2958, %v2954
        %v3391 = vpack.c.b16 %v2959, %v2955
        %v3392 = vpack.c.b16 %v2960, %v2956
        %v3393 = vpack.c.b16 %v2961, %v2957
        %v3394 = vpack.c.b16 %v2966, %v2962
        %v3395 = vpack.c.b16 %v2967, %v2963
        %v3396 = vpack.c.b16 %v2968, %v2964
        %v3397 = vpack.c.b16 %v2969, %v2965
        %v3398 = vpack.c.b16 %v2974, %v2970
        %v3399 = vpack.c.b16 %v2975, %v2971
        %v3400 = vpack.c.b16 %v2976, %v2972
        %v3401 = vpack.c.b16 %v2977, %v2973
        %v3402 = vpack.c.b16 %v2982, %v2978
        %v3403 = vpack.c.b16 %v2983, %v2979
        %v3404 = vpack.c.b16 %v2984, %v2980
        %v3405 = vpack.c.b16 %v2985, %v2981
        %v3406 = vpack.c.b16 %v2990, %v2986
        %v3407 = vpack.c.b16 %v2991, %v2987
        %v3408 = vpack.c.b16 %v2992, %v2988
        %v3409 = vpack.c.b16 %v2993, %v2989
        %v3410 = vpack.c.b16 %v2998, %v2994
        %v3411 = vpack.c.b16 %v2999, %v2995
        %v3412 = vpack.c.b16 %v3000, %v2996
        %v3413 = vpack.c.b16 %v3001, %v2997
        %v3414 = vpack.c.b16 %v3006, %v3002
        %v3415 = vpack.c.b16 %v3007, %v3003
        %v3416 = vpack.c.b16 %v3008, %v3004
        %v3417 = vpack.c.b16 %v3009, %v3005
        %v3418 = vpack.c.b16 %v3014, %v3010
        %v3419 = vpack.c.b16 %v3015, %v3011
        %v3420 = vpack.c.b16 %v3016, %v3012
        %v3421 = vpack.c.b16 %v3017, %v3013
        %v3422 = vpack.c.b16 %v3022, %v3018
        %v3423 = vpack.c.b16 %v3023, %v3019
        %v3424 = vpack.c.b16 %v3024, %v3020
        %v3425 = vpack.c.b16 %v3025, %v3021
        %v3426 = vpack.c.b16 %v3030, %v3026
        %v3427 = vpack.c.b16 %v3031, %v3027
        %v3428 = vpack.c.b16 %v3032, %v3028
        %v3429 = vpack.c.b16 %v3033, %v3029
        %v3430 = vpack.c.b16 %v3038, %v3034
        %v3431 = vpack.c.b16 %v3039, %v3035
        %v3432 = vpack.c.b16 %v3040, %v3036
        %v3433 = vpack.c.b16 %v3041, %v3037
        %v3434 = vpack.c.b16 %v3046, %v3042
        %v3435 = vpack.c.b16 %v3047, %v3043
        %v3436 = vpack.c.b16 %v3048, %v3044
        %v3437 = vpack.c.b16 %v3049, %v3045
        %v3438 = vpack.c.b16 %v3054, %v3050
        %v3439 = vpack.c.b16 %v3055, %v3051
        %v3440 = vpack.c.b16 %v3056, %v3052
        %v3441 = vpack.c.b16 %v3057, %v3053
        %v3442 = vpack.c.b16 %v3062, %v3058
        %v3443 = vpack.c.b16 %v3063, %v3059
        %v3444 = vpack.c.b16 %v3064, %v3060
        %v3445 = vpack.c.b16 %v3065, %v3061
        %v3446 = vpack.c.b16 %v3070, %v3066
        %v3447 = vpack.c.b16 %v3071, %v3067
        %v3448 = vpack.c.b16 %v3072, %v3068
        %v3449 = vpack.c.b16 %v3073, %v3069
        %v3450 = vpack.c.b16 %v3078, %v3074
        %v3451 = vpack.c.b16 %v3079, %v3075
        %v3452 = vpack.c.b16 %v3080, %v3076
        %v3453 = vpack.c.b16 %v3081, %v3077
        %v3454 = vpack.c.b16 %v3086, %v3082
        %v3455 = vpack.c.b16 %v3087, %v3083
        %v3456 = vpack.c.b16 %v3088, %v3084
        %v3457 = vpack.c.b16 %v3089, %v3085
        %v3458 = vpack.c.b16 %v3094, %v3090
        %v3459 = vpack.c.b16 %v3095, %v3091
        %v3460 = vpack.c.b16 %v3096, %v3092
        %v3461 = vpack.c.b16 %v3097, %v3093
        %v3462 = vpack.c.b16 %v3102, %v3098
        %v3463 = vpack.c.b16 %v3103, %v3099
        %v3464 = vpack.c.b16 %v3104, %v3100
        %v3465 = vpack.c.b16 %v3105, %v3101
        %v3466 = vpack.c.b16 %v3110, %v3106
        %v3467 = vpack.c.b16 %v3111, %v3107
        %v3468 = vpack.c.b16 %v3112, %v3108
        %v3469 = vpack.c.b16 %v3113, %v3109
        %v3470 = vpack.c.b16 %v3118, %v3114
        %v3471 = vpack.c.b16 %v3119, %v3115
        %v3472 = vpack.c.b16 %v3120, %v3116
        %v3473 = vpack.c.b16 %v3121, %v3117
        %v3474 = vpack.c.b16 %v3126, %v3122
        %v3475 = vpack.c.b16 %v3127, %v3123
        %v3476 = vpack.c.b16 %v3128, %v3124
        %v3477 = vpack.c.b16 %v3129, %v3125
        %v3478 = vpack.c.b16 %v3134, %v3130
        %v3479 = vpack.c.b16 %v3135, %v3131
        %v3480 = vpack.c.b16 %v3136, %v3132
        %v3481 = vpack.c.b16 %v3137, %v3133
        %v3482 = vpack.c.b16 %v3142, %v3138
        %v3483 = vpack.c.b16 %v3143, %v3139
        %v3484 = vpack.c.b16 %v3144, %v3140
        %v3485 = vpack.c.b16 %v3145, %v3141
        %v3486 = vpack.c.b16 %v3150, %v3146
        %v3487 = vpack.c.b16 %v3151, %v3147
        %v3488 = vpack.c.b16 %v3152, %v3148
        %v3489 = vpack.c.b16 %v3153, %v3149
        %v3490 = vpack.c.b16 %v3158, %v3154
        %v3491 = vpack.c.b16 %v3159, %v3155
        %v3492 = vpack.c.b16 %v3160, %v3156
        %v3493 = vpack.c.b16 %v3161, %v3157
        %v3494 = vpack.c.b16 %v3166, %v3162
        %v3495 = vpack.c.b16 %v3167, %v3163
        %v3496 = vpack.c.b16 %v3168, %v3164
        %v3497 = vpack.c.b16 %v3169, %v3165
        %v3498 = vpack.c.b16 %v3174, %v3170
        %v3499 = vpack.c.b16 %v3175, %v3171
        %v3500 = vpack.c.b16 %v3176, %v3172
        %v3501 = vpack.c.b16 %v3177, %v3173
        %v3502 = vpack.c.b16 %v3182, %v3178
        %v3503 = vpack.c.b16 %v3183, %v3179
        %v3504 = vpack.c.b16 %v3184, %v3180
        %v3505 = vpack.c.b16 %v3185, %v3181
        %v3506 = vpack.c.b16 %v3190, %v3186
        %v3507 = vpack.c.b16 %v3191, %v3187
        %v3508 = vpack.c.b16 %v3192, %v3188
        %v3509 = vpack.c.b16 %v3193, %v3189
        %v3510 = vpack.c.b16 %v3198, %v3194
        %v3511 = vpack.c.b16 %v3199, %v3195
        %v3512 = vpack.c.b16 %v3200, %v3196
        %v3513 = vpack.c.b16 %v3201, %v3197
        %v3514 = vpack.c.b16 %v3206, %v3202
        %v3515 = vpack.c.b16 %v3207, %v3203
        %v3516 = vpack.c.b16 %v3208, %v3204
        %v3517 = vpack.c.b16 %v3209, %v3205
        %v3518 = vpack.c.b16 %v3214, %v3210
        %v3519 = vpack.c.b16 %v3215, %v3211
        %v3520 = vpack.c.b16 %v3216, %v3212
        %v3521 = vpack.c.b16 %v3217, %v3213
        %v3522 = vpack.c.b16 %v3222, %v3218
        %v3523 = vpack.c.b16 %v3223, %v3219
        %v3524 = vpack.c.b16 %v3224, %v3220
        %v3525 = vpack.c.b16 %v3225, %v3221
        %v3526 = vpack.c.b16 %v3230, %v3226
        %v3527 = vpack.c.b16 %v3231, %v3227
        %v3528 = vpack.c.b16 %v3232, %v3228
        %v3529 = vpack.c.b16 %v3233, %v3229
        %v3530 = vpack.c.b16 %v3238, %v3234
        %v3531 = vpack.c.b16 %v3239, %v3235
        %v3532 = vpack.c.b16 %v3240, %v3236
        %v3533 = vpack.c.b16 %v3241, %v3237
        %v3534 = vpack.c.b16 %v3246, %v3242
        %v3535 = vpack.c.b16 %v3247, %v3243
        %v3536 = vpack.c.b16 %v3248, %v3244
        %v3537 = vpack.c.b16 %v3249, %v3245
        %v3538 = vpack.c.b16 %v3254, %v3250
        %v3539 = vpack.c.b16 %v3255, %v3251
        %v3540 = vpack.c.b16 %v3256, %v3252
        %v3541 = vpack.c.b16 %v3257, %v3253
        %v3542 = vpack.c.b16 %v3262, %v3258
        %v3543 = vpack.c.b16 %v3263, %v3259
        %v3544 = vpack.c.b16 %v3264, %v3260
        %v3545 = vpack.c.b16 %v3265, %v3261
        %v3546 = vpack.c.b16 %v3270, %v3266
        %v3547 = vpack.c.b16 %v3271, %v3267
        %v3548 = vpack.c.b16 %v3272, %v3268
        %v3549 = vpack.c.b16 %v3273, %v3269
        %v3550 = vpack.c.b16 %v3278, %v3274
        %v3551 = vpack.c.b16 %v3279, %v3275
        %v3552 = vpack.c.b16 %v3280, %v3276
        %v3553 = vpack.c.b16 %v3281, %v3277
        %v3554 = vpack.c.b16 %v3286, %v3282
        %v3555 = vpack.c.b16 %v3287, %v3283
        %v3556 = vpack.c.b16 %v3288, %v3284
        %v3557 = vpack.c.b16 %v3289, %v3285
        %v3558 = vpack.c.b16 %v3294, %v3290
        %v3559 = vpack.c.b16 %v3295, %v3291
        %v3560 = vpack.c.b16 %v3296, %v3292
        %v3561 = vpack.c.b16 %v3297, %v3293
        %v3562 = vpack.c.b16 %v3302, %v3298
        %v3563 = vpack.c.b16 %v3303, %v3299
        %v3564 = vpack.c.b16 %v3304, %v3300
        %v3565 = vpack.c.b16 %v3305, %v3301
        %v3566 = vpack.c.b16 %v3310, %v3306
        %v3567 = vpack.c.b16 %v3311, %v3307
        %v3568 = vpack.c.b16 %v3312, %v3308
        %v3569 = vpack.c.b16 %v3313, %v3309
        %3826 = vmatprep.subr.bf16.mxu0 %v3315
        %3827 = vmatpush1.bf16.msra.mxu0 %v3314
        %3828 = vmatprep.subr.bf16.mxu0 %v3319
        %3829 = vmatpush1.bf16.msra.mxu0 %v3318
        %3830 = vmatprep.subr.bf16.mxu0 %v3323
        %3831 = vmatpush1.bf16.msra.mxu0 %v3322
        %3832 = vmatprep.subr.bf16.mxu0 %v3327
        %3833 = vmatpush1.bf16.msra.mxu0 %v3326
        %3834 = vmatprep.subr.bf16.mxu0 %v3331
        %3835 = vmatpush1.bf16.msra.mxu0 %v3330
        %3836 = vmatprep.subr.bf16.mxu0 %v3335
        %3837 = vmatpush1.bf16.msra.mxu0 %v3334
        %3838 = vmatprep.subr.bf16.mxu0 %v3339
        %3839 = vmatpush1.bf16.msra.mxu0 %v3338
        %3840 = vmatprep.subr.bf16.mxu0 %v3343
        %3841 = vmatpush1.bf16.msra.mxu0 %v3342
        %3842 = vmatprep.subr.bf16.mxu0 %v3347
        %3843 = vmatpush1.bf16.msra.mxu0 %v3346
        %3844 = vmatprep.subr.bf16.mxu0 %v3351
        %3845 = vmatpush1.bf16.msra.mxu0 %v3350
        %3846 = vmatprep.subr.bf16.mxu0 %v3355
        %3847 = vmatpush1.bf16.msra.mxu0 %v3354
        %3848 = vmatprep.subr.bf16.mxu0 %v3359
        %3849 = vmatpush1.bf16.msra.mxu0 %v3358
        %3850 = vmatprep.subr.bf16.mxu0 %v3363
        %3851 = vmatpush1.bf16.msra.mxu0 %v3362
        %3852 = vmatprep.subr.bf16.mxu0 %v3367
        %3853 = vmatpush1.bf16.msra.mxu0 %v3366
        %3854 = vmatprep.subr.bf16.mxu0 %v3371
        %3855 = vmatpush1.bf16.msra.mxu0 %v3370
        %3856 = vmatprep.subr.bf16.mxu0 %v3375
        %3857 = vmatpush1.bf16.msra.mxu0 %v3374
        %3858 = vmatprep.mubr.bf16.mxu0 %v2518
        %3859 = vmatmul.mubr.bf16.gmra.mrb[0].mxu0 %v2517
        %v3860 = vpop.f32.mrb[0].mxu0
        %v3861 = vadd.f32 %v2529, %v3860
        %v3862 = vpop.f32.mrb[0].mxu0
        %v3863 = vadd.f32 %v2533, %v3862
        %v3864 = vpop.f32.mrb[0].mxu0
        %v3865 = vpop.f32.mrb[0].mxu0
        %3866 = vdwg.mxu0
        %3867 = vmatprep.subr.bf16.mxu0 %v3379
        %3868 = vmatpush1.bf16.msra.mxu0 %v3378
        %3869 = vmatprep.subr.bf16.mxu0 %v3383
        %3870 = vmatpush1.bf16.msra.mxu0 %v3382
        %3871 = vmatprep.subr.bf16.mxu0 %v3387
        %3872 = vmatpush1.bf16.msra.mxu0 %v3386
        %3873 = vmatprep.subr.bf16.mxu0 %v3391
        %3874 = vmatpush1.bf16.msra.mxu0 %v3390
        %3875 = vmatprep.subr.bf16.mxu0 %v3395
        %3876 = vmatpush1.bf16.msra.mxu0 %v3394
        %3877 = vmatprep.subr.bf16.mxu0 %v3399
        %3878 = vmatpush1.bf16.msra.mxu0 %v3398
        %3879 = vmatprep.subr.bf16.mxu0 %v3403
        %3880 = vmatpush1.bf16.msra.mxu0 %v3402
        %3881 = vmatprep.subr.bf16.mxu0 %v3407
        %3882 = vmatpush1.bf16.msra.mxu0 %v3406
        %3883 = vmatprep.subr.bf16.mxu0 %v3411
        %3884 = vmatpush1.bf16.msra.mxu0 %v3410
        %3885 = vmatprep.subr.bf16.mxu0 %v3415
        %3886 = vmatpush1.bf16.msra.mxu0 %v3414
        %3887 = vmatprep.subr.bf16.mxu0 %v3419
        %3888 = vmatpush1.bf16.msra.mxu0 %v3418
        %3889 = vmatprep.subr.bf16.mxu0 %v3423
        %3890 = vmatpush1.bf16.msra.mxu0 %v3422
        %3891 = vmatprep.subr.bf16.mxu0 %v3427
        %3892 = vmatpush1.bf16.msra.mxu0 %v3426
        %3893 = vmatprep.subr.bf16.mxu0 %v3431
        %3894 = vmatpush1.bf16.msra.mxu0 %v3430
        %3895 = vmatprep.subr.bf16.mxu0 %v3435
        %3896 = vmatpush1.bf16.msra.mxu0 %v3434
        %3897 = vmatprep.subr.bf16.mxu0 %v3439
        %3898 = vmatpush1.bf16.msra.mxu0 %v3438
        %3899 = vmatprep.mubr.bf16.mxu0 %v2520
        %3900 = vmatmul.mubr.bf16.gmra.mrb[0].mxu0 %v2519
        %v3901 = vpop.f32.mrb[0].mxu0
        %v3902 = vadd.f32 %v3861, %v3901
        %v3903 = vpop.f32.mrb[0].mxu0
        %v3904 = vadd.f32 %v3863, %v3903
        %v3905 = vpop.f32.mrb[0].mxu0
        %v3906 = vpop.f32.mrb[0].mxu0
        %3907 = vdwg.mxu0
        %3908 = vmatprep.subr.bf16.mxu0 %v3443
        %3909 = vmatpush1.bf16.msra.mxu0 %v3442
        %3910 = vmatprep.subr.bf16.mxu0 %v3447
        %3911 = vmatpush1.bf16.msra.mxu0 %v3446
        %3912 = vmatprep.subr.bf16.mxu0 %v3451
        %3913 = vmatpush1.bf16.msra.mxu0 %v3450
        %3914 = vmatprep.subr.bf16.mxu0 %v3455
        %3915 = vmatpush1.bf16.msra.mxu0 %v3454
        %3916 = vmatprep.subr.bf16.mxu0 %v3459
        %3917 = vmatpush1.bf16.msra.mxu0 %v3458
        %3918 = vmatprep.subr.bf16.mxu0 %v3463
        %3919 = vmatpush1.bf16.msra.mxu0 %v3462
        %3920 = vmatprep.subr.bf16.mxu0 %v3467
        %3921 = vmatpush1.bf16.msra.mxu0 %v3466
        %3922 = vmatprep.subr.bf16.mxu0 %v3471
        %3923 = vmatpush1.bf16.msra.mxu0 %v3470
        %3924 = vmatprep.subr.bf16.mxu0 %v3475
        %3925 = vmatpush1.bf16.msra.mxu0 %v3474
        %3926 = vmatprep.subr.bf16.mxu0 %v3479
        %3927 = vmatpush1.bf16.msra.mxu0 %v3478
        %3928 = vmatprep.subr.bf16.mxu0 %v3483
        %3929 = vmatpush1.bf16.msra.mxu0 %v3482
        %3930 = vmatprep.subr.bf16.mxu0 %v3487
        %3931 = vmatpush1.bf16.msra.mxu0 %v3486
        %3932 = vmatprep.subr.bf16.mxu0 %v3491
        %3933 = vmatpush1.bf16.msra.mxu0 %v3490
        %3934 = vmatprep.subr.bf16.mxu0 %v3495
        %3935 = vmatpush1.bf16.msra.mxu0 %v3494
        %3936 = vmatprep.subr.bf16.mxu0 %v3499
        %3937 = vmatpush1.bf16.msra.mxu0 %v3498
        %3938 = vmatprep.subr.bf16.mxu0 %v3503
        %3939 = vmatpush1.bf16.msra.mxu0 %v3502
        %3940 = vmatprep.mubr.bf16.mxu0 %v2522
        %3941 = vmatmul.mubr.bf16.gmra.mrb[0].mxu0 %v2521
        %v3942 = vpop.f32.mrb[0].mxu0
        %v3943 = vadd.f32 %v3902, %v3942
        %v3944 = vpop.f32.mrb[0].mxu0
        %v3945 = vadd.f32 %v3904, %v3944
        %v3946 = vpop.f32.mrb[0].mxu0
        %v3947 = vpop.f32.mrb[0].mxu0
        %3948 = vdwg.mxu0
        %3949 = vmatprep.subr.bf16.mxu0 %v3507
        %3950 = vmatpush1.bf16.msra.mxu0 %v3506
        %3951 = vmatprep.subr.bf16.mxu0 %v3511
        %3952 = vmatpush1.bf16.msra.mxu0 %v3510
        %3953 = vmatprep.subr.bf16.mxu0 %v3515
        %3954 = vmatpush1.bf16.msra.mxu0 %v3514
        %3955 = vmatprep.subr.bf16.mxu0 %v3519
        %3956 = vmatpush1.bf16.msra.mxu0 %v3518
        %3957 = vmatprep.subr.bf16.mxu0 %v3523
        %3958 = vmatpush1.bf16.msra.mxu0 %v3522
        %3959 = vmatprep.subr.bf16.mxu0 %v3527
        %3960 = vmatpush1.bf16.msra.mxu0 %v3526
        %3961 = vmatprep.subr.bf16.mxu0 %v3531
        %3962 = vmatpush1.bf16.msra.mxu0 %v3530
        %3963 = vmatprep.subr.bf16.mxu0 %v3535
        %3964 = vmatpush1.bf16.msra.mxu0 %v3534
        %3965 = vmatprep.subr.bf16.mxu0 %v3539
        %3966 = vmatpush1.bf16.msra.mxu0 %v3538
        %3967 = vmatprep.subr.bf16.mxu0 %v3543
        %3968 = vmatpush1.bf16.msra.mxu0 %v3542
        %3969 = vmatprep.subr.bf16.mxu0 %v3547
        %3970 = vmatpush1.bf16.msra.mxu0 %v3546
        %3971 = vmatprep.subr.bf16.mxu0 %v3551
        %3972 = vmatpush1.bf16.msra.mxu0 %v3550
        %3973 = vmatprep.subr.bf16.mxu0 %v3555
        %3974 = vmatpush1.bf16.msra.mxu0 %v3554
        %3975 = vmatprep.subr.bf16.mxu0 %v3559
        %3976 = vmatpush1.bf16.msra.mxu0 %v3558
        %3977 = vmatprep.subr.bf16.mxu0 %v3563
        %3978 = vmatpush1.bf16.msra.mxu0 %v3562
        %3979 = vmatprep.subr.bf16.mxu0 %v3567
        %3980 = vmatpush1.bf16.msra.mxu0 %v3566
        %3981 = vmatprep.mubr.bf16.mxu0 %v2524
        %3982 = vmatmul.mubr.bf16.gmra.mrb[0].mxu0 %v2523
        %v3983 = vpop.f32.mrb[0].mxu0
        %v3984 = vadd.f32 %v3943, %v3983
        %v3985 = vpop.f32.mrb[0].mxu0
        %v3986 = vadd.f32 %v3945, %v3985
        %v3987 = vpop.f32.mrb[0].mxu0
        %v3988 = vpop.f32.mrb[0].mxu0
        %3989 = vdwg.mxu0
        %3990 = vmatprep.subr.bf16.mxu0 %v3317
        %3991 = vmatpush1.bf16.msra.mxu0 %v3316
        %3992 = vmatprep.subr.bf16.mxu0 %v3321
        %3993 = vmatpush1.bf16.msra.mxu0 %v3320
        %3994 = vmatprep.subr.bf16.mxu0 %v3325
        %3995 = vmatpush1.bf16.msra.mxu0 %v3324
        %3996 = vmatprep.subr.bf16.mxu0 %v3329
        %3997 = vmatpush1.bf16.msra.mxu0 %v3328
        %3998 = vmatprep.subr.bf16.mxu0 %v3333
        %3999 = vmatpush1.bf16.msra.mxu0 %v3332
        %4000 = vmatprep.subr.bf16.mxu0 %v3337
        %4001 = vmatpush1.bf16.msra.mxu0 %v3336
        %4002 = vmatprep.subr.bf16.mxu0 %v3341
        %4003 = vmatpush1.bf16.msra.mxu0 %v3340
        %4004 = vmatprep.subr.bf16.mxu0 %v3345
        %4005 = vmatpush1.bf16.msra.mxu0 %v3344
        %4006 = vmatprep.subr.bf16.mxu0 %v3349
        %4007 = vmatpush1.bf16.msra.mxu0 %v3348
        %4008 = vmatprep.subr.bf16.mxu0 %v3353
        %4009 = vmatpush1.bf16.msra.mxu0 %v3352
        %4010 = vmatprep.subr.bf16.mxu0 %v3357
        %4011 = vmatpush1.bf16.msra.mxu0 %v3356
        %4012 = vmatprep.subr.bf16.mxu0 %v3361
        %4013 = vmatpush1.bf16.msra.mxu0 %v3360
        %4014 = vmatprep.subr.bf16.mxu0 %v3365
        %4015 = vmatpush1.bf16.msra.mxu0 %v3364
        %4016 = vmatprep.subr.bf16.mxu0 %v3369
        %4017 = vmatpush1.bf16.msra.mxu0 %v3368
        %4018 = vmatprep.subr.bf16.mxu0 %v3373
        %4019 = vmatpush1.bf16.msra.mxu0 %v3372
        %4020 = vmatprep.subr.bf16.mxu0 %v3377
        %4021 = vmatpush1.bf16.msra.mxu0 %v3376
        %4022 = vmatprep.mubr.bf16.mxu0 %v2518
        %4023 = vmatmul.mubr.bf16.gmra.mrb[0].mxu0 %v2517
        %v4024 = vpop.f32.mrb[0].mxu0
        %v4025 = vadd.f32 %v2537, %v4024
        %v4026 = vpop.f32.mrb[0].mxu0
        %v4027 = vadd.f32 %v2541, %v4026
        %v4028 = vpop.f32.mrb[0].mxu0
        %v4029 = vpop.f32.mrb[0].mxu0
        %4030 = vdwg.mxu0
        %4031 = vmatprep.subr.bf16.mxu0 %v3381
        %4032 = vmatpush1.bf16.msra.mxu0 %v3380
        %4033 = vmatprep.subr.bf16.mxu0 %v3385
        %4034 = vmatpush1.bf16.msra.mxu0 %v3384
        %4035 = vmatprep.subr.bf16.mxu0 %v3389
        %4036 = vmatpush1.bf16.msra.mxu0 %v3388
        %4037 = vmatprep.subr.bf16.mxu0 %v3393
        %4038 = vmatpush1.bf16.msra.mxu0 %v3392
        %4039 = vmatprep.subr.bf16.mxu0 %v3397
        %4040 = vmatpush1.bf16.msra.mxu0 %v3396
        %4041 = vmatprep.subr.bf16.mxu0 %v3401
        %4042 = vmatpush1.bf16.msra.mxu0 %v3400
        %4043 = vmatprep.subr.bf16.mxu0 %v3405
        %4044 = vmatpush1.bf16.msra.mxu0 %v3404
        %4045 = vmatprep.subr.bf16.mxu0 %v3409
        %4046 = vmatpush1.bf16.msra.mxu0 %v3408
        %4047 = vmatprep.subr.bf16.mxu0 %v3413
        %4048 = vmatpush1.bf16.msra.mxu0 %v3412
        %4049 = vmatprep.subr.bf16.mxu0 %v3417
        %4050 = vmatpush1.bf16.msra.mxu0 %v3416
        %4051 = vmatprep.subr.bf16.mxu0 %v3421
        %4052 = vmatpush1.bf16.msra.mxu0 %v3420
        %4053 = vmatprep.subr.bf16.mxu0 %v3425
        %4054 = vmatpush1.bf16.msra.mxu0 %v3424
        %4055 = vmatprep.subr.bf16.mxu0 %v3429
        %4056 = vmatpush1.bf16.msra.mxu0 %v3428
        %4057 = vmatprep.subr.bf16.mxu0 %v3433
        %4058 = vmatpush1.bf16.msra.mxu0 %v3432
        %4059 = vmatprep.subr.bf16.mxu0 %v3437
        %4060 = vmatpush1.bf16.msra.mxu0 %v3436
        %4061 = vmatprep.subr.bf16.mxu0 %v3441
        %4062 = vmatpush1.bf16.msra.mxu0 %v3440
        %4063 = vmatprep.mubr.bf16.mxu0 %v2520
        %4064 = vmatmul.mubr.bf16.gmra.mrb[0].mxu0 %v2519
        %v4065 = vpop.f32.mrb[0].mxu0
        %v4066 = vadd.f32 %v4025, %v4065
        %v4067 = vpop.f32.mrb[0].mxu0
        %v4068 = vadd.f32 %v4027, %v4067
        %v4069 = vpop.f32.mrb[0].mxu0
        %v4070 = vpop.f32.mrb[0].mxu0
        %4071 = vdwg.mxu0
        %4072 = vmatprep.subr.bf16.mxu0 %v3445
        %4073 = vmatpush1.bf16.msra.mxu0 %v3444
        %4074 = vmatprep.subr.bf16.mxu0 %v3449
        %4075 = vmatpush1.bf16.msra.mxu0 %v3448
        %4076 = vmatprep.subr.bf16.mxu0 %v3453
        %4077 = vmatpush1.bf16.msra.mxu0 %v3452
        %4078 = vmatprep.subr.bf16.mxu0 %v3457
        %4079 = vmatpush1.bf16.msra.mxu0 %v3456
        %4080 = vmatprep.subr.bf16.mxu0 %v3461
        %4081 = vmatpush1.bf16.msra.mxu0 %v3460
        %4082 = vmatprep.subr.bf16.mxu0 %v3465
        %4083 = vmatpush1.bf16.msra.mxu0 %v3464
        %4084 = vmatprep.subr.bf16.mxu0 %v3469
        %4085 = vmatpush1.bf16.msra.mxu0 %v3468
        %4086 = vmatprep.subr.bf16.mxu0 %v3473
        %4087 = vmatpush1.bf16.msra.mxu0 %v3472
        %4088 = vmatprep.subr.bf16.mxu0 %v3477
        %4089 = vmatpush1.bf16.msra.mxu0 %v3476
        %4090 = vmatprep.subr.bf16.mxu0 %v3481
        %4091 = vmatpush1.bf16.msra.mxu0 %v3480
        %4092 = vmatprep.subr.bf16.mxu0 %v3485
        %4093 = vmatpush1.bf16.msra.mxu0 %v3484
        %4094 = vmatprep.subr.bf16.mxu0 %v3489
        %4095 = vmatpush1.bf16.msra.mxu0 %v3488
        %4096 = vmatprep.subr.bf16.mxu0 %v3493
        %4097 = vmatpush1.bf16.msra.mxu0 %v3492
        %4098 = vmatprep.subr.bf16.mxu0 %v3497
        %4099 = vmatpush1.bf16.msra.mxu0 %v3496
        %4100 = vmatprep.subr.bf16.mxu0 %v3501
        %4101 = vmatpush1.bf16.msra.mxu0 %v3500
        %4102 = vmatprep.subr.bf16.mxu0 %v3505
        %4103 = vmatpush1.bf16.msra.mxu0 %v3504
        %4104 = vmatprep.mubr.bf16.mxu0 %v2522
        %4105 = vmatmul.mubr.bf16.gmra.mrb[0].mxu0 %v2521
        %v4106 = vpop.f32.mrb[0].mxu0
        %v4107 = vadd.f32 %v4066, %v4106
        %v4108 = vpop.f32.mrb[0].mxu0
        %v4109 = vadd.f32 %v4068, %v4108
        %v4110 = vpop.f32.mrb[0].mxu0
        %v4111 = vpop.f32.mrb[0].mxu0
        %4112 = vdwg.mxu0
        %4113 = vmatprep.subr.bf16.mxu0 %v3509
        %4114 = vmatpush1.bf16.msra.mxu0 %v3508
        %4115 = vmatprep.subr.bf16.mxu0 %v3513
        %4116 = vmatpush1.bf16.msra.mxu0 %v3512
        %4117 = vmatprep.subr.bf16.mxu0 %v3517
        %4118 = vmatpush1.bf16.msra.mxu0 %v3516
        %4119 = vmatprep.subr.bf16.mxu0 %v3521
        %4120 = vmatpush1.bf16.msra.mxu0 %v3520
        %4121 = vmatprep.subr.bf16.mxu0 %v3525
        %4122 = vmatpush1.bf16.msra.mxu0 %v3524
        %4123 = vmatprep.subr.bf16.mxu0 %v3529
        %4124 = vmatpush1.bf16.msra.mxu0 %v3528
        %4125 = vmatprep.subr.bf16.mxu0 %v3533
        %4126 = vmatpush1.bf16.msra.mxu0 %v3532
        %4127 = vmatprep.subr.bf16.mxu0 %v3537
        %4128 = vmatpush1.bf16.msra.mxu0 %v3536
        %4129 = vmatprep.subr.bf16.mxu0 %v3541
        %4130 = vmatpush1.bf16.msra.mxu0 %v3540
        %4131 = vmatprep.subr.bf16.mxu0 %v3545
        %4132 = vmatpush1.bf16.msra.mxu0 %v3544
        %4133 = vmatprep.subr.bf16.mxu0 %v3549
        %4134 = vmatpush1.bf16.msra.mxu0 %v3548
        %4135 = vmatprep.subr.bf16.mxu0 %v3553
        %4136 = vmatpush1.bf16.msra.mxu0 %v3552
        %4137 = vmatprep.subr.bf16.mxu0 %v3557
        %4138 = vmatpush1.bf16.msra.mxu0 %v3556
        %4139 = vmatprep.subr.bf16.mxu0 %v3561
        %4140 = vmatpush1.bf16.msra.mxu0 %v3560
        %4141 = vmatprep.subr.bf16.mxu0 %v3565
        %4142 = vmatpush1.bf16.msra.mxu0 %v3564
        %4143 = vmatprep.subr.bf16.mxu0 %v3569
        %4144 = vmatpush1.bf16.msra.mxu0 %v3568
        %4145 = vmatprep.mubr.bf16.mxu0 %v2524
        %4146 = vmatmul.mubr.bf16.gmra.mrb[0].mxu0 %v2523
        %v4147 = vpop.f32.mrb[0].mxu0
        %v4148 = vadd.f32 %v4107, %v4147
        %v4149 = vpop.f32.mrb[0].mxu0
        %v4150 = vadd.f32 %v4109, %v4149
        %v4151 = vpop.f32.mrb[0].mxu0
        %v4152 = vpop.f32.mrb[0].mxu0
        %4153 = vdwg.mxu0
        %v4154 = vmax.f32 %v3984, 0.0
        %v4155 = vmax.f32 %v3986, 0.0
        %v4156 = vmax.f32 %v4148, 0.0
        %v4157 = vmax.f32 %v4150, 0.0
        %v4158 = vld [vmem:[%s1296] sm:$0xf]
        %v4159 = vld [vmem:[%s1296 + $0x4] sm:$0xf]
        %v4160 = vld [vmem:[%s1296 + $0x8] sm:$0xf]
        %v4161 = vld [vmem:[%s1296 + $0xc] sm:$0xf]
        %v4162 = vld [vmem:[%s1296 + $0x10] sm:$0xf]
        %v4163 = vld [vmem:[%s1296 + $0x14] sm:$0xf]
        %v4164 = vld [vmem:[%s1296 + $0x18] sm:$0xf]
        %v4165 = vld [vmem:[%s1296 + $0x1c] sm:$0xf]
        %v4166 = vld [vmem:[%s1296 + $0x20] sm:$0xf]
        %v4167 = vld [vmem:[%s1296 + $0x24] sm:$0xf]
        %v4168 = vld [vmem:[%s1296 + $0x28] sm:$0xf]
        %v4169 = vld [vmem:[%s1296 + $0x2c] sm:$0xf]
        %v4170 = vld [vmem:[%s1296 + $0x30] sm:$0xf]
        %v4171 = vld [vmem:[%s1296 + $0x34] sm:$0xf]
        %v4172 = vld [vmem:[%s1296 + $0x38] sm:$0xf]
        %v4173 = vld [vmem:[%s1296 + $0x3c] sm:$0xf]
        %v4174 = vld [vmem:[%s1296 + $0x40] sm:$0xf]
        %v4175 = vld [vmem:[%s1296 + $0x44] sm:$0xf]
        %v4176 = vld [vmem:[%s1296 + $0x48] sm:$0xf]
        %v4177 = vld [vmem:[%s1296 + $0x4c] sm:$0xf]
        %v4178 = vld [vmem:[%s1296 + $0x50] sm:$0xf]
        %v4179 = vld [vmem:[%s1296 + $0x54] sm:$0xf]
        %v4180 = vld [vmem:[%s1296 + $0x58] sm:$0xf]
        %v4181 = vld [vmem:[%s1296 + $0x5c] sm:$0xf]
        %v4182 = vld [vmem:[%s1296 + $0x60] sm:$0xf]
        %v4183 = vld [vmem:[%s1296 + $0x64] sm:$0xf]
        %v4184 = vld [vmem:[%s1296 + $0x68] sm:$0xf]
        %v4185 = vld [vmem:[%s1296 + $0x6c] sm:$0xf]
        %v4186 = vld [vmem:[%s1296 + $0x70] sm:$0xf]
        %v4187 = vld [vmem:[%s1296 + $0x74] sm:$0xf]
        %v4188 = vld [vmem:[%s1296 + $0x78] sm:$0xf]
        %v4189 = vld [vmem:[%s1296 + $0x7c] sm:$0xf]
        %v4190 = vld [vmem:[%s1296 + $0x80] sm:$0xf]
        %v4191 = vld [vmem:[%s1296 + $0x84] sm:$0xf]
        %v4192 = vld [vmem:[%s1296 + $0x88] sm:$0xf]
        %v4193 = vld [vmem:[%s1296 + $0x8c] sm:$0xf]
        %v4194 = vld [vmem:[%s1296 + $0x90] sm:$0xf]
        %v4195 = vld [vmem:[%s1296 + $0x94] sm:$0xf]
        %v4196 = vld [vmem:[%s1296 + $0x98] sm:$0xf]
        %v4197 = vld [vmem:[%s1296 + $0x9c] sm:$0xf]
        %v4198 = vld [vmem:[%s1296 + $0xa0] sm:$0xf]
        %v4199 = vld [vmem:[%s1296 + $0xa4] sm:$0xf]
        %v4200 = vld [vmem:[%s1296 + $0xa8] sm:$0xf]
        %v4201 = vld [vmem:[%s1296 + $0xac] sm:$0xf]
        %v4202 = vld [vmem:[%s1296 + $0xb0] sm:$0xf]
        %v4203 = vld [vmem:[%s1296 + $0xb4] sm:$0xf]
        %v4204 = vld [vmem:[%s1296 + $0xb8] sm:$0xf]
        %v4205 = vld [vmem:[%s1296 + $0xbc] sm:$0xf]
        %v4206 = vld [vmem:[%s1296 + $0xc0] sm:$0xf]
        %v4207 = vld [vmem:[%s1296 + $0xc4] sm:$0xf]
        %v4208 = vld [vmem:[%s1296 + $0xc8] sm:$0xf]
        %v4209 = vld [vmem:[%s1296 + $0xcc] sm:$0xf]
        %v4210 = vld [vmem:[%s1296 + $0xd0] sm:$0xf]
        %v4211 = vld [vmem:[%s1296 + $0xd4] sm:$0xf]
        %v4212 = vld [vmem:[%s1296 + $0xd8] sm:$0xf]
        %v4213 = vld [vmem:[%s1296 + $0xdc] sm:$0xf]
        %v4214 = vld [vmem:[%s1296 + $0xe0] sm:$0xf]
        %v4215 = vld [vmem:[%s1296 + $0xe4] sm:$0xf]
        %v4216 = vld [vmem:[%s1296 + $0xe8] sm:$0xf]
        %v4217 = vld [vmem:[%s1296 + $0xec] sm:$0xf]
        %v4218 = vld [vmem:[%s1296 + $0xf0] sm:$0xf]
        %v4219 = vld [vmem:[%s1296 + $0xf4] sm:$0xf]
        %v4220 = vld [vmem:[%s1296 + $0xf8] sm:$0xf]
        %v4221 = vld [vmem:[%s1296 + $0xfc] sm:$0xf]
        %v4222 = vld [vmem:[%s1052] sm:$0x1]
        %v4223 = vpack.c.bf16 %v4154, %v4154
        %v4224 = vpack.c.bf16 %v4155, %v4155
        %v4225 = vpack.c.bf16 %v4156, %v4156
        %v4226 = vpack.c.bf16 %v4157, %v4157
        %v4228 = vlaneseq
        %v4229 = vshrl.u32 %v4228, 7
        %v4230 = vsub.s32 0, %v4229
        %v4231 = vrot.slane %v4222, %v4230
        %v4297 = vunpack.c.l.b16 %v4158
        %v4298 = vunpack.c.l.b16 %v4159
        %v4299 = vunpack.c.l.b16 %v4160
        %v4300 = vunpack.c.l.b16 %v4161
        %v4301 = vunpack.c.l.b16 %v4162
        %v4302 = vunpack.c.l.b16 %v4163
        %v4303 = vunpack.c.l.b16 %v4164
        %v4304 = vunpack.c.l.b16 %v4165
        %v4305 = vunpack.c.l.b16 %v4166
        %v4306 = vunpack.c.l.b16 %v4167
        %v4307 = vunpack.c.l.b16 %v4168
        %v4308 = vunpack.c.l.b16 %v4169
        %v4309 = vunpack.c.l.b16 %v4170
        %v4310 = vunpack.c.l.b16 %v4171
        %v4311 = vunpack.c.l.b16 %v4172
        %v4312 = vunpack.c.l.b16 %v4173
        %v4313 = vunpack.c.l.b16 %v4174
        %v4314 = vunpack.c.l.b16 %v4175
        %v4315 = vunpack.c.l.b16 %v4176
        %v4316 = vunpack.c.l.b16 %v4177
        %v4317 = vunpack.c.l.b16 %v4178
        %v4318 = vunpack.c.l.b16 %v4179
        %v4319 = vunpack.c.l.b16 %v4180
        %v4320 = vunpack.c.l.b16 %v4181
        %v4321 = vunpack.c.l.b16 %v4182
        %v4322 = vunpack.c.l.b16 %v4183
        %v4323 = vunpack.c.l.b16 %v4184
        %v4324 = vunpack.c.l.b16 %v4185
        %v4325 = vunpack.c.l.b16 %v4186
        %v4326 = vunpack.c.l.b16 %v4187
        %v4327 = vunpack.c.l.b16 %v4188
        %v4328 = vunpack.c.l.b16 %v4189
        %v4329 = vunpack.c.l.b16 %v4190
        %v4330 = vunpack.c.l.b16 %v4191
        %v4331 = vunpack.c.l.b16 %v4192
        %v4332 = vunpack.c.l.b16 %v4193
        %v4333 = vunpack.c.l.b16 %v4194
        %v4334 = vunpack.c.l.b16 %v4195
        %v4335 = vunpack.c.l.b16 %v4196
        %v4336 = vunpack.c.l.b16 %v4197
        %v4337 = vunpack.c.l.b16 %v4198
        %v4338 = vunpack.c.l.b16 %v4199
        %v4339 = vunpack.c.l.b16 %v4200
        %v4340 = vunpack.c.l.b16 %v4201
        %v4341 = vunpack.c.l.b16 %v4202
        %v4342 = vunpack.c.l.b16 %v4203
        %v4343 = vunpack.c.l.b16 %v4204
        %v4344 = vunpack.c.l.b16 %v4205
        %v4345 = vunpack.c.l.b16 %v4206
        %v4346 = vunpack.c.l.b16 %v4207
        %v4347 = vunpack.c.l.b16 %v4208
        %v4348 = vunpack.c.l.b16 %v4209
        %v4349 = vunpack.c.l.b16 %v4210
        %v4350 = vunpack.c.l.b16 %v4211
        %v4351 = vunpack.c.l.b16 %v4212
        %v4352 = vunpack.c.l.b16 %v4213
        %v4353 = vunpack.c.l.b16 %v4214
        %v4354 = vunpack.c.l.b16 %v4215
        %v4355 = vunpack.c.l.b16 %v4216
        %v4356 = vunpack.c.l.b16 %v4217
        %v4357 = vunpack.c.l.b16 %v4218
        %v4358 = vunpack.c.l.b16 %v4219
        %v4359 = vunpack.c.l.b16 %v4220
        %v4360 = vunpack.c.l.b16 %v4221
        %v4361 = vpack.c.b16 %v4298, %v4297
        %v4362 = vpack.c.b16 %v4300, %v4299
        %v4363 = vpack.c.b16 %v4302, %v4301
        %v4364 = vpack.c.b16 %v4304, %v4303
        %v4365 = vpack.c.b16 %v4306, %v4305
        %v4366 = vpack.c.b16 %v4308, %v4307
        %v4367 = vpack.c.b16 %v4310, %v4309
        %v4368 = vpack.c.b16 %v4312, %v4311
        %v4369 = vpack.c.b16 %v4314, %v4313
        %v4370 = vpack.c.b16 %v4316, %v4315
        %v4371 = vpack.c.b16 %v4318, %v4317
        %v4372 = vpack.c.b16 %v4320, %v4319
        %v4373 = vpack.c.b16 %v4322, %v4321
        %v4374 = vpack.c.b16 %v4324, %v4323
        %v4375 = vpack.c.b16 %v4326, %v4325
        %v4376 = vpack.c.b16 %v4328, %v4327
        %v4377 = vpack.c.b16 %v4330, %v4329
        %v4378 = vpack.c.b16 %v4332, %v4331
        %v4379 = vpack.c.b16 %v4334, %v4333
        %v4380 = vpack.c.b16 %v4336, %v4335
        %v4381 = vpack.c.b16 %v4338, %v4337
        %v4382 = vpack.c.b16 %v4340, %v4339
        %v4383 = vpack.c.b16 %v4342, %v4341
        %v4384 = vpack.c.b16 %v4344, %v4343
        %v4385 = vpack.c.b16 %v4346, %v4345
        %v4386 = vpack.c.b16 %v4348, %v4347
        %v4387 = vpack.c.b16 %v4350, %v4349
        %v4388 = vpack.c.b16 %v4352, %v4351
        %v4389 = vpack.c.b16 %v4354, %v4353
        %v4390 = vpack.c.b16 %v4356, %v4355
        %v4391 = vpack.c.b16 %v4358, %v4357
        %v4392 = vpack.c.b16 %v4360, %v4359
        %4425 = vmatprep.subr.bf16.mxu0 0
        %4426 = vmatpush1.bf16.msra.mxu0 %v4361
        %4427 = vmatprep.subr.bf16.mxu0 0
        %4428 = vmatpush1.bf16.msra.mxu0 %v4362
        %4429 = vmatprep.subr.bf16.mxu0 0
        %4430 = vmatpush1.bf16.msra.mxu0 %v4363
        %4431 = vmatprep.subr.bf16.mxu0 0
        %4432 = vmatpush1.bf16.msra.mxu0 %v4364
        %4433 = vmatprep.subr.bf16.mxu0 0
        %4434 = vmatpush1.bf16.msra.mxu0 %v4365
        %4435 = vmatprep.subr.bf16.mxu0 0
        %4436 = vmatpush1.bf16.msra.mxu0 %v4366
        %4437 = vmatprep.subr.bf16.mxu0 0
        %4438 = vmatpush1.bf16.msra.mxu0 %v4367
        %4439 = vmatprep.subr.bf16.mxu0 0
        %4440 = vmatpush1.bf16.msra.mxu0 %v4368
        %4441 = vmatprep.subr.bf16.mxu0 0
        %4442 = vmatpush1.bf16.msra.mxu0 %v4369
        %4443 = vmatprep.subr.bf16.mxu0 0
        %4444 = vmatpush1.bf16.msra.mxu0 %v4370
        %4445 = vmatprep.subr.bf16.mxu0 0
        %4446 = vmatpush1.bf16.msra.mxu0 %v4371
        %4447 = vmatprep.subr.bf16.mxu0 0
        %4448 = vmatpush1.bf16.msra.mxu0 %v4372
        %4449 = vmatprep.subr.bf16.mxu0 0
        %4450 = vmatpush1.bf16.msra.mxu0 %v4373
        %4451 = vmatprep.subr.bf16.mxu0 0
        %4452 = vmatpush1.bf16.msra.mxu0 %v4374
        %4453 = vmatprep.subr.bf16.mxu0 0
        %4454 = vmatpush1.bf16.msra.mxu0 %v4375
        %4455 = vmatprep.subr.bf16.mxu0 0
        %4456 = vmatpush1.bf16.msra.mxu0 %v4376
        %4457 = vmatprep.mubr.bf16.mxu0 %v4224
        %4458 = vmatmul.mubr.bf16.gmra.mrb[0].mxu0 %v4223
        %v4459 = vpop.f32.mrb[0].mxu0
        %v4460 = vadd.f32 %v4231, %v4459
        %v4461 = vpop.f32.mrb[0].mxu0
        %v4462 = vpop.f32.mrb[0].mxu0
        %v4463 = vpop.f32.mrb[0].mxu0
        %4464 = vdwg.mxu0
        %4465 = vmatprep.subr.bf16.mxu0 0
        %4466 = vmatpush1.bf16.msra.mxu0 %v4377
        %4467 = vmatprep.subr.bf16.mxu0 0
        %4468 = vmatpush1.bf16.msra.mxu0 %v4378
        %4469 = vmatprep.subr.bf16.mxu0 0
        %4470 = vmatpush1.bf16.msra.mxu0 %v4379
        %4471 = vmatprep.subr.bf16.mxu0 0
        %4472 = vmatpush1.bf16.msra.mxu0 %v4380
        %4473 = vmatprep.subr.bf16.mxu0 0
        %4474 = vmatpush1.bf16.msra.mxu0 %v4381
        %4475 = vmatprep.subr.bf16.mxu0 0
        %4476 = vmatpush1.bf16.msra.mxu0 %v4382
        %4477 = vmatprep.subr.bf16.mxu0 0
        %4478 = vmatpush1.bf16.msra.mxu0 %v4383
        %4479 = vmatprep.subr.bf16.mxu0 0
        %4480 = vmatpush1.bf16.msra.mxu0 %v4384
        %4481 = vmatprep.subr.bf16.mxu0 0
        %4482 = vmatpush1.bf16.msra.mxu0 %v4385
        %4483 = vmatprep.subr.bf16.mxu0 0
        %4484 = vmatpush1.bf16.msra.mxu0 %v4386
        %4485 = vmatprep.subr.bf16.mxu0 0
        %4486 = vmatpush1.bf16.msra.mxu0 %v4387
        %4487 = vmatprep.subr.bf16.mxu0 0
        %4488 = vmatpush1.bf16.msra.mxu0 %v4388
        %4489 = vmatprep.subr.bf16.mxu0 0
        %4490 = vmatpush1.bf16.msra.mxu0 %v4389
        %4491 = vmatprep.subr.bf16.mxu0 0
        %4492 = vmatpush1.bf16.msra.mxu0 %v4390
        %4493 = vmatprep.subr.bf16.mxu0 0
        %4494 = vmatpush1.bf16.msra.mxu0 %v4391
        %4495 = vmatprep.subr.bf16.mxu0 0
        %4496 = vmatpush1.bf16.msra.mxu0 %v4392
        %4497 = vmatprep.mubr.bf16.mxu0 %v4226
        %4498 = vmatmul.mubr.bf16.gmra.mrb[0].mxu0 %v4225
        %v4499 = vpop.f32.mrb[0].mxu0
        %v4500 = vadd.f32 %v4460, %v4499
        %v4501 = vpop.f32.mrb[0].mxu0
        %v4502 = vpop.f32.mrb[0].mxu0
        %v4503 = vpop.f32.mrb[0].mxu0
        %4504 = vdwg.mxu0
        %vm4505 = vcmp.ge.f32.partialorder %v4500, 0.0
        %v4506 = vsel %vm4505, 1.0, -1.0
        %v4507 = vld [vmem:[%s1061] sm:$0xff]
        %v4508 = vld [vmem:[%s1061 + $0x8] sm:$0xff]
        %v4509 = vld [vmem:[%s1061 + $0x10] sm:$0xff]
        %v4510 = vld [vmem:[%s1061 + $0x18] sm:$0xff]
        %v4511 = vld [vmem:[%s1061 + $0x20] sm:$0xff]
        %v4512 = vld [vmem:[%s1061 + $0x28] sm:$0xff]
        %v4513 = vld [vmem:[%s1061 + $0x30] sm:$0xff]
        %v4514 = vld [vmem:[%s1061 + $0x38] sm:$0xff]
        %v4515 = vld [vmem:[%s1070] sm:$0xf]
        %v4516 = vpack.c.bf16 %v4506, %v4506
        %v4518 = vlaneseq
        %v4519 = vshrl.u32 %v4518, 7
        %v4520 = vsub.s32 0, %v4519
        %v4521 = vrot.slane %v4515, %v4520
        %v4522 = vlaneseq
        %v4523 = vshrl.u32 %v4522, 7
        %v4524 = vsub.s32 1, %v4523
        %v4525 = vrot.slane %v4515, %v4524
        %v4526 = vlaneseq
        %v4527 = vshrl.u32 %v4526, 7
        %v4528 = vsub.s32 2, %v4527
        %v4529 = vrot.slane %v4515, %v4528
        %v4530 = vlaneseq
        %v4531 = vshrl.u32 %v4530, 7
        %v4532 = vsub.s32 3, %v4531
        %v4533 = vrot.slane %v4515, %v4532
        %v4546 = vunpack.c.l.b16 %v4507
        %v4547 = vunpack.c.h.b16 %v4507
        %v4548 = vunpack.c.l.b16 %v4508
        %v4549 = vunpack.c.h.b16 %v4508
        %v4550 = vunpack.c.l.b16 %v4509
        %v4551 = vunpack.c.h.b16 %v4509
        %v4552 = vunpack.c.l.b16 %v4510
        %v4553 = vunpack.c.h.b16 %v4510
        %v4554 = vunpack.c.l.b16 %v4511
        %v4555 = vunpack.c.h.b16 %v4511
        %v4556 = vunpack.c.l.b16 %v4512
        %v4557 = vunpack.c.h.b16 %v4512
        %v4558 = vunpack.c.l.b16 %v4513
        %v4559 = vunpack.c.h.b16 %v4513
        %v4560 = vunpack.c.l.b16 %v4514
        %v4561 = vunpack.c.h.b16 %v4514
        %v4562 = vpack.c.b16 %v4550, %v4546
        %v4563 = vpack.c.b16 %v4551, %v4547
        %v4564 = vpack.c.b16 %v4552, %v4548
        %v4565 = vpack.c.b16 %v4553, %v4549
        %v4566 = vpack.c.b16 %v4558, %v4554
        %v4567 = vpack.c.b16 %v4559, %v4555
        %v4568 = vpack.c.b16 %v4560, %v4556
        %v4569 = vpack.c.b16 %v4561, %v4557
        %vm4578 = vcmask 261120
        %v4580 = vsel %vm4578, %v4516, 0
        %4582 = vmatprep.subr.bf16.mxu0 %v4563
        %4583 = vmatpush1.bf16.msra.mxu0 %v4562
        %4584 = vmatprep.subr.bf16.mxu0 %v4567
        %4585 = vmatpush1.bf16.msra.mxu0 %v4566
        %4586 = vmatprep.subr.bf16.mxu0 0
        %4587 = vmatpush1.bf16.msra.mxu0 0
        %4588 = vmatprep.subr.bf16.mxu0 0
        %4589 = vmatpush1.bf16.msra.mxu0 0
        %4590 = vmatprep.subr.bf16.mxu0 0
        %4591 = vmatpush1.bf16.msra.mxu0 0
        %4592 = vmatprep.subr.bf16.mxu0 0
        %4593 = vmatpush1.bf16.msra.mxu0 0
        %4594 = vmatprep.subr.bf16.mxu0 0
        %4595 = vmatpush1.bf16.msra.mxu0 0
        %4596 = vmatprep.subr.bf16.mxu0 0
        %4597 = vmatpush1.bf16.msra.mxu0 0
        %4598 = vmatprep.subr.bf16.mxu0 0
        %4599 = vmatpush1.bf16.msra.mxu0 0
        %4600 = vmatprep.subr.bf16.mxu0 0
        %4601 = vmatpush1.bf16.msra.mxu0 0
        %4602 = vmatprep.subr.bf16.mxu0 0
        %4603 = vmatpush1.bf16.msra.mxu0 0
        %4604 = vmatprep.subr.bf16.mxu0 0
        %4605 = vmatpush1.bf16.msra.mxu0 0
        %4606 = vmatprep.subr.bf16.mxu0 0
        %4607 = vmatpush1.bf16.msra.mxu0 0
        %4608 = vmatprep.subr.bf16.mxu0 0
        %4609 = vmatpush1.bf16.msra.mxu0 0
        %4610 = vmatprep.subr.bf16.mxu0 0
        %4611 = vmatpush1.bf16.msra.mxu0 0
        %4612 = vmatprep.subr.bf16.mxu0 0
        %4613 = vmatpush1.bf16.msra.mxu0 0
        %4614 = vmatprep.mubr.bf16.mxu0 0
        %4615 = vmatmul.mubr.bf16.gmra.mrb[0].mxu0 %v4580
        %v4616 = vpop.f32.mrb[0].mxu0
        %v4617 = vadd.f32 %v4521, %v4616
        %v4618 = vpop.f32.mrb[0].mxu0
        %v4619 = vadd.f32 %v4525, %v4618
        %v4620 = vpop.f32.mrb[0].mxu0
        %v4621 = vpop.f32.mrb[0].mxu0
        %4622 = vdwg.mxu0
        %4623 = vmatprep.subr.bf16.mxu0 %v4565
        %4624 = vmatpush1.bf16.msra.mxu0 %v4564
        %4625 = vmatprep.subr.bf16.mxu0 %v4569
        %4626 = vmatpush1.bf16.msra.mxu0 %v4568
        %4627 = vmatprep.subr.bf16.mxu0 0
        %4628 = vmatpush1.bf16.msra.mxu0 0
        %4629 = vmatprep.subr.bf16.mxu0 0
        %4630 = vmatpush1.bf16.msra.mxu0 0
        %4631 = vmatprep.subr.bf16.mxu0 0
        %4632 = vmatpush1.bf16.msra.mxu0 0
        %4633 = vmatprep.subr.bf16.mxu0 0
        %4634 = vmatpush1.bf16.msra.mxu0 0
        %4635 = vmatprep.subr.bf16.mxu0 0
        %4636 = vmatpush1.bf16.msra.mxu0 0
        %4637 = vmatprep.subr.bf16.mxu0 0
        %4638 = vmatpush1.bf16.msra.mxu0 0
        %4639 = vmatprep.subr.bf16.mxu0 0
        %4640 = vmatpush1.bf16.msra.mxu0 0
        %4641 = vmatprep.subr.bf16.mxu0 0
        %4642 = vmatpush1.bf16.msra.mxu0 0
        %4643 = vmatprep.subr.bf16.mxu0 0
        %4644 = vmatpush1.bf16.msra.mxu0 0
        %4645 = vmatprep.subr.bf16.mxu0 0
        %4646 = vmatpush1.bf16.msra.mxu0 0
        %4647 = vmatprep.subr.bf16.mxu0 0
        %4648 = vmatpush1.bf16.msra.mxu0 0
        %4649 = vmatprep.subr.bf16.mxu0 0
        %4650 = vmatpush1.bf16.msra.mxu0 0
        %4651 = vmatprep.subr.bf16.mxu0 0
        %4652 = vmatpush1.bf16.msra.mxu0 0
        %4653 = vmatprep.subr.bf16.mxu0 0
        %4654 = vmatpush1.bf16.msra.mxu0 0
        %4655 = vmatprep.mubr.bf16.mxu0 0
        %4656 = vmatmul.mubr.bf16.gmra.mrb[0].mxu0 %v4580
        %v4657 = vpop.f32.mrb[0].mxu0
        %v4658 = vadd.f32 %v4529, %v4657
        %v4659 = vpop.f32.mrb[0].mxu0
        %v4660 = vadd.f32 %v4533, %v4659
        %v4661 = vpop.f32.mrb[0].mxu0
        %v4662 = vpop.f32.mrb[0].mxu0
        %4663 = vdwg.mxu0
        %v4664 = vmax.f32 %v4617, 0.0
        %v4665 = vmax.f32 %v4619, 0.0
        %v4666 = vmax.f32 %v4658, 0.0
        %v4667 = vmax.f32 %v4660, 0.0
        %v4668 = vld [vmem:[%s1079] sm:$0xff]
        %v4669 = vld [vmem:[%s1079 + $0x8] sm:$0xff]
        %v4670 = vld [vmem:[%s1079 + $0x10] sm:$0xff]
        %v4671 = vld [vmem:[%s1079 + $0x18] sm:$0xff]
        %v4672 = vld [vmem:[%s1079 + $0x20] sm:$0xff]
        %v4673 = vld [vmem:[%s1079 + $0x28] sm:$0xff]
        %v4674 = vld [vmem:[%s1079 + $0x30] sm:$0xff]
        %v4675 = vld [vmem:[%s1079 + $0x38] sm:$0xff]
        %v4676 = vld [vmem:[%s1079 + $0x40] sm:$0xff]
        %v4677 = vld [vmem:[%s1079 + $0x48] sm:$0xff]
        %v4678 = vld [vmem:[%s1079 + $0x50] sm:$0xff]
        %v4679 = vld [vmem:[%s1079 + $0x58] sm:$0xff]
        %v4680 = vld [vmem:[%s1079 + $0x60] sm:$0xff]
        %v4681 = vld [vmem:[%s1079 + $0x68] sm:$0xff]
        %v4682 = vld [vmem:[%s1079 + $0x70] sm:$0xff]
        %v4683 = vld [vmem:[%s1079 + $0x78] sm:$0xff]
        %v4684 = vld [vmem:[%s1079 + $0x80] sm:$0xff]
        %v4685 = vld [vmem:[%s1079 + $0x88] sm:$0xff]
        %v4686 = vld [vmem:[%s1079 + $0x90] sm:$0xff]
        %v4687 = vld [vmem:[%s1079 + $0x98] sm:$0xff]
        %v4688 = vld [vmem:[%s1079 + $0xa0] sm:$0xff]
        %v4689 = vld [vmem:[%s1079 + $0xa8] sm:$0xff]
        %v4690 = vld [vmem:[%s1079 + $0xb0] sm:$0xff]
        %v4691 = vld [vmem:[%s1079 + $0xb8] sm:$0xff]
        %v4692 = vld [vmem:[%s1079 + $0xc0] sm:$0xff]
        %v4693 = vld [vmem:[%s1079 + $0xc8] sm:$0xff]
        %v4694 = vld [vmem:[%s1079 + $0xd0] sm:$0xff]
        %v4695 = vld [vmem:[%s1079 + $0xd8] sm:$0xff]
        %v4696 = vld [vmem:[%s1079 + $0xe0] sm:$0xff]
        %v4697 = vld [vmem:[%s1079 + $0xe8] sm:$0xff]
        %v4698 = vld [vmem:[%s1079 + $0xf0] sm:$0xff]
        %v4699 = vld [vmem:[%s1079 + $0xf8] sm:$0xff]
        %v4700 = vld [vmem:[%s1079 + $0x100] sm:$0xff]
        %v4701 = vld [vmem:[%s1079 + $0x108] sm:$0xff]
        %v4702 = vld [vmem:[%s1079 + $0x110] sm:$0xff]
        %v4703 = vld [vmem:[%s1079 + $0x118] sm:$0xff]
        %v4704 = vld [vmem:[%s1079 + $0x120] sm:$0xff]
        %v4705 = vld [vmem:[%s1079 + $0x128] sm:$0xff]
        %v4706 = vld [vmem:[%s1079 + $0x130] sm:$0xff]
        %v4707 = vld [vmem:[%s1079 + $0x138] sm:$0xff]
        %v4708 = vld [vmem:[%s1079 + $0x140] sm:$0xff]
        %v4709 = vld [vmem:[%s1079 + $0x148] sm:$0xff]
        %v4710 = vld [vmem:[%s1079 + $0x150] sm:$0xff]
        %v4711 = vld [vmem:[%s1079 + $0x158] sm:$0xff]
        %v4712 = vld [vmem:[%s1079 + $0x160] sm:$0xff]
        %v4713 = vld [vmem:[%s1079 + $0x168] sm:$0xff]
        %v4714 = vld [vmem:[%s1079 + $0x170] sm:$0xff]
        %v4715 = vld [vmem:[%s1079 + $0x178] sm:$0xff]
        %v4716 = vld [vmem:[%s1079 + $0x180] sm:$0xff]
        %v4717 = vld [vmem:[%s1079 + $0x188] sm:$0xff]
        %v4718 = vld [vmem:[%s1079 + $0x190] sm:$0xff]
        %v4719 = vld [vmem:[%s1079 + $0x198] sm:$0xff]
        %v4720 = vld [vmem:[%s1079 + $0x1a0] sm:$0xff]
        %v4721 = vld [vmem:[%s1079 + $0x1a8] sm:$0xff]
        %v4722 = vld [vmem:[%s1079 + $0x1b0] sm:$0xff]
        %v4723 = vld [vmem:[%s1079 + $0x1b8] sm:$0xff]
        %v4724 = vld [vmem:[%s1079 + $0x1c0] sm:$0xff]
        %v4725 = vld [vmem:[%s1079 + $0x1c8] sm:$0xff]
        %v4726 = vld [vmem:[%s1079 + $0x1d0] sm:$0xff]
        %v4727 = vld [vmem:[%s1079 + $0x1d8] sm:$0xff]
        %v4728 = vld [vmem:[%s1079 + $0x1e0] sm:$0xff]
        %v4729 = vld [vmem:[%s1079 + $0x1e8] sm:$0xff]
        %v4730 = vld [vmem:[%s1079 + $0x1f0] sm:$0xff]
        %v4731 = vld [vmem:[%s1079 + $0x1f8] sm:$0xff]
        %v4732 = vld [vmem:[%s1079 + $0x200] sm:$0xff]
        %v4733 = vld [vmem:[%s1079 + $0x208] sm:$0xff]
        %v4734 = vld [vmem:[%s1079 + $0x210] sm:$0xff]
        %v4735 = vld [vmem:[%s1079 + $0x218] sm:$0xff]
        %v4736 = vld [vmem:[%s1079 + $0x220] sm:$0xff]
        %v4737 = vld [vmem:[%s1079 + $0x228] sm:$0xff]
        %v4738 = vld [vmem:[%s1079 + $0x230] sm:$0xff]
        %v4739 = vld [vmem:[%s1079 + $0x238] sm:$0xff]
        %v4740 = vld [vmem:[%s1079 + $0x240] sm:$0xff]
        %v4741 = vld [vmem:[%s1079 + $0x248] sm:$0xff]
        %v4742 = vld [vmem:[%s1079 + $0x250] sm:$0xff]
        %v4743 = vld [vmem:[%s1079 + $0x258] sm:$0xff]
        %v4744 = vld [vmem:[%s1079 + $0x260] sm:$0xff]
        %v4745 = vld [vmem:[%s1079 + $0x268] sm:$0xff]
        %v4746 = vld [vmem:[%s1079 + $0x270] sm:$0xff]
        %v4747 = vld [vmem:[%s1079 + $0x278] sm:$0xff]
        %v4748 = vld [vmem:[%s1079 + $0x280] sm:$0xff]
        %v4749 = vld [vmem:[%s1079 + $0x288] sm:$0xff]
        %v4750 = vld [vmem:[%s1079 + $0x290] sm:$0xff]
        %v4751 = vld [vmem:[%s1079 + $0x298] sm:$0xff]
        %v4752 = vld [vmem:[%s1079 + $0x2a0] sm:$0xff]
        %v4753 = vld [vmem:[%s1079 + $0x2a8] sm:$0xff]
        %v4754 = vld [vmem:[%s1079 + $0x2b0] sm:$0xff]
        %v4755 = vld [vmem:[%s1079 + $0x2b8] sm:$0xff]
        %v4756 = vld [vmem:[%s1079 + $0x2c0] sm:$0xff]
        %v4757 = vld [vmem:[%s1079 + $0x2c8] sm:$0xff]
        %v4758 = vld [vmem:[%s1079 + $0x2d0] sm:$0xff]
        %v4759 = vld [vmem:[%s1079 + $0x2d8] sm:$0xff]
        %v4760 = vld [vmem:[%s1079 + $0x2e0] sm:$0xff]
        %v4761 = vld [vmem:[%s1079 + $0x2e8] sm:$0xff]
        %v4762 = vld [vmem:[%s1079 + $0x2f0] sm:$0xff]
        %v4763 = vld [vmem:[%s1079 + $0x2f8] sm:$0xff]
        %v4764 = vld [vmem:[%s1079 + $0x300] sm:$0xff]
        %v4765 = vld [vmem:[%s1079 + $0x308] sm:$0xff]
        %v4766 = vld [vmem:[%s1079 + $0x310] sm:$0xff]
        %v4767 = vld [vmem:[%s1079 + $0x318] sm:$0xff]
        %v4768 = vld [vmem:[%s1079 + $0x320] sm:$0xff]
        %v4769 = vld [vmem:[%s1079 + $0x328] sm:$0xff]
        %v4770 = vld [vmem:[%s1079 + $0x330] sm:$0xff]
        %v4771 = vld [vmem:[%s1079 + $0x338] sm:$0xff]
        %v4772 = vld [vmem:[%s1079 + $0x340] sm:$0xff]
        %v4773 = vld [vmem:[%s1079 + $0x348] sm:$0xff]
        %v4774 = vld [vmem:[%s1079 + $0x350] sm:$0xff]
        %v4775 = vld [vmem:[%s1079 + $0x358] sm:$0xff]
        %v4776 = vld [vmem:[%s1079 + $0x360] sm:$0xff]
        %v4777 = vld [vmem:[%s1079 + $0x368] sm:$0xff]
        %v4778 = vld [vmem:[%s1079 + $0x370] sm:$0xff]
        %v4779 = vld [vmem:[%s1079 + $0x378] sm:$0xff]
        %v4780 = vld [vmem:[%s1079 + $0x380] sm:$0xff]
        %v4781 = vld [vmem:[%s1079 + $0x388] sm:$0xff]
        %v4782 = vld [vmem:[%s1079 + $0x390] sm:$0xff]
        %v4783 = vld [vmem:[%s1079 + $0x398] sm:$0xff]
        %v4784 = vld [vmem:[%s1079 + $0x3a0] sm:$0xff]
        %v4785 = vld [vmem:[%s1079 + $0x3a8] sm:$0xff]
        %v4786 = vld [vmem:[%s1079 + $0x3b0] sm:$0xff]
        %v4787 = vld [vmem:[%s1079 + $0x3b8] sm:$0xff]
        %v4788 = vld [vmem:[%s1079 + $0x3c0] sm:$0xff]
        %v4789 = vld [vmem:[%s1079 + $0x3c8] sm:$0xff]
        %v4790 = vld [vmem:[%s1079 + $0x3d0] sm:$0xff]
        %v4791 = vld [vmem:[%s1079 + $0x3d8] sm:$0xff]
        %v4792 = vld [vmem:[%s1079 + $0x3e0] sm:$0xff]
        %v4793 = vld [vmem:[%s1079 + $0x3e8] sm:$0xff]
        %v4794 = vld [vmem:[%s1079 + $0x3f0] sm:$0xff]
        %v4795 = vld [vmem:[%s1079 + $0x3f8] sm:$0xff]
        %v4796 = vld [vmem:[%s1079 + $0x400] sm:$0xff]
        %v4797 = vld [vmem:[%s1079 + $0x408] sm:$0xff]
        %v4798 = vld [vmem:[%s1079 + $0x410] sm:$0xff]
        %v4799 = vld [vmem:[%s1079 + $0x418] sm:$0xff]
        %v4800 = vld [vmem:[%s1079 + $0x420] sm:$0xff]
        %v4801 = vld [vmem:[%s1079 + $0x428] sm:$0xff]
        %v4802 = vld [vmem:[%s1079 + $0x430] sm:$0xff]
        %v4803 = vld [vmem:[%s1079 + $0x438] sm:$0xff]
        %v4804 = vld [vmem:[%s1079 + $0x440] sm:$0xff]
        %v4805 = vld [vmem:[%s1079 + $0x448] sm:$0xff]
        %v4806 = vld [vmem:[%s1079 + $0x450] sm:$0xff]
        %v4807 = vld [vmem:[%s1079 + $0x458] sm:$0xff]
        %v4808 = vld [vmem:[%s1079 + $0x460] sm:$0xff]
        %v4809 = vld [vmem:[%s1079 + $0x468] sm:$0xff]
        %v4810 = vld [vmem:[%s1079 + $0x470] sm:$0xff]
        %v4811 = vld [vmem:[%s1079 + $0x478] sm:$0xff]
        %v4812 = vld [vmem:[%s1079 + $0x480] sm:$0xff]
        %v4813 = vld [vmem:[%s1079 + $0x488] sm:$0xff]
        %v4814 = vld [vmem:[%s1079 + $0x490] sm:$0xff]
        %v4815 = vld [vmem:[%s1079 + $0x498] sm:$0xff]
        %v4816 = vld [vmem:[%s1079 + $0x4a0] sm:$0xff]
        %v4817 = vld [vmem:[%s1079 + $0x4a8] sm:$0xff]
        %v4818 = vld [vmem:[%s1079 + $0x4b0] sm:$0xff]
        %v4819 = vld [vmem:[%s1079 + $0x4b8] sm:$0xff]
        %v4820 = vld [vmem:[%s1079 + $0x4c0] sm:$0xff]
        %v4821 = vld [vmem:[%s1079 + $0x4c8] sm:$0xff]
        %v4822 = vld [vmem:[%s1079 + $0x4d0] sm:$0xff]
        %v4823 = vld [vmem:[%s1079 + $0x4d8] sm:$0xff]
        %v4824 = vld [vmem:[%s1079 + $0x4e0] sm:$0xff]
        %v4825 = vld [vmem:[%s1079 + $0x4e8] sm:$0xff]
        %v4826 = vld [vmem:[%s1079 + $0x4f0] sm:$0xff]
        %v4827 = vld [vmem:[%s1079 + $0x4f8] sm:$0xff]
        %v4828 = vld [vmem:[%s1079 + $0x500] sm:$0xff]
        %v4829 = vld [vmem:[%s1079 + $0x508] sm:$0xff]
        %v4830 = vld [vmem:[%s1079 + $0x510] sm:$0xff]
        %v4831 = vld [vmem:[%s1079 + $0x518] sm:$0xff]
        %v4832 = vld [vmem:[%s1079 + $0x520] sm:$0xff]
        %v4833 = vld [vmem:[%s1079 + $0x528] sm:$0xff]
        %v4834 = vld [vmem:[%s1079 + $0x530] sm:$0xff]
        %v4835 = vld [vmem:[%s1079 + $0x538] sm:$0xff]
        %v4836 = vld [vmem:[%s1079 + $0x540] sm:$0xff]
        %v4837 = vld [vmem:[%s1079 + $0x548] sm:$0xff]
        %v4838 = vld [vmem:[%s1079 + $0x550] sm:$0xff]
        %v4839 = vld [vmem:[%s1079 + $0x558] sm:$0xff]
        %v4840 = vld [vmem:[%s1079 + $0x560] sm:$0xff]
        %v4841 = vld [vmem:[%s1079 + $0x568] sm:$0xff]
        %v4842 = vld [vmem:[%s1079 + $0x570] sm:$0xff]
        %v4843 = vld [vmem:[%s1079 + $0x578] sm:$0xff]
        %v4844 = vld [vmem:[%s1079 + $0x580] sm:$0xff]
        %v4845 = vld [vmem:[%s1079 + $0x588] sm:$0xff]
        %v4846 = vld [vmem:[%s1079 + $0x590] sm:$0xff]
        %v4847 = vld [vmem:[%s1079 + $0x598] sm:$0xff]
        %v4848 = vld [vmem:[%s1079 + $0x5a0] sm:$0xff]
        %v4849 = vld [vmem:[%s1079 + $0x5a8] sm:$0xff]
        %v4850 = vld [vmem:[%s1079 + $0x5b0] sm:$0xff]
        %v4851 = vld [vmem:[%s1079 + $0x5b8] sm:$0xff]
        %v4852 = vld [vmem:[%s1079 + $0x5c0] sm:$0xff]
        %v4853 = vld [vmem:[%s1079 + $0x5c8] sm:$0xff]
        %v4854 = vld [vmem:[%s1079 + $0x5d0] sm:$0xff]
        %v4855 = vld [vmem:[%s1079 + $0x5d8] sm:$0xff]
        %v4856 = vld [vmem:[%s1079 + $0x5e0] sm:$0xff]
        %v4857 = vld [vmem:[%s1079 + $0x5e8] sm:$0xff]
        %v4858 = vld [vmem:[%s1079 + $0x5f0] sm:$0xff]
        %v4859 = vld [vmem:[%s1079 + $0x5f8] sm:$0xff]
        %v4860 = vld [vmem:[%s1079 + $0x600] sm:$0xff]
        %v4861 = vld [vmem:[%s1079 + $0x608] sm:$0xff]
        %v4862 = vld [vmem:[%s1079 + $0x610] sm:$0xff]
        %v4863 = vld [vmem:[%s1079 + $0x618] sm:$0xff]
        %v4864 = vld [vmem:[%s1079 + $0x620] sm:$0xff]
        %v4865 = vld [vmem:[%s1079 + $0x628] sm:$0xff]
        %v4866 = vld [vmem:[%s1079 + $0x630] sm:$0xff]
        %v4867 = vld [vmem:[%s1079 + $0x638] sm:$0xff]
        %v4868 = vld [vmem:[%s1079 + $0x640] sm:$0xff]
        %v4869 = vld [vmem:[%s1079 + $0x648] sm:$0xff]
        %v4870 = vld [vmem:[%s1079 + $0x650] sm:$0xff]
        %v4871 = vld [vmem:[%s1079 + $0x658] sm:$0xff]
        %v4872 = vld [vmem:[%s1079 + $0x660] sm:$0xff]
        %v4873 = vld [vmem:[%s1079 + $0x668] sm:$0xff]
        %v4874 = vld [vmem:[%s1079 + $0x670] sm:$0xff]
        %v4875 = vld [vmem:[%s1079 + $0x678] sm:$0xff]
        %v4876 = vld [vmem:[%s1079 + $0x680] sm:$0xff]
        %v4877 = vld [vmem:[%s1079 + $0x688] sm:$0xff]
        %v4878 = vld [vmem:[%s1079 + $0x690] sm:$0xff]
        %v4879 = vld [vmem:[%s1079 + $0x698] sm:$0xff]
        %v4880 = vld [vmem:[%s1079 + $0x6a0] sm:$0xff]
        %v4881 = vld [vmem:[%s1079 + $0x6a8] sm:$0xff]
        %v4882 = vld [vmem:[%s1079 + $0x6b0] sm:$0xff]
        %v4883 = vld [vmem:[%s1079 + $0x6b8] sm:$0xff]
        %v4884 = vld [vmem:[%s1079 + $0x6c0] sm:$0xff]
        %v4885 = vld [vmem:[%s1079 + $0x6c8] sm:$0xff]
        %v4886 = vld [vmem:[%s1079 + $0x6d0] sm:$0xff]
        %v4887 = vld [vmem:[%s1079 + $0x6d8] sm:$0xff]
        %v4888 = vld [vmem:[%s1079 + $0x6e0] sm:$0xff]
        %v4889 = vld [vmem:[%s1079 + $0x6e8] sm:$0xff]
        %v4890 = vld [vmem:[%s1079 + $0x6f0] sm:$0xff]
        %v4891 = vld [vmem:[%s1079 + $0x6f8] sm:$0xff]
        %v4892 = vld [vmem:[%s1079 + $0x700] sm:$0xff]
        %v4893 = vld [vmem:[%s1079 + $0x708] sm:$0xff]
        %v4894 = vld [vmem:[%s1079 + $0x710] sm:$0xff]
        %v4895 = vld [vmem:[%s1079 + $0x718] sm:$0xff]
        %v4896 = vld [vmem:[%s1079 + $0x720] sm:$0xff]
        %v4897 = vld [vmem:[%s1079 + $0x728] sm:$0xff]
        %v4898 = vld [vmem:[%s1079 + $0x730] sm:$0xff]
        %v4899 = vld [vmem:[%s1079 + $0x738] sm:$0xff]
        %v4900 = vld [vmem:[%s1079 + $0x740] sm:$0xff]
        %v4901 = vld [vmem:[%s1079 + $0x748] sm:$0xff]
        %v4902 = vld [vmem:[%s1079 + $0x750] sm:$0xff]
        %v4903 = vld [vmem:[%s1079 + $0x758] sm:$0xff]
        %v4904 = vld [vmem:[%s1079 + $0x760] sm:$0xff]
        %v4905 = vld [vmem:[%s1079 + $0x768] sm:$0xff]
        %v4906 = vld [vmem:[%s1079 + $0x770] sm:$0xff]
        %v4907 = vld [vmem:[%s1079 + $0x778] sm:$0xff]
        %v4908 = vld [vmem:[%s1079 + $0x780] sm:$0xff]
        %v4909 = vld [vmem:[%s1079 + $0x788] sm:$0xff]
        %v4910 = vld [vmem:[%s1079 + $0x790] sm:$0xff]
        %v4911 = vld [vmem:[%s1079 + $0x798] sm:$0xff]
        %v4912 = vld [vmem:[%s1079 + $0x7a0] sm:$0xff]
        %v4913 = vld [vmem:[%s1079 + $0x7a8] sm:$0xff]
        %v4914 = vld [vmem:[%s1079 + $0x7b0] sm:$0xff]
        %v4915 = vld [vmem:[%s1079 + $0x7b8] sm:$0xff]
        %v4916 = vld [vmem:[%s1079 + $0x7c0] sm:$0xff]
        %v4917 = vld [vmem:[%s1079 + $0x7c8] sm:$0xff]
        %v4918 = vld [vmem:[%s1079 + $0x7d0] sm:$0xff]
        %v4919 = vld [vmem:[%s1079 + $0x7d8] sm:$0xff]
        %v4920 = vld [vmem:[%s1079 + $0x7e0] sm:$0xff]
        %v4921 = vld [vmem:[%s1079 + $0x7e8] sm:$0xff]
        %v4922 = vld [vmem:[%s1079 + $0x7f0] sm:$0xff]
        %v4923 = vld [vmem:[%s1079 + $0x7f8] sm:$0xff]
        %v4924 = vld [vmem:[%s1088] sm:$0xff]
        %v4925 = vpack.c.bf16 %v4664, %v4664
        %v4926 = vpack.c.bf16 %v4665, %v4665
        %v4927 = vpack.c.bf16 %v4666, %v4666
        %v4928 = vpack.c.bf16 %v4667, %v4667
        %v4930 = vlaneseq
        %v4931 = vshrl.u32 %v4930, 7
        %v4932 = vsub.s32 0, %v4931
        %v4933 = vrot.slane %v4924, %v4932
        %v4934 = vlaneseq
        %v4935 = vshrl.u32 %v4934, 7
        %v4936 = vsub.s32 1, %v4935
        %v4937 = vrot.slane %v4924, %v4936
        %v4938 = vlaneseq
        %v4939 = vshrl.u32 %v4938, 7
        %v4940 = vsub.s32 2, %v4939
        %v4941 = vrot.slane %v4924, %v4940
        %v4942 = vlaneseq
        %v4943 = vshrl.u32 %v4942, 7
        %v4944 = vsub.s32 3, %v4943
        %v4945 = vrot.slane %v4924, %v4944
        %v4946 = vlaneseq
        %v4947 = vshrl.u32 %v4946, 7
        %v4948 = vsub.s32 4, %v4947
        %v4949 = vrot.slane %v4924, %v4948
        %v4950 = vlaneseq
        %v4951 = vshrl.u32 %v4950, 7
        %v4952 = vsub.s32 5, %v4951
        %v4953 = vrot.slane %v4924, %v4952
        %v4954 = vlaneseq
        %v4955 = vshrl.u32 %v4954, 7
        %v4956 = vsub.s32 6, %v4955
        %v4957 = vrot.slane %v4924, %v4956
        %v4958 = vlaneseq
        %v4959 = vshrl.u32 %v4958, 7
        %v4960 = vsub.s32 7, %v4959
        %v4961 = vrot.slane %v4924, %v4960
        %v5226 = vunpack.c.l.b16 %v4668
        %v5227 = vunpack.c.h.b16 %v4668
        %v5228 = vunpack.c.l.b16 %v4669
        %v5229 = vunpack.c.h.b16 %v4669
        %v5230 = vunpack.c.l.b16 %v4670
        %v5231 = vunpack.c.h.b16 %v4670
        %v5232 = vunpack.c.l.b16 %v4671
        %v5233 = vunpack.c.h.b16 %v4671
        %v5234 = vunpack.c.l.b16 %v4672
        %v5235 = vunpack.c.h.b16 %v4672
        %v5236 = vunpack.c.l.b16 %v4673
        %v5237 = vunpack.c.h.b16 %v4673
        %v5238 = vunpack.c.l.b16 %v4674
        %v5239 = vunpack.c.h.b16 %v4674
        %v5240 = vunpack.c.l.b16 %v4675
        %v5241 = vunpack.c.h.b16 %v4675
        %v5242 = vunpack.c.l.b16 %v4676
        %v5243 = vunpack.c.h.b16 %v4676
        %v5244 = vunpack.c.l.b16 %v4677
        %v5245 = vunpack.c.h.b16 %v4677
        %v5246 = vunpack.c.l.b16 %v4678
        %v5247 = vunpack.c.h.b16 %v4678
        %v5248 = vunpack.c.l.b16 %v4679
        %v5249 = vunpack.c.h.b16 %v4679
        %v5250 = vunpack.c.l.b16 %v4680
        %v5251 = vunpack.c.h.b16 %v4680
        %v5252 = vunpack.c.l.b16 %v4681
        %v5253 = vunpack.c.h.b16 %v4681
        %v5254 = vunpack.c.l.b16 %v4682
        %v5255 = vunpack.c.h.b16 %v4682
        %v5256 = vunpack.c.l.b16 %v4683
        %v5257 = vunpack.c.h.b16 %v4683
        %v5258 = vunpack.c.l.b16 %v4684
        %v5259 = vunpack.c.h.b16 %v4684
        %v5260 = vunpack.c.l.b16 %v4685
        %v5261 = vunpack.c.h.b16 %v4685
        %v5262 = vunpack.c.l.b16 %v4686
        %v5263 = vunpack.c.h.b16 %v4686
        %v5264 = vunpack.c.l.b16 %v4687
        %v5265 = vunpack.c.h.b16 %v4687
        %v5266 = vunpack.c.l.b16 %v4688
        %v5267 = vunpack.c.h.b16 %v4688
        %v5268 = vunpack.c.l.b16 %v4689
        %v5269 = vunpack.c.h.b16 %v4689
        %v5270 = vunpack.c.l.b16 %v4690
        %v5271 = vunpack.c.h.b16 %v4690
        %v5272 = vunpack.c.l.b16 %v4691
        %v5273 = vunpack.c.h.b16 %v4691
        %v5274 = vunpack.c.l.b16 %v4692
        %v5275 = vunpack.c.h.b16 %v4692
        %v5276 = vunpack.c.l.b16 %v4693
        %v5277 = vunpack.c.h.b16 %v4693
        %v5278 = vunpack.c.l.b16 %v4694
        %v5279 = vunpack.c.h.b16 %v4694
        %v5280 = vunpack.c.l.b16 %v4695
        %v5281 = vunpack.c.h.b16 %v4695
        %v5282 = vunpack.c.l.b16 %v4696
        %v5283 = vunpack.c.h.b16 %v4696
        %v5284 = vunpack.c.l.b16 %v4697
        %v5285 = vunpack.c.h.b16 %v4697
        %v5286 = vunpack.c.l.b16 %v4698
        %v5287 = vunpack.c.h.b16 %v4698
        %v5288 = vunpack.c.l.b16 %v4699
        %v5289 = vunpack.c.h.b16 %v4699
        %v5290 = vunpack.c.l.b16 %v4700
        %v5291 = vunpack.c.h.b16 %v4700
        %v5292 = vunpack.c.l.b16 %v4701
        %v5293 = vunpack.c.h.b16 %v4701
        %v5294 = vunpack.c.l.b16 %v4702
        %v5295 = vunpack.c.h.b16 %v4702
        %v5296 = vunpack.c.l.b16 %v4703
        %v5297 = vunpack.c.h.b16 %v4703
        %v5298 = vunpack.c.l.b16 %v4704
        %v5299 = vunpack.c.h.b16 %v4704
        %v5300 = vunpack.c.l.b16 %v4705
        %v5301 = vunpack.c.h.b16 %v4705
        %v5302 = vunpack.c.l.b16 %v4706
        %v5303 = vunpack.c.h.b16 %v4706
        %v5304 = vunpack.c.l.b16 %v4707
        %v5305 = vunpack.c.h.b16 %v4707
        %v5306 = vunpack.c.l.b16 %v4708
        %v5307 = vunpack.c.h.b16 %v4708
        %v5308 = vunpack.c.l.b16 %v4709
        %v5309 = vunpack.c.h.b16 %v4709
        %v5310 = vunpack.c.l.b16 %v4710
        %v5311 = vunpack.c.h.b16 %v4710
        %v5312 = vunpack.c.l.b16 %v4711
        %v5313 = vunpack.c.h.b16 %v4711
        %v5314 = vunpack.c.l.b16 %v4712
        %v5315 = vunpack.c.h.b16 %v4712
        %v5316 = vunpack.c.l.b16 %v4713
        %v5317 = vunpack.c.h.b16 %v4713
        %v5318 = vunpack.c.l.b16 %v4714
        %v5319 = vunpack.c.h.b16 %v4714
        %v5320 = vunpack.c.l.b16 %v4715
        %v5321 = vunpack.c.h.b16 %v4715
        %v5322 = vunpack.c.l.b16 %v4716
        %v5323 = vunpack.c.h.b16 %v4716
        %v5324 = vunpack.c.l.b16 %v4717
        %v5325 = vunpack.c.h.b16 %v4717
        %v5326 = vunpack.c.l.b16 %v4718
        %v5327 = vunpack.c.h.b16 %v4718
        %v5328 = vunpack.c.l.b16 %v4719
        %v5329 = vunpack.c.h.b16 %v4719
        %v5330 = vunpack.c.l.b16 %v4720
        %v5331 = vunpack.c.h.b16 %v4720
        %v5332 = vunpack.c.l.b16 %v4721
        %v5333 = vunpack.c.h.b16 %v4721
        %v5334 = vunpack.c.l.b16 %v4722
        %v5335 = vunpack.c.h.b16 %v4722
        %v5336 = vunpack.c.l.b16 %v4723
        %v5337 = vunpack.c.h.b16 %v4723
        %v5338 = vunpack.c.l.b16 %v4724
        %v5339 = vunpack.c.h.b16 %v4724
        %v5340 = vunpack.c.l.b16 %v4725
        %v5341 = vunpack.c.h.b16 %v4725
        %v5342 = vunpack.c.l.b16 %v4726
        %v5343 = vunpack.c.h.b16 %v4726
        %v5344 = vunpack.c.l.b16 %v4727
        %v5345 = vunpack.c.h.b16 %v4727
        %v5346 = vunpack.c.l.b16 %v4728
        %v5347 = vunpack.c.h.b16 %v4728
        %v5348 = vunpack.c.l.b16 %v4729
        %v5349 = vunpack.c.h.b16 %v4729
        %v5350 = vunpack.c.l.b16 %v4730
        %v5351 = vunpack.c.h.b16 %v4730
        %v5352 = vunpack.c.l.b16 %v4731
        %v5353 = vunpack.c.h.b16 %v4731
        %v5354 = vunpack.c.l.b16 %v4732
        %v5355 = vunpack.c.h.b16 %v4732
        %v5356 = vunpack.c.l.b16 %v4733
        %v5357 = vunpack.c.h.b16 %v4733
        %v5358 = vunpack.c.l.b16 %v4734
        %v5359 = vunpack.c.h.b16 %v4734
        %v5360 = vunpack.c.l.b16 %v4735
        %v5361 = vunpack.c.h.b16 %v4735
        %v5362 = vunpack.c.l.b16 %v4736
        %v5363 = vunpack.c.h.b16 %v4736
        %v5364 = vunpack.c.l.b16 %v4737
        %v5365 = vunpack.c.h.b16 %v4737
        %v5366 = vunpack.c.l.b16 %v4738
        %v5367 = vunpack.c.h.b16 %v4738
        %v5368 = vunpack.c.l.b16 %v4739
        %v5369 = vunpack.c.h.b16 %v4739
        %v5370 = vunpack.c.l.b16 %v4740
        %v5371 = vunpack.c.h.b16 %v4740
        %v5372 = vunpack.c.l.b16 %v4741
        %v5373 = vunpack.c.h.b16 %v4741
        %v5374 = vunpack.c.l.b16 %v4742
        %v5375 = vunpack.c.h.b16 %v4742
        %v5376 = vunpack.c.l.b16 %v4743
        %v5377 = vunpack.c.h.b16 %v4743
        %v5378 = vunpack.c.l.b16 %v4744
        %v5379 = vunpack.c.h.b16 %v4744
        %v5380 = vunpack.c.l.b16 %v4745
        %v5381 = vunpack.c.h.b16 %v4745
        %v5382 = vunpack.c.l.b16 %v4746
        %v5383 = vunpack.c.h.b16 %v4746
        %v5384 = vunpack.c.l.b16 %v4747
        %v5385 = vunpack.c.h.b16 %v4747
        %v5386 = vunpack.c.l.b16 %v4748
        %v5387 = vunpack.c.h.b16 %v4748
        %v5388 = vunpack.c.l.b16 %v4749
        %v5389 = vunpack.c.h.b16 %v4749
        %v5390 = vunpack.c.l.b16 %v4750
        %v5391 = vunpack.c.h.b16 %v4750
        %v5392 = vunpack.c.l.b16 %v4751
        %v5393 = vunpack.c.h.b16 %v4751
        %v5394 = vunpack.c.l.b16 %v4752
        %v5395 = vunpack.c.h.b16 %v4752
        %v5396 = vunpack.c.l.b16 %v4753
        %v5397 = vunpack.c.h.b16 %v4753
        %v5398 = vunpack.c.l.b16 %v4754
        %v5399 = vunpack.c.h.b16 %v4754
        %v5400 = vunpack.c.l.b16 %v4755
        %v5401 = vunpack.c.h.b16 %v4755
        %v5402 = vunpack.c.l.b16 %v4756
        %v5403 = vunpack.c.h.b16 %v4756
        %v5404 = vunpack.c.l.b16 %v4757
        %v5405 = vunpack.c.h.b16 %v4757
        %v5406 = vunpack.c.l.b16 %v4758
        %v5407 = vunpack.c.h.b16 %v4758
        %v5408 = vunpack.c.l.b16 %v4759
        %v5409 = vunpack.c.h.b16 %v4759
        %v5410 = vunpack.c.l.b16 %v4760
        %v5411 = vunpack.c.h.b16 %v4760
        %v5412 = vunpack.c.l.b16 %v4761
        %v5413 = vunpack.c.h.b16 %v4761
        %v5414 = vunpack.c.l.b16 %v4762
        %v5415 = vunpack.c.h.b16 %v4762
        %v5416 = vunpack.c.l.b16 %v4763
        %v5417 = vunpack.c.h.b16 %v4763
        %v5418 = vunpack.c.l.b16 %v4764
        %v5419 = vunpack.c.h.b16 %v4764
        %v5420 = vunpack.c.l.b16 %v4765
        %v5421 = vunpack.c.h.b16 %v4765
        %v5422 = vunpack.c.l.b16 %v4766
        %v5423 = vunpack.c.h.b16 %v4766
        %v5424 = vunpack.c.l.b16 %v4767
        %v5425 = vunpack.c.h.b16 %v4767
        %v5426 = vunpack.c.l.b16 %v4768
        %v5427 = vunpack.c.h.b16 %v4768
        %v5428 = vunpack.c.l.b16 %v4769
        %v5429 = vunpack.c.h.b16 %v4769
        %v5430 = vunpack.c.l.b16 %v4770
        %v5431 = vunpack.c.h.b16 %v4770
        %v5432 = vunpack.c.l.b16 %v4771
        %v5433 = vunpack.c.h.b16 %v4771
        %v5434 = vunpack.c.l.b16 %v4772
        %v5435 = vunpack.c.h.b16 %v4772
        %v5436 = vunpack.c.l.b16 %v4773
        %v5437 = vunpack.c.h.b16 %v4773
        %v5438 = vunpack.c.l.b16 %v4774
        %v5439 = vunpack.c.h.b16 %v4774
        %v5440 = vunpack.c.l.b16 %v4775
        %v5441 = vunpack.c.h.b16 %v4775
        %v5442 = vunpack.c.l.b16 %v4776
        %v5443 = vunpack.c.h.b16 %v4776
        %v5444 = vunpack.c.l.b16 %v4777
        %v5445 = vunpack.c.h.b16 %v4777
        %v5446 = vunpack.c.l.b16 %v4778
        %v5447 = vunpack.c.h.b16 %v4778
        %v5448 = vunpack.c.l.b16 %v4779
        %v5449 = vunpack.c.h.b16 %v4779
        %v5450 = vunpack.c.l.b16 %v4780
        %v5451 = vunpack.c.h.b16 %v4780
        %v5452 = vunpack.c.l.b16 %v4781
        %v5453 = vunpack.c.h.b16 %v4781
        %v5454 = vunpack.c.l.b16 %v4782
        %v5455 = vunpack.c.h.b16 %v4782
        %v5456 = vunpack.c.l.b16 %v4783
        %v5457 = vunpack.c.h.b16 %v4783
        %v5458 = vunpack.c.l.b16 %v4784
        %v5459 = vunpack.c.h.b16 %v4784
        %v5460 = vunpack.c.l.b16 %v4785
        %v5461 = vunpack.c.h.b16 %v4785
        %v5462 = vunpack.c.l.b16 %v4786
        %v5463 = vunpack.c.h.b16 %v4786
        %v5464 = vunpack.c.l.b16 %v4787
        %v5465 = vunpack.c.h.b16 %v4787
        %v5466 = vunpack.c.l.b16 %v4788
        %v5467 = vunpack.c.h.b16 %v4788
        %v5468 = vunpack.c.l.b16 %v4789
        %v5469 = vunpack.c.h.b16 %v4789
        %v5470 = vunpack.c.l.b16 %v4790
        %v5471 = vunpack.c.h.b16 %v4790
        %v5472 = vunpack.c.l.b16 %v4791
        %v5473 = vunpack.c.h.b16 %v4791
        %v5474 = vunpack.c.l.b16 %v4792
        %v5475 = vunpack.c.h.b16 %v4792
        %v5476 = vunpack.c.l.b16 %v4793
        %v5477 = vunpack.c.h.b16 %v4793
        %v5478 = vunpack.c.l.b16 %v4794
        %v5479 = vunpack.c.h.b16 %v4794
        %v5480 = vunpack.c.l.b16 %v4795
        %v5481 = vunpack.c.h.b16 %v4795
        %v5482 = vunpack.c.l.b16 %v4796
        %v5483 = vunpack.c.h.b16 %v4796
        %v5484 = vunpack.c.l.b16 %v4797
        %v5485 = vunpack.c.h.b16 %v4797
        %v5486 = vunpack.c.l.b16 %v4798
        %v5487 = vunpack.c.h.b16 %v4798
        %v5488 = vunpack.c.l.b16 %v4799
        %v5489 = vunpack.c.h.b16 %v4799
        %v5490 = vunpack.c.l.b16 %v4800
        %v5491 = vunpack.c.h.b16 %v4800
        %v5492 = vunpack.c.l.b16 %v4801
        %v5493 = vunpack.c.h.b16 %v4801
        %v5494 = vunpack.c.l.b16 %v4802
        %v5495 = vunpack.c.h.b16 %v4802
        %v5496 = vunpack.c.l.b16 %v4803
        %v5497 = vunpack.c.h.b16 %v4803
        %v5498 = vunpack.c.l.b16 %v4804
        %v5499 = vunpack.c.h.b16 %v4804
        %v5500 = vunpack.c.l.b16 %v4805
        %v5501 = vunpack.c.h.b16 %v4805
        %v5502 = vunpack.c.l.b16 %v4806
        %v5503 = vunpack.c.h.b16 %v4806
        %v5504 = vunpack.c.l.b16 %v4807
        %v5505 = vunpack.c.h.b16 %v4807
        %v5506 = vunpack.c.l.b16 %v4808
        %v5507 = vunpack.c.h.b16 %v4808
        %v5508 = vunpack.c.l.b16 %v4809
        %v5509 = vunpack.c.h.b16 %v4809
        %v5510 = vunpack.c.l.b16 %v4810
        %v5511 = vunpack.c.h.b16 %v4810
        %v5512 = vunpack.c.l.b16 %v4811
        %v5513 = vunpack.c.h.b16 %v4811
        %v5514 = vunpack.c.l.b16 %v4812
        %v5515 = vunpack.c.h.b16 %v4812
        %v5516 = vunpack.c.l.b16 %v4813
        %v5517 = vunpack.c.h.b16 %v4813
        %v5518 = vunpack.c.l.b16 %v4814
        %v5519 = vunpack.c.h.b16 %v4814
        %v5520 = vunpack.c.l.b16 %v4815
        %v5521 = vunpack.c.h.b16 %v4815
        %v5522 = vunpack.c.l.b16 %v4816
        %v5523 = vunpack.c.h.b16 %v4816
        %v5524 = vunpack.c.l.b16 %v4817
        %v5525 = vunpack.c.h.b16 %v4817
        %v5526 = vunpack.c.l.b16 %v4818
        %v5527 = vunpack.c.h.b16 %v4818
        %v5528 = vunpack.c.l.b16 %v4819
        %v5529 = vunpack.c.h.b16 %v4819
        %v5530 = vunpack.c.l.b16 %v4820
        %v5531 = vunpack.c.h.b16 %v4820
        %v5532 = vunpack.c.l.b16 %v4821
        %v5533 = vunpack.c.h.b16 %v4821
        %v5534 = vunpack.c.l.b16 %v4822
        %v5535 = vunpack.c.h.b16 %v4822
        %v5536 = vunpack.c.l.b16 %v4823
        %v5537 = vunpack.c.h.b16 %v4823
        %v5538 = vunpack.c.l.b16 %v4824
        %v5539 = vunpack.c.h.b16 %v4824
        %v5540 = vunpack.c.l.b16 %v4825
        %v5541 = vunpack.c.h.b16 %v4825
        %v5542 = vunpack.c.l.b16 %v4826
        %v5543 = vunpack.c.h.b16 %v4826
        %v5544 = vunpack.c.l.b16 %v4827
        %v5545 = vunpack.c.h.b16 %v4827
        %v5546 = vunpack.c.l.b16 %v4828
        %v5547 = vunpack.c.h.b16 %v4828
        %v5548 = vunpack.c.l.b16 %v4829
        %v5549 = vunpack.c.h.b16 %v4829
        %v5550 = vunpack.c.l.b16 %v4830
        %v5551 = vunpack.c.h.b16 %v4830
        %v5552 = vunpack.c.l.b16 %v4831
        %v5553 = vunpack.c.h.b16 %v4831
        %v5554 = vunpack.c.l.b16 %v4832
        %v5555 = vunpack.c.h.b16 %v4832
        %v5556 = vunpack.c.l.b16 %v4833
        %v5557 = vunpack.c.h.b16 %v4833
        %v5558 = vunpack.c.l.b16 %v4834
        %v5559 = vunpack.c.h.b16 %v4834
        %v5560 = vunpack.c.l.b16 %v4835
        %v5561 = vunpack.c.h.b16 %v4835
        %v5562 = vunpack.c.l.b16 %v4836
        %v5563 = vunpack.c.h.b16 %v4836
        %v5564 = vunpack.c.l.b16 %v4837
        %v5565 = vunpack.c.h.b16 %v4837
        %v5566 = vunpack.c.l.b16 %v4838
        %v5567 = vunpack.c.h.b16 %v4838
        %v5568 = vunpack.c.l.b16 %v4839
        %v5569 = vunpack.c.h.b16 %v4839
        %v5570 = vunpack.c.l.b16 %v4840
        %v5571 = vunpack.c.h.b16 %v4840
        %v5572 = vunpack.c.l.b16 %v4841
        %v5573 = vunpack.c.h.b16 %v4841
        %v5574 = vunpack.c.l.b16 %v4842
        %v5575 = vunpack.c.h.b16 %v4842
        %v5576 = vunpack.c.l.b16 %v4843
        %v5577 = vunpack.c.h.b16 %v4843
        %v5578 = vunpack.c.l.b16 %v4844
        %v5579 = vunpack.c.h.b16 %v4844
        %v5580 = vunpack.c.l.b16 %v4845
        %v5581 = vunpack.c.h.b16 %v4845
        %v5582 = vunpack.c.l.b16 %v4846
        %v5583 = vunpack.c.h.b16 %v4846
        %v5584 = vunpack.c.l.b16 %v4847
        %v5585 = vunpack.c.h.b16 %v4847
        %v5586 = vunpack.c.l.b16 %v4848
        %v5587 = vunpack.c.h.b16 %v4848
        %v5588 = vunpack.c.l.b16 %v4849
        %v5589 = vunpack.c.h.b16 %v4849
        %v5590 = vunpack.c.l.b16 %v4850
        %v5591 = vunpack.c.h.b16 %v4850
        %v5592 = vunpack.c.l.b16 %v4851
        %v5593 = vunpack.c.h.b16 %v4851
        %v5594 = vunpack.c.l.b16 %v4852
        %v5595 = vunpack.c.h.b16 %v4852
        %v5596 = vunpack.c.l.b16 %v4853
        %v5597 = vunpack.c.h.b16 %v4853
        %v5598 = vunpack.c.l.b16 %v4854
        %v5599 = vunpack.c.h.b16 %v4854
        %v5600 = vunpack.c.l.b16 %v4855
        %v5601 = vunpack.c.h.b16 %v4855
        %v5602 = vunpack.c.l.b16 %v4856
        %v5603 = vunpack.c.h.b16 %v4856
        %v5604 = vunpack.c.l.b16 %v4857
        %v5605 = vunpack.c.h.b16 %v4857
        %v5606 = vunpack.c.l.b16 %v4858
        %v5607 = vunpack.c.h.b16 %v4858
        %v5608 = vunpack.c.l.b16 %v4859
        %v5609 = vunpack.c.h.b16 %v4859
        %v5610 = vunpack.c.l.b16 %v4860
        %v5611 = vunpack.c.h.b16 %v4860
        %v5612 = vunpack.c.l.b16 %v4861
        %v5613 = vunpack.c.h.b16 %v4861
        %v5614 = vunpack.c.l.b16 %v4862
        %v5615 = vunpack.c.h.b16 %v4862
        %v5616 = vunpack.c.l.b16 %v4863
        %v5617 = vunpack.c.h.b16 %v4863
        %v5618 = vunpack.c.l.b16 %v4864
        %v5619 = vunpack.c.h.b16 %v4864
        %v5620 = vunpack.c.l.b16 %v4865
        %v5621 = vunpack.c.h.b16 %v4865
        %v5622 = vunpack.c.l.b16 %v4866
        %v5623 = vunpack.c.h.b16 %v4866
        %v5624 = vunpack.c.l.b16 %v4867
        %v5625 = vunpack.c.h.b16 %v4867
        %v5626 = vunpack.c.l.b16 %v4868
        %v5627 = vunpack.c.h.b16 %v4868
        %v5628 = vunpack.c.l.b16 %v4869
        %v5629 = vunpack.c.h.b16 %v4869
        %v5630 = vunpack.c.l.b16 %v4870
        %v5631 = vunpack.c.h.b16 %v4870
        %v5632 = vunpack.c.l.b16 %v4871
        %v5633 = vunpack.c.h.b16 %v4871
        %v5634 = vunpack.c.l.b16 %v4872
        %v5635 = vunpack.c.h.b16 %v4872
        %v5636 = vunpack.c.l.b16 %v4873
        %v5637 = vunpack.c.h.b16 %v4873
        %v5638 = vunpack.c.l.b16 %v4874
        %v5639 = vunpack.c.h.b16 %v4874
        %v5640 = vunpack.c.l.b16 %v4875
        %v5641 = vunpack.c.h.b16 %v4875
        %v5642 = vunpack.c.l.b16 %v4876
        %v5643 = vunpack.c.h.b16 %v4876
        %v5644 = vunpack.c.l.b16 %v4877
        %v5645 = vunpack.c.h.b16 %v4877
        %v5646 = vunpack.c.l.b16 %v4878
        %v5647 = vunpack.c.h.b16 %v4878
        %v5648 = vunpack.c.l.b16 %v4879
        %v5649 = vunpack.c.h.b16 %v4879
        %v5650 = vunpack.c.l.b16 %v4880
        %v5651 = vunpack.c.h.b16 %v4880
        %v5652 = vunpack.c.l.b16 %v4881
        %v5653 = vunpack.c.h.b16 %v4881
        %v5654 = vunpack.c.l.b16 %v4882
        %v5655 = vunpack.c.h.b16 %v4882
        %v5656 = vunpack.c.l.b16 %v4883
        %v5657 = vunpack.c.h.b16 %v4883
        %v5658 = vunpack.c.l.b16 %v4884
        %v5659 = vunpack.c.h.b16 %v4884
        %v5660 = vunpack.c.l.b16 %v4885
        %v5661 = vunpack.c.h.b16 %v4885
        %v5662 = vunpack.c.l.b16 %v4886
        %v5663 = vunpack.c.h.b16 %v4886
        %v5664 = vunpack.c.l.b16 %v4887
        %v5665 = vunpack.c.h.b16 %v4887
        %v5666 = vunpack.c.l.b16 %v4888
        %v5667 = vunpack.c.h.b16 %v4888
        %v5668 = vunpack.c.l.b16 %v4889
        %v5669 = vunpack.c.h.b16 %v4889
        %v5670 = vunpack.c.l.b16 %v4890
        %v5671 = vunpack.c.h.b16 %v4890
        %v5672 = vunpack.c.l.b16 %v4891
        %v5673 = vunpack.c.h.b16 %v4891
        %v5674 = vunpack.c.l.b16 %v4892
        %v5675 = vunpack.c.h.b16 %v4892
        %v5676 = vunpack.c.l.b16 %v4893
        %v5677 = vunpack.c.h.b16 %v4893
        %v5678 = vunpack.c.l.b16 %v4894
        %v5679 = vunpack.c.h.b16 %v4894
        %v5680 = vunpack.c.l.b16 %v4895
        %v5681 = vunpack.c.h.b16 %v4895
        %v5682 = vunpack.c.l.b16 %v4896
        %v5683 = vunpack.c.h.b16 %v4896
        %v5684 = vunpack.c.l.b16 %v4897
        %v5685 = vunpack.c.h.b16 %v4897
        %v5686 = vunpack.c.l.b16 %v4898
        %v5687 = vunpack.c.h.b16 %v4898
        %v5688 = vunpack.c.l.b16 %v4899
        %v5689 = vunpack.c.h.b16 %v4899
        %v5690 = vunpack.c.l.b16 %v4900
        %v5691 = vunpack.c.h.b16 %v4900
        %v5692 = vunpack.c.l.b16 %v4901
        %v5693 = vunpack.c.h.b16 %v4901
        %v5694 = vunpack.c.l.b16 %v4902
        %v5695 = vunpack.c.h.b16 %v4902
        %v5696 = vunpack.c.l.b16 %v4903
        %v5697 = vunpack.c.h.b16 %v4903
        %v5698 = vunpack.c.l.b16 %v4904
        %v5699 = vunpack.c.h.b16 %v4904
        %v5700 = vunpack.c.l.b16 %v4905
        %v5701 = vunpack.c.h.b16 %v4905
        %v5702 = vunpack.c.l.b16 %v4906
        %v5703 = vunpack.c.h.b16 %v4906
        %v5704 = vunpack.c.l.b16 %v4907
        %v5705 = vunpack.c.h.b16 %v4907
        %v5706 = vunpack.c.l.b16 %v4908
        %v5707 = vunpack.c.h.b16 %v4908
        %v5708 = vunpack.c.l.b16 %v4909
        %v5709 = vunpack.c.h.b16 %v4909
        %v5710 = vunpack.c.l.b16 %v4910
        %v5711 = vunpack.c.h.b16 %v4910
        %v5712 = vunpack.c.l.b16 %v4911
        %v5713 = vunpack.c.h.b16 %v4911
        %v5714 = vunpack.c.l.b16 %v4912
        %v5715 = vunpack.c.h.b16 %v4912
        %v5716 = vunpack.c.l.b16 %v4913
        %v5717 = vunpack.c.h.b16 %v4913
        %v5718 = vunpack.c.l.b16 %v4914
        %v5719 = vunpack.c.h.b16 %v4914
        %v5720 = vunpack.c.l.b16 %v4915
        %v5721 = vunpack.c.h.b16 %v4915
        %v5722 = vunpack.c.l.b16 %v4916
        %v5723 = vunpack.c.h.b16 %v4916
        %v5724 = vunpack.c.l.b16 %v4917
        %v5725 = vunpack.c.h.b16 %v4917
        %v5726 = vunpack.c.l.b16 %v4918
        %v5727 = vunpack.c.h.b16 %v4918
        %v5728 = vunpack.c.l.b16 %v4919
        %v5729 = vunpack.c.h.b16 %v4919
        %v5730 = vunpack.c.l.b16 %v4920
        %v5731 = vunpack.c.h.b16 %v4920
        %v5732 = vunpack.c.l.b16 %v4921
        %v5733 = vunpack.c.h.b16 %v4921
        %v5734 = vunpack.c.l.b16 %v4922
        %v5735 = vunpack.c.h.b16 %v4922
        %v5736 = vunpack.c.l.b16 %v4923
        %v5737 = vunpack.c.h.b16 %v4923
        %v5738 = vpack.c.b16 %v5234, %v5226
        %v5739 = vpack.c.b16 %v5235, %v5227
        %v5740 = vpack.c.b16 %v5236, %v5228
        %v5741 = vpack.c.b16 %v5237, %v5229
        %v5742 = vpack.c.b16 %v5238, %v5230
        %v5743 = vpack.c.b16 %v5239, %v5231
        %v5744 = vpack.c.b16 %v5240, %v5232
        %v5745 = vpack.c.b16 %v5241, %v5233
        %v5746 = vpack.c.b16 %v5250, %v5242
        %v5747 = vpack.c.b16 %v5251, %v5243
        %v5748 = vpack.c.b16 %v5252, %v5244
        %v5749 = vpack.c.b16 %v5253, %v5245
        %v5750 = vpack.c.b16 %v5254, %v5246
        %v5751 = vpack.c.b16 %v5255, %v5247
        %v5752 = vpack.c.b16 %v5256, %v5248
        %v5753 = vpack.c.b16 %v5257, %v5249
        %v5754 = vpack.c.b16 %v5266, %v5258
        %v5755 = vpack.c.b16 %v5267, %v5259
        %v5756 = vpack.c.b16 %v5268, %v5260
        %v5757 = vpack.c.b16 %v5269, %v5261
        %v5758 = vpack.c.b16 %v5270, %v5262
        %v5759 = vpack.c.b16 %v5271, %v5263
        %v5760 = vpack.c.b16 %v5272, %v5264
        %v5761 = vpack.c.b16 %v5273, %v5265
        %v5762 = vpack.c.b16 %v5282, %v5274
        %v5763 = vpack.c.b16 %v5283, %v5275
        %v5764 = vpack.c.b16 %v5284, %v5276
        %v5765 = vpack.c.b16 %v5285, %v5277
        %v5766 = vpack.c.b16 %v5286, %v5278
        %v5767 = vpack.c.b16 %v5287, %v5279
        %v5768 = vpack.c.b16 %v5288, %v5280
        %v5769 = vpack.c.b16 %v5289, %v5281
        %v5770 = vpack.c.b16 %v5298, %v5290
        %v5771 = vpack.c.b16 %v5299, %v5291
        %v5772 = vpack.c.b16 %v5300, %v5292
        %v5773 = vpack.c.b16 %v5301, %v5293
        %v5774 = vpack.c.b16 %v5302, %v5294
        %v5775 = vpack.c.b16 %v5303, %v5295
        %v5776 = vpack.c.b16 %v5304, %v5296
        %v5777 = vpack.c.b16 %v5305, %v5297
        %v5778 = vpack.c.b16 %v5314, %v5306
        %v5779 = vpack.c.b16 %v5315, %v5307
        %v5780 = vpack.c.b16 %v5316, %v5308
        %v5781 = vpack.c.b16 %v5317, %v5309
        %v5782 = vpack.c.b16 %v5318, %v5310
        %v5783 = vpack.c.b16 %v5319, %v5311
        %v5784 = vpack.c.b16 %v5320, %v5312
        %v5785 = vpack.c.b16 %v5321, %v5313
        %v5786 = vpack.c.b16 %v5330, %v5322
        %v5787 = vpack.c.b16 %v5331, %v5323
        %v5788 = vpack.c.b16 %v5332, %v5324
        %v5789 = vpack.c.b16 %v5333, %v5325
        %v5790 = vpack.c.b16 %v5334, %v5326
        %v5791 = vpack.c.b16 %v5335, %v5327
        %v5792 = vpack.c.b16 %v5336, %v5328
        %v5793 = vpack.c.b16 %v5337, %v5329
        %v5794 = vpack.c.b16 %v5346, %v5338
        %v5795 = vpack.c.b16 %v5347, %v5339
        %v5796 = vpack.c.b16 %v5348, %v5340
        %v5797 = vpack.c.b16 %v5349, %v5341
        %v5798 = vpack.c.b16 %v5350, %v5342
        %v5799 = vpack.c.b16 %v5351, %v5343
        %v5800 = vpack.c.b16 %v5352, %v5344
        %v5801 = vpack.c.b16 %v5353, %v5345
        %v5802 = vpack.c.b16 %v5362, %v5354
        %v5803 = vpack.c.b16 %v5363, %v5355
        %v5804 = vpack.c.b16 %v5364, %v5356
        %v5805 = vpack.c.b16 %v5365, %v5357
        %v5806 = vpack.c.b16 %v5366, %v5358
        %v5807 = vpack.c.b16 %v5367, %v5359
        %v5808 = vpack.c.b16 %v5368, %v5360
        %v5809 = vpack.c.b16 %v5369, %v5361
        %v5810 = vpack.c.b16 %v5378, %v5370
        %v5811 = vpack.c.b16 %v5379, %v5371
        %v5812 = vpack.c.b16 %v5380, %v5372
        %v5813 = vpack.c.b16 %v5381, %v5373
        %v5814 = vpack.c.b16 %v5382, %v5374
        %v5815 = vpack.c.b16 %v5383, %v5375
        %v5816 = vpack.c.b16 %v5384, %v5376
        %v5817 = vpack.c.b16 %v5385, %v5377
        %v5818 = vpack.c.b16 %v5394, %v5386
        %v5819 = vpack.c.b16 %v5395, %v5387
        %v5820 = vpack.c.b16 %v5396, %v5388
        %v5821 = vpack.c.b16 %v5397, %v5389
        %v5822 = vpack.c.b16 %v5398, %v5390
        %v5823 = vpack.c.b16 %v5399, %v5391
        %v5824 = vpack.c.b16 %v5400, %v5392
        %v5825 = vpack.c.b16 %v5401, %v5393
        %v5826 = vpack.c.b16 %v5410, %v5402
        %v5827 = vpack.c.b16 %v5411, %v5403
        %v5828 = vpack.c.b16 %v5412, %v5404
        %v5829 = vpack.c.b16 %v5413, %v5405
        %v5830 = vpack.c.b16 %v5414, %v5406
        %v5831 = vpack.c.b16 %v5415, %v5407
        %v5832 = vpack.c.b16 %v5416, %v5408
        %v5833 = vpack.c.b16 %v5417, %v5409
        %v5834 = vpack.c.b16 %v5426, %v5418
        %v5835 = vpack.c.b16 %v5427, %v5419
        %v5836 = vpack.c.b16 %v5428, %v5420
        %v5837 = vpack.c.b16 %v5429, %v5421
        %v5838 = vpack.c.b16 %v5430, %v5422
        %v5839 = vpack.c.b16 %v5431, %v5423
        %v5840 = vpack.c.b16 %v5432, %v5424
        %v5841 = vpack.c.b16 %v5433, %v5425
        %v5842 = vpack.c.b16 %v5442, %v5434
        %v5843 = vpack.c.b16 %v5443, %v5435
        %v5844 = vpack.c.b16 %v5444, %v5436
        %v5845 = vpack.c.b16 %v5445, %v5437
        %v5846 = vpack.c.b16 %v5446, %v5438
        %v5847 = vpack.c.b16 %v5447, %v5439
        %v5848 = vpack.c.b16 %v5448, %v5440
        %v5849 = vpack.c.b16 %v5449, %v5441
        %v5850 = vpack.c.b16 %v5458, %v5450
        %v5851 = vpack.c.b16 %v5459, %v5451
        %v5852 = vpack.c.b16 %v5460, %v5452
        %v5853 = vpack.c.b16 %v5461, %v5453
        %v5854 = vpack.c.b16 %v5462, %v5454
        %v5855 = vpack.c.b16 %v5463, %v5455
        %v5856 = vpack.c.b16 %v5464, %v5456
        %v5857 = vpack.c.b16 %v5465, %v5457
        %v5858 = vpack.c.b16 %v5474, %v5466
        %v5859 = vpack.c.b16 %v5475, %v5467
        %v5860 = vpack.c.b16 %v5476, %v5468
        %v5861 = vpack.c.b16 %v5477, %v5469
        %v5862 = vpack.c.b16 %v5478, %v5470
        %v5863 = vpack.c.b16 %v5479, %v5471
        %v5864 = vpack.c.b16 %v5480, %v5472
        %v5865 = vpack.c.b16 %v5481, %v5473
        %v5866 = vpack.c.b16 %v5490, %v5482
        %v5867 = vpack.c.b16 %v5491, %v5483
        %v5868 = vpack.c.b16 %v5492, %v5484
        %v5869 = vpack.c.b16 %v5493, %v5485
        %v5870 = vpack.c.b16 %v5494, %v5486
        %v5871 = vpack.c.b16 %v5495, %v5487
        %v5872 = vpack.c.b16 %v5496, %v5488
        %v5873 = vpack.c.b16 %v5497, %v5489
        %v5874 = vpack.c.b16 %v5506, %v5498
        %v5875 = vpack.c.b16 %v5507, %v5499
        %v5876 = vpack.c.b16 %v5508, %v5500
        %v5877 = vpack.c.b16 %v5509, %v5501
        %v5878 = vpack.c.b16 %v5510, %v5502
        %v5879 = vpack.c.b16 %v5511, %v5503
        %v5880 = vpack.c.b16 %v5512, %v5504
        %v5881 = vpack.c.b16 %v5513, %v5505
        %v5882 = vpack.c.b16 %v5522, %v5514
        %v5883 = vpack.c.b16 %v5523, %v5515
        %v5884 = vpack.c.b16 %v5524, %v5516
        %v5885 = vpack.c.b16 %v5525, %v5517
        %v5886 = vpack.c.b16 %v5526, %v5518
        %v5887 = vpack.c.b16 %v5527, %v5519
        %v5888 = vpack.c.b16 %v5528, %v5520
        %v5889 = vpack.c.b16 %v5529, %v5521
        %v5890 = vpack.c.b16 %v5538, %v5530
        %v5891 = vpack.c.b16 %v5539, %v5531
        %v5892 = vpack.c.b16 %v5540, %v5532
        %v5893 = vpack.c.b16 %v5541, %v5533
        %v5894 = vpack.c.b16 %v5542, %v5534
        %v5895 = vpack.c.b16 %v5543, %v5535
        %v5896 = vpack.c.b16 %v5544, %v5536
        %v5897 = vpack.c.b16 %v5545, %v5537
        %v5898 = vpack.c.b16 %v5554, %v5546
        %v5899 = vpack.c.b16 %v5555, %v5547
        %v5900 = vpack.c.b16 %v5556, %v5548
        %v5901 = vpack.c.b16 %v5557, %v5549
        %v5902 = vpack.c.b16 %v5558, %v5550
        %v5903 = vpack.c.b16 %v5559, %v5551
        %v5904 = vpack.c.b16 %v5560, %v5552
        %v5905 = vpack.c.b16 %v5561, %v5553
        %v5906 = vpack.c.b16 %v5570, %v5562
        %v5907 = vpack.c.b16 %v5571, %v5563
        %v5908 = vpack.c.b16 %v5572, %v5564
        %v5909 = vpack.c.b16 %v5573, %v5565
        %v5910 = vpack.c.b16 %v5574, %v5566
        %v5911 = vpack.c.b16 %v5575, %v5567
        %v5912 = vpack.c.b16 %v5576, %v5568
        %v5913 = vpack.c.b16 %v5577, %v5569
        %v5914 = vpack.c.b16 %v5586, %v5578
        %v5915 = vpack.c.b16 %v5587, %v5579
        %v5916 = vpack.c.b16 %v5588, %v5580
        %v5917 = vpack.c.b16 %v5589, %v5581
        %v5918 = vpack.c.b16 %v5590, %v5582
        %v5919 = vpack.c.b16 %v5591, %v5583
        %v5920 = vpack.c.b16 %v5592, %v5584
        %v5921 = vpack.c.b16 %v5593, %v5585
        %v5922 = vpack.c.b16 %v5602, %v5594
        %v5923 = vpack.c.b16 %v5603, %v5595
        %v5924 = vpack.c.b16 %v5604, %v5596
        %v5925 = vpack.c.b16 %v5605, %v5597
        %v5926 = vpack.c.b16 %v5606, %v5598
        %v5927 = vpack.c.b16 %v5607, %v5599
        %v5928 = vpack.c.b16 %v5608, %v5600
        %v5929 = vpack.c.b16 %v5609, %v5601
        %v5930 = vpack.c.b16 %v5618, %v5610
        %v5931 = vpack.c.b16 %v5619, %v5611
        %v5932 = vpack.c.b16 %v5620, %v5612
        %v5933 = vpack.c.b16 %v5621, %v5613
        %v5934 = vpack.c.b16 %v5622, %v5614
        %v5935 = vpack.c.b16 %v5623, %v5615
        %v5936 = vpack.c.b16 %v5624, %v5616
        %v5937 = vpack.c.b16 %v5625, %v5617
        %v5938 = vpack.c.b16 %v5634, %v5626
        %v5939 = vpack.c.b16 %v5635, %v5627
        %v5940 = vpack.c.b16 %v5636, %v5628
        %v5941 = vpack.c.b16 %v5637, %v5629
        %v5942 = vpack.c.b16 %v5638, %v5630
        %v5943 = vpack.c.b16 %v5639, %v5631
        %v5944 = vpack.c.b16 %v5640, %v5632
        %v5945 = vpack.c.b16 %v5641, %v5633
        %v5946 = vpack.c.b16 %v5650, %v5642
        %v5947 = vpack.c.b16 %v5651, %v5643
        %v5948 = vpack.c.b16 %v5652, %v5644
        %v5949 = vpack.c.b16 %v5653, %v5645
        %v5950 = vpack.c.b16 %v5654, %v5646
        %v5951 = vpack.c.b16 %v5655, %v5647
        %v5952 = vpack.c.b16 %v5656, %v5648
        %v5953 = vpack.c.b16 %v5657, %v5649
        %v5954 = vpack.c.b16 %v5666, %v5658
        %v5955 = vpack.c.b16 %v5667, %v5659
        %v5956 = vpack.c.b16 %v5668, %v5660
        %v5957 = vpack.c.b16 %v5669, %v5661
        %v5958 = vpack.c.b16 %v5670, %v5662
        %v5959 = vpack.c.b16 %v5671, %v5663
        %v5960 = vpack.c.b16 %v5672, %v5664
        %v5961 = vpack.c.b16 %v5673, %v5665
        %v5962 = vpack.c.b16 %v5682, %v5674
        %v5963 = vpack.c.b16 %v5683, %v5675
        %v5964 = vpack.c.b16 %v5684, %v5676
        %v5965 = vpack.c.b16 %v5685, %v5677
        %v5966 = vpack.c.b16 %v5686, %v5678
        %v5967 = vpack.c.b16 %v5687, %v5679
        %v5968 = vpack.c.b16 %v5688, %v5680
        %v5969 = vpack.c.b16 %v5689, %v5681
        %v5970 = vpack.c.b16 %v5698, %v5690
        %v5971 = vpack.c.b16 %v5699, %v5691
        %v5972 = vpack.c.b16 %v5700, %v5692
        %v5973 = vpack.c.b16 %v5701, %v5693
        %v5974 = vpack.c.b16 %v5702, %v5694
        %v5975 = vpack.c.b16 %v5703, %v5695
        %v5976 = vpack.c.b16 %v5704, %v5696
        %v5977 = vpack.c.b16 %v5705, %v5697
        %v5978 = vpack.c.b16 %v5714, %v5706
        %v5979 = vpack.c.b16 %v5715, %v5707
        %v5980 = vpack.c.b16 %v5716, %v5708
        %v5981 = vpack.c.b16 %v5717, %v5709
        %v5982 = vpack.c.b16 %v5718, %v5710
        %v5983 = vpack.c.b16 %v5719, %v5711
        %v5984 = vpack.c.b16 %v5720, %v5712
        %v5985 = vpack.c.b16 %v5721, %v5713
        %v5986 = vpack.c.b16 %v5730, %v5722
        %v5987 = vpack.c.b16 %v5731, %v5723
        %v5988 = vpack.c.b16 %v5732, %v5724
        %v5989 = vpack.c.b16 %v5733, %v5725
        %v5990 = vpack.c.b16 %v5734, %v5726
        %v5991 = vpack.c.b16 %v5735, %v5727
        %v5992 = vpack.c.b16 %v5736, %v5728
        %v5993 = vpack.c.b16 %v5737, %v5729
        %6250 = vmatprep.subr.bf16.mxu0 %v5739
        %6251 = vmatpush1.bf16.msra.mxu0 %v5738
        %6252 = vmatprep.subr.bf16.mxu0 %v5747
        %6253 = vmatpush1.bf16.msra.mxu0 %v5746
        %6254 = vmatprep.subr.bf16.mxu0 %v5755
        %6255 = vmatpush1.bf16.msra.mxu0 %v5754
        %6256 = vmatprep.subr.bf16.mxu0 %v5763
        %6257 = vmatpush1.bf16.msra.mxu0 %v5762
        %6258 = vmatprep.subr.bf16.mxu0 %v5771
        %6259 = vmatpush1.bf16.msra.mxu0 %v5770
        %6260 = vmatprep.subr.bf16.mxu0 %v5779
        %6261 = vmatpush1.bf16.msra.mxu0 %v5778
        %6262 = vmatprep.subr.bf16.mxu0 %v5787
        %6263 = vmatpush1.bf16.msra.mxu0 %v5786
        %6264 = vmatprep.subr.bf16.mxu0 %v5795
        %6265 = vmatpush1.bf16.msra.mxu0 %v5794
        %6266 = vmatprep.subr.bf16.mxu0 %v5803
        %6267 = vmatpush1.bf16.msra.mxu0 %v5802
        %6268 = vmatprep.subr.bf16.mxu0 %v5811
        %6269 = vmatpush1.bf16.msra.mxu0 %v5810
        %6270 = vmatprep.subr.bf16.mxu0 %v5819
        %6271 = vmatpush1.bf16.msra.mxu0 %v5818
        %6272 = vmatprep.subr.bf16.mxu0 %v5827
        %6273 = vmatpush1.bf16.msra.mxu0 %v5826
        %6274 = vmatprep.subr.bf16.mxu0 %v5835
        %6275 = vmatpush1.bf16.msra.mxu0 %v5834
        %6276 = vmatprep.subr.bf16.mxu0 %v5843
        %6277 = vmatpush1.bf16.msra.mxu0 %v5842
        %6278 = vmatprep.subr.bf16.mxu0 %v5851
        %6279 = vmatpush1.bf16.msra.mxu0 %v5850
        %6280 = vmatprep.subr.bf16.mxu0 %v5859
        %6281 = vmatpush1.bf16.msra.mxu0 %v5858
        %6282 = vmatprep.mubr.bf16.mxu0 %v4926
        %6283 = vmatmul.mubr.bf16.gmra.mrb[0].mxu0 %v4925
        %v6284 = vpop.f32.mrb[0].mxu0
        %v6285 = vadd.f32 %v4933, %v6284
        %v6286 = vpop.f32.mrb[0].mxu0
        %v6287 = vadd.f32 %v4937, %v6286
        %v6288 = vpop.f32.mrb[0].mxu0
        %v6289 = vpop.f32.mrb[0].mxu0
        %6290 = vdwg.mxu0
        %6291 = vmatprep.subr.bf16.mxu0 %v5867
        %6292 = vmatpush1.bf16.msra.mxu0 %v5866
        %6293 = vmatprep.subr.bf16.mxu0 %v5875
        %6294 = vmatpush1.bf16.msra.mxu0 %v5874
        %6295 = vmatprep.subr.bf16.mxu0 %v5883
        %6296 = vmatpush1.bf16.msra.mxu0 %v5882
        %6297 = vmatprep.subr.bf16.mxu0 %v5891
        %6298 = vmatpush1.bf16.msra.mxu0 %v5890
        %6299 = vmatprep.subr.bf16.mxu0 %v5899
        %6300 = vmatpush1.bf16.msra.mxu0 %v5898
        %6301 = vmatprep.subr.bf16.mxu0 %v5907
        %6302 = vmatpush1.bf16.msra.mxu0 %v5906
        %6303 = vmatprep.subr.bf16.mxu0 %v5915
        %6304 = vmatpush1.bf16.msra.mxu0 %v5914
        %6305 = vmatprep.subr.bf16.mxu0 %v5923
        %6306 = vmatpush1.bf16.msra.mxu0 %v5922
        %6307 = vmatprep.subr.bf16.mxu0 %v5931
        %6308 = vmatpush1.bf16.msra.mxu0 %v5930
        %6309 = vmatprep.subr.bf16.mxu0 %v5939
        %6310 = vmatpush1.bf16.msra.mxu0 %v5938
        %6311 = vmatprep.subr.bf16.mxu0 %v5947
        %6312 = vmatpush1.bf16.msra.mxu0 %v5946
        %6313 = vmatprep.subr.bf16.mxu0 %v5955
        %6314 = vmatpush1.bf16.msra.mxu0 %v5954
        %6315 = vmatprep.subr.bf16.mxu0 %v5963
        %6316 = vmatpush1.bf16.msra.mxu0 %v5962
        %6317 = vmatprep.subr.bf16.mxu0 %v5971
        %6318 = vmatpush1.bf16.msra.mxu0 %v5970
        %6319 = vmatprep.subr.bf16.mxu0 %v5979
        %6320 = vmatpush1.bf16.msra.mxu0 %v5978
        %6321 = vmatprep.subr.bf16.mxu0 %v5987
        %6322 = vmatpush1.bf16.msra.mxu0 %v5986
        %6323 = vmatprep.mubr.bf16.mxu0 %v4928
        %6324 = vmatmul.mubr.bf16.gmra.mrb[0].mxu0 %v4927
        %v6325 = vpop.f32.mrb[0].mxu0
        %v6326 = vadd.f32 %v6285, %v6325
        %v6327 = vpop.f32.mrb[0].mxu0
        %v6328 = vadd.f32 %v6287, %v6327
        %v6329 = vpop.f32.mrb[0].mxu0
        %v6330 = vpop.f32.mrb[0].mxu0
        %6331 = vdwg.mxu0
        %6332 = vmatprep.subr.bf16.mxu0 %v5741
        %6333 = vmatpush1.bf16.msra.mxu0 %v5740
        %6334 = vmatprep.subr.bf16.mxu0 %v5749
        %6335 = vmatpush1.bf16.msra.mxu0 %v5748
        %6336 = vmatprep.subr.bf16.mxu0 %v5757
        %6337 = vmatpush1.bf16.msra.mxu0 %v5756
        %6338 = vmatprep.subr.bf16.mxu0 %v5765
        %6339 = vmatpush1.bf16.msra.mxu0 %v5764
        %6340 = vmatprep.subr.bf16.mxu0 %v5773
        %6341 = vmatpush1.bf16.msra.mxu0 %v5772
        %6342 = vmatprep.subr.bf16.mxu0 %v5781
        %6343 = vmatpush1.bf16.msra.mxu0 %v5780
        %6344 = vmatprep.subr.bf16.mxu0 %v5789
        %6345 = vmatpush1.bf16.msra.mxu0 %v5788
        %6346 = vmatprep.subr.bf16.mxu0 %v5797
        %6347 = vmatpush1.bf16.msra.mxu0 %v5796
        %6348 = vmatprep.subr.bf16.mxu0 %v5805
        %6349 = vmatpush1.bf16.msra.mxu0 %v5804
        %6350 = vmatprep.subr.bf16.mxu0 %v5813
        %6351 = vmatpush1.bf16.msra.mxu0 %v5812
        %6352 = vmatprep.subr.bf16.mxu0 %v5821
        %6353 = vmatpush1.bf16.msra.mxu0 %v5820
        %6354 = vmatprep.subr.bf16.mxu0 %v5829
        %6355 = vmatpush1.bf16.msra.mxu0 %v5828
        %6356 = vmatprep.subr.bf16.mxu0 %v5837
        %6357 = vmatpush1.bf16.msra.mxu0 %v5836
        %6358 = vmatprep.subr.bf16.mxu0 %v5845
        %6359 = vmatpush1.bf16.msra.mxu0 %v5844
        %6360 = vmatprep.subr.bf16.mxu0 %v5853
        %6361 = vmatpush1.bf16.msra.mxu0 %v5852
        %6362 = vmatprep.subr.bf16.mxu0 %v5861
        %6363 = vmatpush1.bf16.msra.mxu0 %v5860
        %6364 = vmatprep.mubr.bf16.mxu0 %v4926
        %6365 = vmatmul.mubr.bf16.gmra.mrb[0].mxu0 %v4925
        %v6366 = vpop.f32.mrb[0].mxu0
        %v6367 = vadd.f32 %v4941, %v6366
        %v6368 = vpop.f32.mrb[0].mxu0
        %v6369 = vadd.f32 %v4945, %v6368
        %v6370 = vpop.f32.mrb[0].mxu0
        %v6371 = vpop.f32.mrb[0].mxu0
        %6372 = vdwg.mxu0
        %6373 = vmatprep.subr.bf16.mxu0 %v5869
        %6374 = vmatpush1.bf16.msra.mxu0 %v5868
        %6375 = vmatprep.subr.bf16.mxu0 %v5877
        %6376 = vmatpush1.bf16.msra.mxu0 %v5876
        %6377 = vmatprep.subr.bf16.mxu0 %v5885
        %6378 = vmatpush1.bf16.msra.mxu0 %v5884
        %6379 = vmatprep.subr.bf16.mxu0 %v5893
        %6380 = vmatpush1.bf16.msra.mxu0 %v5892
        %6381 = vmatprep.subr.bf16.mxu0 %v5901
        %6382 = vmatpush1.bf16.msra.mxu0 %v5900
        %6383 = vmatprep.subr.bf16.mxu0 %v5909
        %6384 = vmatpush1.bf16.msra.mxu0 %v5908
        %6385 = vmatprep.subr.bf16.mxu0 %v5917
        %6386 = vmatpush1.bf16.msra.mxu0 %v5916
        %6387 = vmatprep.subr.bf16.mxu0 %v5925
        %6388 = vmatpush1.bf16.msra.mxu0 %v5924
        %6389 = vmatprep.subr.bf16.mxu0 %v5933
        %6390 = vmatpush1.bf16.msra.mxu0 %v5932
        %6391 = vmatprep.subr.bf16.mxu0 %v5941
        %6392 = vmatpush1.bf16.msra.mxu0 %v5940
        %6393 = vmatprep.subr.bf16.mxu0 %v5949
        %6394 = vmatpush1.bf16.msra.mxu0 %v5948
        %6395 = vmatprep.subr.bf16.mxu0 %v5957
        %6396 = vmatpush1.bf16.msra.mxu0 %v5956
        %6397 = vmatprep.subr.bf16.mxu0 %v5965
        %6398 = vmatpush1.bf16.msra.mxu0 %v5964
        %6399 = vmatprep.subr.bf16.mxu0 %v5973
        %6400 = vmatpush1.bf16.msra.mxu0 %v5972
        %6401 = vmatprep.subr.bf16.mxu0 %v5981
        %6402 = vmatpush1.bf16.msra.mxu0 %v5980
        %6403 = vmatprep.subr.bf16.mxu0 %v5989
        %6404 = vmatpush1.bf16.msra.mxu0 %v5988
        %6405 = vmatprep.mubr.bf16.mxu0 %v4928
        %6406 = vmatmul.mubr.bf16.gmra.mrb[0].mxu0 %v4927
        %v6407 = vpop.f32.mrb[0].mxu0
        %v6408 = vadd.f32 %v6367, %v6407
        %v6409 = vpop.f32.mrb[0].mxu0
        %v6410 = vadd.f32 %v6369, %v6409
        %v6411 = vpop.f32.mrb[0].mxu0
        %v6412 = vpop.f32.mrb[0].mxu0
        %6413 = vdwg.mxu0
        %6414 = vmatprep.subr.bf16.mxu0 %v5743
        %6415 = vmatpush1.bf16.msra.mxu0 %v5742
        %6416 = vmatprep.subr.bf16.mxu0 %v5751
        %6417 = vmatpush1.bf16.msra.mxu0 %v5750
        %6418 = vmatprep.subr.bf16.mxu0 %v5759
        %6419 = vmatpush1.bf16.msra.mxu0 %v5758
        %6420 = vmatprep.subr.bf16.mxu0 %v5767
        %6421 = vmatpush1.bf16.msra.mxu0 %v5766
        %6422 = vmatprep.subr.bf16.mxu0 %v5775
        %6423 = vmatpush1.bf16.msra.mxu0 %v5774
        %6424 = vmatprep.subr.bf16.mxu0 %v5783
        %6425 = vmatpush1.bf16.msra.mxu0 %v5782
        %6426 = vmatprep.subr.bf16.mxu0 %v5791
        %6427 = vmatpush1.bf16.msra.mxu0 %v5790
        %6428 = vmatprep.subr.bf16.mxu0 %v5799
        %6429 = vmatpush1.bf16.msra.mxu0 %v5798
        %6430 = vmatprep.subr.bf16.mxu0 %v5807
        %6431 = vmatpush1.bf16.msra.mxu0 %v5806
        %6432 = vmatprep.subr.bf16.mxu0 %v5815
        %6433 = vmatpush1.bf16.msra.mxu0 %v5814
        %6434 = vmatprep.subr.bf16.mxu0 %v5823
        %6435 = vmatpush1.bf16.msra.mxu0 %v5822
        %6436 = vmatprep.subr.bf16.mxu0 %v5831
        %6437 = vmatpush1.bf16.msra.mxu0 %v5830
        %6438 = vmatprep.subr.bf16.mxu0 %v5839
        %6439 = vmatpush1.bf16.msra.mxu0 %v5838
        %6440 = vmatprep.subr.bf16.mxu0 %v5847
        %6441 = vmatpush1.bf16.msra.mxu0 %v5846
        %6442 = vmatprep.subr.bf16.mxu0 %v5855
        %6443 = vmatpush1.bf16.msra.mxu0 %v5854
        %6444 = vmatprep.subr.bf16.mxu0 %v5863
        %6445 = vmatpush1.bf16.msra.mxu0 %v5862
        %6446 = vmatprep.mubr.bf16.mxu0 %v4926
        %6447 = vmatmul.mubr.bf16.gmra.mrb[0].mxu0 %v4925
        %v6448 = vpop.f32.mrb[0].mxu0
        %v6449 = vadd.f32 %v4949, %v6448
        %v6450 = vpop.f32.mrb[0].mxu0
        %v6451 = vadd.f32 %v4953, %v6450
        %v6452 = vpop.f32.mrb[0].mxu0
        %v6453 = vpop.f32.mrb[0].mxu0
        %6454 = vdwg.mxu0
        %6455 = vmatprep.subr.bf16.mxu0 %v5871
        %6456 = vmatpush1.bf16.msra.mxu0 %v5870
        %6457 = vmatprep.subr.bf16.mxu0 %v5879
        %6458 = vmatpush1.bf16.msra.mxu0 %v5878
        %6459 = vmatprep.subr.bf16.mxu0 %v5887
        %6460 = vmatpush1.bf16.msra.mxu0 %v5886
        %6461 = vmatprep.subr.bf16.mxu0 %v5895
        %6462 = vmatpush1.bf16.msra.mxu0 %v5894
        %6463 = vmatprep.subr.bf16.mxu0 %v5903
        %6464 = vmatpush1.bf16.msra.mxu0 %v5902
        %6465 = vmatprep.subr.bf16.mxu0 %v5911
        %6466 = vmatpush1.bf16.msra.mxu0 %v5910
        %6467 = vmatprep.subr.bf16.mxu0 %v5919
        %6468 = vmatpush1.bf16.msra.mxu0 %v5918
        %6469 = vmatprep.subr.bf16.mxu0 %v5927
        %6470 = vmatpush1.bf16.msra.mxu0 %v5926
        %6471 = vmatprep.subr.bf16.mxu0 %v5935
        %6472 = vmatpush1.bf16.msra.mxu0 %v5934
        %6473 = vmatprep.subr.bf16.mxu0 %v5943
        %6474 = vmatpush1.bf16.msra.mxu0 %v5942
        %6475 = vmatprep.subr.bf16.mxu0 %v5951
        %6476 = vmatpush1.bf16.msra.mxu0 %v5950
        %6477 = vmatprep.subr.bf16.mxu0 %v5959
        %6478 = vmatpush1.bf16.msra.mxu0 %v5958
        %6479 = vmatprep.subr.bf16.mxu0 %v5967
        %6480 = vmatpush1.bf16.msra.mxu0 %v5966
        %6481 = vmatprep.subr.bf16.mxu0 %v5975
        %6482 = vmatpush1.bf16.msra.mxu0 %v5974
        %6483 = vmatprep.subr.bf16.mxu0 %v5983
        %6484 = vmatpush1.bf16.msra.mxu0 %v5982
        %6485 = vmatprep.subr.bf16.mxu0 %v5991
        %6486 = vmatpush1.bf16.msra.mxu0 %v5990
        %6487 = vmatprep.mubr.bf16.mxu0 %v4928
        %6488 = vmatmul.mubr.bf16.gmra.mrb[0].mxu0 %v4927
        %v6489 = vpop.f32.mrb[0].mxu0
        %v6490 = vadd.f32 %v6449, %v6489
        %v6491 = vpop.f32.mrb[0].mxu0
        %v6492 = vadd.f32 %v6451, %v6491
        %v6493 = vpop.f32.mrb[0].mxu0
        %v6494 = vpop.f32.mrb[0].mxu0
        %6495 = vdwg.mxu0
        %6496 = vmatprep.subr.bf16.mxu0 %v5745
        %6497 = vmatpush1.bf16.msra.mxu0 %v5744
        %6498 = vmatprep.subr.bf16.mxu0 %v5753
        %6499 = vmatpush1.bf16.msra.mxu0 %v5752
        %6500 = vmatprep.subr.bf16.mxu0 %v5761
        %6501 = vmatpush1.bf16.msra.mxu0 %v5760
        %6502 = vmatprep.subr.bf16.mxu0 %v5769
        %6503 = vmatpush1.bf16.msra.mxu0 %v5768
        %6504 = vmatprep.subr.bf16.mxu0 %v5777
        %6505 = vmatpush1.bf16.msra.mxu0 %v5776
        %6506 = vmatprep.subr.bf16.mxu0 %v5785
        %6507 = vmatpush1.bf16.msra.mxu0 %v5784
        %6508 = vmatprep.subr.bf16.mxu0 %v5793
        %6509 = vmatpush1.bf16.msra.mxu0 %v5792
        %6510 = vmatprep.subr.bf16.mxu0 %v5801
        %6511 = vmatpush1.bf16.msra.mxu0 %v5800
        %6512 = vmatprep.subr.bf16.mxu0 %v5809
        %6513 = vmatpush1.bf16.msra.mxu0 %v5808
        %6514 = vmatprep.subr.bf16.mxu0 %v5817
        %6515 = vmatpush1.bf16.msra.mxu0 %v5816
        %6516 = vmatprep.subr.bf16.mxu0 %v5825
        %6517 = vmatpush1.bf16.msra.mxu0 %v5824
        %6518 = vmatprep.subr.bf16.mxu0 %v5833
        %6519 = vmatpush1.bf16.msra.mxu0 %v5832
        %6520 = vmatprep.subr.bf16.mxu0 %v5841
        %6521 = vmatpush1.bf16.msra.mxu0 %v5840
        %6522 = vmatprep.subr.bf16.mxu0 %v5849
        %6523 = vmatpush1.bf16.msra.mxu0 %v5848
        %6524 = vmatprep.subr.bf16.mxu0 %v5857
        %6525 = vmatpush1.bf16.msra.mxu0 %v5856
        %6526 = vmatprep.subr.bf16.mxu0 %v5865
        %6527 = vmatpush1.bf16.msra.mxu0 %v5864
        %6528 = vmatprep.mubr.bf16.mxu0 %v4926
        %6529 = vmatmul.mubr.bf16.gmra.mrb[0].mxu0 %v4925
        %v6530 = vpop.f32.mrb[0].mxu0
        %v6531 = vadd.f32 %v4957, %v6530
        %v6532 = vpop.f32.mrb[0].mxu0
        %v6533 = vadd.f32 %v4961, %v6532
        %v6534 = vpop.f32.mrb[0].mxu0
        %v6535 = vpop.f32.mrb[0].mxu0
        %6536 = vdwg.mxu0
        %6537 = vmatprep.subr.bf16.mxu0 %v5873
        %6538 = vmatpush1.bf16.msra.mxu0 %v5872
        %6539 = vmatprep.subr.bf16.mxu0 %v5881
        %6540 = vmatpush1.bf16.msra.mxu0 %v5880
        %6541 = vmatprep.subr.bf16.mxu0 %v5889
        %6542 = vmatpush1.bf16.msra.mxu0 %v5888
        %6543 = vmatprep.subr.bf16.mxu0 %v5897
        %6544 = vmatpush1.bf16.msra.mxu0 %v5896
        %6545 = vmatprep.subr.bf16.mxu0 %v5905
        %6546 = vmatpush1.bf16.msra.mxu0 %v5904
        %6547 = vmatprep.subr.bf16.mxu0 %v5913
        %6548 = vmatpush1.bf16.msra.mxu0 %v5912
        %6549 = vmatprep.subr.bf16.mxu0 %v5921
        %6550 = vmatpush1.bf16.msra.mxu0 %v5920
        %6551 = vmatprep.subr.bf16.mxu0 %v5929
        %6552 = vmatpush1.bf16.msra.mxu0 %v5928
        %6553 = vmatprep.subr.bf16.mxu0 %v5937
        %6554 = vmatpush1.bf16.msra.mxu0 %v5936
        %6555 = vmatprep.subr.bf16.mxu0 %v5945
        %6556 = vmatpush1.bf16.msra.mxu0 %v5944
        %6557 = vmatprep.subr.bf16.mxu0 %v5953
        %6558 = vmatpush1.bf16.msra.mxu0 %v5952
        %6559 = vmatprep.subr.bf16.mxu0 %v5961
        %6560 = vmatpush1.bf16.msra.mxu0 %v5960
        %6561 = vmatprep.subr.bf16.mxu0 %v5969
        %6562 = vmatpush1.bf16.msra.mxu0 %v5968
        %6563 = vmatprep.subr.bf16.mxu0 %v5977
        %6564 = vmatpush1.bf16.msra.mxu0 %v5976
        %6565 = vmatprep.subr.bf16.mxu0 %v5985
        %6566 = vmatpush1.bf16.msra.mxu0 %v5984
        %6567 = vmatprep.subr.bf16.mxu0 %v5993
        %6568 = vmatpush1.bf16.msra.mxu0 %v5992
        %6569 = vmatprep.mubr.bf16.mxu0 %v4928
        %6570 = vmatmul.mubr.bf16.gmra.mrb[0].mxu0 %v4927
        %v6571 = vpop.f32.mrb[0].mxu0
        %v6572 = vadd.f32 %v6531, %v6571
        %v6573 = vpop.f32.mrb[0].mxu0
        %v6574 = vadd.f32 %v6533, %v6573
        %v6575 = vpop.f32.mrb[0].mxu0
        %v6576 = vpop.f32.mrb[0].mxu0
        %6577 = vdwg.mxu0
        %v6578 = vmax.f32 %v6326, 0.0
        %v6579 = vmax.f32 %v6328, 0.0
        %v6580 = vmax.f32 %v6408, 0.0
        %v6581 = vmax.f32 %v6410, 0.0
        %v6582 = vmax.f32 %v6490, 0.0
        %v6583 = vmax.f32 %v6492, 0.0
        %v6584 = vmax.f32 %v6572, 0.0
        %v6585 = vmax.f32 %v6574, 0.0
        %v6588 = vrot.slane %v6580, 6
        %v6589 = vrot.slane %v6581, 6
        %v6594 = vrot.slane %v6582, 4
        %v6595 = vrot.slane %v6583, 4
        %v6600 = vrot.slane %v6584, 2
        %v6601 = vrot.slane %v6585, 2
        %vm6604 = vcmask 1041408
        %v6605 = vsel %vm6604, %v6578, %v6588
        %v6606 = vsel %vm6604, %v6579, %v6589
        %vm6607 = vcmask 1043456
        %v6608 = vsel %vm6607, %v6605, %v6594
        %v6609 = vsel %vm6607, %v6606, %v6595
        %v6610 = vsel %vm1412, %v6608, %v6600
        %v6611 = vsel %vm1412, %v6609, %v6601
        %v6612 = vld [vmem:[%s1301] sm:$0xff]
        %v6613 = vld [vmem:[%s1301 + $0x8] sm:$0xff]
        %v6614 = vld [vmem:[%s1301 + $0x10] sm:$0xff]
        %v6615 = vld [vmem:[%s1301 + $0x18] sm:$0xff]
        %v6616 = vld [vmem:[%s1301 + $0x20] sm:$0xff]
        %v6617 = vld [vmem:[%s1301 + $0x28] sm:$0xff]
        %v6618 = vld [vmem:[%s1301 + $0x30] sm:$0xff]
        %v6619 = vld [vmem:[%s1301 + $0x38] sm:$0xff]
        %v6620 = vld [vmem:[%s1301 + $0x40] sm:$0xff]
        %v6621 = vld [vmem:[%s1301 + $0x48] sm:$0xff]
        %v6622 = vld [vmem:[%s1301 + $0x50] sm:$0xff]
        %v6623 = vld [vmem:[%s1301 + $0x58] sm:$0xff]
        %v6624 = vld [vmem:[%s1301 + $0x60] sm:$0xff]
        %v6625 = vld [vmem:[%s1301 + $0x68] sm:$0xff]
        %v6626 = vld [vmem:[%s1301 + $0x70] sm:$0xff]
        %v6627 = vld [vmem:[%s1301 + $0x78] sm:$0xff]
        %v6628 = vld [vmem:[%s1301 + $0x80] sm:$0xff]
        %v6629 = vld [vmem:[%s1301 + $0x88] sm:$0xff]
        %v6630 = vld [vmem:[%s1301 + $0x90] sm:$0xff]
        %v6631 = vld [vmem:[%s1301 + $0x98] sm:$0xff]
        %v6632 = vld [vmem:[%s1301 + $0xa0] sm:$0xff]
        %v6633 = vld [vmem:[%s1301 + $0xa8] sm:$0xff]
        %v6634 = vld [vmem:[%s1301 + $0xb0] sm:$0xff]
        %v6635 = vld [vmem:[%s1301 + $0xb8] sm:$0xff]
        %v6636 = vld [vmem:[%s1301 + $0xc0] sm:$0xff]
        %v6637 = vld [vmem:[%s1301 + $0xc8] sm:$0xff]
        %v6638 = vld [vmem:[%s1301 + $0xd0] sm:$0xff]
        %v6639 = vld [vmem:[%s1301 + $0xd8] sm:$0xff]
        %v6640 = vld [vmem:[%s1301 + $0xe0] sm:$0xff]
        %v6641 = vld [vmem:[%s1301 + $0xe8] sm:$0xff]
        %v6642 = vld [vmem:[%s1301 + $0xf0] sm:$0xff]
        %v6643 = vld [vmem:[%s1301 + $0xf8] sm:$0xff]
        %v6644 = vld [vmem:[%s1301 + $0x100] sm:$0xff]
        %v6645 = vld [vmem:[%s1301 + $0x108] sm:$0xff]
        %v6646 = vld [vmem:[%s1301 + $0x110] sm:$0xff]
        %v6647 = vld [vmem:[%s1301 + $0x118] sm:$0xff]
        %v6648 = vld [vmem:[%s1301 + $0x120] sm:$0xff]
        %v6649 = vld [vmem:[%s1301 + $0x128] sm:$0xff]
        %v6650 = vld [vmem:[%s1301 + $0x130] sm:$0xff]
        %v6651 = vld [vmem:[%s1301 + $0x138] sm:$0xff]
        %v6652 = vld [vmem:[%s1301 + $0x140] sm:$0xff]
        %v6653 = vld [vmem:[%s1301 + $0x148] sm:$0xff]
        %v6654 = vld [vmem:[%s1301 + $0x150] sm:$0xff]
        %v6655 = vld [vmem:[%s1301 + $0x158] sm:$0xff]
        %v6656 = vld [vmem:[%s1301 + $0x160] sm:$0xff]
        %v6657 = vld [vmem:[%s1301 + $0x168] sm:$0xff]
        %v6658 = vld [vmem:[%s1301 + $0x170] sm:$0xff]
        %v6659 = vld [vmem:[%s1301 + $0x178] sm:$0xff]
        %v6660 = vld [vmem:[%s1301 + $0x180] sm:$0xff]
        %v6661 = vld [vmem:[%s1301 + $0x188] sm:$0xff]
        %v6662 = vld [vmem:[%s1301 + $0x190] sm:$0xff]
        %v6663 = vld [vmem:[%s1301 + $0x198] sm:$0xff]
        %v6664 = vld [vmem:[%s1301 + $0x1a0] sm:$0xff]
        %v6665 = vld [vmem:[%s1301 + $0x1a8] sm:$0xff]
        %v6666 = vld [vmem:[%s1301 + $0x1b0] sm:$0xff]
        %v6667 = vld [vmem:[%s1301 + $0x1b8] sm:$0xff]
        %v6668 = vld [vmem:[%s1301 + $0x1c0] sm:$0xff]
        %v6669 = vld [vmem:[%s1301 + $0x1c8] sm:$0xff]
        %v6670 = vld [vmem:[%s1301 + $0x1d0] sm:$0xff]
        %v6671 = vld [vmem:[%s1301 + $0x1d8] sm:$0xff]
        %v6672 = vld [vmem:[%s1301 + $0x1e0] sm:$0xff]
        %v6673 = vld [vmem:[%s1301 + $0x1e8] sm:$0xff]
        %v6674 = vld [vmem:[%s1301 + $0x1f0] sm:$0xff]
        %v6675 = vld [vmem:[%s1301 + $0x1f8] sm:$0xff]
        %v6676 = vld [vmem:[%s1097] sm:$0xf]
        %v6677 = vpack.c.bf16 %v6610, %v6610
        %v6678 = vpack.c.bf16 %v6611, %v6611
        %v6680 = vlaneseq
        %v6681 = vshrl.u32 %v6680, 7
        %v6682 = vsub.s32 0, %v6681
        %v6683 = vrot.slane %v6676, %v6682
        %v6684 = vlaneseq
        %v6685 = vshrl.u32 %v6684, 7
        %v6686 = vsub.s32 1, %v6685
        %v6687 = vrot.slane %v6676, %v6686
        %v6688 = vlaneseq
        %v6689 = vshrl.u32 %v6688, 7
        %v6690 = vsub.s32 2, %v6689
        %v6691 = vrot.slane %v6676, %v6690
        %v6692 = vlaneseq
        %v6693 = vshrl.u32 %v6692, 7
        %v6694 = vsub.s32 3, %v6693
        %v6695 = vrot.slane %v6676, %v6694
        %v6764 = vunpack.c.l.b16 %v6612
        %v6765 = vunpack.c.h.b16 %v6612
        %v6766 = vunpack.c.l.b16 %v6613
        %v6767 = vunpack.c.h.b16 %v6613
        %v6768 = vunpack.c.l.b16 %v6614
        %v6769 = vunpack.c.h.b16 %v6614
        %v6770 = vunpack.c.l.b16 %v6615
        %v6771 = vunpack.c.h.b16 %v6615
        %v6772 = vunpack.c.l.b16 %v6616
        %v6773 = vunpack.c.h.b16 %v6616
        %v6774 = vunpack.c.l.b16 %v6617
        %v6775 = vunpack.c.h.b16 %v6617
        %v6776 = vunpack.c.l.b16 %v6618
        %v6777 = vunpack.c.h.b16 %v6618
        %v6778 = vunpack.c.l.b16 %v6619
        %v6779 = vunpack.c.h.b16 %v6619
        %v6780 = vunpack.c.l.b16 %v6620
        %v6781 = vunpack.c.h.b16 %v6620
        %v6782 = vunpack.c.l.b16 %v6621
        %v6783 = vunpack.c.h.b16 %v6621
        %v6784 = vunpack.c.l.b16 %v6622
        %v6785 = vunpack.c.h.b16 %v6622
        %v6786 = vunpack.c.l.b16 %v6623
        %v6787 = vunpack.c.h.b16 %v6623
        %v6788 = vunpack.c.l.b16 %v6624
        %v6789 = vunpack.c.h.b16 %v6624
        %v6790 = vunpack.c.l.b16 %v6625
        %v6791 = vunpack.c.h.b16 %v6625
        %v6792 = vunpack.c.l.b16 %v6626
        %v6793 = vunpack.c.h.b16 %v6626
        %v6794 = vunpack.c.l.b16 %v6627
        %v6795 = vunpack.c.h.b16 %v6627
        %v6796 = vunpack.c.l.b16 %v6628
        %v6797 = vunpack.c.h.b16 %v6628
        %v6798 = vunpack.c.l.b16 %v6629
        %v6799 = vunpack.c.h.b16 %v6629
        %v6800 = vunpack.c.l.b16 %v6630
        %v6801 = vunpack.c.h.b16 %v6630
        %v6802 = vunpack.c.l.b16 %v6631
        %v6803 = vunpack.c.h.b16 %v6631
        %v6804 = vunpack.c.l.b16 %v6632
        %v6805 = vunpack.c.h.b16 %v6632
        %v6806 = vunpack.c.l.b16 %v6633
        %v6807 = vunpack.c.h.b16 %v6633
        %v6808 = vunpack.c.l.b16 %v6634
        %v6809 = vunpack.c.h.b16 %v6634
        %v6810 = vunpack.c.l.b16 %v6635
        %v6811 = vunpack.c.h.b16 %v6635
        %v6812 = vunpack.c.l.b16 %v6636
        %v6813 = vunpack.c.h.b16 %v6636
        %v6814 = vunpack.c.l.b16 %v6637
        %v6815 = vunpack.c.h.b16 %v6637
        %v6816 = vunpack.c.l.b16 %v6638
        %v6817 = vunpack.c.h.b16 %v6638
        %v6818 = vunpack.c.l.b16 %v6639
        %v6819 = vunpack.c.h.b16 %v6639
        %v6820 = vunpack.c.l.b16 %v6640
        %v6821 = vunpack.c.h.b16 %v6640
        %v6822 = vunpack.c.l.b16 %v6641
        %v6823 = vunpack.c.h.b16 %v6641
        %v6824 = vunpack.c.l.b16 %v6642
        %v6825 = vunpack.c.h.b16 %v6642
        %v6826 = vunpack.c.l.b16 %v6643
        %v6827 = vunpack.c.h.b16 %v6643
        %v6828 = vunpack.c.l.b16 %v6644
        %v6829 = vunpack.c.h.b16 %v6644
        %v6830 = vunpack.c.l.b16 %v6645
        %v6831 = vunpack.c.h.b16 %v6645
        %v6832 = vunpack.c.l.b16 %v6646
        %v6833 = vunpack.c.h.b16 %v6646
        %v6834 = vunpack.c.l.b16 %v6647
        %v6835 = vunpack.c.h.b16 %v6647
        %v6836 = vunpack.c.l.b16 %v6648
        %v6837 = vunpack.c.h.b16 %v6648
        %v6838 = vunpack.c.l.b16 %v6649
        %v6839 = vunpack.c.h.b16 %v6649
        %v6840 = vunpack.c.l.b16 %v6650
        %v6841 = vunpack.c.h.b16 %v6650
        %v6842 = vunpack.c.l.b16 %v6651
        %v6843 = vunpack.c.h.b16 %v6651
        %v6844 = vunpack.c.l.b16 %v6652
        %v6845 = vunpack.c.h.b16 %v6652
        %v6846 = vunpack.c.l.b16 %v6653
        %v6847 = vunpack.c.h.b16 %v6653
        %v6848 = vunpack.c.l.b16 %v6654
        %v6849 = vunpack.c.h.b16 %v6654
        %v6850 = vunpack.c.l.b16 %v6655
        %v6851 = vunpack.c.h.b16 %v6655
        %v6852 = vunpack.c.l.b16 %v6656
        %v6853 = vunpack.c.h.b16 %v6656
        %v6854 = vunpack.c.l.b16 %v6657
        %v6855 = vunpack.c.h.b16 %v6657
        %v6856 = vunpack.c.l.b16 %v6658
        %v6857 = vunpack.c.h.b16 %v6658
        %v6858 = vunpack.c.l.b16 %v6659
        %v6859 = vunpack.c.h.b16 %v6659
        %v6860 = vunpack.c.l.b16 %v6660
        %v6861 = vunpack.c.h.b16 %v6660
        %v6862 = vunpack.c.l.b16 %v6661
        %v6863 = vunpack.c.h.b16 %v6661
        %v6864 = vunpack.c.l.b16 %v6662
        %v6865 = vunpack.c.h.b16 %v6662
        %v6866 = vunpack.c.l.b16 %v6663
        %v6867 = vunpack.c.h.b16 %v6663
        %v6868 = vunpack.c.l.b16 %v6664
        %v6869 = vunpack.c.h.b16 %v6664
        %v6870 = vunpack.c.l.b16 %v6665
        %v6871 = vunpack.c.h.b16 %v6665
        %v6872 = vunpack.c.l.b16 %v6666
        %v6873 = vunpack.c.h.b16 %v6666
        %v6874 = vunpack.c.l.b16 %v6667
        %v6875 = vunpack.c.h.b16 %v6667
        %v6876 = vunpack.c.l.b16 %v6668
        %v6877 = vunpack.c.h.b16 %v6668
        %v6878 = vunpack.c.l.b16 %v6669
        %v6879 = vunpack.c.h.b16 %v6669
        %v6880 = vunpack.c.l.b16 %v6670
        %v6881 = vunpack.c.h.b16 %v6670
        %v6882 = vunpack.c.l.b16 %v6671
        %v6883 = vunpack.c.h.b16 %v6671
        %v6884 = vunpack.c.l.b16 %v6672
        %v6885 = vunpack.c.h.b16 %v6672
        %v6886 = vunpack.c.l.b16 %v6673
        %v6887 = vunpack.c.h.b16 %v6673
        %v6888 = vunpack.c.l.b16 %v6674
        %v6889 = vunpack.c.h.b16 %v6674
        %v6890 = vunpack.c.l.b16 %v6675
        %v6891 = vunpack.c.h.b16 %v6675
        %v6892 = vpack.c.b16 %v6768, %v6764
        %v6893 = vpack.c.b16 %v6769, %v6765
        %v6894 = vpack.c.b16 %v6770, %v6766
        %v6895 = vpack.c.b16 %v6771, %v6767
        %v6896 = vpack.c.b16 %v6776, %v6772
        %v6897 = vpack.c.b16 %v6777, %v6773
        %v6898 = vpack.c.b16 %v6778, %v6774
        %v6899 = vpack.c.b16 %v6779, %v6775
        %v6900 = vpack.c.b16 %v6784, %v6780
        %v6901 = vpack.c.b16 %v6785, %v6781
        %v6902 = vpack.c.b16 %v6786, %v6782
        %v6903 = vpack.c.b16 %v6787, %v6783
        %v6904 = vpack.c.b16 %v6792, %v6788
        %v6905 = vpack.c.b16 %v6793, %v6789
        %v6906 = vpack.c.b16 %v6794, %v6790
        %v6907 = vpack.c.b16 %v6795, %v6791
        %v6908 = vpack.c.b16 %v6800, %v6796
        %v6909 = vpack.c.b16 %v6801, %v6797
        %v6910 = vpack.c.b16 %v6802, %v6798
        %v6911 = vpack.c.b16 %v6803, %v6799
        %v6912 = vpack.c.b16 %v6808, %v6804
        %v6913 = vpack.c.b16 %v6809, %v6805
        %v6914 = vpack.c.b16 %v6810, %v6806
        %v6915 = vpack.c.b16 %v6811, %v6807
        %v6916 = vpack.c.b16 %v6816, %v6812
        %v6917 = vpack.c.b16 %v6817, %v6813
        %v6918 = vpack.c.b16 %v6818, %v6814
        %v6919 = vpack.c.b16 %v6819, %v6815
        %v6920 = vpack.c.b16 %v6824, %v6820
        %v6921 = vpack.c.b16 %v6825, %v6821
        %v6922 = vpack.c.b16 %v6826, %v6822
        %v6923 = vpack.c.b16 %v6827, %v6823
        %v6924 = vpack.c.b16 %v6832, %v6828
        %v6925 = vpack.c.b16 %v6833, %v6829
        %v6926 = vpack.c.b16 %v6834, %v6830
        %v6927 = vpack.c.b16 %v6835, %v6831
        %v6928 = vpack.c.b16 %v6840, %v6836
        %v6929 = vpack.c.b16 %v6841, %v6837
        %v6930 = vpack.c.b16 %v6842, %v6838
        %v6931 = vpack.c.b16 %v6843, %v6839
        %v6932 = vpack.c.b16 %v6848, %v6844
        %v6933 = vpack.c.b16 %v6849, %v6845
        %v6934 = vpack.c.b16 %v6850, %v6846
        %v6935 = vpack.c.b16 %v6851, %v6847
        %v6936 = vpack.c.b16 %v6856, %v6852
        %v6937 = vpack.c.b16 %v6857, %v6853
        %v6938 = vpack.c.b16 %v6858, %v6854
        %v6939 = vpack.c.b16 %v6859, %v6855
        %v6940 = vpack.c.b16 %v6864, %v6860
        %v6941 = vpack.c.b16 %v6865, %v6861
        %v6942 = vpack.c.b16 %v6866, %v6862
        %v6943 = vpack.c.b16 %v6867, %v6863
        %v6944 = vpack.c.b16 %v6872, %v6868
        %v6945 = vpack.c.b16 %v6873, %v6869
        %v6946 = vpack.c.b16 %v6874, %v6870
        %v6947 = vpack.c.b16 %v6875, %v6871
        %v6948 = vpack.c.b16 %v6880, %v6876
        %v6949 = vpack.c.b16 %v6881, %v6877
        %v6950 = vpack.c.b16 %v6882, %v6878
        %v6951 = vpack.c.b16 %v6883, %v6879
        %v6952 = vpack.c.b16 %v6888, %v6884
        %v6953 = vpack.c.b16 %v6889, %v6885
        %v6954 = vpack.c.b16 %v6890, %v6886
        %v6955 = vpack.c.b16 %v6891, %v6887
        %7020 = vmatprep.subr.bf16.mxu0 %v6893
        %7021 = vmatpush1.bf16.msra.mxu0 %v6892
        %7022 = vmatprep.subr.bf16.mxu0 %v6897
        %7023 = vmatpush1.bf16.msra.mxu0 %v6896
        %7024 = vmatprep.subr.bf16.mxu0 %v6901
        %7025 = vmatpush1.bf16.msra.mxu0 %v6900
        %7026 = vmatprep.subr.bf16.mxu0 %v6905
        %7027 = vmatpush1.bf16.msra.mxu0 %v6904
        %7028 = vmatprep.subr.bf16.mxu0 %v6909
        %7029 = vmatpush1.bf16.msra.mxu0 %v6908
        %7030 = vmatprep.subr.bf16.mxu0 %v6913
        %7031 = vmatpush1.bf16.msra.mxu0 %v6912
        %7032 = vmatprep.subr.bf16.mxu0 %v6917
        %7033 = vmatpush1.bf16.msra.mxu0 %v6916
        %7034 = vmatprep.subr.bf16.mxu0 %v6921
        %7035 = vmatpush1.bf16.msra.mxu0 %v6920
        %7036 = vmatprep.subr.bf16.mxu0 %v6925
        %7037 = vmatpush1.bf16.msra.mxu0 %v6924
        %7038 = vmatprep.subr.bf16.mxu0 %v6929
        %7039 = vmatpush1.bf16.msra.mxu0 %v6928
        %7040 = vmatprep.subr.bf16.mxu0 %v6933
        %7041 = vmatpush1.bf16.msra.mxu0 %v6932
        %7042 = vmatprep.subr.bf16.mxu0 %v6937
        %7043 = vmatpush1.bf16.msra.mxu0 %v6936
        %7044 = vmatprep.subr.bf16.mxu0 %v6941
        %7045 = vmatpush1.bf16.msra.mxu0 %v6940
        %7046 = vmatprep.subr.bf16.mxu0 %v6945
        %7047 = vmatpush1.bf16.msra.mxu0 %v6944
        %7048 = vmatprep.subr.bf16.mxu0 %v6949
        %7049 = vmatpush1.bf16.msra.mxu0 %v6948
        %7050 = vmatprep.subr.bf16.mxu0 %v6953
        %7051 = vmatpush1.bf16.msra.mxu0 %v6952
        %7052 = vmatprep.mubr.bf16.mxu0 %v6678
        %7053 = vmatmul.mubr.bf16.gmra.mrb[0].mxu0 %v6677
        %v7054 = vpop.f32.mrb[0].mxu0
        %v7055 = vadd.f32 %v6683, %v7054
        %v7056 = vpop.f32.mrb[0].mxu0
        %v7057 = vadd.f32 %v6687, %v7056
        %v7058 = vpop.f32.mrb[0].mxu0
        %v7059 = vpop.f32.mrb[0].mxu0
        %7060 = vdwg.mxu0
        %7061 = vmatprep.subr.bf16.mxu0 %v6895
        %7062 = vmatpush1.bf16.msra.mxu0 %v6894
        %7063 = vmatprep.subr.bf16.mxu0 %v6899
        %7064 = vmatpush1.bf16.msra.mxu0 %v6898
        %7065 = vmatprep.subr.bf16.mxu0 %v6903
        %7066 = vmatpush1.bf16.msra.mxu0 %v6902
        %7067 = vmatprep.subr.bf16.mxu0 %v6907
        %7068 = vmatpush1.bf16.msra.mxu0 %v6906
        %7069 = vmatprep.subr.bf16.mxu0 %v6911
        %7070 = vmatpush1.bf16.msra.mxu0 %v6910
        %7071 = vmatprep.subr.bf16.mxu0 %v6915
        %7072 = vmatpush1.bf16.msra.mxu0 %v6914
        %7073 = vmatprep.subr.bf16.mxu0 %v6919
        %7074 = vmatpush1.bf16.msra.mxu0 %v6918
        %7075 = vmatprep.subr.bf16.mxu0 %v6923
        %7076 = vmatpush1.bf16.msra.mxu0 %v6922
        %7077 = vmatprep.subr.bf16.mxu0 %v6927
        %7078 = vmatpush1.bf16.msra.mxu0 %v6926
        %7079 = vmatprep.subr.bf16.mxu0 %v6931
        %7080 = vmatpush1.bf16.msra.mxu0 %v6930
        %7081 = vmatprep.subr.bf16.mxu0 %v6935
        %7082 = vmatpush1.bf16.msra.mxu0 %v6934
        %7083 = vmatprep.subr.bf16.mxu0 %v6939
        %7084 = vmatpush1.bf16.msra.mxu0 %v6938
        %7085 = vmatprep.subr.bf16.mxu0 %v6943
        %7086 = vmatpush1.bf16.msra.mxu0 %v6942
        %7087 = vmatprep.subr.bf16.mxu0 %v6947
        %7088 = vmatpush1.bf16.msra.mxu0 %v6946
        %7089 = vmatprep.subr.bf16.mxu0 %v6951
        %7090 = vmatpush1.bf16.msra.mxu0 %v6950
        %7091 = vmatprep.subr.bf16.mxu0 %v6955
        %7092 = vmatpush1.bf16.msra.mxu0 %v6954
        %7093 = vmatprep.mubr.bf16.mxu0 %v6678
        %7094 = vmatmul.mubr.bf16.gmra.mrb[0].mxu0 %v6677
        %v7095 = vpop.f32.mrb[0].mxu0
        %v7096 = vadd.f32 %v6691, %v7095
        %v7097 = vpop.f32.mrb[0].mxu0
        %v7098 = vadd.f32 %v6695, %v7097
        %v7099 = vpop.f32.mrb[0].mxu0
        %v7100 = vpop.f32.mrb[0].mxu0
        %7101 = vdwg.mxu0
        %v7102 = vmax.f32 %v7055, 0.0
        %v7103 = vmax.f32 %v7057, 0.0
        %v7104 = vmax.f32 %v7096, 0.0
        %v7105 = vmax.f32 %v7098, 0.0
        %v7106 = vld [vmem:[%s1106] sm:$0xff]
        %v7107 = vld [vmem:[%s1106 + $0x8] sm:$0xff]
        %v7108 = vld [vmem:[%s1106 + $0x10] sm:$0xff]
        %v7109 = vld [vmem:[%s1106 + $0x18] sm:$0xff]
        %v7110 = vld [vmem:[%s1106 + $0x20] sm:$0xff]
        %v7111 = vld [vmem:[%s1106 + $0x28] sm:$0xff]
        %v7112 = vld [vmem:[%s1106 + $0x30] sm:$0xff]
        %v7113 = vld [vmem:[%s1106 + $0x38] sm:$0xff]
        %v7114 = vld [vmem:[%s1106 + $0x40] sm:$0xff]
        %v7115 = vld [vmem:[%s1106 + $0x48] sm:$0xff]
        %v7116 = vld [vmem:[%s1106 + $0x50] sm:$0xff]
        %v7117 = vld [vmem:[%s1106 + $0x58] sm:$0xff]
        %v7118 = vld [vmem:[%s1106 + $0x60] sm:$0xff]
        %v7119 = vld [vmem:[%s1106 + $0x68] sm:$0xff]
        %v7120 = vld [vmem:[%s1106 + $0x70] sm:$0xff]
        %v7121 = vld [vmem:[%s1106 + $0x78] sm:$0xff]
        %v7122 = vld [vmem:[%s1115] sm:$0x3]
        %v7123 = vpack.c.bf16 %v7103, %v7102
        %v7124 = vpack.c.bf16 %v7105, %v7104
        %v7126 = vlaneseq
        %v7127 = vshrl.u32 %v7126, 7
        %v7128 = vsub.s32 0, %v7127
        %v7129 = vrot.slane %v7122, %v7128
        %v7130 = vlaneseq
        %v7131 = vshrl.u32 %v7130, 7
        %v7132 = vsub.s32 1, %v7131
        %v7133 = vrot.slane %v7122, %v7132
        %v7152 = vunpack.c.l.b16 %v7106
        %v7153 = vunpack.c.h.b16 %v7106
        %v7154 = vunpack.c.l.b16 %v7107
        %v7155 = vunpack.c.h.b16 %v7107
        %v7156 = vunpack.c.l.b16 %v7108
        %v7157 = vunpack.c.h.b16 %v7108
        %v7158 = vunpack.c.l.b16 %v7109
        %v7159 = vunpack.c.h.b16 %v7109
        %v7160 = vunpack.c.l.b16 %v7110
        %v7161 = vunpack.c.h.b16 %v7110
        %v7162 = vunpack.c.l.b16 %v7111
        %v7163 = vunpack.c.h.b16 %v7111
        %v7164 = vunpack.c.l.b16 %v7112
        %v7165 = vunpack.c.h.b16 %v7112
        %v7166 = vunpack.c.l.b16 %v7113
        %v7167 = vunpack.c.h.b16 %v7113
        %v7168 = vunpack.c.l.b16 %v7114
        %v7169 = vunpack.c.h.b16 %v7114
        %v7170 = vunpack.c.l.b16 %v7115
        %v7171 = vunpack.c.h.b16 %v7115
        %v7172 = vunpack.c.l.b16 %v7116
        %v7173 = vunpack.c.h.b16 %v7116
        %v7174 = vunpack.c.l.b16 %v7117
        %v7175 = vunpack.c.h.b16 %v7117
        %v7176 = vunpack.c.l.b16 %v7118
        %v7177 = vunpack.c.h.b16 %v7118
        %v7178 = vunpack.c.l.b16 %v7119
        %v7179 = vunpack.c.h.b16 %v7119
        %v7180 = vunpack.c.l.b16 %v7120
        %v7181 = vunpack.c.h.b16 %v7120
        %v7182 = vunpack.c.l.b16 %v7121
        %v7183 = vunpack.c.h.b16 %v7121
        %v7184 = vpack.c.b16 %v7154, %v7152
        %v7185 = vpack.c.b16 %v7155, %v7153
        %v7186 = vpack.c.b16 %v7158, %v7156
        %v7187 = vpack.c.b16 %v7159, %v7157
        %v7188 = vpack.c.b16 %v7162, %v7160
        %v7189 = vpack.c.b16 %v7163, %v7161
        %v7190 = vpack.c.b16 %v7166, %v7164
        %v7191 = vpack.c.b16 %v7167, %v7165
        %v7192 = vpack.c.b16 %v7170, %v7168
        %v7193 = vpack.c.b16 %v7171, %v7169
        %v7194 = vpack.c.b16 %v7174, %v7172
        %v7195 = vpack.c.b16 %v7175, %v7173
        %v7196 = vpack.c.b16 %v7178, %v7176
        %v7197 = vpack.c.b16 %v7179, %v7177
        %v7198 = vpack.c.b16 %v7182, %v7180
        %v7199 = vpack.c.b16 %v7183, %v7181
        %7216 = vmatprep.subr.bf16.mxu0 %v7185
        %7217 = vmatpush1.bf16.msra.mxu0 %v7184
        %7218 = vmatprep.subr.bf16.mxu0 %v7187
        %7219 = vmatpush1.bf16.msra.mxu0 %v7186
        %7220 = vmatprep.subr.bf16.mxu0 %v7189
        %7221 = vmatpush1.bf16.msra.mxu0 %v7188
        %7222 = vmatprep.subr.bf16.mxu0 %v7191
        %7223 = vmatpush1.bf16.msra.mxu0 %v7190
        %7224 = vmatprep.subr.bf16.mxu0 %v7193
        %7225 = vmatpush1.bf16.msra.mxu0 %v7192
        %7226 = vmatprep.subr.bf16.mxu0 %v7195
        %7227 = vmatpush1.bf16.msra.mxu0 %v7194
        %7228 = vmatprep.subr.bf16.mxu0 %v7197
        %7229 = vmatpush1.bf16.msra.mxu0 %v7196
        %7230 = vmatprep.subr.bf16.mxu0 %v7199
        %7231 = vmatpush1.bf16.msra.mxu0 %v7198
        %7232 = vmatprep.subr.bf16.mxu0 0
        %7233 = vmatpush1.bf16.msra.mxu0 0
        %7234 = vmatprep.subr.bf16.mxu0 0
        %7235 = vmatpush1.bf16.msra.mxu0 0
        %7236 = vmatprep.subr.bf16.mxu0 0
        %7237 = vmatpush1.bf16.msra.mxu0 0
        %7238 = vmatprep.subr.bf16.mxu0 0
        %7239 = vmatpush1.bf16.msra.mxu0 0
        %7240 = vmatprep.subr.bf16.mxu0 0
        %7241 = vmatpush1.bf16.msra.mxu0 0
        %7242 = vmatprep.subr.bf16.mxu0 0
        %7243 = vmatpush1.bf16.msra.mxu0 0
        %7244 = vmatprep.subr.bf16.mxu0 0
        %7245 = vmatpush1.bf16.msra.mxu0 0
        %7246 = vmatprep.subr.bf16.mxu0 0
        %7247 = vmatpush1.bf16.msra.mxu0 0
        %7248 = vmatprep.mubr.bf16.mxu0 0
        %7249 = vmatmul.mubr.bf16.gmra.mrb[0].mxu0 %v7123
        %v7250 = vpop.f32.mrb[0].mxu0
        %v7251 = vadd.f32 %v7129, %v7250
        %v7252 = vpop.f32.mrb[0].mxu0
        %v7253 = vadd.f32 %v7133, %v7252
        %v7254 = vpop.f32.mrb[0].mxu0
        %v7255 = vadd.f32 %v7129, %v7254
        %v7256 = vpop.f32.mrb[0].mxu0
        %v7257 = vadd.f32 %v7133, %v7256
        %7258 = vmatprep.mubr.bf16.mxu0 0
        %7259 = vmatmul.mubr.bf16.gmra.mrb[0].mxu0 %v7124
        %v7260 = vpop.f32.mrb[0].mxu0
        %v7261 = vadd.f32 %v7129, %v7260
        %v7262 = vpop.f32.mrb[0].mxu0
        %v7263 = vadd.f32 %v7133, %v7262
        %v7264 = vpop.f32.mrb[0].mxu0
        %v7265 = vadd.f32 %v7129, %v7264
        %v7266 = vpop.f32.mrb[0].mxu0
        %v7267 = vadd.f32 %v7133, %v7266
        %7268 = vdwg.mxu0
        %v7269 = vmax.f32 %v7251, 0.0
        %v7270 = vmax.f32 %v7253, 0.0
        %v7271 = vmax.f32 %v7255, 0.0
        %v7272 = vmax.f32 %v7257, 0.0
        %v7273 = vmax.f32 %v7261, 0.0
        %v7274 = vmax.f32 %v7263, 0.0
        %v7275 = vmax.f32 %v7265, 0.0
        %v7276 = vmax.f32 %v7267, 0.0
        %7281 = vrot.lane.b32.xlu0 %v7269, 64
        %v7282 = vpop.permute.xlu0 %7281
        %7283 = vrot.lane.b32.xlu0 %v7271, 64
        %v7284 = vpop.permute.xlu0 %7283
        %7285 = vrot.lane.b32.xlu0 %v7273, 64
        %v7286 = vpop.permute.xlu0 %7285
        %7287 = vrot.lane.b32.xlu0 %v7275, 64
        %v7288 = vpop.permute.xlu0 %7287
        %7297 = vrot.lane.b32.xlu0 %v7270, 64
        %v7298 = vpop.permute.xlu0 %7297
        %7299 = vrot.lane.b32.xlu0 %v7272, 64
        %v7300 = vpop.permute.xlu0 %7299
        %7301 = vrot.lane.b32.xlu0 %v7274, 64
        %v7302 = vpop.permute.xlu0 %7301
        %7303 = vrot.lane.b32.xlu0 %v7276, 64
        %v7304 = vpop.permute.xlu0 %7303
        %v7309 = vld [vmem:[%s1306] sm:$0xf]
        %v7310 = vld [vmem:[%s1306 + $0x4] sm:$0xf]
        %v7311 = vld [vmem:[%s1306 + $0x8] sm:$0xf]
        %v7312 = vld [vmem:[%s1306 + $0xc] sm:$0xf]
        %v7313 = vld [vmem:[%s1306 + $0x10] sm:$0xf]
        %v7314 = vld [vmem:[%s1306 + $0x14] sm:$0xf]
        %v7315 = vld [vmem:[%s1306 + $0x18] sm:$0xf]
        %v7316 = vld [vmem:[%s1306 + $0x1c] sm:$0xf]
        %v7317 = vld [vmem:[%s1123] sm:$0x1]
        %v7318 = vpack.c.bf16 %v7271, %v7269
        %v7319 = vpack.c.bf16 %v7275, %v7273
        %v7320 = vpack.c.bf16 %v7284, %v7282
        %v7321 = vpack.c.bf16 %v7288, %v7286
        %v7322 = vpack.c.bf16 %v7272, %v7270
        %v7323 = vpack.c.bf16 %v7276, %v7274
        %v7324 = vpack.c.bf16 %v7300, %v7298
        %v7325 = vpack.c.bf16 %v7304, %v7302
        %v7327 = vlaneseq
        %v7328 = vshrl.u32 %v7327, 7
        %v7329 = vsub.s32 0, %v7328
        %v7330 = vrot.slane %v7317, %v7329
        %v7340 = vunpack.c.l.b16 %v7309
        %v7341 = vunpack.c.l.b16 %v7310
        %v7342 = vunpack.c.l.b16 %v7311
        %v7343 = vunpack.c.l.b16 %v7312
        %v7344 = vunpack.c.l.b16 %v7313
        %v7345 = vunpack.c.l.b16 %v7314
        %v7346 = vunpack.c.l.b16 %v7315
        %v7347 = vunpack.c.l.b16 %v7316
        %v7348 = vpack.c.b16 %v7341, %v7340
        %v7349 = vpack.c.b16 %v7343, %v7342
        %v7350 = vpack.c.b16 %v7345, %v7344
        %v7351 = vpack.c.b16 %v7347, %v7346
        %v7357 = vsel %vm1561, %v7318, 0
        %v7360 = vsel %vm1561, %v7319, 0
        %v7363 = vsel %vm1561, %v7320, 0
        %v7366 = vsel %vm1561, %v7321, 0
        %v7369 = vsel %vm1561, %v7322, 0
        %v7372 = vsel %vm1561, %v7323, 0
        %v7375 = vsel %vm1561, %v7324, 0
        %v7378 = vsel %vm1561, %v7325, 0
        %7380 = vmatprep.subr.bf16.mxu0 0
        %7381 = vmatpush1.bf16.msra.mxu0 %v7348
        %7382 = vmatprep.subr.bf16.mxu0 0
        %7383 = vmatpush1.bf16.msra.mxu0 %v7349
        %7384 = vmatprep.subr.bf16.mxu0 0
        %7385 = vmatpush1.bf16.msra.mxu0 %v7350
        %7386 = vmatprep.subr.bf16.mxu0 0
        %7387 = vmatpush1.bf16.msra.mxu0 %v7351
        %7388 = vmatprep.subr.bf16.mxu0 0
        %7389 = vmatpush1.bf16.msra.mxu0 0
        %7390 = vmatprep.subr.bf16.mxu0 0
        %7391 = vmatpush1.bf16.msra.mxu0 0
        %7392 = vmatprep.subr.bf16.mxu0 0
        %7393 = vmatpush1.bf16.msra.mxu0 0
        %7394 = vmatprep.subr.bf16.mxu0 0
        %7395 = vmatpush1.bf16.msra.mxu0 0
        %7396 = vmatprep.subr.bf16.mxu0 0
        %7397 = vmatpush1.bf16.msra.mxu0 0
        %7398 = vmatprep.subr.bf16.mxu0 0
        %7399 = vmatpush1.bf16.msra.mxu0 0
        %7400 = vmatprep.subr.bf16.mxu0 0
        %7401 = vmatpush1.bf16.msra.mxu0 0
        %7402 = vmatprep.subr.bf16.mxu0 0
        %7403 = vmatpush1.bf16.msra.mxu0 0
        %7404 = vmatprep.subr.bf16.mxu0 0
        %7405 = vmatpush1.bf16.msra.mxu0 0
        %7406 = vmatprep.subr.bf16.mxu0 0
        %7407 = vmatpush1.bf16.msra.mxu0 0
        %7408 = vmatprep.subr.bf16.mxu0 0
        %7409 = vmatpush1.bf16.msra.mxu0 0
        %7410 = vmatprep.subr.bf16.mxu0 0
        %7411 = vmatpush1.bf16.msra.mxu0 0
        %7412 = vmatprep.mubr.bf16.mxu0 0
        %7413 = vmatmul.mubr.bf16.gmra.mrb[0].mxu0 %v7357
        %v7414 = vpop.f32.mrb[0].mxu0
        %v7415 = vadd.f32 %v7330, %v7414
        %v7416 = vpop.f32.mrb[0].mxu0
        %v7417 = vpop.f32.mrb[0].mxu0
        %v7418 = vadd.f32 %v7330, %v7417
        %v7419 = vpop.f32.mrb[0].mxu0
        %7420 = vmatprep.mubr.bf16.mxu0 0
        %7421 = vmatmul.mubr.bf16.gmra.mrb[0].mxu0 %v7360
        %v7422 = vpop.f32.mrb[0].mxu0
        %v7423 = vadd.f32 %v7330, %v7422
        %v7424 = vpop.f32.mrb[0].mxu0
        %v7425 = vpop.f32.mrb[0].mxu0
        %v7426 = vadd.f32 %v7330, %v7425
        %v7427 = vpop.f32.mrb[0].mxu0
        %7428 = vmatprep.mubr.bf16.mxu0 0
        %7429 = vmatmul.mubr.bf16.gmra.mrb[0].mxu0 %v7363
        %v7430 = vpop.f32.mrb[0].mxu0
        %v7431 = vadd.f32 %v7330, %v7430
        %v7432 = vpop.f32.mrb[0].mxu0
        %v7433 = vpop.f32.mrb[0].mxu0
        %v7434 = vadd.f32 %v7330, %v7433
        %v7435 = vpop.f32.mrb[0].mxu0
        %7436 = vmatprep.mubr.bf16.mxu0 0
        %7437 = vmatmul.mubr.bf16.gmra.mrb[0].mxu0 %v7366
        %v7438 = vpop.f32.mrb[0].mxu0
        %v7439 = vadd.f32 %v7330, %v7438
        %v7440 = vpop.f32.mrb[0].mxu0
        %v7441 = vpop.f32.mrb[0].mxu0
        %v7442 = vadd.f32 %v7330, %v7441
        %v7443 = vpop.f32.mrb[0].mxu0
        %7444 = vmatprep.mubr.bf16.mxu0 0
        %7445 = vmatmul.mubr.bf16.gmra.mrb[0].mxu0 %v7369
        %v7446 = vpop.f32.mrb[0].mxu0
        %v7447 = vadd.f32 %v7330, %v7446
        %v7448 = vpop.f32.mrb[0].mxu0
        %v7449 = vpop.f32.mrb[0].mxu0
        %v7450 = vadd.f32 %v7330, %v7449
        %v7451 = vpop.f32.mrb[0].mxu0
        %7452 = vmatprep.mubr.bf16.mxu0 0
        %7453 = vmatmul.mubr.bf16.gmra.mrb[0].mxu0 %v7372
        %v7454 = vpop.f32.mrb[0].mxu0
        %v7455 = vadd.f32 %v7330, %v7454
        %v7456 = vpop.f32.mrb[0].mxu0
        %v7457 = vpop.f32.mrb[0].mxu0
        %v7458 = vadd.f32 %v7330, %v7457
        %v7459 = vpop.f32.mrb[0].mxu0
        %7460 = vmatprep.mubr.bf16.mxu0 0
        %7461 = vmatmul.mubr.bf16.gmra.mrb[0].mxu0 %v7375
        %v7462 = vpop.f32.mrb[0].mxu0
        %v7463 = vadd.f32 %v7330, %v7462
        %v7464 = vpop.f32.mrb[0].mxu0
        %v7465 = vpop.f32.mrb[0].mxu0
        %v7466 = vadd.f32 %v7330, %v7465
        %v7467 = vpop.f32.mrb[0].mxu0
        %7468 = vmatprep.mubr.bf16.mxu0 0
        %7469 = vmatmul.mubr.bf16.gmra.mrb[0].mxu0 %v7378
        %v7470 = vpop.f32.mrb[0].mxu0
        %v7471 = vadd.f32 %v7330, %v7470
        %v7472 = vpop.f32.mrb[0].mxu0
        %v7473 = vpop.f32.mrb[0].mxu0
        %v7474 = vadd.f32 %v7330, %v7473
        %v7475 = vpop.f32.mrb[0].mxu0
        %7476 = vdwg.mxu0
        %v7477 = vtanh.pop %v7415
        %v7478 = vtanh.pop %v7418
        %v7479 = vtanh.pop %v7423
        %v7480 = vtanh.pop %v7426
        %v7481 = vtanh.pop %v7431
        %v7482 = vtanh.pop %v7434
        %v7483 = vtanh.pop %v7439
        %v7484 = vtanh.pop %v7442
        %v7485 = vtanh.pop %v7447
        %v7486 = vtanh.pop %v7450
        %v7487 = vtanh.pop %v7455
        %v7488 = vtanh.pop %v7458
        %v7489 = vtanh.pop %v7463
        %v7490 = vtanh.pop %v7466
        %v7491 = vtanh.pop %v7471
        %v7492 = vtanh.pop %v7474
        %v7493 = vsub.f32 %v1349, %v7477
        %v7494 = vsub.f32 %v1350, %v7478
        %v7495 = vsub.f32 %v1351, %v7479
        %v7496 = vsub.f32 %v1352, %v7480
        %v7497 = vsub.f32 %v1353, %v7481
        %v7498 = vsub.f32 %v1354, %v7482
        %v7499 = vsub.f32 %v1355, %v7483
        %v7500 = vsub.f32 %v1356, %v7484
        %v7501 = vsub.f32 %v1357, %v7485
        %v7502 = vsub.f32 %v1358, %v7486
        %v7503 = vsub.f32 %v1359, %v7487
        %v7504 = vsub.f32 %v1360, %v7488
        %v7505 = vsub.f32 %v1361, %v7489
        %v7506 = vsub.f32 %v1362, %v7490
        %v7507 = vsub.f32 %v1363, %v7491
        %v7508 = vsub.f32 %v1364, %v7492
        %7509 = vst.msk [vmem:[#allocation2] sm:$0xff] %vm1387, %v7493
        %7510 = vst.msk [vmem:[#allocation2 + $0x8] sm:$0xff] %vm1387, %v7494
        %7511 = vst.msk [vmem:[#allocation2 + $0x10] sm:$0xff] %vm1387, %v7495
        %7512 = vst.msk [vmem:[#allocation2 + $0x18] sm:$0xff] %vm1387, %v7496
        %7513 = vst.msk [vmem:[#allocation2 + $0x20] sm:$0xff] %vm1387, %v7497
        %7514 = vst.msk [vmem:[#allocation2 + $0x28] sm:$0xff] %vm1387, %v7498
        %7515 = vst.msk [vmem:[#allocation2 + $0x30] sm:$0xff] %vm1387, %v7499
        %7516 = vst.msk [vmem:[#allocation2 + $0x38] sm:$0xff] %vm1387, %v7500
        %7517 = vst.msk [vmem:[#allocation2 + $0x40] sm:$0xff] %vm1387, %v7501
        %7518 = vst.msk [vmem:[#allocation2 + $0x48] sm:$0xff] %vm1387, %v7502
        %7519 = vst.msk [vmem:[#allocation2 + $0x50] sm:$0xff] %vm1387, %v7503
        %7520 = vst.msk [vmem:[#allocation2 + $0x58] sm:$0xff] %vm1387, %v7504
        %7521 = vst.msk [vmem:[#allocation2 + $0x60] sm:$0xff] %vm1387, %v7505
        %7522 = vst.msk [vmem:[#allocation2 + $0x68] sm:$0xff] %vm1387, %v7506
        %7523 = vst.msk [vmem:[#allocation2 + $0x70] sm:$0xff] %vm1387, %v7507
        %7524 = vst.msk [vmem:[#allocation2 + $0x78] sm:$0xff] %vm1387, %v7508
        %v7525 = vand.u32 2147483647, %v7493
        %v7526 = vand.u32 2147483647, %v7494
        %v7527 = vand.u32 2147483647, %v7495
        %v7528 = vand.u32 2147483647, %v7496
        %v7529 = vand.u32 2147483647, %v7497
        %v7530 = vand.u32 2147483647, %v7498
        %v7531 = vand.u32 2147483647, %v7499
        %v7532 = vand.u32 2147483647, %v7500
        %v7533 = vand.u32 2147483647, %v7501
        %v7534 = vand.u32 2147483647, %v7502
        %v7535 = vand.u32 2147483647, %v7503
        %v7536 = vand.u32 2147483647, %v7504
        %v7537 = vand.u32 2147483647, %v7505
        %v7538 = vand.u32 2147483647, %v7506
        %v7539 = vand.u32 2147483647, %v7507
        %v7540 = vand.u32 2147483647, %v7508
        %v7541 = vsel %vm1387, %v7525, 0.0
        %v7542 = vsel %vm1387, %v7526, 0.0
        %v7543 = vadd.f32 %v7541, %v7542
        %v7544 = vsel %vm1387, %v7527, 0.0
        %v7545 = vadd.f32 %v7543, %v7544
        %v7546 = vsel %vm1387, %v7528, 0.0
        %v7547 = vadd.f32 %v7545, %v7546
        %v7548 = vsel %vm1387, %v7529, 0.0
        %v7549 = vadd.f32 %v7547, %v7548
        %v7550 = vsel %vm1387, %v7530, 0.0
        %v7551 = vadd.f32 %v7549, %v7550
        %v7552 = vsel %vm1387, %v7531, 0.0
        %v7553 = vadd.f32 %v7551, %v7552
        %v7554 = vsel %vm1387, %v7532, 0.0
        %v7555 = vadd.f32 %v7553, %v7554
        %v7556 = vsel %vm1387, %v7533, 0.0
        %v7557 = vadd.f32 %v7555, %v7556
        %v7558 = vsel %vm1387, %v7534, 0.0
        %v7559 = vadd.f32 %v7557, %v7558
        %v7560 = vsel %vm1387, %v7535, 0.0
        %v7561 = vadd.f32 %v7559, %v7560
        %v7562 = vsel %vm1387, %v7536, 0.0
        %v7563 = vadd.f32 %v7561, %v7562
        %v7564 = vsel %vm1387, %v7537, 0.0
        %v7565 = vadd.f32 %v7563, %v7564
        %v7566 = vsel %vm1387, %v7538, 0.0
        %v7567 = vadd.f32 %v7565, %v7566
        %v7568 = vsel %vm1387, %v7539, 0.0
        %v7569 = vadd.f32 %v7567, %v7568
        %v7570 = vsel %vm1387, %v7540, 0.0
        %v7571 = vadd.f32 %v7569, %v7570
        %7572 = vadd.xlane.f32.xlu0 %v7571
        %v7573 = vpop.xlane.xlu0 %7572
        %v7574 = vrot.slane %v7573, 4
        %v7575 = vadd.f32 %v7573, %v7574
        %v7576 = vrot.slane %v7575, 2
        %v7577 = vadd.f32 %v7575, %v7576
        %v7578 = vrot.slane %v7577, 1
        %v7579 = vadd.f32 %v7577, %v7578
        %s7580 = vtos %v7579
        %v7581 = vld [vmem:[%s1309] sm:$0x1]
        %v7582 = vstv %s7580
        %v7583 = vadd.f32 %v7581, %v7582
        %7584 = vst [vmem:[%s1309] sm:$0x1] %v7583
        %p7585 = scmp.lt.s32.totalorder %s60, 0
        %s7586 = scalar_select %p7585, %s60, 0
        %s7587 = scalar_lea.vmem %s21, %s7586
        // Predicated region
        $region169: #{conv_ar_forward.1} parent=103 // pred_check
          %p7588 = pneg %p632
        $region170: #{conv_ar_forward.1} parent=103 // pred_check_branch
          %7590 = sbr.rel (%p7588) target = $region172
        $region171: #{conv_ar_forward.1} parent=103 // pred_region
          _
        $region172: #{conv_ar_forward.1} parent=103 // pred_fallthru
          _
        // Predicated region
        $region173: #{conv_ar_forward.1} parent=103 // pred_check
          %p7591 = pneg %p632
        $region174: #{conv_ar_forward.1} parent=103 // pred_check_branch
          %7593 = sbr.rel (%p7591) target = $region176
        $region175: #{conv_ar_forward.1} parent=103 // pred_region
          %p7594 = scmp.lt.s32.totalorder %s60, 0
          %s7595 = scalar_select %p7594, %s60, 0
          %s7596 = scalar_lea.vmem %s21, %s7595
        $region176: #{conv_ar_forward.1} parent=103 // pred_fallthru
          _
      $region104: #{conv_ar_forward.1} parent=5 // pred_fallthru
        _
      %p7597 = scmp.le.s32.totalorder 2, %s51
      // Predicated region
      $region177: #{conv_ar_forward.1} parent=5 // pred_check
        %p7598 = pneg %p7597
      $region178: #{conv_ar_forward.1} parent=5 // pred_check_branch
        %7600 = sbr.rel (%p7598) target = $region180
      $region179: #{conv_ar_forward.1} parent=5 // pred_region
        %s7601 = ssub.s32 %s51, 2
      $region180: #{conv_ar_forward.1} parent=5 // pred_fallthru
        _
    $region6: #{conv_ar_forward.1} parent=1 // loop_footer
      %s55 = sadd.s32 1, %s51
    $region7: #{conv_ar_forward.1} parent=1 // loop_footer_branch
      %50 = sbr.rel target = $region3
    $region8: #{conv_ar_forward.1} parent=1 // loop_exit
      _
    %7602 = vsyncpa [#allocation4], 1
    %s7603 = scalar_lea.sflag [#allocation4], 1
    %7604 = vsyncpa %s7603, 1
    %7605 = vsyncpa [#allocation6], 1
    %s7606 = scalar_lea.sflag [#allocation6], 1
    %7607 = vsyncpa %s7606, 1
    %7608 = vsyncpa [#allocation9], 1
    %s7609 = scalar_lea.sflag [#allocation9], 1
    %7610 = vsyncpa %s7609, 1
    %7611 = vsyncpa [#allocation12], 1
    %s7612 = scalar_lea.sflag [#allocation12], 1
    %7613 = vsyncpa %s7612, 1
    %7614 = vsyncpa [#allocation15], 1
    %s7615 = scalar_lea.sflag [#allocation15], 1
    %7616 = vsyncpa %s7615, 1
    %7617 = vsyncpa [#allocation18], 1
    %s7618 = scalar_lea.sflag [#allocation18], 1
    %7619 = vsyncpa %s7618, 1
    %7620 = vsyncpa [#allocation21], 1
    %s7621 = scalar_lea.sflag [#allocation21], 1
    %7622 = vsyncpa %s7621, 1
    %7623 = vsyncpa [#allocation24], 1
    %s7624 = scalar_lea.sflag [#allocation24], 1
    %7625 = vsyncpa %s7624, 1

</llo_original>
